<compile_context>
chip_gen: v6e
topology: v6e:2x2x1
jax: 0.10.0
libtpu: 0.0.40
codegen_flags: <defaults>
</compile_context>

<pallas_src>
import numpy as np
import jax
import jax.numpy as jnp
from jax.experimental import pallas as pl
from jax.experimental.pallas import tpu as pltpu

# ---------------- small config (stand-in for dinov2 vitb14) ----------------
B = 2
C_IN = 3
IMG = 16
PATCH = 4                       # vit.patch_embed.proj.kernel_size[0]
H = W = IMG // PATCH            # 4 x 4 patches
N_PATCH = H * W                 # 16 spatial tokens
T = 1 + N_PATCH                 # cls + patches = 17
BT = B * T                      # all tokens of all batches folded into rows
BN = B * N_PATCH                # all spatial tokens
D = 32                          # hidden dim (768 in the real vitb14)
NUM_HEADS = 2
DH = D // NUM_HEADS
MLP_HIDDEN = 64
NUM_LAYERS = 4
MULTILAYERS = [NUM_LAYERS // 4 - 1, NUM_LAYERS // 2 - 1,
               NUM_LAYERS // 4 * 3 - 1, NUM_LAYERS - 1]   # -> [0, 1, 2, 3]
N_ML = len(MULTILAYERS)
DPT_OUT = 16                    # output_channels (112 in the reference)
OUT_HW = 16                     # F.interpolate target size

VMEM = pltpu.MemorySpace.VMEM


# ------------------------------ math helpers --------------------------------
def _ln(v, g, b, eps=1e-6):
    mu = jnp.mean(v, axis=-1, keepdims=True)
    var = jnp.mean((v - mu) ** 2, axis=-1, keepdims=True)
    return (v - mu) * jax.lax.rsqrt(var + eps) * g + b


def _erf(x):
    # Abramowitz & Stegun 7.1.26 (|err| < 1.5e-7, i.e. exact at f32) so the
    # exact-erf GELU of dinov2 is matched using only exp / mul / add / where.
    a1, a2, a3, a4, a5 = 0.254829592, -0.284496736, 1.421413741, -1.453152027, 1.061405429
    p = 0.3275911
    ax = jnp.abs(x)
    t = 1.0 / (1.0 + p * ax)
    poly = ((((a5 * t + a4) * t + a3) * t + a2) * t + a1) * t
    y = 1.0 - poly * jnp.exp(-ax * ax)
    return jnp.where(x >= 0.0, y, -y)


def _gelu_exact(x):
    return 0.5 * x * (1.0 + _erf(x * 0.7071067811865476))


# -------------------------- the fused DINO kernel ----------------------------
def _dino_kernel(patches_ref, pw_ref, tok_ref, bias_ref,
                 ln1g_ref, ln1b_ref, wq_ref, bq_ref, wk_ref, bk_ref,
                 wv_ref, bv_ref, wo_ref, bo_ref, ls1_ref,
                 ln2g_ref, ln2b_ref, w1_ref, b1_ref, w2_ref, b2_ref, ls2_ref,
                 dptw_ref, dptb_ref, interp_ref,
                 feat_ref, up_ref):
    # ---- prepare_tokens_with_masks: strided-conv patch embed as one matmul.
    # Row layout: [batch0 spatial(16), batch1 spatial(16), batch0 cls, batch1 cls].
    # cls rows have all-zero "patches"; the cls token + positional embedding +
    # patch-embed bias live in tok_ref (built on the host).
    x = jnp.dot(patches_ref[...], pw_ref[...],
                preferred_element_type=jnp.float32) + tok_ref[...]       # (BT, D)
    bias = bias_ref[...]                                                 # (BT, BT) block-diag
    scale = 1.0 / (DH ** 0.5)

    # ---- all transformer blocks fused (stacked weights, unrolled layer loop)
    for l in range(NUM_LAYERS):
        # attention branch
        h = _ln(x, ln1g_ref[l], ln1b_ref[l])
        attn = bo_ref[l]                                                 # (1, D)
        for hh in range(NUM_HEADS):                                      # head-major weights:
            qh = jnp.dot(h, wq_ref[l, hh],                               # no lane slicing
                         preferred_element_type=jnp.float32) + bq_ref[l, hh]
            kh = jnp.dot(h, wk_ref[l, hh],
                         preferred_element_type=jnp.float32) + bk_ref[l, hh]
            vh = jnp.dot(h, wv_ref[l, hh],
                         preferred_element_type=jnp.float32) + bv_ref[l, hh]
            s = jax.lax.dot_general(qh, kh, (((1,), (1,)), ((), ())),
                                    preferred_element_type=jnp.float32)
            p = jax.nn.softmax(s * scale + bias, axis=-1)                # per-batch softmax
            oh = jnp.dot(p, vh, preferred_element_type=jnp.float32)      # (BT, DH)
            attn = attn + jnp.dot(oh, wo_ref[l, hh],
                                  preferred_element_type=jnp.float32)    # (BT, D)
        x = x + ls1_ref[l] * attn
        # MLP branch (exact erf GELU, matching dinov2)
        h2 = _ln(x, ln2g_ref[l], ln2b_ref[l])
        m = jnp.dot(h2, w1_ref[l], preferred_element_type=jnp.float32) + b1_ref[l]
        m = _gelu_exact(m)
        m = jnp.dot(m, w2_ref[l], preferred_element_type=jnp.float32) + b2_ref[l]
        x = x + ls2_ref[l] * m

        # multilayer feature collection, written lane-densely into a
        # (B*N_PATCH, N_ML*D = 128)-wide output slab (spatial tokens only).
        if l in MULTILAYERS:
            slot = MULTILAYERS.index(l)
            feat_ref[:, slot * D:(slot + 1) * D] = x[:BN, :]

    # ---- DPT stand-in: per-layer 1x1 projections + sum + ReLU folded into a
    # single K = N_ML*D = 128 matmul over the concatenated features.
    # TODO(synk): the reference DPT class definition is not provided; this is
    # the same fused-projection stand-in used previously.
    feat_all = feat_ref[...]                                             # (BN, 128)
    fused = jnp.maximum(
        jnp.dot(feat_all, dptw_ref[...], preferred_element_type=jnp.float32)
        + dptb_ref[...], 0.0)                                            # (BN, DPT_OUT)

    # ---- F.interpolate(..., (16,16), 'bilinear', align_corners=True) as one
    # precomputed (OUT*OUT, N_PATCH) interpolation-matrix matmul per batch.
    interp = interp_ref[...]
    for b in range(B):
        fb = fused[b * N_PATCH:(b + 1) * N_PATCH, :]                     # (N_PATCH, C)
        up_ref[b] = jnp.dot(interp, fb, preferred_element_type=jnp.float32)


# ------------------------------ glue / params -------------------------------
def bilinear_matrix(out_size, in_size):
    """Row-interpolation matrix for bilinear, align_corners=True."""
    R = np.zeros((out_size, in_size), dtype=np.float32)
    if in_size == 1:
        R[:, 0] = 1.0
        return R
    for o in range(out_size):
        c = o * (in_size - 1) / (out_size - 1) if out_size > 1 else 0.0
        i0 = int(np.floor(c))
        i1 = min(i0 + 1, in_size - 1)
        f = c - i0
        R[o, i0] += 1.0 - f
        R[o, i1] += f
    return R


def center_padding(images, patch_size):
    h, w = images.shape[-2:]
    dh = (patch_size - h % patch_size) % patch_size
    dw = (patch_size - w % patch_size) % patch_size
    pt, pb = dh // 2, dh - dh // 2
    plft, prgt = dw // 2, dw - dw // 2
    return jnp.pad(images, ((0, 0), (0, 0), (pt, pb), (plft, prgt)))


def init_params(key):
    keys = jax.random.split(key, 16)
    ki = iter(keys)

    def nrm(shape, scale=0.02):
        return (scale * jax.random.normal(next(ki), shape)).astype(jnp.float32)

    L = NUM_LAYERS
    params = {
        'patch_w': nrm((C_IN * PATCH * PATCH, D)),
        'patch_b': jnp.zeros((1, D), jnp.float32),
        'cls': nrm((1, 1, D)),
        'pos': nrm((1, T, D)),
        # per-layer weights stacked on a leading L axis; q/k/v/out head-major
        'ln1g': jnp.ones((L, 1, D), jnp.float32),
        'ln1b': jnp.zeros((L, 1, D), jnp.float32),
        'wq': nrm((L, NUM_HEADS, D, DH)),
        'bq': jnp.zeros((L, NUM_HEADS, 1, DH), jnp.float32),
        'wk': nrm((L, NUM_HEADS, D, DH)),
        'bk': jnp.zeros((L, NUM_HEADS, 1, DH), jnp.float32),
        'wv': nrm((L, NUM_HEADS, D, DH)),
        'bv': jnp.zeros((L, NUM_HEADS, 1, DH), jnp.float32),
        'wo': nrm((L, NUM_HEADS, DH, D)),
        'bo': jnp.zeros((L, 1, D), jnp.float32),
        'ls1': jnp.full((L, 1, D), 0.1, jnp.float32),
        'ln2g': jnp.ones((L, 1, D), jnp.float32),
        'ln2b': jnp.zeros((L, 1, D), jnp.float32),
        'w1': nrm((L, D, MLP_HIDDEN)),
        'b1': jnp.zeros((L, 1, MLP_HIDDEN), jnp.float32),
        'w2': nrm((L, MLP_HIDDEN, D)),
        'b2': jnp.zeros((L, 1, D), jnp.float32),
        'ls2': jnp.full((L, 1, D), 0.1, jnp.float32),
        'dpt_w': nrm((N_ML, D, DPT_OUT)),
        'dpt_b': jnp.zeros((N_ML, 1, DPT_OUT), jnp.float32),
    }
    return params


@jax.jit
def dino_forward(params, images):
    images = center_padding(images, PATCH)
    h = images.shape[-2] // PATCH
    w = images.shape[-1] // PATCH
    n = h * w
    assert n == N_PATCH

    # im2col so the strided conv patch-embed becomes one matmul in the kernel.
    patches = images.reshape(B, C_IN, h, PATCH, w, PATCH)
    patches = patches.transpose(0, 2, 4, 1, 3, 5).reshape(
        B * n, C_IN * PATCH * PATCH)
    # rows: [batch0 spatial, batch1 spatial, batch0 cls, batch1 cls]
    patches_all = jnp.concatenate(
        [patches, jnp.zeros((B, C_IN * PATCH * PATCH), jnp.float32)], axis=0)

    # token-wise additive term: positional embedding (reordered to the folded
    # row layout) + patch-embed bias on spatial rows + cls token on cls rows.
    pos = params['pos'][0]                                    # (T, D): [cls, patches]
    cls2d = params['cls'].reshape(1, D)
    tok_add = jnp.concatenate(
        [jnp.tile(pos[1:] + params['patch_b'], (B, 1)),
         jnp.tile(pos[:1] + cls2d, (B, 1))], axis=0)          # (BT, D)

    # block-diagonal additive attention bias: tokens never attend across batch.
    row_batch = np.concatenate([np.repeat(np.arange(B), n), np.arange(B)])
    attn_bias = jnp.asarray(
        np.where(row_batch[:, None] == row_batch[None, :],
                 0.0, -1e30).astype(np.float32))              # (BT, BT)

    # DPT 1x1 fusion: per-layer weights concatenated along K, biases summed.
    dpt_w_cat = params['dpt_w'].reshape(N_ML * D, DPT_OUT)
    dpt_b_sum = jnp.sum(params['dpt_b'], axis=0)

    # combined bilinear align_corners=True interpolation matrix (rows ⊗ cols),
    # precomputed at trace time (h, w are static under jit).
    interp_m = jnp.asarray(np.kron(bilinear_matrix(OUT_HW, h),
                                   bilinear_matrix(OUT_HW, w)))

    inputs = (patches_all, params['patch_w'], tok_add, attn_bias,
              params['ln1g'], params['ln1b'],
              params['wq'], params['bq'], params['wk'], params['bk'],
              params['wv'], params['bv'], params['wo'], params['bo'],
              params['ls1'], params['ln2g'], params['ln2b'],
              params['w1'], params['b1'], params['w2'], params['b2'],
              params['ls2'], dpt_w_cat, dpt_b_sum, interp_m)

    feat, up = pl.pallas_call(
        _dino_kernel,
        out_shape=(jax.ShapeDtypeStruct((B * n, N_ML * D), jnp.float32),
                   jax.ShapeDtypeStruct((B, OUT_HW * OUT_HW, DPT_OUT),
                                        jnp.float32)),
        in_specs=[pl.BlockSpec(memory_space=VMEM)] * len(inputs),
        out_specs=(pl.BlockSpec(memory_space=VMEM),
                   pl.BlockSpec(memory_space=VMEM)),
    )(*inputs)

    # outputs[0]: layer MULTILAYERS[0] dense map, 'b (h w) c -> b c h w'
    dense0 = feat[:, :D].reshape(B, n, D).transpose(0, 2, 1).reshape(B, D, h, w)
    # final interpolated DPT output, NCHW
    x_up = up.reshape(B, OUT_HW, OUT_HW, DPT_OUT).transpose(0, 3, 1, 2)
    return dense0, x_up


if __name__ == "__main__":
    key = jax.random.PRNGKey(0)
    pkey, xkey = jax.random.split(key)
    params = init_params(pkey)
    images = jax.random.normal(xkey, (B, C_IN, IMG, IMG), dtype=jnp.float32)

    dense0, x_up = dino_forward(params, images)
    jax.block_until_ready((dense0, x_up))

    assert dense0.shape == (B, D, H, W), dense0.shape
    assert x_up.shape == (B, DPT_OUT, OUT_HW, OUT_HW), x_up.shape
    assert bool(jnp.all(jnp.isfinite(dense0))) and bool(jnp.all(jnp.isfinite(x_up)))
    print("KERNEL_OK")
</pallas_src>

<mosaic_0001>
module attributes {stable_mosaic.version = 11 : i64} {
  func.func @_dino_kernel(%arg0: memref<34x48xf32, #tpu.memory_space<vmem>>, %arg1: memref<48x32xf32, #tpu.memory_space<vmem>>, %arg2: memref<34x32xf32, #tpu.memory_space<vmem>>, %arg3: memref<34x34xf32, #tpu.memory_space<vmem>>, %arg4: memref<4x1x32xf32, #tpu.memory_space<vmem>>, %arg5: memref<4x1x32xf32, #tpu.memory_space<vmem>>, %arg6: memref<4x2x32x16xf32, #tpu.memory_space<vmem>>, %arg7: memref<4x2x1x16xf32, #tpu.memory_space<vmem>>, %arg8: memref<4x2x32x16xf32, #tpu.memory_space<vmem>>, %arg9: memref<4x2x1x16xf32, #tpu.memory_space<vmem>>, %arg10: memref<4x2x32x16xf32, #tpu.memory_space<vmem>>, %arg11: memref<4x2x1x16xf32, #tpu.memory_space<vmem>>, %arg12: memref<4x2x16x32xf32, #tpu.memory_space<vmem>>, %arg13: memref<4x1x32xf32, #tpu.memory_space<vmem>>, %arg14: memref<4x1x32xf32, #tpu.memory_space<vmem>>, %arg15: memref<4x1x32xf32, #tpu.memory_space<vmem>>, %arg16: memref<4x1x32xf32, #tpu.memory_space<vmem>>, %arg17: memref<4x32x64xf32, #tpu.memory_space<vmem>>, %arg18: memref<4x1x64xf32, #tpu.memory_space<vmem>>, %arg19: memref<4x64x32xf32, #tpu.memory_space<vmem>>, %arg20: memref<4x1x32xf32, #tpu.memory_space<vmem>>, %arg21: memref<4x1x32xf32, #tpu.memory_space<vmem>>, %arg22: memref<128x16xf32, #tpu.memory_space<vmem>>, %arg23: memref<1x16xf32, #tpu.memory_space<vmem>>, %arg24: memref<256x16xf32, #tpu.memory_space<vmem>>, %arg25: memref<32x128xf32, #tpu.memory_space<vmem>>, %arg26: memref<2x256x16xf32, #tpu.memory_space<vmem>>) attributes {dimension_semantics = [], scalar_prefetch = 0 : i64, scratch_operands = 0 : i64, tpu.core_type = #tpu.core_type<tc>} {
    %c0 = arith.constant 0 : index
    %c0_0 = arith.constant 0 : index
    %0 = vector.load %arg0[%c0, %c0_0] : memref<34x48xf32, #tpu.memory_space<vmem>>, vector<34x48xf32>
    %c0_1 = arith.constant 0 : index
    %c0_2 = arith.constant 0 : index
    %1 = vector.load %arg1[%c0_1, %c0_2] : memref<48x32xf32, #tpu.memory_space<vmem>>, vector<48x32xf32>
    %cst = arith.constant dense<0.000000e+00> : vector<34x32xf32>
    %2 = tpu.matmul %0, %1, %cst {dimension_numbers = #tpu.dot_dimension_numbers<[1], [0], [0], [1], [0, 0, 1, 1], [], []>} : vector<34x48xf32>, vector<48x32xf32>, vector<34x32xf32> -> vector<34x32xf32>
    %c0_3 = arith.constant 0 : index
    %c0_4 = arith.constant 0 : index
    %3 = vector.load %arg2[%c0_3, %c0_4] : memref<34x32xf32, #tpu.memory_space<vmem>>, vector<34x32xf32>
    %4 = arith.addf %2, %3 : vector<34x32xf32>
    %c0_5 = arith.constant 0 : index
    %c0_6 = arith.constant 0 : index
    %5 = vector.load %arg3[%c0_5, %c0_6] : memref<34x34xf32, #tpu.memory_space<vmem>>, vector<34x34xf32>
    %c0_7 = arith.constant 0 : index
    %c0_8 = arith.constant 0 : index
    %c0_9 = arith.constant 0 : index
    %6 = vector.load %arg4[%c0_7, %c0_8, %c0_9] : memref<4x1x32xf32, #tpu.memory_space<vmem>>, vector<1x1x32xf32>
    %7 = vector.shape_cast %6 : vector<1x1x32xf32> to vector<1x32xf32>
    %c0_10 = arith.constant 0 : index
    %c0_11 = arith.constant 0 : index
    %c0_12 = arith.constant 0 : index
    %8 = vector.load %arg5[%c0_10, %c0_11, %c0_12] : memref<4x1x32xf32, #tpu.memory_space<vmem>>, vector<1x1x32xf32>
    %9 = vector.shape_cast %8 : vector<1x1x32xf32> to vector<1x32xf32>
    %cst_13 = arith.constant dense<0.000000e+00> : vector<34xf32>
    %10 = vector.multi_reduction <add>, %4, %cst_13 [1] : vector<34x32xf32> to vector<34xf32>
    %11 = vector.shape_cast %10 : vector<34xf32> to vector<34x1xf32>
    %cst_14 = arith.constant 3.200000e+01 : f32
    %12 = vector.broadcast %cst_14 : f32 to vector<34x1xf32>
    %13 = arith.divf %11, %12 : vector<34x1xf32>
    %14 = vector.broadcast %13 : vector<34x1xf32> to vector<34x32xf32>
    %15 = arith.subf %4, %14 : vector<34x32xf32>
    %16 = arith.mulf %15, %15 : vector<34x32xf32>
    %cst_15 = arith.constant dense<0.000000e+00> : vector<34xf32>
    %17 = vector.multi_reduction <add>, %16, %cst_15 [1] : vector<34x32xf32> to vector<34xf32>
    %18 = vector.shape_cast %17 : vector<34xf32> to vector<34x1xf32>
    %cst_16 = arith.constant 3.200000e+01 : f32
    %19 = vector.broadcast %cst_16 : f32 to vector<34x1xf32>
    %20 = arith.divf %18, %19 : vector<34x1xf32>
    %21 = vector.broadcast %13 : vector<34x1xf32> to vector<34x32xf32>
    %22 = arith.subf %4, %21 : vector<34x32xf32>
    %cst_17 = arith.constant 9.99999997E-7 : f32
    %23 = vector.broadcast %cst_17 : f32 to vector<34x1xf32>
    %24 = arith.addf %20, %23 : vector<34x1xf32>
    %25 = math.rsqrt %24 : vector<34x1xf32>
    %26 = vector.broadcast %25 : vector<34x1xf32> to vector<34x32xf32>
    %27 = arith.mulf %22, %26 : vector<34x32xf32>
    %28 = vector.broadcast %7 : vector<1x32xf32> to vector<34x32xf32>
    %29 = arith.mulf %27, %28 : vector<34x32xf32>
    %30 = vector.broadcast %9 : vector<1x32xf32> to vector<34x32xf32>
    %31 = arith.addf %29, %30 : vector<34x32xf32>
    %c0_18 = arith.constant 0 : index
    %c0_19 = arith.constant 0 : index
    %c0_20 = arith.constant 0 : index
    %32 = vector.load %arg13[%c0_18, %c0_19, %c0_20] : memref<4x1x32xf32, #tpu.memory_space<vmem>>, vector<1x1x32xf32>
    %33 = vector.shape_cast %32 : vector<1x1x32xf32> to vector<1x32xf32>
    %c0_21 = arith.constant 0 : index
    %c0_22 = arith.constant 0 : index
    %c0_23 = arith.constant 0 : index
    %c0_24 = arith.constant 0 : index
    %34 = vector.load %arg6[%c0_21, %c0_22, %c0_23, %c0_24] : memref<4x2x32x16xf32, #tpu.memory_space<vmem>>, vector<1x1x32x16xf32>
    %35 = vector.shape_cast %34 : vector<1x1x32x16xf32> to vector<32x16xf32>
    %cst_25 = arith.constant dense<0.000000e+00> : vector<34x16xf32>
    %36 = tpu.matmul %31, %35, %cst_25 {dimension_numbers = #tpu.dot_dimension_numbers<[1], [0], [0], [1], [0, 0, 1, 1], [], []>} : vector<34x32xf32>, vector<32x16xf32>, vector<34x16xf32> -> vector<34x16xf32>
    %c0_26 = arith.constant 0 : index
    %c0_27 = arith.constant 0 : index
    %c0_28 = arith.constant 0 : index
    %c0_29 = arith.constant 0 : index
    %37 = vector.load %arg7[%c0_26, %c0_27, %c0_28, %c0_29] : memref<4x2x1x16xf32, #tpu.memory_space<vmem>>, vector<1x1x1x16xf32>
    %38 = vector.shape_cast %37 : vector<1x1x1x16xf32> to vector<1x16xf32>
    %39 = vector.broadcast %38 : vector<1x16xf32> to vector<34x16xf32>
    %40 = arith.addf %36, %39 : vector<34x16xf32>
    %c0_30 = arith.constant 0 : index
    %c0_31 = arith.constant 0 : index
    %c0_32 = arith.constant 0 : index
    %c0_33 = arith.constant 0 : index
    %41 = vector.load %arg8[%c0_30, %c0_31, %c0_32, %c0_33] : memref<4x2x32x16xf32, #tpu.memory_space<vmem>>, vector<1x1x32x16xf32>
    %42 = vector.shape_cast %41 : vector<1x1x32x16xf32> to vector<32x16xf32>
    %cst_34 = arith.constant dense<0.000000e+00> : vector<34x16xf32>
    %43 = tpu.matmul %31, %42, %cst_34 {dimension_numbers = #tpu.dot_dimension_numbers<[1], [0], [0], [1], [0, 0, 1, 1], [], []>} : vector<34x32xf32>, vector<32x16xf32>, vector<34x16xf32> -> vector<34x16xf32>
    %c0_35 = arith.constant 0 : index
    %c0_36 = arith.constant 0 : index
    %c0_37 = arith.constant 0 : index
    %c0_38 = arith.constant 0 : index
    %44 = vector.load %arg9[%c0_35, %c0_36, %c0_37, %c0_38] : memref<4x2x1x16xf32, #tpu.memory_space<vmem>>, vector<1x1x1x16xf32>
    %45 = vector.shape_cast %44 : vector<1x1x1x16xf32> to vector<1x16xf32>
    %46 = vector.broadcast %45 : vector<1x16xf32> to vector<34x16xf32>
    %47 = arith.addf %43, %46 : vector<34x16xf32>
    %c0_39 = arith.constant 0 : index
    %c0_40 = arith.constant 0 : index
    %c0_41 = arith.constant 0 : index
    %c0_42 = arith.constant 0 : index
    %48 = vector.load %arg10[%c0_39, %c0_40, %c0_41, %c0_42] : memref<4x2x32x16xf32, #tpu.memory_space<vmem>>, vector<1x1x32x16xf32>
    %49 = vector.shape_cast %48 : vector<1x1x32x16xf32> to vector<32x16xf32>
    %cst_43 = arith.constant dense<0.000000e+00> : vector<34x16xf32>
    %50 = tpu.matmul %31, %49, %cst_43 {dimension_numbers = #tpu.dot_dimension_numbers<[1], [0], [0], [1], [0, 0, 1, 1], [], []>} : vector<34x32xf32>, vector<32x16xf32>, vector<34x16xf32> -> vector<34x16xf32>
    %c0_44 = arith.constant 0 : index
    %c0_45 = arith.constant 0 : index
    %c0_46 = arith.constant 0 : index
    %c0_47 = arith.constant 0 : index
    %51 = vector.load %arg11[%c0_44, %c0_45, %c0_46, %c0_47] : memref<4x2x1x16xf32, #tpu.memory_space<vmem>>, vector<1x1x1x16xf32>
    %52 = vector.shape_cast %51 : vector<1x1x1x16xf32> to vector<1x16xf32>
    %53 = vector.broadcast %52 : vector<1x16xf32> to vector<34x16xf32>
    %54 = arith.addf %50, %53 : vector<34x16xf32>
    %cst_48 = arith.constant dense<0.000000e+00> : vector<34x34xf32>
    %55 = tpu.matmul %40, %47, %cst_48 {dimension_numbers = #tpu.dot_dimension_numbers<[1], [1], [0], [0], [0, 0, 1, 0], [], []>} : vector<34x16xf32>, vector<34x16xf32>, vector<34x34xf32> -> vector<34x34xf32>
    %cst_49 = arith.constant 2.500000e-01 : f32
    %56 = vector.broadcast %cst_49 : f32 to vector<34x34xf32>
    %57 = arith.mulf %55, %56 : vector<34x34xf32>
    %58 = arith.addf %57, %5 : vector<34x34xf32>
    %cst_50 = arith.constant dense<0xFF800000> : vector<34xf32>
    %59 = vector.multi_reduction <maximumf>, %58, %cst_50 [1] : vector<34x34xf32> to vector<34xf32>
    %cst_51 = arith.constant 0xFF800000 : f32
    %60 = vector.broadcast %cst_51 : f32 to vector<34xf32>
    %61 = arith.maximumf %60, %59 : vector<34xf32>
    %62 = vector.shape_cast %61 : vector<34xf32> to vector<34x1xf32>
    %63 = vector.broadcast %62 : vector<34x1xf32> to vector<34x34xf32>
    %64 = arith.subf %58, %63 : vector<34x34xf32>
    %65 = math.exp %64 : vector<34x34xf32>
    %cst_52 = arith.constant dense<0.000000e+00> : vector<34xf32>
    %66 = vector.multi_reduction <add>, %65, %cst_52 [1] : vector<34x34xf32> to vector<34xf32>
    %67 = vector.shape_cast %66 : vector<34xf32> to vector<34x1xf32>
    %68 = vector.broadcast %67 : vector<34x1xf32> to vector<34x34xf32>
    %69 = arith.divf %65, %68 : vector<34x34xf32>
    %cst_53 = arith.constant dense<0.000000e+00> : vector<34x16xf32>
    %70 = tpu.matmul %69, %54, %cst_53 {dimension_numbers = #tpu.dot_dimension_numbers<[1], [0], [0], [1], [0, 0, 1, 1], [], []>} : vector<34x34xf32>, vector<34x16xf32>, vector<34x16xf32> -> vector<34x16xf32>
    %c0_54 = arith.constant 0 : index
    %c0_55 = arith.constant 0 : index
    %c0_56 = arith.constant 0 : index
    %c0_57 = arith.constant 0 : index
    %71 = vector.load %arg12[%c0_54, %c0_55, %c0_56, %c0_57] : memref<4x2x16x32xf32, #tpu.memory_space<vmem>>, vector<1x1x16x32xf32>
    %72 = vector.shape_cast %71 : vector<1x1x16x32xf32> to vector<16x32xf32>
    %cst_58 = arith.constant dense<0.000000e+00> : vector<34x32xf32>
    %73 = tpu.matmul %70, %72, %cst_58 {dimension_numbers = #tpu.dot_dimension_numbers<[1], [0], [0], [1], [0, 0, 1, 1], [], []>} : vector<34x16xf32>, vector<16x32xf32>, vector<34x32xf32> -> vector<34x32xf32>
    %74 = vector.broadcast %33 : vector<1x32xf32> to vector<34x32xf32>
    %75 = arith.addf %74, %73 : vector<34x32xf32>
    %c0_59 = arith.constant 0 : index
    %c1 = arith.constant 1 : index
    %c0_60 = arith.constant 0 : index
    %c0_61 = arith.constant 0 : index
    %76 = vector.load %arg6[%c0_59, %c1, %c0_60, %c0_61] : memref<4x2x32x16xf32, #tpu.memory_space<vmem>>, vector<1x1x32x16xf32>
    %77 = vector.shape_cast %76 : vector<1x1x32x16xf32> to vector<32x16xf32>
    %cst_62 = arith.constant dense<0.000000e+00> : vector<34x16xf32>
    %78 = tpu.matmul %31, %77, %cst_62 {dimension_numbers = #tpu.dot_dimension_numbers<[1], [0], [0], [1], [0, 0, 1, 1], [], []>} : vector<34x32xf32>, vector<32x16xf32>, vector<34x16xf32> -> vector<34x16xf32>
    %c0_63 = arith.constant 0 : index
    %c1_64 = arith.constant 1 : index
    %c0_65 = arith.constant 0 : index
    %c0_66 = arith.constant 0 : index
    %79 = vector.load %arg7[%c0_63, %c1_64, %c0_65, %c0_66] : memref<4x2x1x16xf32, #tpu.memory_space<vmem>>, vector<1x1x1x16xf32>
    %80 = vector.shape_cast %79 : vector<1x1x1x16xf32> to vector<1x16xf32>
    %81 = vector.broadcast %80 : vector<1x16xf32> to vector<34x16xf32>
    %82 = arith.addf %78, %81 : vector<34x16xf32>
    %c0_67 = arith.constant 0 : index
    %c1_68 = arith.constant 1 : index
    %c0_69 = arith.constant 0 : index
    %c0_70 = arith.constant 0 : index
    %83 = vector.load %arg8[%c0_67, %c1_68, %c0_69, %c0_70] : memref<4x2x32x16xf32, #tpu.memory_space<vmem>>, vector<1x1x32x16xf32>
    %84 = vector.shape_cast %83 : vector<1x1x32x16xf32> to vector<32x16xf32>
    %cst_71 = arith.constant dense<0.000000e+00> : vector<34x16xf32>
    %85 = tpu.matmul %31, %84, %cst_71 {dimension_numbers = #tpu.dot_dimension_numbers<[1], [0], [0], [1], [0, 0, 1, 1], [], []>} : vector<34x32xf32>, vector<32x16xf32>, vector<34x16xf32> -> vector<34x16xf32>
    %c0_72 = arith.constant 0 : index
    %c1_73 = arith.constant 1 : index
    %c0_74 = arith.constant 0 : index
    %c0_75 = arith.constant 0 : index
    %86 = vector.load %arg9[%c0_72, %c1_73, %c0_74, %c0_75] : memref<4x2x1x16xf32, #tpu.memory_space<vmem>>, vector<1x1x1x16xf32>
    %87 = vector.shape_cast %86 : vector<1x1x1x16xf32> to vector<1x16xf32>
    %88 = vector.broadcast %87 : vector<1x16xf32> to vector<34x16xf32>
    %89 = arith.addf %85, %88 : vector<34x16xf32>
    %c0_76 = arith.constant 0 : index
    %c1_77 = arith.constant 1 : index
    %c0_78 = arith.constant 0 : index
    %c0_79 = arith.constant 0 : index
    %90 = vector.load %arg10[%c0_76, %c1_77, %c0_78, %c0_79] : memref<4x2x32x16xf32, #tpu.memory_space<vmem>>, vector<1x1x32x16xf32>
    %91 = vector.shape_cast %90 : vector<1x1x32x16xf32> to vector<32x16xf32>
    %cst_80 = arith.constant dense<0.000000e+00> : vector<34x16xf32>
    %92 = tpu.matmul %31, %91, %cst_80 {dimension_numbers = #tpu.dot_dimension_numbers<[1], [0], [0], [1], [0, 0, 1, 1], [], []>} : vector<34x32xf32>, vector<32x16xf32>, vector<34x16xf32> -> vector<34x16xf32>
    %c0_81 = arith.constant 0 : index
    %c1_82 = arith.constant 1 : index
    %c0_83 = arith.constant 0 : index
    %c0_84 = arith.constant 0 : index
    %93 = vector.load %arg11[%c0_81, %c1_82, %c0_83, %c0_84] : memref<4x2x1x16xf32, #tpu.memory_space<vmem>>, vector<1x1x1x16xf32>
    %94 = vector.shape_cast %93 : vector<1x1x1x16xf32> to vector<1x16xf32>
    %95 = vector.broadcast %94 : vector<1x16xf32> to vector<34x16xf32>
    %96 = arith.addf %92, %95 : vector<34x16xf32>
    %cst_85 = arith.constant dense<0.000000e+00> : vector<34x34xf32>
    %97 = tpu.matmul %82, %89, %cst_85 {dimension_numbers = #tpu.dot_dimension_numbers<[1], [1], [0], [0], [0, 0, 1, 0], [], []>} : vector<34x16xf32>, vector<34x16xf32>, vector<34x34xf32> -> vector<34x34xf32>
    %cst_86 = arith.constant 2.500000e-01 : f32
    %98 = vector.broadcast %cst_86 : f32 to vector<34x34xf32>
    %99 = arith.mulf %97, %98 : vector<34x34xf32>
    %100 = arith.addf %99, %5 : vector<34x34xf32>
    %cst_87 = arith.constant dense<0xFF800000> : vector<34xf32>
    %101 = vector.multi_reduction <maximumf>, %100, %cst_87 [1] : vector<34x34xf32> to vector<34xf32>
    %cst_88 = arith.constant 0xFF800000 : f32
    %102 = vector.broadcast %cst_88 : f32 to vector<34xf32>
    %103 = arith.maximumf %102, %101 : vector<34xf32>
    %104 = vector.shape_cast %103 : vector<34xf32> to vector<34x1xf32>
    %105 = vector.broadcast %104 : vector<34x1xf32> to vector<34x34xf32>
    %106 = arith.subf %100, %105 : vector<34x34xf32>
    %107 = math.exp %106 : vector<34x34xf32>
    %cst_89 = arith.constant dense<0.000000e+00> : vector<34xf32>
    %108 = vector.multi_reduction <add>, %107, %cst_89 [1] : vector<34x34xf32> to vector<34xf32>
    %109 = vector.shape_cast %108 : vector<34xf32> to vector<34x1xf32>
    %110 = vector.broadcast %109 : vector<34x1xf32> to vector<34x34xf32>
    %111 = arith.divf %107, %110 : vector<34x34xf32>
    %cst_90 = arith.constant dense<0.000000e+00> : vector<34x16xf32>
    %112 = tpu.matmul %111, %96, %cst_90 {dimension_numbers = #tpu.dot_dimension_numbers<[1], [0], [0], [1], [0, 0, 1, 1], [], []>} : vector<34x34xf32>, vector<34x16xf32>, vector<34x16xf32> -> vector<34x16xf32>
    %c0_91 = arith.constant 0 : index
    %c1_92 = arith.constant 1 : index
    %c0_93 = arith.constant 0 : index
    %c0_94 = arith.constant 0 : index
    %113 = vector.load %arg12[%c0_91, %c1_92, %c0_93, %c0_94] : memref<4x2x16x32xf32, #tpu.memory_space<vmem>>, vector<1x1x16x32xf32>
    %114 = vector.shape_cast %113 : vector<1x1x16x32xf32> to vector<16x32xf32>
    %cst_95 = arith.constant dense<0.000000e+00> : vector<34x32xf32>
    %115 = tpu.matmul %112, %114, %cst_95 {dimension_numbers = #tpu.dot_dimension_numbers<[1], [0], [0], [1], [0, 0, 1, 1], [], []>} : vector<34x16xf32>, vector<16x32xf32>, vector<34x32xf32> -> vector<34x32xf32>
    %116 = arith.addf %75, %115 : vector<34x32xf32>
    %c0_96 = arith.constant 0 : index
    %c0_97 = arith.constant 0 : index
    %c0_98 = arith.constant 0 : index
    %117 = vector.load %arg14[%c0_96, %c0_97, %c0_98] : memref<4x1x32xf32, #tpu.memory_space<vmem>>, vector<1x1x32xf32>
    %118 = vector.shape_cast %117 : vector<1x1x32xf32> to vector<1x32xf32>
    %119 = vector.broadcast %118 : vector<1x32xf32> to vector<34x32xf32>
    %120 = arith.mulf %119, %116 : vector<34x32xf32>
    %121 = arith.addf %4, %120 : vector<34x32xf32>
    %c0_99 = arith.constant 0 : index
    %c0_100 = arith.constant 0 : index
    %c0_101 = arith.constant 0 : index
    %122 = vector.load %arg15[%c0_99, %c0_100, %c0_101] : memref<4x1x32xf32, #tpu.memory_space<vmem>>, vector<1x1x32xf32>
    %123 = vector.shape_cast %122 : vector<1x1x32xf32> to vector<1x32xf32>
    %c0_102 = arith.constant 0 : index
    %c0_103 = arith.constant 0 : index
    %c0_104 = arith.constant 0 : index
    %124 = vector.load %arg16[%c0_102, %c0_103, %c0_104] : memref<4x1x32xf32, #tpu.memory_space<vmem>>, vector<1x1x32xf32>
    %125 = vector.shape_cast %124 : vector<1x1x32xf32> to vector<1x32xf32>
    %cst_105 = arith.constant dense<0.000000e+00> : vector<34xf32>
    %126 = vector.multi_reduction <add>, %121, %cst_105 [1] : vector<34x32xf32> to vector<34xf32>
    %127 = vector.shape_cast %126 : vector<34xf32> to vector<34x1xf32>
    %cst_106 = arith.constant 3.200000e+01 : f32
    %128 = vector.broadcast %cst_106 : f32 to vector<34x1xf32>
    %129 = arith.divf %127, %128 : vector<34x1xf32>
    %130 = vector.broadcast %129 : vector<34x1xf32> to vector<34x32xf32>
    %131 = arith.subf %121, %130 : vector<34x32xf32>
    %132 = arith.mulf %131, %131 : vector<34x32xf32>
    %cst_107 = arith.constant dense<0.000000e+00> : vector<34xf32>
    %133 = vector.multi_reduction <add>, %132, %cst_107 [1] : vector<34x32xf32> to vector<34xf32>
    %134 = vector.shape_cast %133 : vector<34xf32> to vector<34x1xf32>
    %cst_108 = arith.constant 3.200000e+01 : f32
    %135 = vector.broadcast %cst_108 : f32 to vector<34x1xf32>
    %136 = arith.divf %134, %135 : vector<34x1xf32>
    %137 = vector.broadcast %129 : vector<34x1xf32> to vector<34x32xf32>
    %138 = arith.subf %121, %137 : vector<34x32xf32>
    %cst_109 = arith.constant 9.99999997E-7 : f32
    %139 = vector.broadcast %cst_109 : f32 to vector<34x1xf32>
    %140 = arith.addf %136, %139 : vector<34x1xf32>
    %141 = math.rsqrt %140 : vector<34x1xf32>
    %142 = vector.broadcast %141 : vector<34x1xf32> to vector<34x32xf32>
    %143 = arith.mulf %138, %142 : vector<34x32xf32>
    %144 = vector.broadcast %123 : vector<1x32xf32> to vector<34x32xf32>
    %145 = arith.mulf %143, %144 : vector<34x32xf32>
    %146 = vector.broadcast %125 : vector<1x32xf32> to vector<34x32xf32>
    %147 = arith.addf %145, %146 : vector<34x32xf32>
    %c0_110 = arith.constant 0 : index
    %c0_111 = arith.constant 0 : index
    %c0_112 = arith.constant 0 : index
    %148 = vector.load %arg17[%c0_110, %c0_111, %c0_112] : memref<4x32x64xf32, #tpu.memory_space<vmem>>, vector<1x32x64xf32>
    %149 = vector.shape_cast %148 : vector<1x32x64xf32> to vector<32x64xf32>
    %cst_113 = arith.constant dense<0.000000e+00> : vector<34x64xf32>
    %150 = tpu.matmul %147, %149, %cst_113 {dimension_numbers = #tpu.dot_dimension_numbers<[1], [0], [0], [1], [0, 0, 1, 1], [], []>} : vector<34x32xf32>, vector<32x64xf32>, vector<34x64xf32> -> vector<34x64xf32>
    %c0_114 = arith.constant 0 : index
    %c0_115 = arith.constant 0 : index
    %c0_116 = arith.constant 0 : index
    %151 = vector.load %arg18[%c0_114, %c0_115, %c0_116] : memref<4x1x64xf32, #tpu.memory_space<vmem>>, vector<1x1x64xf32>
    %152 = vector.shape_cast %151 : vector<1x1x64xf32> to vector<1x64xf32>
    %153 = vector.broadcast %152 : vector<1x64xf32> to vector<34x64xf32>
    %154 = arith.addf %150, %153 : vector<34x64xf32>
    %cst_117 = arith.constant 5.000000e-01 : f32
    %155 = vector.broadcast %cst_117 : f32 to vector<34x64xf32>
    %156 = arith.mulf %155, %154 : vector<34x64xf32>
    %cst_118 = arith.constant 0.707106769 : f32
    %157 = vector.broadcast %cst_118 : f32 to vector<34x64xf32>
    %158 = arith.mulf %154, %157 : vector<34x64xf32>
    %159 = math.absf %158 : vector<34x64xf32>
    %cst_119 = arith.constant 0.327591091 : f32
    %160 = vector.broadcast %cst_119 : f32 to vector<34x64xf32>
    %161 = arith.mulf %160, %159 : vector<34x64xf32>
    %cst_120 = arith.constant 1.000000e+00 : f32
    %162 = vector.broadcast %cst_120 : f32 to vector<34x64xf32>
    %163 = arith.addf %162, %161 : vector<34x64xf32>
    %cst_121 = arith.constant 1.000000e+00 : f32
    %164 = vector.broadcast %cst_121 : f32 to vector<34x64xf32>
    %165 = arith.divf %164, %163 : vector<34x64xf32>
    %cst_122 = arith.constant 1.06140542 : f32
    %166 = vector.broadcast %cst_122 : f32 to vector<34x64xf32>
    %167 = arith.mulf %166, %165 : vector<34x64xf32>
    %cst_123 = arith.constant -1.45315206 : f32
    %168 = vector.broadcast %cst_123 : f32 to vector<34x64xf32>
    %169 = arith.addf %167, %168 : vector<34x64xf32>
    %170 = arith.mulf %169, %165 : vector<34x64xf32>
    %cst_124 = arith.constant 1.42141378 : f32
    %171 = vector.broadcast %cst_124 : f32 to vector<34x64xf32>
    %172 = arith.addf %170, %171 : vector<34x64xf32>
    %173 = arith.mulf %172, %165 : vector<34x64xf32>
    %cst_125 = arith.constant -0.284496725 : f32
    %174 = vector.broadcast %cst_125 : f32 to vector<34x64xf32>
    %175 = arith.addf %173, %174 : vector<34x64xf32>
    %176 = arith.mulf %175, %165 : vector<34x64xf32>
    %cst_126 = arith.constant 0.254829586 : f32
    %177 = vector.broadcast %cst_126 : f32 to vector<34x64xf32>
    %178 = arith.addf %176, %177 : vector<34x64xf32>
    %179 = arith.mulf %178, %165 : vector<34x64xf32>
    %cst_127 = arith.constant 0.000000e+00 : f32
    %180 = vector.broadcast %cst_127 : f32 to vector<34x64xf32>
    %181 = arith.subf %180, %159 : vector<34x64xf32>
    %182 = arith.mulf %181, %159 : vector<34x64xf32>
    %183 = math.exp %182 : vector<34x64xf32>
    %184 = arith.mulf %179, %183 : vector<34x64xf32>
    %cst_128 = arith.constant 1.000000e+00 : f32
    %185 = vector.broadcast %cst_128 : f32 to vector<34x64xf32>
    %186 = arith.subf %185, %184 : vector<34x64xf32>
    %cst_129 = arith.constant 0.000000e+00 : f32
    %187 = vector.broadcast %cst_129 : f32 to vector<34x64xf32>
    %188 = arith.cmpf oge, %158, %187 : vector<34x64xf32>
    %cst_130 = arith.constant 0.000000e+00 : f32
    %189 = vector.broadcast %cst_130 : f32 to vector<34x64xf32>
    %190 = arith.subf %189, %186 : vector<34x64xf32>
    %191 = arith.select %188, %186, %190 : vector<34x64xi1>, vector<34x64xf32>
    %cst_131 = arith.constant 1.000000e+00 : f32
    %192 = vector.broadcast %cst_131 : f32 to vector<34x64xf32>
    %193 = arith.addf %192, %191 : vector<34x64xf32>
    %194 = arith.mulf %156, %193 : vector<34x64xf32>
    %c0_132 = arith.constant 0 : index
    %c0_133 = arith.constant 0 : index
    %c0_134 = arith.constant 0 : index
    %195 = vector.load %arg19[%c0_132, %c0_133, %c0_134] : memref<4x64x32xf32, #tpu.memory_space<vmem>>, vector<1x64x32xf32>
    %196 = vector.shape_cast %195 : vector<1x64x32xf32> to vector<64x32xf32>
    %cst_135 = arith.constant dense<0.000000e+00> : vector<34x32xf32>
    %197 = tpu.matmul %194, %196, %cst_135 {dimension_numbers = #tpu.dot_dimension_numbers<[1], [0], [0], [1], [0, 0, 1, 1], [], []>} : vector<34x64xf32>, vector<64x32xf32>, vector<34x32xf32> -> vector<34x32xf32>
    %c0_136 = arith.constant 0 : index
    %c0_137 = arith.constant 0 : index
    %c0_138 = arith.constant 0 : index
    %198 = vector.load %arg20[%c0_136, %c0_137, %c0_138] : memref<4x1x32xf32, #tpu.memory_space<vmem>>, vector<1x1x32xf32>
    %199 = vector.shape_cast %198 : vector<1x1x32xf32> to vector<1x32xf32>
    %200 = vector.broadcast %199 : vector<1x32xf32> to vector<34x32xf32>
    %201 = arith.addf %197, %200 : vector<34x32xf32>
    %c0_139 = arith.constant 0 : index
    %c0_140 = arith.constant 0 : index
    %c0_141 = arith.constant 0 : index
    %202 = vector.load %arg21[%c0_139, %c0_140, %c0_141] : memref<4x1x32xf32, #tpu.memory_space<vmem>>, vector<1x1x32xf32>
    %203 = vector.shape_cast %202 : vector<1x1x32xf32> to vector<1x32xf32>
    %204 = vector.broadcast %203 : vector<1x32xf32> to vector<34x32xf32>
    %205 = arith.mulf %204, %201 : vector<34x32xf32>
    %206 = arith.addf %121, %205 : vector<34x32xf32>
    %207 = vector.extract_strided_slice %206 {offsets = [0, 0], sizes = [32, 32], strides = [1, 1]} : vector<34x32xf32> to vector<32x32xf32>
    %c0_142 = arith.constant 0 : index
    %c0_143 = arith.constant 0 : index
    %208 = vector.load %arg25[%c0_142, %c0_143] : memref<32x128xf32, #tpu.memory_space<vmem>>, vector<32x32xf32>
    tpu.vector_store %arg25[%c0_142, %c0_143], %207 {strides = array<i32>} : memref<32x128xf32, #tpu.memory_space<vmem>>, vector<32x32xf32>,
    %c1_144 = arith.constant 1 : index
    %c0_145 = arith.constant 0 : index
    %c0_146 = arith.constant 0 : index
    %209 = vector.load %arg4[%c1_144, %c0_145, %c0_146] : memref<4x1x32xf32, #tpu.memory_space<vmem>>, vector<1x1x32xf32>
    %210 = vector.shape_cast %209 : vector<1x1x32xf32> to vector<1x32xf32>
    %c1_147 = arith.constant 1 : index
    %c0_148 = arith.constant 0 : index
    %c0_149 = arith.constant 0 : index
    %211 = vector.load %arg5[%c1_147, %c0_148, %c0_149] : memref<4x1x32xf32, #tpu.memory_space<vmem>>, vector<1x1x32xf32>
    %212 = vector.shape_cast %211 : vector<1x1x32xf32> to vector<1x32xf32>
    %cst_150 = arith.constant dense<0.000000e+00> : vector<34xf32>
    %213 = vector.multi_reduction <add>, %206, %cst_150 [1] : vector<34x32xf32> to vector<34xf32>
    %214 = vector.shape_cast %213 : vector<34xf32> to vector<34x1xf32>
    %cst_151 = arith.constant 3.200000e+01 : f32
    %215 = vector.broadcast %cst_151 : f32 to vector<34x1xf32>
    %216 = arith.divf %214, %215 : vector<34x1xf32>
    %217 = vector.broadcast %216 : vector<34x1xf32> to vector<34x32xf32>
    %218 = arith.subf %206, %217 : vector<34x32xf32>
    %219 = arith.mulf %218, %218 : vector<34x32xf32>
    %cst_152 = arith.constant dense<0.000000e+00> : vector<34xf32>
    %220 = vector.multi_reduction <add>, %219, %cst_152 [1] : vector<34x32xf32> to vector<34xf32>
    %221 = vector.shape_cast %220 : vector<34xf32> to vector<34x1xf32>
    %cst_153 = arith.constant 3.200000e+01 : f32
    %222 = vector.broadcast %cst_153 : f32 to vector<34x1xf32>
    %223 = arith.divf %221, %222 : vector<34x1xf32>
    %224 = vector.broadcast %216 : vector<34x1xf32> to vector<34x32xf32>
    %225 = arith.subf %206, %224 : vector<34x32xf32>
    %cst_154 = arith.constant 9.99999997E-7 : f32
    %226 = vector.broadcast %cst_154 : f32 to vector<34x1xf32>
    %227 = arith.addf %223, %226 : vector<34x1xf32>
    %228 = math.rsqrt %227 : vector<34x1xf32>
    %229 = vector.broadcast %228 : vector<34x1xf32> to vector<34x32xf32>
    %230 = arith.mulf %225, %229 : vector<34x32xf32>
    %231 = vector.broadcast %210 : vector<1x32xf32> to vector<34x32xf32>
    %232 = arith.mulf %230, %231 : vector<34x32xf32>
    %233 = vector.broadcast %212 : vector<1x32xf32> to vector<34x32xf32>
    %234 = arith.addf %232, %233 : vector<34x32xf32>
    %c1_155 = arith.constant 1 : index
    %c0_156 = arith.constant 0 : index
    %c0_157 = arith.constant 0 : index
    %235 = vector.load %arg13[%c1_155, %c0_156, %c0_157] : memref<4x1x32xf32, #tpu.memory_space<vmem>>, vector<1x1x32xf32>
    %236 = vector.shape_cast %235 : vector<1x1x32xf32> to vector<1x32xf32>
    %c1_158 = arith.constant 1 : index
    %c0_159 = arith.constant 0 : index
    %c0_160 = arith.constant 0 : index
    %c0_161 = arith.constant 0 : index
    %237 = vector.load %arg6[%c1_158, %c0_159, %c0_160, %c0_161] : memref<4x2x32x16xf32, #tpu.memory_space<vmem>>, vector<1x1x32x16xf32>
    %238 = vector.shape_cast %237 : vector<1x1x32x16xf32> to vector<32x16xf32>
    %cst_162 = arith.constant dense<0.000000e+00> : vector<34x16xf32>
    %239 = tpu.matmul %234, %238, %cst_162 {dimension_numbers = #tpu.dot_dimension_numbers<[1], [0], [0], [1], [0, 0, 1, 1], [], []>} : vector<34x32xf32>, vector<32x16xf32>, vector<34x16xf32> -> vector<34x16xf32>
    %c1_163 = arith.constant 1 : index
    %c0_164 = arith.constant 0 : index
    %c0_165 = arith.constant 0 : index
    %c0_166 = arith.constant 0 : index
    %240 = vector.load %arg7[%c1_163, %c0_164, %c0_165, %c0_166] : memref<4x2x1x16xf32, #tpu.memory_space<vmem>>, vector<1x1x1x16xf32>
    %241 = vector.shape_cast %240 : vector<1x1x1x16xf32> to vector<1x16xf32>
    %242 = vector.broadcast %241 : vector<1x16xf32> to vector<34x16xf32>
    %243 = arith.addf %239, %242 : vector<34x16xf32>
    %c1_167 = arith.constant 1 : index
    %c0_168 = arith.constant 0 : index
    %c0_169 = arith.constant 0 : index
    %c0_170 = arith.constant 0 : index
    %244 = vector.load %arg8[%c1_167, %c0_168, %c0_169, %c0_170] : memref<4x2x32x16xf32, #tpu.memory_space<vmem>>, vector<1x1x32x16xf32>
    %245 = vector.shape_cast %244 : vector<1x1x32x16xf32> to vector<32x16xf32>
    %cst_171 = arith.constant dense<0.000000e+00> : vector<34x16xf32>
    %246 = tpu.matmul %234, %245, %cst_171 {dimension_numbers = #tpu.dot_dimension_numbers<[1], [0], [0], [1], [0, 0, 1, 1], [], []>} : vector<34x32xf32>, vector<32x16xf32>, vector<34x16xf32> -> vector<34x16xf32>
    %c1_172 = arith.constant 1 : index
    %c0_173 = arith.constant 0 : index
    %c0_174 = arith.constant 0 : index
    %c0_175 = arith.constant 0 : index
    %247 = vector.load %arg9[%c1_172, %c0_173, %c0_174, %c0_175] : memref<4x2x1x16xf32, #tpu.memory_space<vmem>>, vector<1x1x1x16xf32>
    %248 = vector.shape_cast %247 : vector<1x1x1x16xf32> to vector<1x16xf32>
    %249 = vector.broadcast %248 : vector<1x16xf32> to vector<34x16xf32>
    %250 = arith.addf %246, %249 : vector<34x16xf32>
    %c1_176 = arith.constant 1 : index
    %c0_177 = arith.constant 0 : index
    %c0_178 = arith.constant 0 : index
    %c0_179 = arith.constant 0 : index
    %251 = vector.load %arg10[%c1_176, %c0_177, %c0_178, %c0_179] : memref<4x2x32x16xf32, #tpu.memory_space<vmem>>, vector<1x1x32x16xf32>
    %252 = vector.shape_cast %251 : vector<1x1x32x16xf32> to vector<32x16xf32>
    %cst_180 = arith.constant dense<0.000000e+00> : vector<34x16xf32>
    %253 = tpu.matmul %234, %252, %cst_180 {dimension_numbers = #tpu.dot_dimension_numbers<[1], [0], [0], [1], [0, 0, 1, 1], [], []>} : vector<34x32xf32>, vector<32x16xf32>, vector<34x16xf32> -> vector<34x16xf32>
    %c1_181 = arith.constant 1 : index
    %c0_182 = arith.constant 0 : index
    %c0_183 = arith.constant 0 : index
    %c0_184 = arith.constant 0 : index
    %254 = vector.load %arg11[%c1_181, %c0_182, %c0_183, %c0_184] : memref<4x2x1x16xf32, #tpu.memory_space<vmem>>, vector<1x1x1x16xf32>
    %255 = vector.shape_cast %254 : vector<1x1x1x16xf32> to vector<1x16xf32>
    %256 = vector.broadcast %255 : vector<1x16xf32> to vector<34x16xf32>
    %257 = arith.addf %253, %256 : vector<34x16xf32>
    %cst_185 = arith.constant dense<0.000000e+00> : vector<34x34xf32>
    %258 = tpu.matmul %243, %250, %cst_185 {dimension_numbers = #tpu.dot_dimension_numbers<[1], [1], [0], [0], [0, 0, 1, 0], [], []>} : vector<34x16xf32>, vector<34x16xf32>, vector<34x34xf32> -> vector<34x34xf32>
    %cst_186 = arith.constant 2.500000e-01 : f32
    %259 = vector.broadcast %cst_186 : f32 to vector<34x34xf32>
    %260 = arith.mulf %258, %259 : vector<34x34xf32>
    %261 = arith.addf %260, %5 : vector<34x34xf32>
    %cst_187 = arith.constant dense<0xFF800000> : vector<34xf32>
    %262 = vector.multi_reduction <maximumf>, %261, %cst_187 [1] : vector<34x34xf32> to vector<34xf32>
    %cst_188 = arith.constant 0xFF800000 : f32
    %263 = vector.broadcast %cst_188 : f32 to vector<34xf32>
    %264 = arith.maximumf %263, %262 : vector<34xf32>
    %265 = vector.shape_cast %264 : vector<34xf32> to vector<34x1xf32>
    %266 = vector.broadcast %265 : vector<34x1xf32> to vector<34x34xf32>
    %267 = arith.subf %261, %266 : vector<34x34xf32>
    %268 = math.exp %267 : vector<34x34xf32>
    %cst_189 = arith.constant dense<0.000000e+00> : vector<34xf32>
    %269 = vector.multi_reduction <add>, %268, %cst_189 [1] : vector<34x34xf32> to vector<34xf32>
    %270 = vector.shape_cast %269 : vector<34xf32> to vector<34x1xf32>
    %271 = vector.broadcast %270 : vector<34x1xf32> to vector<34x34xf32>
    %272 = arith.divf %268, %271 : vector<34x34xf32>
    %cst_190 = arith.constant dense<0.000000e+00> : vector<34x16xf32>
    %273 = tpu.matmul %272, %257, %cst_190 {dimension_numbers = #tpu.dot_dimension_numbers<[1], [0], [0], [1], [0, 0, 1, 1], [], []>} : vector<34x34xf32>, vector<34x16xf32>, vector<34x16xf32> -> vector<34x16xf32>
    %c1_191 = arith.constant 1 : index
    %c0_192 = arith.constant 0 : index
    %c0_193 = arith.constant 0 : index
    %c0_194 = arith.constant 0 : index
    %274 = vector.load %arg12[%c1_191, %c0_192, %c0_193, %c0_194] : memref<4x2x16x32xf32, #tpu.memory_space<vmem>>, vector<1x1x16x32xf32>
    %275 = vector.shape_cast %274 : vector<1x1x16x32xf32> to vector<16x32xf32>
    %cst_195 = arith.constant dense<0.000000e+00> : vector<34x32xf32>
    %276 = tpu.matmul %273, %275, %cst_195 {dimension_numbers = #tpu.dot_dimension_numbers<[1], [0], [0], [1], [0, 0, 1, 1], [], []>} : vector<34x16xf32>, vector<16x32xf32>, vector<34x32xf32> -> vector<34x32xf32>
    %277 = vector.broadcast %236 : vector<1x32xf32> to vector<34x32xf32>
    %278 = arith.addf %277, %276 : vector<34x32xf32>
    %c1_196 = arith.constant 1 : index
    %c1_197 = arith.constant 1 : index
    %c0_198 = arith.constant 0 : index
    %c0_199 = arith.constant 0 : index
    %279 = vector.load %arg6[%c1_196, %c1_197, %c0_198, %c0_199] : memref<4x2x32x16xf32, #tpu.memory_space<vmem>>, vector<1x1x32x16xf32>
    %280 = vector.shape_cast %279 : vector<1x1x32x16xf32> to vector<32x16xf32>
    %cst_200 = arith.constant dense<0.000000e+00> : vector<34x16xf32>
    %281 = tpu.matmul %234, %280, %cst_200 {dimension_numbers = #tpu.dot_dimension_numbers<[1], [0], [0], [1], [0, 0, 1, 1], [], []>} : vector<34x32xf32>, vector<32x16xf32>, vector<34x16xf32> -> vector<34x16xf32>
    %c1_201 = arith.constant 1 : index
    %c1_202 = arith.constant 1 : index
    %c0_203 = arith.constant 0 : index
    %c0_204 = arith.constant 0 : index
    %282 = vector.load %arg7[%c1_201, %c1_202, %c0_203, %c0_204] : memref<4x2x1x16xf32, #tpu.memory_space<vmem>>, vector<1x1x1x16xf32>
    %283 = vector.shape_cast %282 : vector<1x1x1x16xf32> to vector<1x16xf32>
    %284 = vector.broadcast %283 : vector<1x16xf32> to vector<34x16xf32>
    %285 = arith.addf %281, %284 : vector<34x16xf32>
    %c1_205 = arith.constant 1 : index
    %c1_206 = arith.constant 1 : index
    %c0_207 = arith.constant 0 : index
    %c0_208 = arith.constant 0 : index
    %286 = vector.load %arg8[%c1_205, %c1_206, %c0_207, %c0_208] : memref<4x2x32x16xf32, #tpu.memory_space<vmem>>, vector<1x1x32x16xf32>
    %287 = vector.shape_cast %286 : vector<1x1x32x16xf32> to vector<32x16xf32>
    %cst_209 = arith.constant dense<0.000000e+00> : vector<34x16xf32>
    %288 = tpu.matmul %234, %287, %cst_209 {dimension_numbers = #tpu.dot_dimension_numbers<[1], [0], [0], [1], [0, 0, 1, 1], [], []>} : vector<34x32xf32>, vector<32x16xf32>, vector<34x16xf32> -> vector<34x16xf32>
    %c1_210 = arith.constant 1 : index
    %c1_211 = arith.constant 1 : index
    %c0_212 = arith.constant 0 : index
    %c0_213 = arith.constant 0 : index
    %289 = vector.load %arg9[%c1_210, %c1_211, %c0_212, %c0_213] : memref<4x2x1x16xf32, #tpu.memory_space<vmem>>, vector<1x1x1x16xf32>
    %290 = vector.shape_cast %289 : vector<1x1x1x16xf32> to vector<1x16xf32>
    %291 = vector.broadcast %290 : vector<1x16xf32> to vector<34x16xf32>
    %292 = arith.addf %288, %291 : vector<34x16xf32>
    %c1_214 = arith.constant 1 : index
    %c1_215 = arith.constant 1 : index
    %c0_216 = arith.constant 0 : index
    %c0_217 = arith.constant 0 : index
    %293 = vector.load %arg10[%c1_214, %c1_215, %c0_216, %c0_217] : memref<4x2x32x16xf32, #tpu.memory_space<vmem>>, vector<1x1x32x16xf32>
    %294 = vector.shape_cast %293 : vector<1x1x32x16xf32> to vector<32x16xf32>
    %cst_218 = arith.constant dense<0.000000e+00> : vector<34x16xf32>
    %295 = tpu.matmul %234, %294, %cst_218 {dimension_numbers = #tpu.dot_dimension_numbers<[1], [0], [0], [1], [0, 0, 1, 1], [], []>} : vector<34x32xf32>, vector<32x16xf32>, vector<34x16xf32> -> vector<34x16xf32>
    %c1_219 = arith.constant 1 : index
    %c1_220 = arith.constant 1 : index
    %c0_221 = arith.constant 0 : index
    %c0_222 = arith.constant 0 : index
    %296 = vector.load %arg11[%c1_219, %c1_220, %c0_221, %c0_222] : memref<4x2x1x16xf32, #tpu.memory_space<vmem>>, vector<1x1x1x16xf32>
    %297 = vector.shape_cast %296 : vector<1x1x1x16xf32> to vector<1x16xf32>
    %298 = vector.broadcast %297 : vector<1x16xf32> to vector<34x16xf32>
    %299 = arith.addf %295, %298 : vector<34x16xf32>
    %cst_223 = arith.constant dense<0.000000e+00> : vector<34x34xf32>
    %300 = tpu.matmul %285, %292, %cst_223 {dimension_numbers = #tpu.dot_dimension_numbers<[1], [1], [0], [0], [0, 0, 1, 0], [], []>} : vector<34x16xf32>, vector<34x16xf32>, vector<34x34xf32> -> vector<34x34xf32>
    %cst_224 = arith.constant 2.500000e-01 : f32
    %301 = vector.broadcast %cst_224 : f32 to vector<34x34xf32>
    %302 = arith.mulf %300, %301 : vector<34x34xf32>
    %303 = arith.addf %302, %5 : vector<34x34xf32>
    %cst_225 = arith.constant dense<0xFF800000> : vector<34xf32>
    %304 = vector.multi_reduction <maximumf>, %303, %cst_225 [1] : vector<34x34xf32> to vector<34xf32>
    %cst_226 = arith.constant 0xFF800000 : f32
    %305 = vector.broadcast %cst_226 : f32 to vector<34xf32>
    %306 = arith.maximumf %305, %304 : vector<34xf32>
    %307 = vector.shape_cast %306 : vector<34xf32> to vector<34x1xf32>
    %308 = vector.broadcast %307 : vector<34x1xf32> to vector<34x34xf32>
    %309 = arith.subf %303, %308 : vector<34x34xf32>
    %310 = math.exp %309 : vector<34x34xf32>
    %cst_227 = arith.constant dense<0.000000e+00> : vector<34xf32>
    %311 = vector.multi_reduction <add>, %310, %cst_227 [1] : vector<34x34xf32> to vector<34xf32>
    %312 = vector.shape_cast %311 : vector<34xf32> to vector<34x1xf32>
    %313 = vector.broadcast %312 : vector<34x1xf32> to vector<34x34xf32>
    %314 = arith.divf %310, %313 : vector<34x34xf32>
    %cst_228 = arith.constant dense<0.000000e+00> : vector<34x16xf32>
    %315 = tpu.matmul %314, %299, %cst_228 {dimension_numbers = #tpu.dot_dimension_numbers<[1], [0], [0], [1], [0, 0, 1, 1], [], []>} : vector<34x34xf32>, vector<34x16xf32>, vector<34x16xf32> -> vector<34x16xf32>
    %c1_229 = arith.constant 1 : index
    %c1_230 = arith.constant 1 : index
    %c0_231 = arith.constant 0 : index
    %c0_232 = arith.constant 0 : index
    %316 = vector.load %arg12[%c1_229, %c1_230, %c0_231, %c0_232] : memref<4x2x16x32xf32, #tpu.memory_space<vmem>>, vector<1x1x16x32xf32>
    %317 = vector.shape_cast %316 : vector<1x1x16x32xf32> to vector<16x32xf32>
    %cst_233 = arith.constant dense<0.000000e+00> : vector<34x32xf32>
    %318 = tpu.matmul %315, %317, %cst_233 {dimension_numbers = #tpu.dot_dimension_numbers<[1], [0], [0], [1], [0, 0, 1, 1], [], []>} : vector<34x16xf32>, vector<16x32xf32>, vector<34x32xf32> -> vector<34x32xf32>
    %319 = arith.addf %278, %318 : vector<34x32xf32>
    %c1_234 = arith.constant 1 : index
    %c0_235 = arith.constant 0 : index
    %c0_236 = arith.constant 0 : index
    %320 = vector.load %arg14[%c1_234, %c0_235, %c0_236] : memref<4x1x32xf32, #tpu.memory_space<vmem>>, vector<1x1x32xf32>
    %321 = vector.shape_cast %320 : vector<1x1x32xf32> to vector<1x32xf32>
    %322 = vector.broadcast %321 : vector<1x32xf32> to vector<34x32xf32>
    %323 = arith.mulf %322, %319 : vector<34x32xf32>
    %324 = arith.addf %206, %323 : vector<34x32xf32>
    %c1_237 = arith.constant 1 : index
    %c0_238 = arith.constant 0 : index
    %c0_239 = arith.constant 0 : index
    %325 = vector.load %arg15[%c1_237, %c0_238, %c0_239] : memref<4x1x32xf32, #tpu.memory_space<vmem>>, vector<1x1x32xf32>
    %326 = vector.shape_cast %325 : vector<1x1x32xf32> to vector<1x32xf32>
    %c1_240 = arith.constant 1 : index
    %c0_241 = arith.constant 0 : index
    %c0_242 = arith.constant 0 : index
    %327 = vector.load %arg16[%c1_240, %c0_241, %c0_242] : memref<4x1x32xf32, #tpu.memory_space<vmem>>, vector<1x1x32xf32>
    %328 = vector.shape_cast %327 : vector<1x1x32xf32> to vector<1x32xf32>
    %cst_243 = arith.constant dense<0.000000e+00> : vector<34xf32>
    %329 = vector.multi_reduction <add>, %324, %cst_243 [1] : vector<34x32xf32> to vector<34xf32>
    %330 = vector.shape_cast %329 : vector<34xf32> to vector<34x1xf32>
    %cst_244 = arith.constant 3.200000e+01 : f32
    %331 = vector.broadcast %cst_244 : f32 to vector<34x1xf32>
    %332 = arith.divf %330, %331 : vector<34x1xf32>
    %333 = vector.broadcast %332 : vector<34x1xf32> to vector<34x32xf32>
    %334 = arith.subf %324, %333 : vector<34x32xf32>
    %335 = arith.mulf %334, %334 : vector<34x32xf32>
    %cst_245 = arith.constant dense<0.000000e+00> : vector<34xf32>
    %336 = vector.multi_reduction <add>, %335, %cst_245 [1] : vector<34x32xf32> to vector<34xf32>
    %337 = vector.shape_cast %336 : vector<34xf32> to vector<34x1xf32>
    %cst_246 = arith.constant 3.200000e+01 : f32
    %338 = vector.broadcast %cst_246 : f32 to vector<34x1xf32>
    %339 = arith.divf %337, %338 : vector<34x1xf32>
    %340 = vector.broadcast %332 : vector<34x1xf32> to vector<34x32xf32>
    %341 = arith.subf %324, %340 : vector<34x32xf32>
    %cst_247 = arith.constant 9.99999997E-7 : f32
    %342 = vector.broadcast %cst_247 : f32 to vector<34x1xf32>
    %343 = arith.addf %339, %342 : vector<34x1xf32>
    %344 = math.rsqrt %343 : vector<34x1xf32>
    %345 = vector.broadcast %344 : vector<34x1xf32> to vector<34x32xf32>
    %346 = arith.mulf %341, %345 : vector<34x32xf32>
    %347 = vector.broadcast %326 : vector<1x32xf32> to vector<34x32xf32>
    %348 = arith.mulf %346, %347 : vector<34x32xf32>
    %349 = vector.broadcast %328 : vector<1x32xf32> to vector<34x32xf32>
    %350 = arith.addf %348, %349 : vector<34x32xf32>
    %c1_248 = arith.constant 1 : index
    %c0_249 = arith.constant 0 : index
    %c0_250 = arith.constant 0 : index
    %351 = vector.load %arg17[%c1_248, %c0_249, %c0_250] : memref<4x32x64xf32, #tpu.memory_space<vmem>>, vector<1x32x64xf32>
    %352 = vector.shape_cast %351 : vector<1x32x64xf32> to vector<32x64xf32>
    %cst_251 = arith.constant dense<0.000000e+00> : vector<34x64xf32>
    %353 = tpu.matmul %350, %352, %cst_251 {dimension_numbers = #tpu.dot_dimension_numbers<[1], [0], [0], [1], [0, 0, 1, 1], [], []>} : vector<34x32xf32>, vector<32x64xf32>, vector<34x64xf32> -> vector<34x64xf32>
    %c1_252 = arith.constant 1 : index
    %c0_253 = arith.constant 0 : index
    %c0_254 = arith.constant 0 : index
    %354 = vector.load %arg18[%c1_252, %c0_253, %c0_254] : memref<4x1x64xf32, #tpu.memory_space<vmem>>, vector<1x1x64xf32>
    %355 = vector.shape_cast %354 : vector<1x1x64xf32> to vector<1x64xf32>
    %356 = vector.broadcast %355 : vector<1x64xf32> to vector<34x64xf32>
    %357 = arith.addf %353, %356 : vector<34x64xf32>
    %cst_255 = arith.constant 5.000000e-01 : f32
    %358 = vector.broadcast %cst_255 : f32 to vector<34x64xf32>
    %359 = arith.mulf %358, %357 : vector<34x64xf32>
    %cst_256 = arith.constant 0.707106769 : f32
    %360 = vector.broadcast %cst_256 : f32 to vector<34x64xf32>
    %361 = arith.mulf %357, %360 : vector<34x64xf32>
    %362 = math.absf %361 : vector<34x64xf32>
    %cst_257 = arith.constant 0.327591091 : f32
    %363 = vector.broadcast %cst_257 : f32 to vector<34x64xf32>
    %364 = arith.mulf %363, %362 : vector<34x64xf32>
    %cst_258 = arith.constant 1.000000e+00 : f32
    %365 = vector.broadcast %cst_258 : f32 to vector<34x64xf32>
    %366 = arith.addf %365, %364 : vector<34x64xf32>
    %cst_259 = arith.constant 1.000000e+00 : f32
    %367 = vector.broadcast %cst_259 : f32 to vector<34x64xf32>
    %368 = arith.divf %367, %366 : vector<34x64xf32>
    %cst_260 = arith.constant 1.06140542 : f32
    %369 = vector.broadcast %cst_260 : f32 to vector<34x64xf32>
    %370 = arith.mulf %369, %368 : vector<34x64xf32>
    %cst_261 = arith.constant -1.45315206 : f32
    %371 = vector.broadcast %cst_261 : f32 to vector<34x64xf32>
    %372 = arith.addf %370, %371 : vector<34x64xf32>
    %373 = arith.mulf %372, %368 : vector<34x64xf32>
    %cst_262 = arith.constant 1.42141378 : f32
    %374 = vector.broadcast %cst_262 : f32 to vector<34x64xf32>
    %375 = arith.addf %373, %374 : vector<34x64xf32>
    %376 = arith.mulf %375, %368 : vector<34x64xf32>
    %cst_263 = arith.constant -0.284496725 : f32
    %377 = vector.broadcast %cst_263 : f32 to vector<34x64xf32>
    %378 = arith.addf %376, %377 : vector<34x64xf32>
    %379 = arith.mulf %378, %368 : vector<34x64xf32>
    %cst_264 = arith.constant 0.254829586 : f32
    %380 = vector.broadcast %cst_264 : f32 to vector<34x64xf32>
    %381 = arith.addf %379, %380 : vector<34x64xf32>
    %382 = arith.mulf %381, %368 : vector<34x64xf32>
    %cst_265 = arith.constant 0.000000e+00 : f32
    %383 = vector.broadcast %cst_265 : f32 to vector<34x64xf32>
    %384 = arith.subf %383, %362 : vector<34x64xf32>
    %385 = arith.mulf %384, %362 : vector<34x64xf32>
    %386 = math.exp %385 : vector<34x64xf32>
    %387 = arith.mulf %382, %386 : vector<34x64xf32>
    %cst_266 = arith.constant 1.000000e+00 : f32
    %388 = vector.broadcast %cst_266 : f32 to vector<34x64xf32>
    %389 = arith.subf %388, %387 : vector<34x64xf32>
    %cst_267 = arith.constant 0.000000e+00 : f32
    %390 = vector.broadcast %cst_267 : f32 to vector<34x64xf32>
    %391 = arith.cmpf oge, %361, %390 : vector<34x64xf32>
    %cst_268 = arith.constant 0.000000e+00 : f32
    %392 = vector.broadcast %cst_268 : f32 to vector<34x64xf32>
    %393 = arith.subf %392, %389 : vector<34x64xf32>
    %394 = arith.select %391, %389, %393 : vector<34x64xi1>, vector<34x64xf32>
    %cst_269 = arith.constant 1.000000e+00 : f32
    %395 = vector.broadcast %cst_269 : f32 to vector<34x64xf32>
    %396 = arith.addf %395, %394 : vector<34x64xf32>
    %397 = arith.mulf %359, %396 : vector<34x64xf32>
    %c1_270 = arith.constant 1 : index
    %c0_271 = arith.constant 0 : index
    %c0_272 = arith.constant 0 : index
    %398 = vector.load %arg19[%c1_270, %c0_271, %c0_272] : memref<4x64x32xf32, #tpu.memory_space<vmem>>, vector<1x64x32xf32>
    %399 = vector.shape_cast %398 : vector<1x64x32xf32> to vector<64x32xf32>
    %cst_273 = arith.constant dense<0.000000e+00> : vector<34x32xf32>
    %400 = tpu.matmul %397, %399, %cst_273 {dimension_numbers = #tpu.dot_dimension_numbers<[1], [0], [0], [1], [0, 0, 1, 1], [], []>} : vector<34x64xf32>, vector<64x32xf32>, vector<34x32xf32> -> vector<34x32xf32>
    %c1_274 = arith.constant 1 : index
    %c0_275 = arith.constant 0 : index
    %c0_276 = arith.constant 0 : index
    %401 = vector.load %arg20[%c1_274, %c0_275, %c0_276] : memref<4x1x32xf32, #tpu.memory_space<vmem>>, vector<1x1x32xf32>
    %402 = vector.shape_cast %401 : vector<1x1x32xf32> to vector<1x32xf32>
    %403 = vector.broadcast %402 : vector<1x32xf32> to vector<34x32xf32>
    %404 = arith.addf %400, %403 : vector<34x32xf32>
    %c1_277 = arith.constant 1 : index
    %c0_278 = arith.constant 0 : index
    %c0_279 = arith.constant 0 : index
    %405 = vector.load %arg21[%c1_277, %c0_278, %c0_279] : memref<4x1x32xf32, #tpu.memory_space<vmem>>, vector<1x1x32xf32>
    %406 = vector.shape_cast %405 : vector<1x1x32xf32> to vector<1x32xf32>
    %407 = vector.broadcast %406 : vector<1x32xf32> to vector<34x32xf32>
    %408 = arith.mulf %407, %404 : vector<34x32xf32>
    %409 = arith.addf %324, %408 : vector<34x32xf32>
    %410 = vector.extract_strided_slice %409 {offsets = [0, 0], sizes = [32, 32], strides = [1, 1]} : vector<34x32xf32> to vector<32x32xf32>
    %c0_280 = arith.constant 0 : index
    %c32 = arith.constant 32 : index
    %411 = vector.load %arg25[%c0_280, %c32] : memref<32x128xf32, #tpu.memory_space<vmem>>, vector<32x32xf32>
    tpu.vector_store %arg25[%c0_280, %c32], %410 {strides = array<i32>} : memref<32x128xf32, #tpu.memory_space<vmem>>, vector<32x32xf32>,
    %c2 = arith.constant 2 : index
    %c0_281 = arith.constant 0 : index
    %c0_282 = arith.constant 0 : index
    %412 = vector.load %arg4[%c2, %c0_281, %c0_282] : memref<4x1x32xf32, #tpu.memory_space<vmem>>, vector<1x1x32xf32>
    %413 = vector.shape_cast %412 : vector<1x1x32xf32> to vector<1x32xf32>
    %c2_283 = arith.constant 2 : index
    %c0_284 = arith.constant 0 : index
    %c0_285 = arith.constant 0 : index
    %414 = vector.load %arg5[%c2_283, %c0_284, %c0_285] : memref<4x1x32xf32, #tpu.memory_space<vmem>>, vector<1x1x32xf32>
    %415 = vector.shape_cast %414 : vector<1x1x32xf32> to vector<1x32xf32>
    %cst_286 = arith.constant dense<0.000000e+00> : vector<34xf32>
    %416 = vector.multi_reduction <add>, %409, %cst_286 [1] : vector<34x32xf32> to vector<34xf32>
    %417 = vector.shape_cast %416 : vector<34xf32> to vector<34x1xf32>
    %cst_287 = arith.constant 3.200000e+01 : f32
    %418 = vector.broadcast %cst_287 : f32 to vector<34x1xf32>
    %419 = arith.divf %417, %418 : vector<34x1xf32>
    %420 = vector.broadcast %419 : vector<34x1xf32> to vector<34x32xf32>
    %421 = arith.subf %409, %420 : vector<34x32xf32>
    %422 = arith.mulf %421, %421 : vector<34x32xf32>
    %cst_288 = arith.constant dense<0.000000e+00> : vector<34xf32>
    %423 = vector.multi_reduction <add>, %422, %cst_288 [1] : vector<34x32xf32> to vector<34xf32>
    %424 = vector.shape_cast %423 : vector<34xf32> to vector<34x1xf32>
    %cst_289 = arith.constant 3.200000e+01 : f32
    %425 = vector.broadcast %cst_289 : f32 to vector<34x1xf32>
    %426 = arith.divf %424, %425 : vector<34x1xf32>
    %427 = vector.broadcast %419 : vector<34x1xf32> to vector<34x32xf32>
    %428 = arith.subf %409, %427 : vector<34x32xf32>
    %cst_290 = arith.constant 9.99999997E-7 : f32
    %429 = vector.broadcast %cst_290 : f32 to vector<34x1xf32>
    %430 = arith.addf %426, %429 : vector<34x1xf32>
    %431 = math.rsqrt %430 : vector<34x1xf32>
    %432 = vector.broadcast %431 : vector<34x1xf32> to vector<34x32xf32>
    %433 = arith.mulf %428, %432 : vector<34x32xf32>
    %434 = vector.broadcast %413 : vector<1x32xf32> to vector<34x32xf32>
    %435 = arith.mulf %433, %434 : vector<34x32xf32>
    %436 = vector.broadcast %415 : vector<1x32xf32> to vector<34x32xf32>
    %437 = arith.addf %435, %436 : vector<34x32xf32>
    %c2_291 = arith.constant 2 : index
    %c0_292 = arith.constant 0 : index
    %c0_293 = arith.constant 0 : index
    %438 = vector.load %arg13[%c2_291, %c0_292, %c0_293] : memref<4x1x32xf32, #tpu.memory_space<vmem>>, vector<1x1x32xf32>
    %439 = vector.shape_cast %438 : vector<1x1x32xf32> to vector<1x32xf32>
    %c2_294 = arith.constant 2 : index
    %c0_295 = arith.constant 0 : index
    %c0_296 = arith.constant 0 : index
    %c0_297 = arith.constant 0 : index
    %440 = vector.load %arg6[%c2_294, %c0_295, %c0_296, %c0_297] : memref<4x2x32x16xf32, #tpu.memory_space<vmem>>, vector<1x1x32x16xf32>
    %441 = vector.shape_cast %440 : vector<1x1x32x16xf32> to vector<32x16xf32>
    %cst_298 = arith.constant dense<0.000000e+00> : vector<34x16xf32>
    %442 = tpu.matmul %437, %441, %cst_298 {dimension_numbers = #tpu.dot_dimension_numbers<[1], [0], [0], [1], [0, 0, 1, 1], [], []>} : vector<34x32xf32>, vector<32x16xf32>, vector<34x16xf32> -> vector<34x16xf32>
    %c2_299 = arith.constant 2 : index
    %c0_300 = arith.constant 0 : index
    %c0_301 = arith.constant 0 : index
    %c0_302 = arith.constant 0 : index
    %443 = vector.load %arg7[%c2_299, %c0_300, %c0_301, %c0_302] : memref<4x2x1x16xf32, #tpu.memory_space<vmem>>, vector<1x1x1x16xf32>
    %444 = vector.shape_cast %443 : vector<1x1x1x16xf32> to vector<1x16xf32>
    %445 = vector.broadcast %444 : vector<1x16xf32> to vector<34x16xf32>
    %446 = arith.addf %442, %445 : vector<34x16xf32>
    %c2_303 = arith.constant 2 : index
    %c0_304 = arith.constant 0 : index
    %c0_305 = arith.constant 0 : index
    %c0_306 = arith.constant 0 : index
    %447 = vector.load %arg8[%c2_303, %c0_304, %c0_305, %c0_306] : memref<4x2x32x16xf32, #tpu.memory_space<vmem>>, vector<1x1x32x16xf32>
    %448 = vector.shape_cast %447 : vector<1x1x32x16xf32> to vector<32x16xf32>
    %cst_307 = arith.constant dense<0.000000e+00> : vector<34x16xf32>
    %449 = tpu.matmul %437, %448, %cst_307 {dimension_numbers = #tpu.dot_dimension_numbers<[1], [0], [0], [1], [0, 0, 1, 1], [], []>} : vector<34x32xf32>, vector<32x16xf32>, vector<34x16xf32> -> vector<34x16xf32>
    %c2_308 = arith.constant 2 : index
    %c0_309 = arith.constant 0 : index
    %c0_310 = arith.constant 0 : index
    %c0_311 = arith.constant 0 : index
    %450 = vector.load %arg9[%c2_308, %c0_309, %c0_310, %c0_311] : memref<4x2x1x16xf32, #tpu.memory_space<vmem>>, vector<1x1x1x16xf32>
    %451 = vector.shape_cast %450 : vector<1x1x1x16xf32> to vector<1x16xf32>
    %452 = vector.broadcast %451 : vector<1x16xf32> to vector<34x16xf32>
    %453 = arith.addf %449, %452 : vector<34x16xf32>
    %c2_312 = arith.constant 2 : index
    %c0_313 = arith.constant 0 : index
    %c0_314 = arith.constant 0 : index
    %c0_315 = arith.constant 0 : index
    %454 = vector.load %arg10[%c2_312, %c0_313, %c0_314, %c0_315] : memref<4x2x32x16xf32, #tpu.memory_space<vmem>>, vector<1x1x32x16xf32>
    %455 = vector.shape_cast %454 : vector<1x1x32x16xf32> to vector<32x16xf32>
    %cst_316 = arith.constant dense<0.000000e+00> : vector<34x16xf32>
    %456 = tpu.matmul %437, %455, %cst_316 {dimension_numbers = #tpu.dot_dimension_numbers<[1], [0], [0], [1], [0, 0, 1, 1], [], []>} : vector<34x32xf32>, vector<32x16xf32>, vector<34x16xf32> -> vector<34x16xf32>
    %c2_317 = arith.constant 2 : index
    %c0_318 = arith.constant 0 : index
    %c0_319 = arith.constant 0 : index
    %c0_320 = arith.constant 0 : index
    %457 = vector.load %arg11[%c2_317, %c0_318, %c0_319, %c0_320] : memref<4x2x1x16xf32, #tpu.memory_space<vmem>>, vector<1x1x1x16xf32>
    %458 = vector.shape_cast %457 : vector<1x1x1x16xf32> to vector<1x16xf32>
    %459 = vector.broadcast %458 : vector<1x16xf32> to vector<34x16xf32>
    %460 = arith.addf %456, %459 : vector<34x16xf32>
    %cst_321 = arith.constant dense<0.000000e+00> : vector<34x34xf32>
    %461 = tpu.matmul %446, %453, %cst_321 {dimension_numbers = #tpu.dot_dimension_numbers<[1], [1], [0], [0], [0, 0, 1, 0], [], []>} : vector<34x16xf32>, vector<34x16xf32>, vector<34x34xf32> -> vector<34x34xf32>
    %cst_322 = arith.constant 2.500000e-01 : f32
    %462 = vector.broadcast %cst_322 : f32 to vector<34x34xf32>
    %463 = arith.mulf %461, %462 : vector<34x34xf32>
    %464 = arith.addf %463, %5 : vector<34x34xf32>
    %cst_323 = arith.constant dense<0xFF800000> : vector<34xf32>
    %465 = vector.multi_reduction <maximumf>, %464, %cst_323 [1] : vector<34x34xf32> to vector<34xf32>
    %cst_324 = arith.constant 0xFF800000 : f32
    %466 = vector.broadcast %cst_324 : f32 to vector<34xf32>
    %467 = arith.maximumf %466, %465 : vector<34xf32>
    %468 = vector.shape_cast %467 : vector<34xf32> to vector<34x1xf32>
    %469 = vector.broadcast %468 : vector<34x1xf32> to vector<34x34xf32>
    %470 = arith.subf %464, %469 : vector<34x34xf32>
    %471 = math.exp %470 : vector<34x34xf32>
    %cst_325 = arith.constant dense<0.000000e+00> : vector<34xf32>
    %472 = vector.multi_reduction <add>, %471, %cst_325 [1] : vector<34x34xf32> to vector<34xf32>
    %473 = vector.shape_cast %472 : vector<34xf32> to vector<34x1xf32>
    %474 = vector.broadcast %473 : vector<34x1xf32> to vector<34x34xf32>
    %475 = arith.divf %471, %474 : vector<34x34xf32>
    %cst_326 = arith.constant dense<0.000000e+00> : vector<34x16xf32>
    %476 = tpu.matmul %475, %460, %cst_326 {dimension_numbers = #tpu.dot_dimension_numbers<[1], [0], [0], [1], [0, 0, 1, 1], [], []>} : vector<34x34xf32>, vector<34x16xf32>, vector<34x16xf32> -> vector<34x16xf32>
    %c2_327 = arith.constant 2 : index
    %c0_328 = arith.constant 0 : index
    %c0_329 = arith.constant 0 : index
    %c0_330 = arith.constant 0 : index
    %477 = vector.load %arg12[%c2_327, %c0_328, %c0_329, %c0_330] : memref<4x2x16x32xf32, #tpu.memory_space<vmem>>, vector<1x1x16x32xf32>
    %478 = vector.shape_cast %477 : vector<1x1x16x32xf32> to vector<16x32xf32>
    %cst_331 = arith.constant dense<0.000000e+00> : vector<34x32xf32>
    %479 = tpu.matmul %476, %478, %cst_331 {dimension_numbers = #tpu.dot_dimension_numbers<[1], [0], [0], [1], [0, 0, 1, 1], [], []>} : vector<34x16xf32>, vector<16x32xf32>, vector<34x32xf32> -> vector<34x32xf32>
    %480 = vector.broadcast %439 : vector<1x32xf32> to vector<34x32xf32>
    %481 = arith.addf %480, %479 : vector<34x32xf32>
    %c2_332 = arith.constant 2 : index
    %c1_333 = arith.constant 1 : index
    %c0_334 = arith.constant 0 : index
    %c0_335 = arith.constant 0 : index
    %482 = vector.load %arg6[%c2_332, %c1_333, %c0_334, %c0_335] : memref<4x2x32x16xf32, #tpu.memory_space<vmem>>, vector<1x1x32x16xf32>
    %483 = vector.shape_cast %482 : vector<1x1x32x16xf32> to vector<32x16xf32>
    %cst_336 = arith.constant dense<0.000000e+00> : vector<34x16xf32>
    %484 = tpu.matmul %437, %483, %cst_336 {dimension_numbers = #tpu.dot_dimension_numbers<[1], [0], [0], [1], [0, 0, 1, 1], [], []>} : vector<34x32xf32>, vector<32x16xf32>, vector<34x16xf32> -> vector<34x16xf32>
    %c2_337 = arith.constant 2 : index
    %c1_338 = arith.constant 1 : index
    %c0_339 = arith.constant 0 : index
    %c0_340 = arith.constant 0 : index
    %485 = vector.load %arg7[%c2_337, %c1_338, %c0_339, %c0_340] : memref<4x2x1x16xf32, #tpu.memory_space<vmem>>, vector<1x1x1x16xf32>
    %486 = vector.shape_cast %485 : vector<1x1x1x16xf32> to vector<1x16xf32>
    %487 = vector.broadcast %486 : vector<1x16xf32> to vector<34x16xf32>
    %488 = arith.addf %484, %487 : vector<34x16xf32>
    %c2_341 = arith.constant 2 : index
    %c1_342 = arith.constant 1 : index
    %c0_343 = arith.constant 0 : index
    %c0_344 = arith.constant 0 : index
    %489 = vector.load %arg8[%c2_341, %c1_342, %c0_343, %c0_344] : memref<4x2x32x16xf32, #tpu.memory_space<vmem>>, vector<1x1x32x16xf32>
    %490 = vector.shape_cast %489 : vector<1x1x32x16xf32> to vector<32x16xf32>
    %cst_345 = arith.constant dense<0.000000e+00> : vector<34x16xf32>
    %491 = tpu.matmul %437, %490, %cst_345 {dimension_numbers = #tpu.dot_dimension_numbers<[1], [0], [0], [1], [0, 0, 1, 1], [], []>} : vector<34x32xf32>, vector<32x16xf32>, vector<34x16xf32> -> vector<34x16xf32>
    %c2_346 = arith.constant 2 : index
    %c1_347 = arith.constant 1 : index
    %c0_348 = arith.constant 0 : index
    %c0_349 = arith.constant 0 : index
    %492 = vector.load %arg9[%c2_346, %c1_347, %c0_348, %c0_349] : memref<4x2x1x16xf32, #tpu.memory_space<vmem>>, vector<1x1x1x16xf32>
    %493 = vector.shape_cast %492 : vector<1x1x1x16xf32> to vector<1x16xf32>
    %494 = vector.broadcast %493 : vector<1x16xf32> to vector<34x16xf32>
    %495 = arith.addf %491, %494 : vector<34x16xf32>
    %c2_350 = arith.constant 2 : index
    %c1_351 = arith.constant 1 : index
    %c0_352 = arith.constant 0 : index
    %c0_353 = arith.constant 0 : index
    %496 = vector.load %arg10[%c2_350, %c1_351, %c0_352, %c0_353] : memref<4x2x32x16xf32, #tpu.memory_space<vmem>>, vector<1x1x32x16xf32>
    %497 = vector.shape_cast %496 : vector<1x1x32x16xf32> to vector<32x16xf32>
    %cst_354 = arith.constant dense<0.000000e+00> : vector<34x16xf32>
    %498 = tpu.matmul %437, %497, %cst_354 {dimension_numbers = #tpu.dot_dimension_numbers<[1], [0], [0], [1], [0, 0, 1, 1], [], []>} : vector<34x32xf32>, vector<32x16xf32>, vector<34x16xf32> -> vector<34x16xf32>
    %c2_355 = arith.constant 2 : index
    %c1_356 = arith.constant 1 : index
    %c0_357 = arith.constant 0 : index
    %c0_358 = arith.constant 0 : index
    %499 = vector.load %arg11[%c2_355, %c1_356, %c0_357, %c0_358] : memref<4x2x1x16xf32, #tpu.memory_space<vmem>>, vector<1x1x1x16xf32>
    %500 = vector.shape_cast %499 : vector<1x1x1x16xf32> to vector<1x16xf32>
    %501 = vector.broadcast %500 : vector<1x16xf32> to vector<34x16xf32>
    %502 = arith.addf %498, %501 : vector<34x16xf32>
    %cst_359 = arith.constant dense<0.000000e+00> : vector<34x34xf32>
    %503 = tpu.matmul %488, %495, %cst_359 {dimension_numbers = #tpu.dot_dimension_numbers<[1], [1], [0], [0], [0, 0, 1, 0], [], []>} : vector<34x16xf32>, vector<34x16xf32>, vector<34x34xf32> -> vector<34x34xf32>
    %cst_360 = arith.constant 2.500000e-01 : f32
    %504 = vector.broadcast %cst_360 : f32 to vector<34x34xf32>
    %505 = arith.mulf %503, %504 : vector<34x34xf32>
    %506 = arith.addf %505, %5 : vector<34x34xf32>
    %cst_361 = arith.constant dense<0xFF800000> : vector<34xf32>
    %507 = vector.multi_reduction <maximumf>, %506, %cst_361 [1] : vector<34x34xf32> to vector<34xf32>
    %cst_362 = arith.constant 0xFF800000 : f32
    %508 = vector.broadcast %cst_362 : f32 to vector<34xf32>
    %509 = arith.maximumf %508, %507 : vector<34xf32>
    %510 = vector.shape_cast %509 : vector<34xf32> to vector<34x1xf32>
    %511 = vector.broadcast %510 : vector<34x1xf32> to vector<34x34xf32>
    %512 = arith.subf %506, %511 : vector<34x34xf32>
    %513 = math.exp %512 : vector<34x34xf32>
    %cst_363 = arith.constant dense<0.000000e+00> : vector<34xf32>
    %514 = vector.multi_reduction <add>, %513, %cst_363 [1] : vector<34x34xf32> to vector<34xf32>
    %515 = vector.shape_cast %514 : vector<34xf32> to vector<34x1xf32>
    %516 = vector.broadcast %515 : vector<34x1xf32> to vector<34x34xf32>
    %517 = arith.divf %513, %516 : vector<34x34xf32>
    %cst_364 = arith.constant dense<0.000000e+00> : vector<34x16xf32>
    %518 = tpu.matmul %517, %502, %cst_364 {dimension_numbers = #tpu.dot_dimension_numbers<[1], [0], [0], [1], [0, 0, 1, 1], [], []>} : vector<34x34xf32>, vector<34x16xf32>, vector<34x16xf32> -> vector<34x16xf32>
    %c2_365 = arith.constant 2 : index
    %c1_366 = arith.constant 1 : index
    %c0_367 = arith.constant 0 : index
    %c0_368 = arith.constant 0 : index
    %519 = vector.load %arg12[%c2_365, %c1_366, %c0_367, %c0_368] : memref<4x2x16x32xf32, #tpu.memory_space<vmem>>, vector<1x1x16x32xf32>
    %520 = vector.shape_cast %519 : vector<1x1x16x32xf32> to vector<16x32xf32>
    %cst_369 = arith.constant dense<0.000000e+00> : vector<34x32xf32>
    %521 = tpu.matmul %518, %520, %cst_369 {dimension_numbers = #tpu.dot_dimension_numbers<[1], [0], [0], [1], [0, 0, 1, 1], [], []>} : vector<34x16xf32>, vector<16x32xf32>, vector<34x32xf32> -> vector<34x32xf32>
    %522 = arith.addf %481, %521 : vector<34x32xf32>
    %c2_370 = arith.constant 2 : index
    %c0_371 = arith.constant 0 : index
    %c0_372 = arith.constant 0 : index
    %523 = vector.load %arg14[%c2_370, %c0_371, %c0_372] : memref<4x1x32xf32, #tpu.memory_space<vmem>>, vector<1x1x32xf32>
    %524 = vector.shape_cast %523 : vector<1x1x32xf32> to vector<1x32xf32>
    %525 = vector.broadcast %524 : vector<1x32xf32> to vector<34x32xf32>
    %526 = arith.mulf %525, %522 : vector<34x32xf32>
    %527 = arith.addf %409, %526 : vector<34x32xf32>
    %c2_373 = arith.constant 2 : index
    %c0_374 = arith.constant 0 : index
    %c0_375 = arith.constant 0 : index
    %528 = vector.load %arg15[%c2_373, %c0_374, %c0_375] : memref<4x1x32xf32, #tpu.memory_space<vmem>>, vector<1x1x32xf32>
    %529 = vector.shape_cast %528 : vector<1x1x32xf32> to vector<1x32xf32>
    %c2_376 = arith.constant 2 : index
    %c0_377 = arith.constant 0 : index
    %c0_378 = arith.constant 0 : index
    %530 = vector.load %arg16[%c2_376, %c0_377, %c0_378] : memref<4x1x32xf32, #tpu.memory_space<vmem>>, vector<1x1x32xf32>
    %531 = vector.shape_cast %530 : vector<1x1x32xf32> to vector<1x32xf32>
    %cst_379 = arith.constant dense<0.000000e+00> : vector<34xf32>
    %532 = vector.multi_reduction <add>, %527, %cst_379 [1] : vector<34x32xf32> to vector<34xf32>
    %533 = vector.shape_cast %532 : vector<34xf32> to vector<34x1xf32>
    %cst_380 = arith.constant 3.200000e+01 : f32
    %534 = vector.broadcast %cst_380 : f32 to vector<34x1xf32>
    %535 = arith.divf %533, %534 : vector<34x1xf32>
    %536 = vector.broadcast %535 : vector<34x1xf32> to vector<34x32xf32>
    %537 = arith.subf %527, %536 : vector<34x32xf32>
    %538 = arith.mulf %537, %537 : vector<34x32xf32>
    %cst_381 = arith.constant dense<0.000000e+00> : vector<34xf32>
    %539 = vector.multi_reduction <add>, %538, %cst_381 [1] : vector<34x32xf32> to vector<34xf32>
    %540 = vector.shape_cast %539 : vector<34xf32> to vector<34x1xf32>
    %cst_382 = arith.constant 3.200000e+01 : f32
    %541 = vector.broadcast %cst_382 : f32 to vector<34x1xf32>
    %542 = arith.divf %540, %541 : vector<34x1xf32>
    %543 = vector.broadcast %535 : vector<34x1xf32> to vector<34x32xf32>
    %544 = arith.subf %527, %543 : vector<34x32xf32>
    %cst_383 = arith.constant 9.99999997E-7 : f32
    %545 = vector.broadcast %cst_383 : f32 to vector<34x1xf32>
    %546 = arith.addf %542, %545 : vector<34x1xf32>
    %547 = math.rsqrt %546 : vector<34x1xf32>
    %548 = vector.broadcast %547 : vector<34x1xf32> to vector<34x32xf32>
    %549 = arith.mulf %544, %548 : vector<34x32xf32>
    %550 = vector.broadcast %529 : vector<1x32xf32> to vector<34x32xf32>
    %551 = arith.mulf %549, %550 : vector<34x32xf32>
    %552 = vector.broadcast %531 : vector<1x32xf32> to vector<34x32xf32>
    %553 = arith.addf %551, %552 : vector<34x32xf32>
    %c2_384 = arith.constant 2 : index
    %c0_385 = arith.constant 0 : index
    %c0_386 = arith.constant 0 : index
    %554 = vector.load %arg17[%c2_384, %c0_385, %c0_386] : memref<4x32x64xf32, #tpu.memory_space<vmem>>, vector<1x32x64xf32>
    %555 = vector.shape_cast %554 : vector<1x32x64xf32> to vector<32x64xf32>
    %cst_387 = arith.constant dense<0.000000e+00> : vector<34x64xf32>
    %556 = tpu.matmul %553, %555, %cst_387 {dimension_numbers = #tpu.dot_dimension_numbers<[1], [0], [0], [1], [0, 0, 1, 1], [], []>} : vector<34x32xf32>, vector<32x64xf32>, vector<34x64xf32> -> vector<34x64xf32>
    %c2_388 = arith.constant 2 : index
    %c0_389 = arith.constant 0 : index
    %c0_390 = arith.constant 0 : index
    %557 = vector.load %arg18[%c2_388, %c0_389, %c0_390] : memref<4x1x64xf32, #tpu.memory_space<vmem>>, vector<1x1x64xf32>
    %558 = vector.shape_cast %557 : vector<1x1x64xf32> to vector<1x64xf32>
    %559 = vector.broadcast %558 : vector<1x64xf32> to vector<34x64xf32>
    %560 = arith.addf %556, %559 : vector<34x64xf32>
    %cst_391 = arith.constant 5.000000e-01 : f32
    %561 = vector.broadcast %cst_391 : f32 to vector<34x64xf32>
    %562 = arith.mulf %561, %560 : vector<34x64xf32>
    %cst_392 = arith.constant 0.707106769 : f32
    %563 = vector.broadcast %cst_392 : f32 to vector<34x64xf32>
    %564 = arith.mulf %560, %563 : vector<34x64xf32>
    %565 = math.absf %564 : vector<34x64xf32>
    %cst_393 = arith.constant 0.327591091 : f32
    %566 = vector.broadcast %cst_393 : f32 to vector<34x64xf32>
    %567 = arith.mulf %566, %565 : vector<34x64xf32>
    %cst_394 = arith.constant 1.000000e+00 : f32
    %568 = vector.broadcast %cst_394 : f32 to vector<34x64xf32>
    %569 = arith.addf %568, %567 : vector<34x64xf32>
    %cst_395 = arith.constant 1.000000e+00 : f32
    %570 = vector.broadcast %cst_395 : f32 to vector<34x64xf32>
    %571 = arith.divf %570, %569 : vector<34x64xf32>
    %cst_396 = arith.constant 1.06140542 : f32
    %572 = vector.broadcast %cst_396 : f32 to vector<34x64xf32>
    %573 = arith.mulf %572, %571 : vector<34x64xf32>
    %cst_397 = arith.constant -1.45315206 : f32
    %574 = vector.broadcast %cst_397 : f32 to vector<34x64xf32>
    %575 = arith.addf %573, %574 : vector<34x64xf32>
    %576 = arith.mulf %575, %571 : vector<34x64xf32>
    %cst_398 = arith.constant 1.42141378 : f32
    %577 = vector.broadcast %cst_398 : f32 to vector<34x64xf32>
    %578 = arith.addf %576, %577 : vector<34x64xf32>
    %579 = arith.mulf %578, %571 : vector<34x64xf32>
    %cst_399 = arith.constant -0.284496725 : f32
    %580 = vector.broadcast %cst_399 : f32 to vector<34x64xf32>
    %581 = arith.addf %579, %580 : vector<34x64xf32>
    %582 = arith.mulf %581, %571 : vector<34x64xf32>
    %cst_400 = arith.constant 0.254829586 : f32
    %583 = vector.broadcast %cst_400 : f32 to vector<34x64xf32>
    %584 = arith.addf %582, %583 : vector<34x64xf32>
    %585 = arith.mulf %584, %571 : vector<34x64xf32>
    %cst_401 = arith.constant 0.000000e+00 : f32
    %586 = vector.broadcast %cst_401 : f32 to vector<34x64xf32>
    %587 = arith.subf %586, %565 : vector<34x64xf32>
    %588 = arith.mulf %587, %565 : vector<34x64xf32>
    %589 = math.exp %588 : vector<34x64xf32>
    %590 = arith.mulf %585, %589 : vector<34x64xf32>
    %cst_402 = arith.constant 1.000000e+00 : f32
    %591 = vector.broadcast %cst_402 : f32 to vector<34x64xf32>
    %592 = arith.subf %591, %590 : vector<34x64xf32>
    %cst_403 = arith.constant 0.000000e+00 : f32
    %593 = vector.broadcast %cst_403 : f32 to vector<34x64xf32>
    %594 = arith.cmpf oge, %564, %593 : vector<34x64xf32>
    %cst_404 = arith.constant 0.000000e+00 : f32
    %595 = vector.broadcast %cst_404 : f32 to vector<34x64xf32>
    %596 = arith.subf %595, %592 : vector<34x64xf32>
    %597 = arith.select %594, %592, %596 : vector<34x64xi1>, vector<34x64xf32>
    %cst_405 = arith.constant 1.000000e+00 : f32
    %598 = vector.broadcast %cst_405 : f32 to vector<34x64xf32>
    %599 = arith.addf %598, %597 : vector<34x64xf32>
    %600 = arith.mulf %562, %599 : vector<34x64xf32>
    %c2_406 = arith.constant 2 : index
    %c0_407 = arith.constant 0 : index
    %c0_408 = arith.constant 0 : index
    %601 = vector.load %arg19[%c2_406, %c0_407, %c0_408] : memref<4x64x32xf32, #tpu.memory_space<vmem>>, vector<1x64x32xf32>
    %602 = vector.shape_cast %601 : vector<1x64x32xf32> to vector<64x32xf32>
    %cst_409 = arith.constant dense<0.000000e+00> : vector<34x32xf32>
    %603 = tpu.matmul %600, %602, %cst_409 {dimension_numbers = #tpu.dot_dimension_numbers<[1], [0], [0], [1], [0, 0, 1, 1], [], []>} : vector<34x64xf32>, vector<64x32xf32>, vector<34x32xf32> -> vector<34x32xf32>
    %c2_410 = arith.constant 2 : index
    %c0_411 = arith.constant 0 : index
    %c0_412 = arith.constant 0 : index
    %604 = vector.load %arg20[%c2_410, %c0_411, %c0_412] : memref<4x1x32xf32, #tpu.memory_space<vmem>>, vector<1x1x32xf32>
    %605 = vector.shape_cast %604 : vector<1x1x32xf32> to vector<1x32xf32>
    %606 = vector.broadcast %605 : vector<1x32xf32> to vector<34x32xf32>
    %607 = arith.addf %603, %606 : vector<34x32xf32>
    %c2_413 = arith.constant 2 : index
    %c0_414 = arith.constant 0 : index
    %c0_415 = arith.constant 0 : index
    %608 = vector.load %arg21[%c2_413, %c0_414, %c0_415] : memref<4x1x32xf32, #tpu.memory_space<vmem>>, vector<1x1x32xf32>
    %609 = vector.shape_cast %608 : vector<1x1x32xf32> to vector<1x32xf32>
    %610 = vector.broadcast %609 : vector<1x32xf32> to vector<34x32xf32>
    %611 = arith.mulf %610, %607 : vector<34x32xf32>
    %612 = arith.addf %527, %611 : vector<34x32xf32>
    %613 = vector.extract_strided_slice %612 {offsets = [0, 0], sizes = [32, 32], strides = [1, 1]} : vector<34x32xf32> to vector<32x32xf32>
    %c0_416 = arith.constant 0 : index
    %c64 = arith.constant 64 : index
    %614 = vector.load %arg25[%c0_416, %c64] : memref<32x128xf32, #tpu.memory_space<vmem>>, vector<32x32xf32>
    tpu.vector_store %arg25[%c0_416, %c64], %613 {strides = array<i32>} : memref<32x128xf32, #tpu.memory_space<vmem>>, vector<32x32xf32>,
    %c3 = arith.constant 3 : index
    %c0_417 = arith.constant 0 : index
    %c0_418 = arith.constant 0 : index
    %615 = vector.load %arg4[%c3, %c0_417, %c0_418] : memref<4x1x32xf32, #tpu.memory_space<vmem>>, vector<1x1x32xf32>
    %616 = vector.shape_cast %615 : vector<1x1x32xf32> to vector<1x32xf32>
    %c3_419 = arith.constant 3 : index
    %c0_420 = arith.constant 0 : index
    %c0_421 = arith.constant 0 : index
    %617 = vector.load %arg5[%c3_419, %c0_420, %c0_421] : memref<4x1x32xf32, #tpu.memory_space<vmem>>, vector<1x1x32xf32>
    %618 = vector.shape_cast %617 : vector<1x1x32xf32> to vector<1x32xf32>
    %cst_422 = arith.constant dense<0.000000e+00> : vector<34xf32>
    %619 = vector.multi_reduction <add>, %612, %cst_422 [1] : vector<34x32xf32> to vector<34xf32>
    %620 = vector.shape_cast %619 : vector<34xf32> to vector<34x1xf32>
    %cst_423 = arith.constant 3.200000e+01 : f32
    %621 = vector.broadcast %cst_423 : f32 to vector<34x1xf32>
    %622 = arith.divf %620, %621 : vector<34x1xf32>
    %623 = vector.broadcast %622 : vector<34x1xf32> to vector<34x32xf32>
    %624 = arith.subf %612, %623 : vector<34x32xf32>
    %625 = arith.mulf %624, %624 : vector<34x32xf32>
    %cst_424 = arith.constant dense<0.000000e+00> : vector<34xf32>
    %626 = vector.multi_reduction <add>, %625, %cst_424 [1] : vector<34x32xf32> to vector<34xf32>
    %627 = vector.shape_cast %626 : vector<34xf32> to vector<34x1xf32>
    %cst_425 = arith.constant 3.200000e+01 : f32
    %628 = vector.broadcast %cst_425 : f32 to vector<34x1xf32>
    %629 = arith.divf %627, %628 : vector<34x1xf32>
    %630 = vector.broadcast %622 : vector<34x1xf32> to vector<34x32xf32>
    %631 = arith.subf %612, %630 : vector<34x32xf32>
    %cst_426 = arith.constant 9.99999997E-7 : f32
    %632 = vector.broadcast %cst_426 : f32 to vector<34x1xf32>
    %633 = arith.addf %629, %632 : vector<34x1xf32>
    %634 = math.rsqrt %633 : vector<34x1xf32>
    %635 = vector.broadcast %634 : vector<34x1xf32> to vector<34x32xf32>
    %636 = arith.mulf %631, %635 : vector<34x32xf32>
    %637 = vector.broadcast %616 : vector<1x32xf32> to vector<34x32xf32>
    %638 = arith.mulf %636, %637 : vector<34x32xf32>
    %639 = vector.broadcast %618 : vector<1x32xf32> to vector<34x32xf32>
    %640 = arith.addf %638, %639 : vector<34x32xf32>
    %c3_427 = arith.constant 3 : index
    %c0_428 = arith.constant 0 : index
    %c0_429 = arith.constant 0 : index
    %641 = vector.load %arg13[%c3_427, %c0_428, %c0_429] : memref<4x1x32xf32, #tpu.memory_space<vmem>>, vector<1x1x32xf32>
    %642 = vector.shape_cast %641 : vector<1x1x32xf32> to vector<1x32xf32>
    %c3_430 = arith.constant 3 : index
    %c0_431 = arith.constant 0 : index
    %c0_432 = arith.constant 0 : index
    %c0_433 = arith.constant 0 : index
    %643 = vector.load %arg6[%c3_430, %c0_431, %c0_432, %c0_433] : memref<4x2x32x16xf32, #tpu.memory_space<vmem>>, vector<1x1x32x16xf32>
    %644 = vector.shape_cast %643 : vector<1x1x32x16xf32> to vector<32x16xf32>
    %cst_434 = arith.constant dense<0.000000e+00> : vector<34x16xf32>
    %645 = tpu.matmul %640, %644, %cst_434 {dimension_numbers = #tpu.dot_dimension_numbers<[1], [0], [0], [1], [0, 0, 1, 1], [], []>} : vector<34x32xf32>, vector<32x16xf32>, vector<34x16xf32> -> vector<34x16xf32>
    %c3_435 = arith.constant 3 : index
    %c0_436 = arith.constant 0 : index
    %c0_437 = arith.constant 0 : index
    %c0_438 = arith.constant 0 : index
    %646 = vector.load %arg7[%c3_435, %c0_436, %c0_437, %c0_438] : memref<4x2x1x16xf32, #tpu.memory_space<vmem>>, vector<1x1x1x16xf32>
    %647 = vector.shape_cast %646 : vector<1x1x1x16xf32> to vector<1x16xf32>
    %648 = vector.broadcast %647 : vector<1x16xf32> to vector<34x16xf32>
    %649 = arith.addf %645, %648 : vector<34x16xf32>
    %c3_439 = arith.constant 3 : index
    %c0_440 = arith.constant 0 : index
    %c0_441 = arith.constant 0 : index
    %c0_442 = arith.constant 0 : index
    %650 = vector.load %arg8[%c3_439, %c0_440, %c0_441, %c0_442] : memref<4x2x32x16xf32, #tpu.memory_space<vmem>>, vector<1x1x32x16xf32>
    %651 = vector.shape_cast %650 : vector<1x1x32x16xf32> to vector<32x16xf32>
    %cst_443 = arith.constant dense<0.000000e+00> : vector<34x16xf32>
    %652 = tpu.matmul %640, %651, %cst_443 {dimension_numbers = #tpu.dot_dimension_numbers<[1], [0], [0], [1], [0, 0, 1, 1], [], []>} : vector<34x32xf32>, vector<32x16xf32>, vector<34x16xf32> -> vector<34x16xf32>
    %c3_444 = arith.constant 3 : index
    %c0_445 = arith.constant 0 : index
    %c0_446 = arith.constant 0 : index
    %c0_447 = arith.constant 0 : index
    %653 = vector.load %arg9[%c3_444, %c0_445, %c0_446, %c0_447] : memref<4x2x1x16xf32, #tpu.memory_space<vmem>>, vector<1x1x1x16xf32>
    %654 = vector.shape_cast %653 : vector<1x1x1x16xf32> to vector<1x16xf32>
    %655 = vector.broadcast %654 : vector<1x16xf32> to vector<34x16xf32>
    %656 = arith.addf %652, %655 : vector<34x16xf32>
    %c3_448 = arith.constant 3 : index
    %c0_449 = arith.constant 0 : index
    %c0_450 = arith.constant 0 : index
    %c0_451 = arith.constant 0 : index
    %657 = vector.load %arg10[%c3_448, %c0_449, %c0_450, %c0_451] : memref<4x2x32x16xf32, #tpu.memory_space<vmem>>, vector<1x1x32x16xf32>
    %658 = vector.shape_cast %657 : vector<1x1x32x16xf32> to vector<32x16xf32>
    %cst_452 = arith.constant dense<0.000000e+00> : vector<34x16xf32>
    %659 = tpu.matmul %640, %658, %cst_452 {dimension_numbers = #tpu.dot_dimension_numbers<[1], [0], [0], [1], [0, 0, 1, 1], [], []>} : vector<34x32xf32>, vector<32x16xf32>, vector<34x16xf32> -> vector<34x16xf32>
    %c3_453 = arith.constant 3 : index
    %c0_454 = arith.constant 0 : index
    %c0_455 = arith.constant 0 : index
    %c0_456 = arith.constant 0 : index
    %660 = vector.load %arg11[%c3_453, %c0_454, %c0_455, %c0_456] : memref<4x2x1x16xf32, #tpu.memory_space<vmem>>, vector<1x1x1x16xf32>
    %661 = vector.shape_cast %660 : vector<1x1x1x16xf32> to vector<1x16xf32>
    %662 = vector.broadcast %661 : vector<1x16xf32> to vector<34x16xf32>
    %663 = arith.addf %659, %662 : vector<34x16xf32>
    %cst_457 = arith.constant dense<0.000000e+00> : vector<34x34xf32>
    %664 = tpu.matmul %649, %656, %cst_457 {dimension_numbers = #tpu.dot_dimension_numbers<[1], [1], [0], [0], [0, 0, 1, 0], [], []>} : vector<34x16xf32>, vector<34x16xf32>, vector<34x34xf32> -> vector<34x34xf32>
    %cst_458 = arith.constant 2.500000e-01 : f32
    %665 = vector.broadcast %cst_458 : f32 to vector<34x34xf32>
    %666 = arith.mulf %664, %665 : vector<34x34xf32>
    %667 = arith.addf %666, %5 : vector<34x34xf32>
    %cst_459 = arith.constant dense<0xFF800000> : vector<34xf32>
    %668 = vector.multi_reduction <maximumf>, %667, %cst_459 [1] : vector<34x34xf32> to vector<34xf32>
    %cst_460 = arith.constant 0xFF800000 : f32
    %669 = vector.broadcast %cst_460 : f32 to vector<34xf32>
    %670 = arith.maximumf %669, %668 : vector<34xf32>
    %671 = vector.shape_cast %670 : vector<34xf32> to vector<34x1xf32>
    %672 = vector.broadcast %671 : vector<34x1xf32> to vector<34x34xf32>
    %673 = arith.subf %667, %672 : vector<34x34xf32>
    %674 = math.exp %673 : vector<34x34xf32>
    %cst_461 = arith.constant dense<0.000000e+00> : vector<34xf32>
    %675 = vector.multi_reduction <add>, %674, %cst_461 [1] : vector<34x34xf32> to vector<34xf32>
    %676 = vector.shape_cast %675 : vector<34xf32> to vector<34x1xf32>
    %677 = vector.broadcast %676 : vector<34x1xf32> to vector<34x34xf32>
    %678 = arith.divf %674, %677 : vector<34x34xf32>
    %cst_462 = arith.constant dense<0.000000e+00> : vector<34x16xf32>
    %679 = tpu.matmul %678, %663, %cst_462 {dimension_numbers = #tpu.dot_dimension_numbers<[1], [0], [0], [1], [0, 0, 1, 1], [], []>} : vector<34x34xf32>, vector<34x16xf32>, vector<34x16xf32> -> vector<34x16xf32>
    %c3_463 = arith.constant 3 : index
    %c0_464 = arith.constant 0 : index
    %c0_465 = arith.constant 0 : index
    %c0_466 = arith.constant 0 : index
    %680 = vector.load %arg12[%c3_463, %c0_464, %c0_465, %c0_466] : memref<4x2x16x32xf32, #tpu.memory_space<vmem>>, vector<1x1x16x32xf32>
    %681 = vector.shape_cast %680 : vector<1x1x16x32xf32> to vector<16x32xf32>
    %cst_467 = arith.constant dense<0.000000e+00> : vector<34x32xf32>
    %682 = tpu.matmul %679, %681, %cst_467 {dimension_numbers = #tpu.dot_dimension_numbers<[1], [0], [0], [1], [0, 0, 1, 1], [], []>} : vector<34x16xf32>, vector<16x32xf32>, vector<34x32xf32> -> vector<34x32xf32>
    %683 = vector.broadcast %642 : vector<1x32xf32> to vector<34x32xf32>
    %684 = arith.addf %683, %682 : vector<34x32xf32>
    %c3_468 = arith.constant 3 : index
    %c1_469 = arith.constant 1 : index
    %c0_470 = arith.constant 0 : index
    %c0_471 = arith.constant 0 : index
    %685 = vector.load %arg6[%c3_468, %c1_469, %c0_470, %c0_471] : memref<4x2x32x16xf32, #tpu.memory_space<vmem>>, vector<1x1x32x16xf32>
    %686 = vector.shape_cast %685 : vector<1x1x32x16xf32> to vector<32x16xf32>
    %cst_472 = arith.constant dense<0.000000e+00> : vector<34x16xf32>
    %687 = tpu.matmul %640, %686, %cst_472 {dimension_numbers = #tpu.dot_dimension_numbers<[1], [0], [0], [1], [0, 0, 1, 1], [], []>} : vector<34x32xf32>, vector<32x16xf32>, vector<34x16xf32> -> vector<34x16xf32>
    %c3_473 = arith.constant 3 : index
    %c1_474 = arith.constant 1 : index
    %c0_475 = arith.constant 0 : index
    %c0_476 = arith.constant 0 : index
    %688 = vector.load %arg7[%c3_473, %c1_474, %c0_475, %c0_476] : memref<4x2x1x16xf32, #tpu.memory_space<vmem>>, vector<1x1x1x16xf32>
    %689 = vector.shape_cast %688 : vector<1x1x1x16xf32> to vector<1x16xf32>
    %690 = vector.broadcast %689 : vector<1x16xf32> to vector<34x16xf32>
    %691 = arith.addf %687, %690 : vector<34x16xf32>
    %c3_477 = arith.constant 3 : index
    %c1_478 = arith.constant 1 : index
    %c0_479 = arith.constant 0 : index
    %c0_480 = arith.constant 0 : index
    %692 = vector.load %arg8[%c3_477, %c1_478, %c0_479, %c0_480] : memref<4x2x32x16xf32, #tpu.memory_space<vmem>>, vector<1x1x32x16xf32>
    %693 = vector.shape_cast %692 : vector<1x1x32x16xf32> to vector<32x16xf32>
    %cst_481 = arith.constant dense<0.000000e+00> : vector<34x16xf32>
    %694 = tpu.matmul %640, %693, %cst_481 {dimension_numbers = #tpu.dot_dimension_numbers<[1], [0], [0], [1], [0, 0, 1, 1], [], []>} : vector<34x32xf32>, vector<32x16xf32>, vector<34x16xf32> -> vector<34x16xf32>
    %c3_482 = arith.constant 3 : index
    %c1_483 = arith.constant 1 : index
    %c0_484 = arith.constant 0 : index
    %c0_485 = arith.constant 0 : index
    %695 = vector.load %arg9[%c3_482, %c1_483, %c0_484, %c0_485] : memref<4x2x1x16xf32, #tpu.memory_space<vmem>>, vector<1x1x1x16xf32>
    %696 = vector.shape_cast %695 : vector<1x1x1x16xf32> to vector<1x16xf32>
    %697 = vector.broadcast %696 : vector<1x16xf32> to vector<34x16xf32>
    %698 = arith.addf %694, %697 : vector<34x16xf32>
    %c3_486 = arith.constant 3 : index
    %c1_487 = arith.constant 1 : index
    %c0_488 = arith.constant 0 : index
    %c0_489 = arith.constant 0 : index
    %699 = vector.load %arg10[%c3_486, %c1_487, %c0_488, %c0_489] : memref<4x2x32x16xf32, #tpu.memory_space<vmem>>, vector<1x1x32x16xf32>
    %700 = vector.shape_cast %699 : vector<1x1x32x16xf32> to vector<32x16xf32>
    %cst_490 = arith.constant dense<0.000000e+00> : vector<34x16xf32>
    %701 = tpu.matmul %640, %700, %cst_490 {dimension_numbers = #tpu.dot_dimension_numbers<[1], [0], [0], [1], [0, 0, 1, 1], [], []>} : vector<34x32xf32>, vector<32x16xf32>, vector<34x16xf32> -> vector<34x16xf32>
    %c3_491 = arith.constant 3 : index
    %c1_492 = arith.constant 1 : index
    %c0_493 = arith.constant 0 : index
    %c0_494 = arith.constant 0 : index
    %702 = vector.load %arg11[%c3_491, %c1_492, %c0_493, %c0_494] : memref<4x2x1x16xf32, #tpu.memory_space<vmem>>, vector<1x1x1x16xf32>
    %703 = vector.shape_cast %702 : vector<1x1x1x16xf32> to vector<1x16xf32>
    %704 = vector.broadcast %703 : vector<1x16xf32> to vector<34x16xf32>
    %705 = arith.addf %701, %704 : vector<34x16xf32>
    %cst_495 = arith.constant dense<0.000000e+00> : vector<34x34xf32>
    %706 = tpu.matmul %691, %698, %cst_495 {dimension_numbers = #tpu.dot_dimension_numbers<[1], [1], [0], [0], [0, 0, 1, 0], [], []>} : vector<34x16xf32>, vector<34x16xf32>, vector<34x34xf32> -> vector<34x34xf32>
    %cst_496 = arith.constant 2.500000e-01 : f32
    %707 = vector.broadcast %cst_496 : f32 to vector<34x34xf32>
    %708 = arith.mulf %706, %707 : vector<34x34xf32>
    %709 = arith.addf %708, %5 : vector<34x34xf32>
    %cst_497 = arith.constant dense<0xFF800000> : vector<34xf32>
    %710 = vector.multi_reduction <maximumf>, %709, %cst_497 [1] : vector<34x34xf32> to vector<34xf32>
    %cst_498 = arith.constant 0xFF800000 : f32
    %711 = vector.broadcast %cst_498 : f32 to vector<34xf32>
    %712 = arith.maximumf %711, %710 : vector<34xf32>
    %713 = vector.shape_cast %712 : vector<34xf32> to vector<34x1xf32>
    %714 = vector.broadcast %713 : vector<34x1xf32> to vector<34x34xf32>
    %715 = arith.subf %709, %714 : vector<34x34xf32>
    %716 = math.exp %715 : vector<34x34xf32>
    %cst_499 = arith.constant dense<0.000000e+00> : vector<34xf32>
    %717 = vector.multi_reduction <add>, %716, %cst_499 [1] : vector<34x34xf32> to vector<34xf32>
    %718 = vector.shape_cast %717 : vector<34xf32> to vector<34x1xf32>
    %719 = vector.broadcast %718 : vector<34x1xf32> to vector<34x34xf32>
    %720 = arith.divf %716, %719 : vector<34x34xf32>
    %cst_500 = arith.constant dense<0.000000e+00> : vector<34x16xf32>
    %721 = tpu.matmul %720, %705, %cst_500 {dimension_numbers = #tpu.dot_dimension_numbers<[1], [0], [0], [1], [0, 0, 1, 1], [], []>} : vector<34x34xf32>, vector<34x16xf32>, vector<34x16xf32> -> vector<34x16xf32>
    %c3_501 = arith.constant 3 : index
    %c1_502 = arith.constant 1 : index
    %c0_503 = arith.constant 0 : index
    %c0_504 = arith.constant 0 : index
    %722 = vector.load %arg12[%c3_501, %c1_502, %c0_503, %c0_504] : memref<4x2x16x32xf32, #tpu.memory_space<vmem>>, vector<1x1x16x32xf32>
    %723 = vector.shape_cast %722 : vector<1x1x16x32xf32> to vector<16x32xf32>
    %cst_505 = arith.constant dense<0.000000e+00> : vector<34x32xf32>
    %724 = tpu.matmul %721, %723, %cst_505 {dimension_numbers = #tpu.dot_dimension_numbers<[1], [0], [0], [1], [0, 0, 1, 1], [], []>} : vector<34x16xf32>, vector<16x32xf32>, vector<34x32xf32> -> vector<34x32xf32>
    %725 = arith.addf %684, %724 : vector<34x32xf32>
    %c3_506 = arith.constant 3 : index
    %c0_507 = arith.constant 0 : index
    %c0_508 = arith.constant 0 : index
    %726 = vector.load %arg14[%c3_506, %c0_507, %c0_508] : memref<4x1x32xf32, #tpu.memory_space<vmem>>, vector<1x1x32xf32>
    %727 = vector.shape_cast %726 : vector<1x1x32xf32> to vector<1x32xf32>
    %728 = vector.broadcast %727 : vector<1x32xf32> to vector<34x32xf32>
    %729 = arith.mulf %728, %725 : vector<34x32xf32>
    %730 = arith.addf %612, %729 : vector<34x32xf32>
    %c3_509 = arith.constant 3 : index
    %c0_510 = arith.constant 0 : index
    %c0_511 = arith.constant 0 : index
    %731 = vector.load %arg15[%c3_509, %c0_510, %c0_511] : memref<4x1x32xf32, #tpu.memory_space<vmem>>, vector<1x1x32xf32>
    %732 = vector.shape_cast %731 : vector<1x1x32xf32> to vector<1x32xf32>
    %c3_512 = arith.constant 3 : index
    %c0_513 = arith.constant 0 : index
    %c0_514 = arith.constant 0 : index
    %733 = vector.load %arg16[%c3_512, %c0_513, %c0_514] : memref<4x1x32xf32, #tpu.memory_space<vmem>>, vector<1x1x32xf32>
    %734 = vector.shape_cast %733 : vector<1x1x32xf32> to vector<1x32xf32>
    %cst_515 = arith.constant dense<0.000000e+00> : vector<34xf32>
    %735 = vector.multi_reduction <add>, %730, %cst_515 [1] : vector<34x32xf32> to vector<34xf32>
    %736 = vector.shape_cast %735 : vector<34xf32> to vector<34x1xf32>
    %cst_516 = arith.constant 3.200000e+01 : f32
    %737 = vector.broadcast %cst_516 : f32 to vector<34x1xf32>
    %738 = arith.divf %736, %737 : vector<34x1xf32>
    %739 = vector.broadcast %738 : vector<34x1xf32> to vector<34x32xf32>
    %740 = arith.subf %730, %739 : vector<34x32xf32>
    %741 = arith.mulf %740, %740 : vector<34x32xf32>
    %cst_517 = arith.constant dense<0.000000e+00> : vector<34xf32>
    %742 = vector.multi_reduction <add>, %741, %cst_517 [1] : vector<34x32xf32> to vector<34xf32>
    %743 = vector.shape_cast %742 : vector<34xf32> to vector<34x1xf32>
    %cst_518 = arith.constant 3.200000e+01 : f32
    %744 = vector.broadcast %cst_518 : f32 to vector<34x1xf32>
    %745 = arith.divf %743, %744 : vector<34x1xf32>
    %746 = vector.broadcast %738 : vector<34x1xf32> to vector<34x32xf32>
    %747 = arith.subf %730, %746 : vector<34x32xf32>
    %cst_519 = arith.constant 9.99999997E-7 : f32
    %748 = vector.broadcast %cst_519 : f32 to vector<34x1xf32>
    %749 = arith.addf %745, %748 : vector<34x1xf32>
    %750 = math.rsqrt %749 : vector<34x1xf32>
    %751 = vector.broadcast %750 : vector<34x1xf32> to vector<34x32xf32>
    %752 = arith.mulf %747, %751 : vector<34x32xf32>
    %753 = vector.broadcast %732 : vector<1x32xf32> to vector<34x32xf32>
    %754 = arith.mulf %752, %753 : vector<34x32xf32>
    %755 = vector.broadcast %734 : vector<1x32xf32> to vector<34x32xf32>
    %756 = arith.addf %754, %755 : vector<34x32xf32>
    %c3_520 = arith.constant 3 : index
    %c0_521 = arith.constant 0 : index
    %c0_522 = arith.constant 0 : index
    %757 = vector.load %arg17[%c3_520, %c0_521, %c0_522] : memref<4x32x64xf32, #tpu.memory_space<vmem>>, vector<1x32x64xf32>
    %758 = vector.shape_cast %757 : vector<1x32x64xf32> to vector<32x64xf32>
    %cst_523 = arith.constant dense<0.000000e+00> : vector<34x64xf32>
    %759 = tpu.matmul %756, %758, %cst_523 {dimension_numbers = #tpu.dot_dimension_numbers<[1], [0], [0], [1], [0, 0, 1, 1], [], []>} : vector<34x32xf32>, vector<32x64xf32>, vector<34x64xf32> -> vector<34x64xf32>
    %c3_524 = arith.constant 3 : index
    %c0_525 = arith.constant 0 : index
    %c0_526 = arith.constant 0 : index
    %760 = vector.load %arg18[%c3_524, %c0_525, %c0_526] : memref<4x1x64xf32, #tpu.memory_space<vmem>>, vector<1x1x64xf32>
    %761 = vector.shape_cast %760 : vector<1x1x64xf32> to vector<1x64xf32>
    %762 = vector.broadcast %761 : vector<1x64xf32> to vector<34x64xf32>
    %763 = arith.addf %759, %762 : vector<34x64xf32>
    %cst_527 = arith.constant 5.000000e-01 : f32
    %764 = vector.broadcast %cst_527 : f32 to vector<34x64xf32>
    %765 = arith.mulf %764, %763 : vector<34x64xf32>
    %cst_528 = arith.constant 0.707106769 : f32
    %766 = vector.broadcast %cst_528 : f32 to vector<34x64xf32>
    %767 = arith.mulf %763, %766 : vector<34x64xf32>
    %768 = math.absf %767 : vector<34x64xf32>
    %cst_529 = arith.constant 0.327591091 : f32
    %769 = vector.broadcast %cst_529 : f32 to vector<34x64xf32>
    %770 = arith.mulf %769, %768 : vector<34x64xf32>
    %cst_530 = arith.constant 1.000000e+00 : f32
    %771 = vector.broadcast %cst_530 : f32 to vector<34x64xf32>
    %772 = arith.addf %771, %770 : vector<34x64xf32>
    %cst_531 = arith.constant 1.000000e+00 : f32
    %773 = vector.broadcast %cst_531 : f32 to vector<34x64xf32>
    %774 = arith.divf %773, %772 : vector<34x64xf32>
    %cst_532 = arith.constant 1.06140542 : f32
    %775 = vector.broadcast %cst_532 : f32 to vector<34x64xf32>
    %776 = arith.mulf %775, %774 : vector<34x64xf32>
    %cst_533 = arith.constant -1.45315206 : f32
    %777 = vector.broadcast %cst_533 : f32 to vector<34x64xf32>
    %778 = arith.addf %776, %777 : vector<34x64xf32>
    %779 = arith.mulf %778, %774 : vector<34x64xf32>
    %cst_534 = arith.constant 1.42141378 : f32
    %780 = vector.broadcast %cst_534 : f32 to vector<34x64xf32>
    %781 = arith.addf %779, %780 : vector<34x64xf32>
    %782 = arith.mulf %781, %774 : vector<34x64xf32>
    %cst_535 = arith.constant -0.284496725 : f32
    %783 = vector.broadcast %cst_535 : f32 to vector<34x64xf32>
    %784 = arith.addf %782, %783 : vector<34x64xf32>
    %785 = arith.mulf %784, %774 : vector<34x64xf32>
    %cst_536 = arith.constant 0.254829586 : f32
    %786 = vector.broadcast %cst_536 : f32 to vector<34x64xf32>
    %787 = arith.addf %785, %786 : vector<34x64xf32>
    %788 = arith.mulf %787, %774 : vector<34x64xf32>
    %cst_537 = arith.constant 0.000000e+00 : f32
    %789 = vector.broadcast %cst_537 : f32 to vector<34x64xf32>
    %790 = arith.subf %789, %768 : vector<34x64xf32>
    %791 = arith.mulf %790, %768 : vector<34x64xf32>
    %792 = math.exp %791 : vector<34x64xf32>
    %793 = arith.mulf %788, %792 : vector<34x64xf32>
    %cst_538 = arith.constant 1.000000e+00 : f32
    %794 = vector.broadcast %cst_538 : f32 to vector<34x64xf32>
    %795 = arith.subf %794, %793 : vector<34x64xf32>
    %cst_539 = arith.constant 0.000000e+00 : f32
    %796 = vector.broadcast %cst_539 : f32 to vector<34x64xf32>
    %797 = arith.cmpf oge, %767, %796 : vector<34x64xf32>
    %cst_540 = arith.constant 0.000000e+00 : f32
    %798 = vector.broadcast %cst_540 : f32 to vector<34x64xf32>
    %799 = arith.subf %798, %795 : vector<34x64xf32>
    %800 = arith.select %797, %795, %799 : vector<34x64xi1>, vector<34x64xf32>
    %cst_541 = arith.constant 1.000000e+00 : f32
    %801 = vector.broadcast %cst_541 : f32 to vector<34x64xf32>
    %802 = arith.addf %801, %800 : vector<34x64xf32>
    %803 = arith.mulf %765, %802 : vector<34x64xf32>
    %c3_542 = arith.constant 3 : index
    %c0_543 = arith.constant 0 : index
    %c0_544 = arith.constant 0 : index
    %804 = vector.load %arg19[%c3_542, %c0_543, %c0_544] : memref<4x64x32xf32, #tpu.memory_space<vmem>>, vector<1x64x32xf32>
    %805 = vector.shape_cast %804 : vector<1x64x32xf32> to vector<64x32xf32>
    %cst_545 = arith.constant dense<0.000000e+00> : vector<34x32xf32>
    %806 = tpu.matmul %803, %805, %cst_545 {dimension_numbers = #tpu.dot_dimension_numbers<[1], [0], [0], [1], [0, 0, 1, 1], [], []>} : vector<34x64xf32>, vector<64x32xf32>, vector<34x32xf32> -> vector<34x32xf32>
    %c3_546 = arith.constant 3 : index
    %c0_547 = arith.constant 0 : index
    %c0_548 = arith.constant 0 : index
    %807 = vector.load %arg20[%c3_546, %c0_547, %c0_548] : memref<4x1x32xf32, #tpu.memory_space<vmem>>, vector<1x1x32xf32>
    %808 = vector.shape_cast %807 : vector<1x1x32xf32> to vector<1x32xf32>
    %809 = vector.broadcast %808 : vector<1x32xf32> to vector<34x32xf32>
    %810 = arith.addf %806, %809 : vector<34x32xf32>
    %c3_549 = arith.constant 3 : index
    %c0_550 = arith.constant 0 : index
    %c0_551 = arith.constant 0 : index
    %811 = vector.load %arg21[%c3_549, %c0_550, %c0_551] : memref<4x1x32xf32, #tpu.memory_space<vmem>>, vector<1x1x32xf32>
    %812 = vector.shape_cast %811 : vector<1x1x32xf32> to vector<1x32xf32>
    %813 = vector.broadcast %812 : vector<1x32xf32> to vector<34x32xf32>
    %814 = arith.mulf %813, %810 : vector<34x32xf32>
    %815 = arith.addf %730, %814 : vector<34x32xf32>
    %816 = vector.extract_strided_slice %815 {offsets = [0, 0], sizes = [32, 32], strides = [1, 1]} : vector<34x32xf32> to vector<32x32xf32>
    %c0_552 = arith.constant 0 : index
    %c96 = arith.constant 96 : index
    %817 = vector.load %arg25[%c0_552, %c96] : memref<32x128xf32, #tpu.memory_space<vmem>>, vector<32x32xf32>
    tpu.vector_store %arg25[%c0_552, %c96], %816 {strides = array<i32>} : memref<32x128xf32, #tpu.memory_space<vmem>>, vector<32x32xf32>,
    %c0_553 = arith.constant 0 : index
    %c0_554 = arith.constant 0 : index
    %818 = vector.load %arg25[%c0_553, %c0_554] : memref<32x128xf32, #tpu.memory_space<vmem>>, vector<32x128xf32>
    %c0_555 = arith.constant 0 : index
    %c0_556 = arith.constant 0 : index
    %819 = vector.load %arg22[%c0_555, %c0_556] : memref<128x16xf32, #tpu.memory_space<vmem>>, vector<128x16xf32>
    %cst_557 = arith.constant dense<0.000000e+00> : vector<32x16xf32>
    %820 = tpu.matmul %818, %819, %cst_557 {dimension_numbers = #tpu.dot_dimension_numbers<[1], [0], [0], [1], [0, 0, 1, 1], [], []>} : vector<32x128xf32>, vector<128x16xf32>, vector<32x16xf32> -> vector<32x16xf32>
    %c0_558 = arith.constant 0 : index
    %c0_559 = arith.constant 0 : index
    %821 = vector.load %arg23[%c0_558, %c0_559] : memref<1x16xf32, #tpu.memory_space<vmem>>, vector<1x16xf32>
    %822 = vector.broadcast %821 : vector<1x16xf32> to vector<32x16xf32>
    %823 = arith.addf %820, %822 : vector<32x16xf32>
    %cst_560 = arith.constant 0.000000e+00 : f32
    %824 = vector.broadcast %cst_560 : f32 to vector<32x16xf32>
    %825 = arith.maximumf %823, %824 : vector<32x16xf32>
    %c0_561 = arith.constant 0 : index
    %c0_562 = arith.constant 0 : index
    %826 = vector.load %arg24[%c0_561, %c0_562] : memref<256x16xf32, #tpu.memory_space<vmem>>, vector<256x16xf32>
    %827 = vector.extract_strided_slice %825 {offsets = [0, 0], sizes = [16, 16], strides = [1, 1]} : vector<32x16xf32> to vector<16x16xf32>
    %cst_563 = arith.constant dense<0.000000e+00> : vector<256x16xf32>
    %828 = tpu.matmul %826, %827, %cst_563 {dimension_numbers = #tpu.dot_dimension_numbers<[1], [0], [0], [1], [0, 0, 1, 1], [], []>} : vector<256x16xf32>, vector<16x16xf32>, vector<256x16xf32> -> vector<256x16xf32>
    %c0_564 = arith.constant 0 : index
    %c0_565 = arith.constant 0 : index
    %c0_566 = arith.constant 0 : index
    %829 = vector.load %arg26[%c0_564, %c0_565, %c0_566] : memref<2x256x16xf32, #tpu.memory_space<vmem>>, vector<1x256x16xf32>
    %830 = vector.shape_cast %829 : vector<1x256x16xf32> to vector<256x16xf32>
    %831 = vector.shape_cast %828 : vector<256x16xf32> to vector<1x256x16xf32>
    tpu.vector_store %arg26[%c0_564, %c0_565, %c0_566], %831 {strides = array<i32>} : memref<2x256x16xf32, #tpu.memory_space<vmem>>, vector<1x256x16xf32>,
    %832 = vector.extract_strided_slice %825 {offsets = [16, 0], sizes = [16, 16], strides = [1, 1]} : vector<32x16xf32> to vector<16x16xf32>
    %cst_567 = arith.constant dense<0.000000e+00> : vector<256x16xf32>
    %833 = tpu.matmul %826, %832, %cst_567 {dimension_numbers = #tpu.dot_dimension_numbers<[1], [0], [0], [1], [0, 0, 1, 1], [], []>} : vector<256x16xf32>, vector<16x16xf32>, vector<256x16xf32> -> vector<256x16xf32>
    %c1_568 = arith.constant 1 : index
    %c0_569 = arith.constant 0 : index
    %c0_570 = arith.constant 0 : index
    %834 = vector.load %arg26[%c1_568, %c0_569, %c0_570] : memref<2x256x16xf32, #tpu.memory_space<vmem>>, vector<1x256x16xf32>
    %835 = vector.shape_cast %834 : vector<1x256x16xf32> to vector<256x16xf32>
    %836 = vector.shape_cast %833 : vector<256x16xf32> to vector<1x256x16xf32>
    tpu.vector_store %arg26[%c1_568, %c0_569, %c0_570], %836 {strides = array<i32>} : memref<2x256x16xf32, #tpu.memory_space<vmem>>, vector<1x256x16xf32>,
    return
  }
}

</mosaic_0001>

<llo_original>
// kernel: dino_forward.1
$region0: #{dino_forward.1}
  #allocation0 [shape = 'u32[]', space=smem, size = 0x4, offset = 0x4, fixed_abs, tag = 'smem constant byte address 0x4 - core index']
  #allocation1 [shape = 'u32[144,128]{1,0:T(1,128)}', space=vmem, size = 0x12000, scoped, tag = 'internal scratch']
  %s0 = inlined_call_operand.vmem [shape: f32[34,48], index: 0, kind: input, shape index: {}]
  %s1 = inlined_call_operand.vmem [shape: f32[48,32], index: 1, kind: input, shape index: {}]
  %s2 = inlined_call_operand.vmem [shape: f32[34,32], index: 2, kind: input, shape index: {}]
  %s3 = inlined_call_operand.vmem [shape: f32[34,34], index: 3, kind: input, shape index: {}]
  %s4 = inlined_call_operand.vmem [shape: f32[4,1,32], index: 4, kind: input, shape index: {}]
  %s5 = inlined_call_operand.vmem [shape: f32[4,1,32], index: 5, kind: input, shape index: {}]
  %s6 = inlined_call_operand.vmem [shape: f32[4,2,32,16], index: 6, kind: input, shape index: {}]
  %s7 = inlined_call_operand.vmem [shape: f32[4,2,1,16], index: 7, kind: input, shape index: {}]
  %s8 = inlined_call_operand.vmem [shape: f32[4,2,32,16], index: 8, kind: input, shape index: {}]
  %s9 = inlined_call_operand.vmem [shape: f32[4,2,1,16], index: 9, kind: input, shape index: {}]
  %s10 = inlined_call_operand.vmem [shape: f32[4,2,32,16], index: 10, kind: input, shape index: {}]
  %s11 = inlined_call_operand.vmem [shape: f32[4,2,1,16], index: 11, kind: input, shape index: {}]
  %s12 = inlined_call_operand.vmem [shape: f32[4,2,16,32], index: 12, kind: input, shape index: {}]
  %s13 = inlined_call_operand.vmem [shape: f32[4,1,32], index: 13, kind: input, shape index: {}]
  %s14 = inlined_call_operand.vmem [shape: f32[4,1,32], index: 14, kind: input, shape index: {}]
  %s15 = inlined_call_operand.vmem [shape: f32[4,1,32], index: 15, kind: input, shape index: {}]
  %s16 = inlined_call_operand.vmem [shape: f32[4,1,32], index: 16, kind: input, shape index: {}]
  %s17 = inlined_call_operand.vmem [shape: f32[4,32,64], index: 17, kind: input, shape index: {}]
  %s18 = inlined_call_operand.vmem [shape: f32[4,1,64], index: 18, kind: input, shape index: {}]
  %s19 = inlined_call_operand.vmem [shape: f32[4,64,32], index: 19, kind: input, shape index: {}]
  %s20 = inlined_call_operand.vmem [shape: f32[4,1,32], index: 20, kind: input, shape index: {}]
  %s21 = inlined_call_operand.vmem [shape: f32[4,1,32], index: 21, kind: input, shape index: {}]
  %s22 = inlined_call_operand.vmem [shape: f32[128,16], index: 22, kind: input, shape index: {}]
  %s23 = inlined_call_operand.vmem [shape: f32[1,16], index: 23, kind: input, shape index: {}]
  %s24 = inlined_call_operand.vmem [shape: f32[256,16], index: 24, kind: input, shape index: {}]
  %s25 = inlined_call_operand.hbm [shape: f32[32,128], index: 25, kind: output, shape index: {0}]
  %s26 = inlined_call_operand.vmem [shape: f32[2,256,16], index: 26, kind: output, shape index: {1}]
  %27 = xla_tuple %s25, %s26
  %s28 = sld [smem:[#allocation0]]
  $region118: #{dino_forward.1} parent=0
    _
  %s30 = ssub.s32 1, %s28
  %s31 = scalar_select 0, %s30, %s28
  $region1: #{dino_forward.1} parent=0
    #allocation2 [shape = 'u8[16384]{0}', space=vmem, size = 0x4000, scoped, tag = 'output window, operand 0, single buffered']
    #allocation3 [shape = 's32[1]{0}', space=sflag, size = 0x4, scoped, tag = 'scoped memory for dino_forward.1']
    %32 = vsyncpa [#allocation3], 0
    // Predicated region
    $region2: #{dino_forward.1} parent=1 // pred_check
      _
    $region3: #{dino_forward.1} parent=1 // pred_check_branch
      %34 = sbr.rel (0) target = $region5
    $region4: #{dino_forward.1} parent=1 // pred_region
      _
    $region5: #{dino_forward.1} parent=1 // pred_fallthru
      _
    // Predicated region
    $region6: #{dino_forward.1} parent=1 // pred_check
      _
    $region7: #{dino_forward.1} parent=1 // pred_check_branch
      %36 = sbr.rel (0) target = $region9
    $region8: #{dino_forward.1} parent=1 // pred_region
      _
    $region9: #{dino_forward.1} parent=1 // pred_fallthru
      _
    // Predicated region
    $region10: #{dino_forward.1} parent=1 // pred_check
      _
    $region11: #{dino_forward.1} parent=1 // pred_check_branch
      %38 = sbr.rel (0) target = $region13
    $region12: #{dino_forward.1} parent=1 // pred_region
      _
    $region13: #{dino_forward.1} parent=1 // pred_fallthru
      _
    // Predicated region
    $region14: #{dino_forward.1} parent=1 // pred_check
      _
    $region15: #{dino_forward.1} parent=1 // pred_check_branch
      %40 = sbr.rel (0) target = $region17
    $region16: #{dino_forward.1} parent=1 // pred_region
      _
    $region17: #{dino_forward.1} parent=1 // pred_fallthru
      _
    // Predicated region
    $region18: #{dino_forward.1} parent=1 // pred_check
      _
    $region19: #{dino_forward.1} parent=1 // pred_check_branch
      %42 = sbr.rel (0) target = $region21
    $region20: #{dino_forward.1} parent=1 // pred_region
      _
    $region21: #{dino_forward.1} parent=1 // pred_fallthru
      _
    // Predicated region
    $region22: #{dino_forward.1} parent=1 // pred_check
      _
    $region23: #{dino_forward.1} parent=1 // pred_check_branch
      %44 = sbr.rel (0) target = $region25
    $region24: #{dino_forward.1} parent=1 // pred_region
      _
    $region25: #{dino_forward.1} parent=1 // pred_fallthru
      _
    // Predicated region
    $region26: #{dino_forward.1} parent=1 // pred_check
      _
    $region27: #{dino_forward.1} parent=1 // pred_check_branch
      %46 = sbr.rel (0) target = $region29
    $region28: #{dino_forward.1} parent=1 // pred_region
      _
    $region29: #{dino_forward.1} parent=1 // pred_fallthru
      _
    // Predicated region
    $region30: #{dino_forward.1} parent=1 // pred_check
      _
    $region31: #{dino_forward.1} parent=1 // pred_check_branch
      %48 = sbr.rel (0) target = $region33
    $region32: #{dino_forward.1} parent=1 // pred_region
      _
    $region33: #{dino_forward.1} parent=1 // pred_fallthru
      _
    // Predicated region
    $region34: #{dino_forward.1} parent=1 // pred_check
      _
    $region35: #{dino_forward.1} parent=1 // pred_check_branch
      %50 = sbr.rel (0) target = $region37
    $region36: #{dino_forward.1} parent=1 // pred_region
      _
    $region37: #{dino_forward.1} parent=1 // pred_fallthru
      _
    // Predicated region
    $region38: #{dino_forward.1} parent=1 // pred_check
      _
    $region39: #{dino_forward.1} parent=1 // pred_check_branch
      %52 = sbr.rel (0) target = $region41
    $region40: #{dino_forward.1} parent=1 // pred_region
      _
    $region41: #{dino_forward.1} parent=1 // pred_fallthru
      _
    // Predicated region
    $region42: #{dino_forward.1} parent=1 // pred_check
      _
    $region43: #{dino_forward.1} parent=1 // pred_check_branch
      %54 = sbr.rel (0) target = $region45
    $region44: #{dino_forward.1} parent=1 // pred_region
      _
    $region45: #{dino_forward.1} parent=1 // pred_fallthru
      _
    // Predicated region
    $region46: #{dino_forward.1} parent=1 // pred_check
      _
    $region47: #{dino_forward.1} parent=1 // pred_check_branch
      %56 = sbr.rel (0) target = $region49
    $region48: #{dino_forward.1} parent=1 // pred_region
      _
    $region49: #{dino_forward.1} parent=1 // pred_fallthru
      _
    // Predicated region
    $region50: #{dino_forward.1} parent=1 // pred_check
      _
    $region51: #{dino_forward.1} parent=1 // pred_check_branch
      %58 = sbr.rel (0) target = $region53
    $region52: #{dino_forward.1} parent=1 // pred_region
      _
    $region53: #{dino_forward.1} parent=1 // pred_fallthru
      _
    // Predicated region
    $region54: #{dino_forward.1} parent=1 // pred_check
      _
    $region55: #{dino_forward.1} parent=1 // pred_check_branch
      %60 = sbr.rel (0) target = $region57
    $region56: #{dino_forward.1} parent=1 // pred_region
      _
    $region57: #{dino_forward.1} parent=1 // pred_fallthru
      _
    // Predicated region
    $region58: #{dino_forward.1} parent=1 // pred_check
      _
    $region59: #{dino_forward.1} parent=1 // pred_check_branch
      %62 = sbr.rel (0) target = $region61
    $region60: #{dino_forward.1} parent=1 // pred_region
      _
    $region61: #{dino_forward.1} parent=1 // pred_fallthru
      _
    // Predicated region
    $region62: #{dino_forward.1} parent=1 // pred_check
      _
    $region63: #{dino_forward.1} parent=1 // pred_check_branch
      %64 = sbr.rel (0) target = $region65
    $region64: #{dino_forward.1} parent=1 // pred_region
      _
    $region65: #{dino_forward.1} parent=1 // pred_fallthru
      _
    // Predicated region
    $region66: #{dino_forward.1} parent=1 // pred_check
      _
    $region67: #{dino_forward.1} parent=1 // pred_check_branch
      %66 = sbr.rel (0) target = $region69
    $region68: #{dino_forward.1} parent=1 // pred_region
      _
    $region69: #{dino_forward.1} parent=1 // pred_fallthru
      _
    // Predicated region
    $region70: #{dino_forward.1} parent=1 // pred_check
      _
    $region71: #{dino_forward.1} parent=1 // pred_check_branch
      %68 = sbr.rel (0) target = $region73
    $region72: #{dino_forward.1} parent=1 // pred_region
      _
    $region73: #{dino_forward.1} parent=1 // pred_fallthru
      _
    // Predicated region
    $region74: #{dino_forward.1} parent=1 // pred_check
      _
    $region75: #{dino_forward.1} parent=1 // pred_check_branch
      %70 = sbr.rel (0) target = $region77
    $region76: #{dino_forward.1} parent=1 // pred_region
      _
    $region77: #{dino_forward.1} parent=1 // pred_fallthru
      _
    // Predicated region
    $region78: #{dino_forward.1} parent=1 // pred_check
      _
    $region79: #{dino_forward.1} parent=1 // pred_check_branch
      %72 = sbr.rel (0) target = $region81
    $region80: #{dino_forward.1} parent=1 // pred_region
      _
    $region81: #{dino_forward.1} parent=1 // pred_fallthru
      _
    // Predicated region
    $region82: #{dino_forward.1} parent=1 // pred_check
      _
    $region83: #{dino_forward.1} parent=1 // pred_check_branch
      %74 = sbr.rel (0) target = $region85
    $region84: #{dino_forward.1} parent=1 // pred_region
      _
    $region85: #{dino_forward.1} parent=1 // pred_fallthru
      _
    // Predicated region
    $region86: #{dino_forward.1} parent=1 // pred_check
      _
    $region87: #{dino_forward.1} parent=1 // pred_check_branch
      %76 = sbr.rel (0) target = $region89
    $region88: #{dino_forward.1} parent=1 // pred_region
      _
    $region89: #{dino_forward.1} parent=1 // pred_fallthru
      _
    // Predicated region
    $region90: #{dino_forward.1} parent=1 // pred_check
      _
    $region91: #{dino_forward.1} parent=1 // pred_check_branch
      %78 = sbr.rel (0) target = $region93
    $region92: #{dino_forward.1} parent=1 // pred_region
      _
    $region93: #{dino_forward.1} parent=1 // pred_fallthru
      _
    // Predicated region
    $region94: #{dino_forward.1} parent=1 // pred_check
      _
    $region95: #{dino_forward.1} parent=1 // pred_check_branch
      %80 = sbr.rel (0) target = $region97
    $region96: #{dino_forward.1} parent=1 // pred_region
      _
    $region97: #{dino_forward.1} parent=1 // pred_fallthru
      _
    // Predicated region
    $region98: #{dino_forward.1} parent=1 // pred_check
      _
    $region99: #{dino_forward.1} parent=1 // pred_check_branch
      %82 = sbr.rel (0) target = $region101
    $region100: #{dino_forward.1} parent=1 // pred_region
      _
    $region101: #{dino_forward.1} parent=1 // pred_fallthru
      _
    %v83 = vld [vmem:[%s0] sm:$0xff]
    %v84 = vld [vmem:[%s0 + $0x8] sm:$0xff]
    %v85 = vld [vmem:[%s0 + $0x10] sm:$0xff]
    %v86 = vld [vmem:[%s0 + $0x18] sm:$0xff]
    %v87 = vld [vmem:[%s0 + $0x20] sm:$0x3]
    %v88 = vld [vmem:[%s1] sm:$0xff]
    %v89 = vld [vmem:[%s1 + $0x8] sm:$0xff]
    %v90 = vld [vmem:[%s1 + $0x10] sm:$0xff]
    %v91 = vld [vmem:[%s1 + $0x18] sm:$0xff]
    %v92 = vld [vmem:[%s1 + $0x20] sm:$0xff]
    %v93 = vld [vmem:[%s1 + $0x28] sm:$0xff]
    %v94 = vld [vmem:[%s2] sm:$0xff]
    %v95 = vld [vmem:[%s2 + $0x8] sm:$0xff]
    %v96 = vld [vmem:[%s2 + $0x10] sm:$0xff]
    %v97 = vld [vmem:[%s2 + $0x18] sm:$0xff]
    %v98 = vld [vmem:[%s2 + $0x20] sm:$0x3]
    %vm99 = vcmask 392192
    %v101 = vsel %vm99, %v83, 0
    %v104 = vsel %vm99, %v84, 0
    %v107 = vsel %vm99, %v85, 0
    %v110 = vsel %vm99, %v86, 0
    %v113 = vsel %vm99, %v87, 0
    %115 = vmatprep.subr.mxu0 0.0
    %116 = vmatpush1.msra.mxu0 0.0
    %117 = vmatprep.subr.mxu0 0.0
    %118 = vmatpush1.msra.mxu0 0.0
    %119 = vmatprep.subr.mxu0 0.0
    %120 = vmatpush1.msra.mxu0 0.0
    %121 = vmatprep.subr.mxu0 0.0
    %122 = vmatpush1.msra.mxu0 0.0
    %123 = vmatprep.subr.mxu0 0.0
    %124 = vmatpush1.msra.mxu0 0.0
    %125 = vmatprep.subr.mxu0 0.0
    %126 = vmatpush1.msra.mxu0 0.0
    %127 = vmatprep.subr.mxu0 0.0
    %128 = vmatpush1.msra.mxu0 0.0
    %129 = vmatprep.subr.mxu0 0.0
    %130 = vmatpush1.msra.mxu0 0.0
    %131 = vmatprep.subr.mxu0 0.0
    %132 = vmatpush1.msra.mxu0 0.0
    %133 = vmatprep.subr.mxu0 0.0
    %134 = vmatpush1.msra.mxu0 0.0
    %135 = vmatprep.subr.mxu0 0.0
    %136 = vmatpush1.msra.mxu0 %v93
    %137 = vmatprep.subr.mxu0 0.0
    %138 = vmatpush1.msra.mxu0 %v92
    %139 = vmatprep.subr.mxu0 0.0
    %140 = vmatpush1.msra.mxu0 %v91
    %141 = vmatprep.subr.mxu0 0.0
    %142 = vmatpush1.msra.mxu0 %v90
    %143 = vmatprep.subr.mxu0 0.0
    %144 = vmatpush1.msra.mxu0 %v89
    %145 = vmatprep.subr.mxu0 0.0
    %146 = vmatpush1.msra.mxu0 %v88
    %147 = vmatprep.subr.mxu0 0.0
    %148 = vmatpush2.msra.mxu0 0.0
    %149 = vmatprep.subr.mxu0 0.0
    %150 = vmatpush2.msra.mxu0 0.0
    %151 = vmatprep.subr.mxu0 0.0
    %152 = vmatpush2.msra.mxu0 0.0
    %153 = vmatprep.subr.mxu0 0.0
    %154 = vmatpush2.msra.mxu0 0.0
    %155 = vmatprep.subr.mxu0 0.0
    %156 = vmatpush2.msra.mxu0 0.0
    %157 = vmatprep.subr.mxu0 0.0
    %158 = vmatpush2.msra.mxu0 0.0
    %159 = vmatprep.subr.mxu0 0.0
    %160 = vmatpush2.msra.mxu0 0.0
    %161 = vmatprep.subr.mxu0 0.0
    %162 = vmatpush2.msra.mxu0 0.0
    %163 = vmatprep.subr.mxu0 0.0
    %164 = vmatpush2.msra.mxu0 0.0
    %165 = vmatprep.subr.mxu0 0.0
    %166 = vmatpush2.msra.mxu0 0.0
    %167 = vmatprep.subr.mxu0 0.0
    %168 = vmatpush2.msra.mxu0 0.0
    %169 = vmatprep.subr.mxu0 0.0
    %170 = vmatpush2.msra.mxu0 0.0
    %171 = vmatprep.subr.mxu0 0.0
    %172 = vmatpush2.msra.mxu0 0.0
    %173 = vmatprep.subr.mxu0 0.0
    %174 = vmatpush2.msra.mxu0 0.0
    %175 = vmatprep.subr.mxu0 0.0
    %176 = vmatpush2.msra.mxu0 0.0
    %177 = vmatprep.subr.mxu0 0.0
    %178 = vmatpush2.msra.mxu0 0.0
    %179 = vmatprep.mubr.f32.mxu0 0.0
    %180 = vmatmul.mubr.f32.gmra.mxu0 %v101
    %v181 = vpop.f32.mrf.mxu0
    %v182 = vadd.f32 %v94, %v181
    %v183 = vpop.f32.mrf.mxu0
    %184 = vmatprep.mubr.f32.mxu0 0.0
    %185 = vmatmul.mubr.f32.gmra.mxu0 %v104
    %v186 = vpop.f32.mrf.mxu0
    %v187 = vadd.f32 %v95, %v186
    %v188 = vpop.f32.mrf.mxu0
    %189 = vmatprep.mubr.f32.mxu0 0.0
    %190 = vmatmul.mubr.f32.gmra.mxu0 %v107
    %v191 = vpop.f32.mrf.mxu0
    %v192 = vadd.f32 %v96, %v191
    %v193 = vpop.f32.mrf.mxu0
    %194 = vmatprep.mubr.f32.mxu0 0.0
    %195 = vmatmul.mubr.f32.gmra.mxu0 %v110
    %v196 = vpop.f32.mrf.mxu0
    %v197 = vadd.f32 %v97, %v196
    %v198 = vpop.f32.mrf.mxu0
    %199 = vmatprep.mubr.f32.mxu0 0.0
    %200 = vmatmul.mubr.f32.gmra.mxu0 %v113
    %v201 = vpop.f32.mrf.mxu0
    %v202 = vadd.f32 %v98, %v201
    %v203 = vpop.f32.mrf.mxu0
    %204 = vdwg.mxu0
    %v205 = vld [vmem:[%s3] sm:$0xff]
    %v206 = vld [vmem:[%s3 + $0x8] sm:$0xff]
    %v207 = vld [vmem:[%s3 + $0x10] sm:$0xff]
    %v208 = vld [vmem:[%s3 + $0x18] sm:$0xff]
    %v209 = vld [vmem:[%s3 + $0x20] sm:$0x3]
    %v210 = vld [vmem:[%s4] sm:$0x1]
    %v211 = vld [vmem:[%s5] sm:$0x1]
    %vm212 = vcmask 261120
    %v213 = vsel %vm212, %v182, 0.0
    %214 = vadd.xlane.f32.xlu0 %v213
    %v215 = vpop.xlane.xlu0 %214
    %v216 = vsel %vm212, %v187, 0.0
    %217 = vadd.xlane.f32.xlu0 %v216
    %v218 = vpop.xlane.xlu0 %217
    %v219 = vsel %vm212, %v192, 0.0
    %220 = vadd.xlane.f32.xlu0 %v219
    %v221 = vpop.xlane.xlu0 %220
    %v222 = vsel %vm212, %v197, 0.0
    %223 = vadd.xlane.f32.xlu0 %v222
    %v224 = vpop.xlane.xlu0 %223
    %vm225 = vcmask 254976
    %v226 = vsel %vm225, %v202, 0.0
    %227 = vadd.xlane.f32.xlu0 %v226
    %v228 = vpop.xlane.xlu0 %227
    %v229 = vrcp.pop 32.0
    %v230 = vmul.f32 %v215, %v229
    %v231 = vmul.f32 %v218, %v229
    %v232 = vmul.f32 %v221, %v229
    %v233 = vmul.f32 %v224, %v229
    %v234 = vmul.f32 %v228, %v229
    %v235 = vsub.f32 %v182, %v230
    %v236 = vsub.f32 %v187, %v231
    %v237 = vsub.f32 %v192, %v232
    %v238 = vsub.f32 %v197, %v233
    %v239 = vsub.f32 %v202, %v234
    %v240 = vmul.f32 %v235, %v235
    %v241 = vmul.f32 %v236, %v236
    %v242 = vmul.f32 %v237, %v237
    %v243 = vmul.f32 %v238, %v238
    %v244 = vmul.f32 %v239, %v239
    %v245 = vsel %vm212, %v240, 0.0
    %246 = vadd.xlane.f32.xlu0 %v245
    %v247 = vpop.xlane.xlu0 %246
    %v248 = vsel %vm212, %v241, 0.0
    %249 = vadd.xlane.f32.xlu0 %v248
    %v250 = vpop.xlane.xlu0 %249
    %v251 = vsel %vm212, %v242, 0.0
    %252 = vadd.xlane.f32.xlu0 %v251
    %v253 = vpop.xlane.xlu0 %252
    %v254 = vsel %vm212, %v243, 0.0
    %255 = vadd.xlane.f32.xlu0 %v254
    %v256 = vpop.xlane.xlu0 %255
    %v257 = vsel %vm225, %v244, 0.0
    %258 = vadd.xlane.f32.xlu0 %v257
    %v259 = vpop.xlane.xlu0 %258
    %v260 = vmul.f32 %v247, %v229
    %v261 = vmul.f32 %v250, %v229
    %v262 = vmul.f32 %v253, %v229
    %v263 = vmul.f32 %v256, %v229
    %v264 = vmul.f32 %v259, %v229
    %v265 = vadd.f32 %v260, 1e-06
    %v266 = vadd.f32 %v261, 1e-06
    %v267 = vadd.f32 %v262, 1e-06
    %v268 = vadd.f32 %v263, 1e-06
    %v269 = vadd.f32 %v264, 1e-06
    %v270 = vrsqrt.pop %v265
    %v271 = vrsqrt.pop %v266
    %v272 = vrsqrt.pop %v267
    %v273 = vrsqrt.pop %v268
    %v274 = vrsqrt.pop %v269
    %v275 = vmul.f32 %v235, %v270
    %v276 = vmul.f32 %v236, %v271
    %v277 = vmul.f32 %v237, %v272
    %v278 = vmul.f32 %v238, %v273
    %v279 = vmul.f32 %v239, %v274
    %v281 = vlaneseq
    %v282 = vshrl.u32 %v281, 7
    %v283 = vsub.s32 0, %v282
    %v284 = vrot.slane %v210, %v283
    %v286 = vmul.f32 %v275, %v284
    %v287 = vmul.f32 %v276, %v284
    %v288 = vmul.f32 %v277, %v284
    %v289 = vmul.f32 %v278, %v284
    %v290 = vmul.f32 %v279, %v284
    %v292 = vlaneseq
    %v293 = vshrl.u32 %v292, 7
    %v294 = vsub.s32 0, %v293
    %v295 = vrot.slane %v211, %v294
    %v297 = vadd.f32 %v286, %v295
    %v298 = vadd.f32 %v287, %v295
    %v299 = vadd.f32 %v288, %v295
    %v300 = vadd.f32 %v289, %v295
    %v301 = vadd.f32 %v290, %v295
    %v302 = vld [vmem:[%s13] sm:$0x1]
    %v303 = vld [vmem:[%s6] sm:$0xff]
    %v304 = vld [vmem:[%s6 + $0x8] sm:$0xff]
    %v305 = vld [vmem:[%s6 + $0x10] sm:$0xff]
    %v306 = vld [vmem:[%s6 + $0x18] sm:$0xff]
    %v307 = vld [vmem:[%s7] sm:$0x1]
    %v309 = vlaneseq
    %v310 = vshrl.u32 %v309, 7
    %v311 = vsub.s32 0, %v310
    %v312 = vrot.slane %v307, %v311
    %v315 = vsel %vm212, %v297, 0
    %v318 = vsel %vm212, %v298, 0
    %v321 = vsel %vm212, %v299, 0
    %v324 = vsel %vm212, %v300, 0
    %v327 = vsel %vm212, %v301, 0
    %329 = vmatprep.subr.mxu0 0.0
    %330 = vmatpush1.msra.mxu0 0.0
    %331 = vmatprep.subr.mxu0 0.0
    %332 = vmatpush1.msra.mxu0 0.0
    %333 = vmatprep.subr.mxu0 0.0
    %334 = vmatpush1.msra.mxu0 0.0
    %335 = vmatprep.subr.mxu0 0.0
    %336 = vmatpush1.msra.mxu0 0.0
    %337 = vmatprep.subr.mxu0 0.0
    %338 = vmatpush1.msra.mxu0 0.0
    %339 = vmatprep.subr.mxu0 0.0
    %340 = vmatpush1.msra.mxu0 0.0
    %341 = vmatprep.subr.mxu0 0.0
    %342 = vmatpush1.msra.mxu0 0.0
    %343 = vmatprep.subr.mxu0 0.0
    %344 = vmatpush1.msra.mxu0 0.0
    %345 = vmatprep.subr.mxu0 0.0
    %346 = vmatpush1.msra.mxu0 0.0
    %347 = vmatprep.subr.mxu0 0.0
    %348 = vmatpush1.msra.mxu0 0.0
    %349 = vmatprep.subr.mxu0 0.0
    %350 = vmatpush1.msra.mxu0 0.0
    %351 = vmatprep.subr.mxu0 0.0
    %352 = vmatpush1.msra.mxu0 0.0
    %353 = vmatprep.subr.mxu0 0.0
    %354 = vmatpush1.msra.mxu0 %v306
    %355 = vmatprep.subr.mxu0 0.0
    %356 = vmatpush1.msra.mxu0 %v305
    %357 = vmatprep.subr.mxu0 0.0
    %358 = vmatpush1.msra.mxu0 %v304
    %359 = vmatprep.subr.mxu0 0.0
    %360 = vmatpush1.msra.mxu0 %v303
    %361 = vmatprep.subr.mxu0 0.0
    %362 = vmatpush2.msra.mxu0 0.0
    %363 = vmatprep.subr.mxu0 0.0
    %364 = vmatpush2.msra.mxu0 0.0
    %365 = vmatprep.subr.mxu0 0.0
    %366 = vmatpush2.msra.mxu0 0.0
    %367 = vmatprep.subr.mxu0 0.0
    %368 = vmatpush2.msra.mxu0 0.0
    %369 = vmatprep.subr.mxu0 0.0
    %370 = vmatpush2.msra.mxu0 0.0
    %371 = vmatprep.subr.mxu0 0.0
    %372 = vmatpush2.msra.mxu0 0.0
    %373 = vmatprep.subr.mxu0 0.0
    %374 = vmatpush2.msra.mxu0 0.0
    %375 = vmatprep.subr.mxu0 0.0
    %376 = vmatpush2.msra.mxu0 0.0
    %377 = vmatprep.subr.mxu0 0.0
    %378 = vmatpush2.msra.mxu0 0.0
    %379 = vmatprep.subr.mxu0 0.0
    %380 = vmatpush2.msra.mxu0 0.0
    %381 = vmatprep.subr.mxu0 0.0
    %382 = vmatpush2.msra.mxu0 0.0
    %383 = vmatprep.subr.mxu0 0.0
    %384 = vmatpush2.msra.mxu0 0.0
    %385 = vmatprep.subr.mxu0 0.0
    %386 = vmatpush2.msra.mxu0 0.0
    %387 = vmatprep.subr.mxu0 0.0
    %388 = vmatpush2.msra.mxu0 0.0
    %389 = vmatprep.subr.mxu0 0.0
    %390 = vmatpush2.msra.mxu0 0.0
    %391 = vmatprep.subr.mxu0 0.0
    %392 = vmatpush2.msra.mxu0 0.0
    %393 = vmatprep.mubr.f32.mxu0 0.0
    %394 = vmatmul.mubr.f32.gmra.mxu0 %v315
    %v395 = vpop.f32.mrf.mxu0
    %v396 = vadd.f32 %v312, %v395
    %v397 = vpop.f32.mrf.mxu0
    %398 = vmatprep.mubr.f32.mxu0 0.0
    %399 = vmatmul.mubr.f32.gmra.mxu0 %v318
    %v400 = vpop.f32.mrf.mxu0
    %v401 = vadd.f32 %v312, %v400
    %v402 = vpop.f32.mrf.mxu0
    %403 = vmatprep.mubr.f32.mxu0 0.0
    %404 = vmatmul.mubr.f32.gmra.mxu0 %v321
    %v405 = vpop.f32.mrf.mxu0
    %v406 = vadd.f32 %v312, %v405
    %v407 = vpop.f32.mrf.mxu0
    %408 = vmatprep.mubr.f32.mxu0 0.0
    %409 = vmatmul.mubr.f32.gmra.mxu0 %v324
    %v410 = vpop.f32.mrf.mxu0
    %v411 = vadd.f32 %v312, %v410
    %v412 = vpop.f32.mrf.mxu0
    %413 = vmatprep.mubr.f32.mxu0 0.0
    %414 = vmatmul.mubr.f32.gmra.mxu0 %v327
    %v415 = vpop.f32.mrf.mxu0
    %v416 = vadd.f32 %v312, %v415
    %v417 = vpop.f32.mrf.mxu0
    %418 = vdwg.mxu0
    %v419 = vld [vmem:[%s8] sm:$0xff]
    %v420 = vld [vmem:[%s8 + $0x8] sm:$0xff]
    %v421 = vld [vmem:[%s8 + $0x10] sm:$0xff]
    %v422 = vld [vmem:[%s8 + $0x18] sm:$0xff]
    %v423 = vld [vmem:[%s9] sm:$0x1]
    %v425 = vlaneseq
    %v426 = vshrl.u32 %v425, 7
    %v427 = vsub.s32 0, %v426
    %v428 = vrot.slane %v423, %v427
    %430 = vmatprep.subr.mxu0 0.0
    %431 = vmatpush1.msra.mxu0 0.0
    %432 = vmatprep.subr.mxu0 0.0
    %433 = vmatpush1.msra.mxu0 0.0
    %434 = vmatprep.subr.mxu0 0.0
    %435 = vmatpush1.msra.mxu0 0.0
    %436 = vmatprep.subr.mxu0 0.0
    %437 = vmatpush1.msra.mxu0 0.0
    %438 = vmatprep.subr.mxu0 0.0
    %439 = vmatpush1.msra.mxu0 0.0
    %440 = vmatprep.subr.mxu0 0.0
    %441 = vmatpush1.msra.mxu0 0.0
    %442 = vmatprep.subr.mxu0 0.0
    %443 = vmatpush1.msra.mxu0 0.0
    %444 = vmatprep.subr.mxu0 0.0
    %445 = vmatpush1.msra.mxu0 0.0
    %446 = vmatprep.subr.mxu0 0.0
    %447 = vmatpush1.msra.mxu0 0.0
    %448 = vmatprep.subr.mxu0 0.0
    %449 = vmatpush1.msra.mxu0 0.0
    %450 = vmatprep.subr.mxu0 0.0
    %451 = vmatpush1.msra.mxu0 0.0
    %452 = vmatprep.subr.mxu0 0.0
    %453 = vmatpush1.msra.mxu0 0.0
    %454 = vmatprep.subr.mxu0 0.0
    %455 = vmatpush1.msra.mxu0 %v422
    %456 = vmatprep.subr.mxu0 0.0
    %457 = vmatpush1.msra.mxu0 %v421
    %458 = vmatprep.subr.mxu0 0.0
    %459 = vmatpush1.msra.mxu0 %v420
    %460 = vmatprep.subr.mxu0 0.0
    %461 = vmatpush1.msra.mxu0 %v419
    %462 = vmatprep.subr.mxu0 0.0
    %463 = vmatpush2.msra.mxu0 0.0
    %464 = vmatprep.subr.mxu0 0.0
    %465 = vmatpush2.msra.mxu0 0.0
    %466 = vmatprep.subr.mxu0 0.0
    %467 = vmatpush2.msra.mxu0 0.0
    %468 = vmatprep.subr.mxu0 0.0
    %469 = vmatpush2.msra.mxu0 0.0
    %470 = vmatprep.subr.mxu0 0.0
    %471 = vmatpush2.msra.mxu0 0.0
    %472 = vmatprep.subr.mxu0 0.0
    %473 = vmatpush2.msra.mxu0 0.0
    %474 = vmatprep.subr.mxu0 0.0
    %475 = vmatpush2.msra.mxu0 0.0
    %476 = vmatprep.subr.mxu0 0.0
    %477 = vmatpush2.msra.mxu0 0.0
    %478 = vmatprep.subr.mxu0 0.0
    %479 = vmatpush2.msra.mxu0 0.0
    %480 = vmatprep.subr.mxu0 0.0
    %481 = vmatpush2.msra.mxu0 0.0
    %482 = vmatprep.subr.mxu0 0.0
    %483 = vmatpush2.msra.mxu0 0.0
    %484 = vmatprep.subr.mxu0 0.0
    %485 = vmatpush2.msra.mxu0 0.0
    %486 = vmatprep.subr.mxu0 0.0
    %487 = vmatpush2.msra.mxu0 0.0
    %488 = vmatprep.subr.mxu0 0.0
    %489 = vmatpush2.msra.mxu0 0.0
    %490 = vmatprep.subr.mxu0 0.0
    %491 = vmatpush2.msra.mxu0 0.0
    %492 = vmatprep.subr.mxu0 0.0
    %493 = vmatpush2.msra.mxu0 0.0
    %494 = vmatprep.mubr.f32.mxu0 0.0
    %495 = vmatmul.mubr.f32.gmra.mxu0 %v315
    %v496 = vpop.f32.mrf.mxu0
    %v497 = vadd.f32 %v428, %v496
    %v498 = vpop.f32.mrf.mxu0
    %499 = vmatprep.mubr.f32.mxu0 0.0
    %500 = vmatmul.mubr.f32.gmra.mxu0 %v318
    %v501 = vpop.f32.mrf.mxu0
    %v502 = vadd.f32 %v428, %v501
    %v503 = vpop.f32.mrf.mxu0
    %504 = vmatprep.mubr.f32.mxu0 0.0
    %505 = vmatmul.mubr.f32.gmra.mxu0 %v321
    %v506 = vpop.f32.mrf.mxu0
    %v507 = vadd.f32 %v428, %v506
    %v508 = vpop.f32.mrf.mxu0
    %509 = vmatprep.mubr.f32.mxu0 0.0
    %510 = vmatmul.mubr.f32.gmra.mxu0 %v324
    %v511 = vpop.f32.mrf.mxu0
    %v512 = vadd.f32 %v428, %v511
    %v513 = vpop.f32.mrf.mxu0
    %514 = vmatprep.mubr.f32.mxu0 0.0
    %515 = vmatmul.mubr.f32.gmra.mxu0 %v327
    %v516 = vpop.f32.mrf.mxu0
    %v517 = vadd.f32 %v428, %v516
    %v518 = vpop.f32.mrf.mxu0
    %519 = vdwg.mxu0
    %v520 = vld [vmem:[%s10] sm:$0xff]
    %v521 = vld [vmem:[%s10 + $0x8] sm:$0xff]
    %v522 = vld [vmem:[%s10 + $0x10] sm:$0xff]
    %v523 = vld [vmem:[%s10 + $0x18] sm:$0xff]
    %v524 = vld [vmem:[%s11] sm:$0x1]
    %v526 = vlaneseq
    %v527 = vshrl.u32 %v526, 7
    %v528 = vsub.s32 0, %v527
    %v529 = vrot.slane %v524, %v528
    %531 = vmatprep.subr.mxu0 0.0
    %532 = vmatpush1.msra.mxu0 0.0
    %533 = vmatprep.subr.mxu0 0.0
    %534 = vmatpush1.msra.mxu0 0.0
    %535 = vmatprep.subr.mxu0 0.0
    %536 = vmatpush1.msra.mxu0 0.0
    %537 = vmatprep.subr.mxu0 0.0
    %538 = vmatpush1.msra.mxu0 0.0
    %539 = vmatprep.subr.mxu0 0.0
    %540 = vmatpush1.msra.mxu0 0.0
    %541 = vmatprep.subr.mxu0 0.0
    %542 = vmatpush1.msra.mxu0 0.0
    %543 = vmatprep.subr.mxu0 0.0
    %544 = vmatpush1.msra.mxu0 0.0
    %545 = vmatprep.subr.mxu0 0.0
    %546 = vmatpush1.msra.mxu0 0.0
    %547 = vmatprep.subr.mxu0 0.0
    %548 = vmatpush1.msra.mxu0 0.0
    %549 = vmatprep.subr.mxu0 0.0
    %550 = vmatpush1.msra.mxu0 0.0
    %551 = vmatprep.subr.mxu0 0.0
    %552 = vmatpush1.msra.mxu0 0.0
    %553 = vmatprep.subr.mxu0 0.0
    %554 = vmatpush1.msra.mxu0 0.0
    %555 = vmatprep.subr.mxu0 0.0
    %556 = vmatpush1.msra.mxu0 %v523
    %557 = vmatprep.subr.mxu0 0.0
    %558 = vmatpush1.msra.mxu0 %v522
    %559 = vmatprep.subr.mxu0 0.0
    %560 = vmatpush1.msra.mxu0 %v521
    %561 = vmatprep.subr.mxu0 0.0
    %562 = vmatpush1.msra.mxu0 %v520
    %563 = vmatprep.subr.mxu0 0.0
    %564 = vmatpush2.msra.mxu0 0.0
    %565 = vmatprep.subr.mxu0 0.0
    %566 = vmatpush2.msra.mxu0 0.0
    %567 = vmatprep.subr.mxu0 0.0
    %568 = vmatpush2.msra.mxu0 0.0
    %569 = vmatprep.subr.mxu0 0.0
    %570 = vmatpush2.msra.mxu0 0.0
    %571 = vmatprep.subr.mxu0 0.0
    %572 = vmatpush2.msra.mxu0 0.0
    %573 = vmatprep.subr.mxu0 0.0
    %574 = vmatpush2.msra.mxu0 0.0
    %575 = vmatprep.subr.mxu0 0.0
    %576 = vmatpush2.msra.mxu0 0.0
    %577 = vmatprep.subr.mxu0 0.0
    %578 = vmatpush2.msra.mxu0 0.0
    %579 = vmatprep.subr.mxu0 0.0
    %580 = vmatpush2.msra.mxu0 0.0
    %581 = vmatprep.subr.mxu0 0.0
    %582 = vmatpush2.msra.mxu0 0.0
    %583 = vmatprep.subr.mxu0 0.0
    %584 = vmatpush2.msra.mxu0 0.0
    %585 = vmatprep.subr.mxu0 0.0
    %586 = vmatpush2.msra.mxu0 0.0
    %587 = vmatprep.subr.mxu0 0.0
    %588 = vmatpush2.msra.mxu0 0.0
    %589 = vmatprep.subr.mxu0 0.0
    %590 = vmatpush2.msra.mxu0 0.0
    %591 = vmatprep.subr.mxu0 0.0
    %592 = vmatpush2.msra.mxu0 0.0
    %593 = vmatprep.subr.mxu0 0.0
    %594 = vmatpush2.msra.mxu0 0.0
    %595 = vmatprep.mubr.f32.mxu0 0.0
    %596 = vmatmul.mubr.f32.gmra.mxu0 %v315
    %v597 = vpop.f32.mrf.mxu0
    %v598 = vadd.f32 %v529, %v597
    %v599 = vpop.f32.mrf.mxu0
    %600 = vmatprep.mubr.f32.mxu0 0.0
    %601 = vmatmul.mubr.f32.gmra.mxu0 %v318
    %v602 = vpop.f32.mrf.mxu0
    %v603 = vadd.f32 %v529, %v602
    %v604 = vpop.f32.mrf.mxu0
    %605 = vmatprep.mubr.f32.mxu0 0.0
    %606 = vmatmul.mubr.f32.gmra.mxu0 %v321
    %v607 = vpop.f32.mrf.mxu0
    %v608 = vadd.f32 %v529, %v607
    %v609 = vpop.f32.mrf.mxu0
    %610 = vmatprep.mubr.f32.mxu0 0.0
    %611 = vmatmul.mubr.f32.gmra.mxu0 %v324
    %v612 = vpop.f32.mrf.mxu0
    %v613 = vadd.f32 %v529, %v612
    %v614 = vpop.f32.mrf.mxu0
    %615 = vmatprep.mubr.f32.mxu0 0.0
    %616 = vmatmul.mubr.f32.gmra.mxu0 %v327
    %v617 = vpop.f32.mrf.mxu0
    %v618 = vadd.f32 %v529, %v617
    %v619 = vpop.f32.mrf.mxu0
    %620 = vdwg.mxu0
    %vm621 = vcmask 130048
    %v623 = vsel %vm621, %v396, 0
    %v626 = vsel %vm621, %v401, 0
    %v629 = vsel %vm621, %v406, 0
    %v632 = vsel %vm621, %v411, 0
    %v635 = vsel %vm621, %v416, 0
    %v638 = vsel %vm621, %v497, 0
    %v641 = vsel %vm621, %v502, 0
    %v644 = vsel %vm621, %v507, 0
    %v647 = vsel %vm621, %v512, 0
    %v650 = vsel %vm621, %v517, 0
    %652 = vmatprep.subr.mxu0 0.0
    %653 = vmatpush1.xpose.msra.mxu0 0.0
    %654 = vmatprep.subr.mxu0 0.0
    %655 = vmatpush1.xpose.msra.mxu0 0.0
    %656 = vmatprep.subr.mxu0 0.0
    %657 = vmatpush1.xpose.msra.mxu0 0.0
    %658 = vmatprep.subr.mxu0 0.0
    %659 = vmatpush1.xpose.msra.mxu0 0.0
    %660 = vmatprep.subr.mxu0 0.0
    %661 = vmatpush1.xpose.msra.mxu0 0.0
    %662 = vmatprep.subr.mxu0 0.0
    %663 = vmatpush1.xpose.msra.mxu0 0.0
    %664 = vmatprep.subr.mxu0 0.0
    %665 = vmatpush1.xpose.msra.mxu0 0.0
    %666 = vmatprep.subr.mxu0 0.0
    %667 = vmatpush1.xpose.msra.mxu0 0.0
    %668 = vmatprep.subr.mxu0 0.0
    %669 = vmatpush1.xpose.msra.mxu0 0.0
    %670 = vmatprep.subr.mxu0 0.0
    %671 = vmatpush1.xpose.msra.mxu0 0.0
    %672 = vmatprep.subr.mxu0 0.0
    %673 = vmatpush1.xpose.msra.mxu0 0.0
    %674 = vmatprep.subr.mxu0 0.0
    %675 = vmatpush1.xpose.msra.mxu0 %v650
    %676 = vmatprep.subr.mxu0 0.0
    %677 = vmatpush1.xpose.msra.mxu0 %v647
    %678 = vmatprep.subr.mxu0 0.0
    %679 = vmatpush1.xpose.msra.mxu0 %v644
    %680 = vmatprep.subr.mxu0 0.0
    %681 = vmatpush1.xpose.msra.mxu0 %v641
    %682 = vmatprep.subr.mxu0 0.0
    %683 = vmatpush1.xpose.msra.mxu0 %v638
    %684 = vmatprep.subr.mxu0 0.0
    %685 = vmatpush2.xpose.msra.mxu0 0.0
    %686 = vmatprep.subr.mxu0 0.0
    %687 = vmatpush2.xpose.msra.mxu0 0.0
    %688 = vmatprep.subr.mxu0 0.0
    %689 = vmatpush2.xpose.msra.mxu0 0.0
    %690 = vmatprep.subr.mxu0 0.0
    %691 = vmatpush2.xpose.msra.mxu0 0.0
    %692 = vmatprep.subr.mxu0 0.0
    %693 = vmatpush2.xpose.msra.mxu0 0.0
    %694 = vmatprep.subr.mxu0 0.0
    %695 = vmatpush2.xpose.msra.mxu0 0.0
    %696 = vmatprep.subr.mxu0 0.0
    %697 = vmatpush2.xpose.msra.mxu0 0.0
    %698 = vmatprep.subr.mxu0 0.0
    %699 = vmatpush2.xpose.msra.mxu0 0.0
    %700 = vmatprep.subr.mxu0 0.0
    %701 = vmatpush2.xpose.msra.mxu0 0.0
    %702 = vmatprep.subr.mxu0 0.0
    %703 = vmatpush2.xpose.msra.mxu0 0.0
    %704 = vmatprep.subr.mxu0 0.0
    %705 = vmatpush2.xpose.msra.mxu0 0.0
    %706 = vmatprep.subr.mxu0 0.0
    %707 = vmatpush2.xpose.msra.mxu0 0.0
    %708 = vmatprep.subr.mxu0 0.0
    %709 = vmatpush2.xpose.msra.mxu0 0.0
    %710 = vmatprep.subr.mxu0 0.0
    %711 = vmatpush2.xpose.msra.mxu0 0.0
    %712 = vmatprep.subr.mxu0 0.0
    %713 = vmatpush2.xpose.msra.mxu0 0.0
    %714 = vmatprep.subr.mxu0 0.0
    %715 = vmatpush2.xpose.msra.mxu0 0.0
    %716 = vmatprep.mubr.f32.mxu0 0.0
    %717 = vmatmul.mubr.f32.gmra.mxu0 %v623
    %v718 = vpop.f32.mrf.mxu0
    %v719 = vadd.f32 0.0, %v718
    %v720 = vpop.f32.mrf.mxu0
    %721 = vmatprep.mubr.f32.mxu0 0.0
    %722 = vmatmul.mubr.f32.gmra.mxu0 %v626
    %v723 = vpop.f32.mrf.mxu0
    %v724 = vadd.f32 0.0, %v723
    %v725 = vpop.f32.mrf.mxu0
    %726 = vmatprep.mubr.f32.mxu0 0.0
    %727 = vmatmul.mubr.f32.gmra.mxu0 %v629
    %v728 = vpop.f32.mrf.mxu0
    %v729 = vadd.f32 0.0, %v728
    %v730 = vpop.f32.mrf.mxu0
    %731 = vmatprep.mubr.f32.mxu0 0.0
    %732 = vmatmul.mubr.f32.gmra.mxu0 %v632
    %v733 = vpop.f32.mrf.mxu0
    %v734 = vadd.f32 0.0, %v733
    %v735 = vpop.f32.mrf.mxu0
    %736 = vmatprep.mubr.f32.mxu0 0.0
    %737 = vmatmul.mubr.f32.gmra.mxu0 %v635
    %v738 = vpop.f32.mrf.mxu0
    %v739 = vadd.f32 0.0, %v738
    %v740 = vpop.f32.mrf.mxu0
    %741 = vdwg.mxu0
    %v742 = vmul.f32 %v719, 0.25
    %v743 = vmul.f32 %v724, 0.25
    %v744 = vmul.f32 %v729, 0.25
    %v745 = vmul.f32 %v734, 0.25
    %v746 = vmul.f32 %v739, 0.25
    %v747 = vadd.f32 %v742, %v205
    %v748 = vadd.f32 %v743, %v206
    %v749 = vadd.f32 %v744, %v207
    %v750 = vadd.f32 %v745, %v208
    %v751 = vadd.f32 %v746, %v209
    %vm752 = vcmask 277504
    %v753 = vsel %vm752, %v747, -inf
    %754 = vmax.xlane.f32.xlu0 %v753
    %v755 = vpop.xlane.xlu0 %754
    %v756 = vsel %vm752, %v748, -inf
    %757 = vmax.xlane.f32.xlu0 %v756
    %v758 = vpop.xlane.xlu0 %757
    %v759 = vsel %vm752, %v749, -inf
    %760 = vmax.xlane.f32.xlu0 %v759
    %v761 = vpop.xlane.xlu0 %760
    %v762 = vsel %vm752, %v750, -inf
    %763 = vmax.xlane.f32.xlu0 %v762
    %v764 = vpop.xlane.xlu0 %763
    %vm765 = vcmask 271360
    %v766 = vsel %vm765, %v751, -inf
    %767 = vmax.xlane.f32.xlu0 %v766
    %v768 = vpop.xlane.xlu0 %767
    %v769 = vsub.f32 %v747, %v755
    %v770 = vsub.f32 %v748, %v758
    %v771 = vsub.f32 %v749, %v761
    %v772 = vsub.f32 %v750, %v764
    %v773 = vsub.f32 %v751, %v768
    %v774 = vmul.f32 %v769, 1.442695
    %v775 = vpow.pop %v774
    %v776 = vmul.f32 %v770, 1.442695
    %v777 = vpow.pop %v776
    %v778 = vmul.f32 %v771, 1.442695
    %v779 = vpow.pop %v778
    %v780 = vmul.f32 %v772, 1.442695
    %v781 = vpow.pop %v780
    %v782 = vmul.f32 %v773, 1.442695
    %v783 = vpow.pop %v782
    %v784 = vsel %vm752, %v775, 0.0
    %785 = vadd.xlane.f32.xlu0 %v784
    %v786 = vpop.xlane.xlu0 %785
    %v787 = vsel %vm752, %v777, 0.0
    %788 = vadd.xlane.f32.xlu0 %v787
    %v789 = vpop.xlane.xlu0 %788
    %v790 = vsel %vm752, %v779, 0.0
    %791 = vadd.xlane.f32.xlu0 %v790
    %v792 = vpop.xlane.xlu0 %791
    %v793 = vsel %vm752, %v781, 0.0
    %794 = vadd.xlane.f32.xlu0 %v793
    %v795 = vpop.xlane.xlu0 %794
    %v796 = vsel %vm765, %v783, 0.0
    %797 = vadd.xlane.f32.xlu0 %v796
    %v798 = vpop.xlane.xlu0 %797
    %v799 = vrcp.pop %v786
    %v800 = vmul.f32 %v775, %v799
    %v801 = vrcp.pop %v789
    %v802 = vmul.f32 %v777, %v801
    %v803 = vrcp.pop %v792
    %v804 = vmul.f32 %v779, %v803
    %v805 = vrcp.pop %v795
    %v806 = vmul.f32 %v781, %v805
    %v807 = vrcp.pop %v798
    %v808 = vmul.f32 %v783, %v807
    %v810 = vsel %vm752, %v800, 0
    %v813 = vsel %vm752, %v802, 0
    %v816 = vsel %vm752, %v804, 0
    %v819 = vsel %vm752, %v806, 0
    %v822 = vsel %vm752, %v808, 0
    %vm824 = vcmask 1041408
    %v826 = vsel %vm824, %v618, 0
    %828 = vmatprep.subr.mxu0 0.0
    %829 = vmatpush1.msra.mxu0 0.0
    %830 = vmatprep.subr.mxu0 0.0
    %831 = vmatpush1.msra.mxu0 0.0
    %832 = vmatprep.subr.mxu0 0.0
    %833 = vmatpush1.msra.mxu0 0.0
    %834 = vmatprep.subr.mxu0 0.0
    %835 = vmatpush1.msra.mxu0 0.0
    %836 = vmatprep.subr.mxu0 0.0
    %837 = vmatpush1.msra.mxu0 0.0
    %838 = vmatprep.subr.mxu0 0.0
    %839 = vmatpush1.msra.mxu0 0.0
    %840 = vmatprep.subr.mxu0 0.0
    %841 = vmatpush1.msra.mxu0 0.0
    %842 = vmatprep.subr.mxu0 0.0
    %843 = vmatpush1.msra.mxu0 0.0
    %844 = vmatprep.subr.mxu0 0.0
    %845 = vmatpush1.msra.mxu0 0.0
    %846 = vmatprep.subr.mxu0 0.0
    %847 = vmatpush1.msra.mxu0 0.0
    %848 = vmatprep.subr.mxu0 0.0
    %849 = vmatpush1.msra.mxu0 0.0
    %850 = vmatprep.subr.mxu0 0.0
    %851 = vmatpush1.msra.mxu0 %v826
    %852 = vmatprep.subr.mxu0 0.0
    %853 = vmatpush1.msra.mxu0 %v613
    %854 = vmatprep.subr.mxu0 0.0
    %855 = vmatpush1.msra.mxu0 %v608
    %856 = vmatprep.subr.mxu0 0.0
    %857 = vmatpush1.msra.mxu0 %v603
    %858 = vmatprep.subr.mxu0 0.0
    %859 = vmatpush1.msra.mxu0 %v598
    %860 = vmatprep.subr.mxu0 0.0
    %861 = vmatpush2.msra.mxu0 0.0
    %862 = vmatprep.subr.mxu0 0.0
    %863 = vmatpush2.msra.mxu0 0.0
    %864 = vmatprep.subr.mxu0 0.0
    %865 = vmatpush2.msra.mxu0 0.0
    %866 = vmatprep.subr.mxu0 0.0
    %867 = vmatpush2.msra.mxu0 0.0
    %868 = vmatprep.subr.mxu0 0.0
    %869 = vmatpush2.msra.mxu0 0.0
    %870 = vmatprep.subr.mxu0 0.0
    %871 = vmatpush2.msra.mxu0 0.0
    %872 = vmatprep.subr.mxu0 0.0
    %873 = vmatpush2.msra.mxu0 0.0
    %874 = vmatprep.subr.mxu0 0.0
    %875 = vmatpush2.msra.mxu0 0.0
    %876 = vmatprep.subr.mxu0 0.0
    %877 = vmatpush2.msra.mxu0 0.0
    %878 = vmatprep.subr.mxu0 0.0
    %879 = vmatpush2.msra.mxu0 0.0
    %880 = vmatprep.subr.mxu0 0.0
    %881 = vmatpush2.msra.mxu0 0.0
    %882 = vmatprep.subr.mxu0 0.0
    %883 = vmatpush2.msra.mxu0 0.0
    %884 = vmatprep.subr.mxu0 0.0
    %885 = vmatpush2.msra.mxu0 0.0
    %886 = vmatprep.subr.mxu0 0.0
    %887 = vmatpush2.msra.mxu0 0.0
    %888 = vmatprep.subr.mxu0 0.0
    %889 = vmatpush2.msra.mxu0 0.0
    %890 = vmatprep.subr.mxu0 0.0
    %891 = vmatpush2.msra.mxu0 0.0
    %892 = vmatprep.mubr.f32.mxu0 0.0
    %893 = vmatmul.mubr.f32.gmra.mxu0 %v810
    %v894 = vpop.f32.mrf.mxu0
    %v895 = vadd.f32 0.0, %v894
    %v896 = vpop.f32.mrf.mxu0
    %897 = vmatprep.mubr.f32.mxu0 0.0
    %898 = vmatmul.mubr.f32.gmra.mxu0 %v813
    %v899 = vpop.f32.mrf.mxu0
    %v900 = vadd.f32 0.0, %v899
    %v901 = vpop.f32.mrf.mxu0
    %902 = vmatprep.mubr.f32.mxu0 0.0
    %903 = vmatmul.mubr.f32.gmra.mxu0 %v816
    %v904 = vpop.f32.mrf.mxu0
    %v905 = vadd.f32 0.0, %v904
    %v906 = vpop.f32.mrf.mxu0
    %907 = vmatprep.mubr.f32.mxu0 0.0
    %908 = vmatmul.mubr.f32.gmra.mxu0 %v819
    %v909 = vpop.f32.mrf.mxu0
    %v910 = vadd.f32 0.0, %v909
    %v911 = vpop.f32.mrf.mxu0
    %912 = vmatprep.mubr.f32.mxu0 0.0
    %913 = vmatmul.mubr.f32.gmra.mxu0 %v822
    %v914 = vpop.f32.mrf.mxu0
    %v915 = vadd.f32 0.0, %v914
    %v916 = vpop.f32.mrf.mxu0
    %917 = vdwg.mxu0
    %v918 = vld [vmem:[%s12] sm:$0xff]
    %v919 = vld [vmem:[%s12 + $0x8] sm:$0xff]
    %v921 = vsel %vm621, %v895, 0
    %v924 = vsel %vm621, %v900, 0
    %v927 = vsel %vm621, %v905, 0
    %v930 = vsel %vm621, %v910, 0
    %v933 = vsel %vm621, %v915, 0
    %935 = vmatprep.subr.mxu0 0.0
    %936 = vmatpush1.msra.mxu0 0.0
    %937 = vmatprep.subr.mxu0 0.0
    %938 = vmatpush1.msra.mxu0 0.0
    %939 = vmatprep.subr.mxu0 0.0
    %940 = vmatpush1.msra.mxu0 0.0
    %941 = vmatprep.subr.mxu0 0.0
    %942 = vmatpush1.msra.mxu0 0.0
    %943 = vmatprep.subr.mxu0 0.0
    %944 = vmatpush1.msra.mxu0 0.0
    %945 = vmatprep.subr.mxu0 0.0
    %946 = vmatpush1.msra.mxu0 0.0
    %947 = vmatprep.subr.mxu0 0.0
    %948 = vmatpush1.msra.mxu0 0.0
    %949 = vmatprep.subr.mxu0 0.0
    %950 = vmatpush1.msra.mxu0 0.0
    %951 = vmatprep.subr.mxu0 0.0
    %952 = vmatpush1.msra.mxu0 0.0
    %953 = vmatprep.subr.mxu0 0.0
    %954 = vmatpush1.msra.mxu0 0.0
    %955 = vmatprep.subr.mxu0 0.0
    %956 = vmatpush1.msra.mxu0 0.0
    %957 = vmatprep.subr.mxu0 0.0
    %958 = vmatpush1.msra.mxu0 0.0
    %959 = vmatprep.subr.mxu0 0.0
    %960 = vmatpush1.msra.mxu0 0.0
    %961 = vmatprep.subr.mxu0 0.0
    %962 = vmatpush1.msra.mxu0 0.0
    %963 = vmatprep.subr.mxu0 0.0
    %964 = vmatpush1.msra.mxu0 %v919
    %965 = vmatprep.subr.mxu0 0.0
    %966 = vmatpush1.msra.mxu0 %v918
    %967 = vmatprep.subr.mxu0 0.0
    %968 = vmatpush2.msra.mxu0 0.0
    %969 = vmatprep.subr.mxu0 0.0
    %970 = vmatpush2.msra.mxu0 0.0
    %971 = vmatprep.subr.mxu0 0.0
    %972 = vmatpush2.msra.mxu0 0.0
    %973 = vmatprep.subr.mxu0 0.0
    %974 = vmatpush2.msra.mxu0 0.0
    %975 = vmatprep.subr.mxu0 0.0
    %976 = vmatpush2.msra.mxu0 0.0
    %977 = vmatprep.subr.mxu0 0.0
    %978 = vmatpush2.msra.mxu0 0.0
    %979 = vmatprep.subr.mxu0 0.0
    %980 = vmatpush2.msra.mxu0 0.0
    %981 = vmatprep.subr.mxu0 0.0
    %982 = vmatpush2.msra.mxu0 0.0
    %983 = vmatprep.subr.mxu0 0.0
    %984 = vmatpush2.msra.mxu0 0.0
    %985 = vmatprep.subr.mxu0 0.0
    %986 = vmatpush2.msra.mxu0 0.0
    %987 = vmatprep.subr.mxu0 0.0
    %988 = vmatpush2.msra.mxu0 0.0
    %989 = vmatprep.subr.mxu0 0.0
    %990 = vmatpush2.msra.mxu0 0.0
    %991 = vmatprep.subr.mxu0 0.0
    %992 = vmatpush2.msra.mxu0 0.0
    %993 = vmatprep.subr.mxu0 0.0
    %994 = vmatpush2.msra.mxu0 0.0
    %995 = vmatprep.subr.mxu0 0.0
    %996 = vmatpush2.msra.mxu0 0.0
    %997 = vmatprep.subr.mxu0 0.0
    %998 = vmatpush2.msra.mxu0 0.0
    %999 = vmatprep.mubr.f32.mxu0 0.0
    %1000 = vmatmul.mubr.f32.gmra.mxu0 %v921
    %v1001 = vpop.f32.mrf.mxu0
    %v1002 = vadd.f32 0.0, %v1001
    %v1003 = vpop.f32.mrf.mxu0
    %1004 = vmatprep.mubr.f32.mxu0 0.0
    %1005 = vmatmul.mubr.f32.gmra.mxu0 %v924
    %v1006 = vpop.f32.mrf.mxu0
    %v1007 = vadd.f32 0.0, %v1006
    %v1008 = vpop.f32.mrf.mxu0
    %1009 = vmatprep.mubr.f32.mxu0 0.0
    %1010 = vmatmul.mubr.f32.gmra.mxu0 %v927
    %v1011 = vpop.f32.mrf.mxu0
    %v1012 = vadd.f32 0.0, %v1011
    %v1013 = vpop.f32.mrf.mxu0
    %1014 = vmatprep.mubr.f32.mxu0 0.0
    %1015 = vmatmul.mubr.f32.gmra.mxu0 %v930
    %v1016 = vpop.f32.mrf.mxu0
    %v1017 = vadd.f32 0.0, %v1016
    %v1018 = vpop.f32.mrf.mxu0
    %1019 = vmatprep.mubr.f32.mxu0 0.0
    %1020 = vmatmul.mubr.f32.gmra.mxu0 %v933
    %v1021 = vpop.f32.mrf.mxu0
    %v1022 = vadd.f32 0.0, %v1021
    %v1023 = vpop.f32.mrf.mxu0
    %1024 = vdwg.mxu0
    %v1026 = vlaneseq
    %v1027 = vshrl.u32 %v1026, 7
    %v1028 = vsub.s32 0, %v1027
    %v1029 = vrot.slane %v302, %v1028
    %v1031 = vadd.f32 %v1029, %v1002
    %v1032 = vadd.f32 %v1029, %v1007
    %v1033 = vadd.f32 %v1029, %v1012
    %v1034 = vadd.f32 %v1029, %v1017
    %v1035 = vadd.f32 %v1029, %v1022
    %s1036 = scalar_lea.vmem %s6, 32
    %v1037 = vld [vmem:[%s1036] sm:$0xff]
    %v1038 = vld [vmem:[%s1036 + $0x8] sm:$0xff]
    %v1039 = vld [vmem:[%s1036 + $0x10] sm:$0xff]
    %v1040 = vld [vmem:[%s1036 + $0x18] sm:$0xff]
    %s1041 = scalar_lea.vmem %s7, 1
    %v1042 = vld [vmem:[%s1041] sm:$0x1]
    %v1044 = vlaneseq
    %v1045 = vshrl.u32 %v1044, 7
    %v1046 = vsub.s32 0, %v1045
    %v1047 = vrot.slane %v1042, %v1046
    %1049 = vmatprep.subr.mxu0 0.0
    %1050 = vmatpush1.msra.mxu0 0.0
    %1051 = vmatprep.subr.mxu0 0.0
    %1052 = vmatpush1.msra.mxu0 0.0
    %1053 = vmatprep.subr.mxu0 0.0
    %1054 = vmatpush1.msra.mxu0 0.0
    %1055 = vmatprep.subr.mxu0 0.0
    %1056 = vmatpush1.msra.mxu0 0.0
    %1057 = vmatprep.subr.mxu0 0.0
    %1058 = vmatpush1.msra.mxu0 0.0
    %1059 = vmatprep.subr.mxu0 0.0
    %1060 = vmatpush1.msra.mxu0 0.0
    %1061 = vmatprep.subr.mxu0 0.0
    %1062 = vmatpush1.msra.mxu0 0.0
    %1063 = vmatprep.subr.mxu0 0.0
    %1064 = vmatpush1.msra.mxu0 0.0
    %1065 = vmatprep.subr.mxu0 0.0
    %1066 = vmatpush1.msra.mxu0 0.0
    %1067 = vmatprep.subr.mxu0 0.0
    %1068 = vmatpush1.msra.mxu0 0.0
    %1069 = vmatprep.subr.mxu0 0.0
    %1070 = vmatpush1.msra.mxu0 0.0
    %1071 = vmatprep.subr.mxu0 0.0
    %1072 = vmatpush1.msra.mxu0 0.0
    %1073 = vmatprep.subr.mxu0 0.0
    %1074 = vmatpush1.msra.mxu0 %v1040
    %1075 = vmatprep.subr.mxu0 0.0
    %1076 = vmatpush1.msra.mxu0 %v1039
    %1077 = vmatprep.subr.mxu0 0.0
    %1078 = vmatpush1.msra.mxu0 %v1038
    %1079 = vmatprep.subr.mxu0 0.0
    %1080 = vmatpush1.msra.mxu0 %v1037
    %1081 = vmatprep.subr.mxu0 0.0
    %1082 = vmatpush2.msra.mxu0 0.0
    %1083 = vmatprep.subr.mxu0 0.0
    %1084 = vmatpush2.msra.mxu0 0.0
    %1085 = vmatprep.subr.mxu0 0.0
    %1086 = vmatpush2.msra.mxu0 0.0
    %1087 = vmatprep.subr.mxu0 0.0
    %1088 = vmatpush2.msra.mxu0 0.0
    %1089 = vmatprep.subr.mxu0 0.0
    %1090 = vmatpush2.msra.mxu0 0.0
    %1091 = vmatprep.subr.mxu0 0.0
    %1092 = vmatpush2.msra.mxu0 0.0
    %1093 = vmatprep.subr.mxu0 0.0
    %1094 = vmatpush2.msra.mxu0 0.0
    %1095 = vmatprep.subr.mxu0 0.0
    %1096 = vmatpush2.msra.mxu0 0.0
    %1097 = vmatprep.subr.mxu0 0.0
    %1098 = vmatpush2.msra.mxu0 0.0
    %1099 = vmatprep.subr.mxu0 0.0
    %1100 = vmatpush2.msra.mxu0 0.0
    %1101 = vmatprep.subr.mxu0 0.0
    %1102 = vmatpush2.msra.mxu0 0.0
    %1103 = vmatprep.subr.mxu0 0.0
    %1104 = vmatpush2.msra.mxu0 0.0
    %1105 = vmatprep.subr.mxu0 0.0
    %1106 = vmatpush2.msra.mxu0 0.0
    %1107 = vmatprep.subr.mxu0 0.0
    %1108 = vmatpush2.msra.mxu0 0.0
    %1109 = vmatprep.subr.mxu0 0.0
    %1110 = vmatpush2.msra.mxu0 0.0
    %1111 = vmatprep.subr.mxu0 0.0
    %1112 = vmatpush2.msra.mxu0 0.0
    %1113 = vmatprep.mubr.f32.mxu0 0.0
    %1114 = vmatmul.mubr.f32.gmra.mxu0 %v315
    %v1115 = vpop.f32.mrf.mxu0
    %v1116 = vadd.f32 %v1047, %v1115
    %v1117 = vpop.f32.mrf.mxu0
    %1118 = vmatprep.mubr.f32.mxu0 0.0
    %1119 = vmatmul.mubr.f32.gmra.mxu0 %v318
    %v1120 = vpop.f32.mrf.mxu0
    %v1121 = vadd.f32 %v1047, %v1120
    %v1122 = vpop.f32.mrf.mxu0
    %1123 = vmatprep.mubr.f32.mxu0 0.0
    %1124 = vmatmul.mubr.f32.gmra.mxu0 %v321
    %v1125 = vpop.f32.mrf.mxu0
    %v1126 = vadd.f32 %v1047, %v1125
    %v1127 = vpop.f32.mrf.mxu0
    %1128 = vmatprep.mubr.f32.mxu0 0.0
    %1129 = vmatmul.mubr.f32.gmra.mxu0 %v324
    %v1130 = vpop.f32.mrf.mxu0
    %v1131 = vadd.f32 %v1047, %v1130
    %v1132 = vpop.f32.mrf.mxu0
    %1133 = vmatprep.mubr.f32.mxu0 0.0
    %1134 = vmatmul.mubr.f32.gmra.mxu0 %v327
    %v1135 = vpop.f32.mrf.mxu0
    %v1136 = vadd.f32 %v1047, %v1135
    %v1137 = vpop.f32.mrf.mxu0
    %1138 = vdwg.mxu0
    %s1139 = scalar_lea.vmem %s8, 32
    %v1140 = vld [vmem:[%s1139] sm:$0xff]
    %v1141 = vld [vmem:[%s1139 + $0x8] sm:$0xff]
    %v1142 = vld [vmem:[%s1139 + $0x10] sm:$0xff]
    %v1143 = vld [vmem:[%s1139 + $0x18] sm:$0xff]
    %s1144 = scalar_lea.vmem %s9, 1
    %v1145 = vld [vmem:[%s1144] sm:$0x1]
    %v1147 = vlaneseq
    %v1148 = vshrl.u32 %v1147, 7
    %v1149 = vsub.s32 0, %v1148
    %v1150 = vrot.slane %v1145, %v1149
    %1152 = vmatprep.subr.mxu0 0.0
    %1153 = vmatpush1.msra.mxu0 0.0
    %1154 = vmatprep.subr.mxu0 0.0
    %1155 = vmatpush1.msra.mxu0 0.0
    %1156 = vmatprep.subr.mxu0 0.0
    %1157 = vmatpush1.msra.mxu0 0.0
    %1158 = vmatprep.subr.mxu0 0.0
    %1159 = vmatpush1.msra.mxu0 0.0
    %1160 = vmatprep.subr.mxu0 0.0
    %1161 = vmatpush1.msra.mxu0 0.0
    %1162 = vmatprep.subr.mxu0 0.0
    %1163 = vmatpush1.msra.mxu0 0.0
    %1164 = vmatprep.subr.mxu0 0.0
    %1165 = vmatpush1.msra.mxu0 0.0
    %1166 = vmatprep.subr.mxu0 0.0
    %1167 = vmatpush1.msra.mxu0 0.0
    %1168 = vmatprep.subr.mxu0 0.0
    %1169 = vmatpush1.msra.mxu0 0.0
    %1170 = vmatprep.subr.mxu0 0.0
    %1171 = vmatpush1.msra.mxu0 0.0
    %1172 = vmatprep.subr.mxu0 0.0
    %1173 = vmatpush1.msra.mxu0 0.0
    %1174 = vmatprep.subr.mxu0 0.0
    %1175 = vmatpush1.msra.mxu0 0.0
    %1176 = vmatprep.subr.mxu0 0.0
    %1177 = vmatpush1.msra.mxu0 %v1143
    %1178 = vmatprep.subr.mxu0 0.0
    %1179 = vmatpush1.msra.mxu0 %v1142
    %1180 = vmatprep.subr.mxu0 0.0
    %1181 = vmatpush1.msra.mxu0 %v1141
    %1182 = vmatprep.subr.mxu0 0.0
    %1183 = vmatpush1.msra.mxu0 %v1140
    %1184 = vmatprep.subr.mxu0 0.0
    %1185 = vmatpush2.msra.mxu0 0.0
    %1186 = vmatprep.subr.mxu0 0.0
    %1187 = vmatpush2.msra.mxu0 0.0
    %1188 = vmatprep.subr.mxu0 0.0
    %1189 = vmatpush2.msra.mxu0 0.0
    %1190 = vmatprep.subr.mxu0 0.0
    %1191 = vmatpush2.msra.mxu0 0.0
    %1192 = vmatprep.subr.mxu0 0.0
    %1193 = vmatpush2.msra.mxu0 0.0
    %1194 = vmatprep.subr.mxu0 0.0
    %1195 = vmatpush2.msra.mxu0 0.0
    %1196 = vmatprep.subr.mxu0 0.0
    %1197 = vmatpush2.msra.mxu0 0.0
    %1198 = vmatprep.subr.mxu0 0.0
    %1199 = vmatpush2.msra.mxu0 0.0
    %1200 = vmatprep.subr.mxu0 0.0
    %1201 = vmatpush2.msra.mxu0 0.0
    %1202 = vmatprep.subr.mxu0 0.0
    %1203 = vmatpush2.msra.mxu0 0.0
    %1204 = vmatprep.subr.mxu0 0.0
    %1205 = vmatpush2.msra.mxu0 0.0
    %1206 = vmatprep.subr.mxu0 0.0
    %1207 = vmatpush2.msra.mxu0 0.0
    %1208 = vmatprep.subr.mxu0 0.0
    %1209 = vmatpush2.msra.mxu0 0.0
    %1210 = vmatprep.subr.mxu0 0.0
    %1211 = vmatpush2.msra.mxu0 0.0
    %1212 = vmatprep.subr.mxu0 0.0
    %1213 = vmatpush2.msra.mxu0 0.0
    %1214 = vmatprep.subr.mxu0 0.0
    %1215 = vmatpush2.msra.mxu0 0.0
    %1216 = vmatprep.mubr.f32.mxu0 0.0
    %1217 = vmatmul.mubr.f32.gmra.mxu0 %v315
    %v1218 = vpop.f32.mrf.mxu0
    %v1219 = vadd.f32 %v1150, %v1218
    %v1220 = vpop.f32.mrf.mxu0
    %1221 = vmatprep.mubr.f32.mxu0 0.0
    %1222 = vmatmul.mubr.f32.gmra.mxu0 %v318
    %v1223 = vpop.f32.mrf.mxu0
    %v1224 = vadd.f32 %v1150, %v1223
    %v1225 = vpop.f32.mrf.mxu0
    %1226 = vmatprep.mubr.f32.mxu0 0.0
    %1227 = vmatmul.mubr.f32.gmra.mxu0 %v321
    %v1228 = vpop.f32.mrf.mxu0
    %v1229 = vadd.f32 %v1150, %v1228
    %v1230 = vpop.f32.mrf.mxu0
    %1231 = vmatprep.mubr.f32.mxu0 0.0
    %1232 = vmatmul.mubr.f32.gmra.mxu0 %v324
    %v1233 = vpop.f32.mrf.mxu0
    %v1234 = vadd.f32 %v1150, %v1233
    %v1235 = vpop.f32.mrf.mxu0
    %1236 = vmatprep.mubr.f32.mxu0 0.0
    %1237 = vmatmul.mubr.f32.gmra.mxu0 %v327
    %v1238 = vpop.f32.mrf.mxu0
    %v1239 = vadd.f32 %v1150, %v1238
    %v1240 = vpop.f32.mrf.mxu0
    %1241 = vdwg.mxu0
    %s1242 = scalar_lea.vmem %s10, 32
    %v1243 = vld [vmem:[%s1242] sm:$0xff]
    %v1244 = vld [vmem:[%s1242 + $0x8] sm:$0xff]
    %v1245 = vld [vmem:[%s1242 + $0x10] sm:$0xff]
    %v1246 = vld [vmem:[%s1242 + $0x18] sm:$0xff]
    %s1247 = scalar_lea.vmem %s11, 1
    %v1248 = vld [vmem:[%s1247] sm:$0x1]
    %v1250 = vlaneseq
    %v1251 = vshrl.u32 %v1250, 7
    %v1252 = vsub.s32 0, %v1251
    %v1253 = vrot.slane %v1248, %v1252
    %1255 = vmatprep.subr.mxu0 0.0
    %1256 = vmatpush1.msra.mxu0 0.0
    %1257 = vmatprep.subr.mxu0 0.0
    %1258 = vmatpush1.msra.mxu0 0.0
    %1259 = vmatprep.subr.mxu0 0.0
    %1260 = vmatpush1.msra.mxu0 0.0
    %1261 = vmatprep.subr.mxu0 0.0
    %1262 = vmatpush1.msra.mxu0 0.0
    %1263 = vmatprep.subr.mxu0 0.0
    %1264 = vmatpush1.msra.mxu0 0.0
    %1265 = vmatprep.subr.mxu0 0.0
    %1266 = vmatpush1.msra.mxu0 0.0
    %1267 = vmatprep.subr.mxu0 0.0
    %1268 = vmatpush1.msra.mxu0 0.0
    %1269 = vmatprep.subr.mxu0 0.0
    %1270 = vmatpush1.msra.mxu0 0.0
    %1271 = vmatprep.subr.mxu0 0.0
    %1272 = vmatpush1.msra.mxu0 0.0
    %1273 = vmatprep.subr.mxu0 0.0
    %1274 = vmatpush1.msra.mxu0 0.0
    %1275 = vmatprep.subr.mxu0 0.0
    %1276 = vmatpush1.msra.mxu0 0.0
    %1277 = vmatprep.subr.mxu0 0.0
    %1278 = vmatpush1.msra.mxu0 0.0
    %1279 = vmatprep.subr.mxu0 0.0
    %1280 = vmatpush1.msra.mxu0 %v1246
    %1281 = vmatprep.subr.mxu0 0.0
    %1282 = vmatpush1.msra.mxu0 %v1245
    %1283 = vmatprep.subr.mxu0 0.0
    %1284 = vmatpush1.msra.mxu0 %v1244
    %1285 = vmatprep.subr.mxu0 0.0
    %1286 = vmatpush1.msra.mxu0 %v1243
    %1287 = vmatprep.subr.mxu0 0.0
    %1288 = vmatpush2.msra.mxu0 0.0
    %1289 = vmatprep.subr.mxu0 0.0
    %1290 = vmatpush2.msra.mxu0 0.0
    %1291 = vmatprep.subr.mxu0 0.0
    %1292 = vmatpush2.msra.mxu0 0.0
    %1293 = vmatprep.subr.mxu0 0.0
    %1294 = vmatpush2.msra.mxu0 0.0
    %1295 = vmatprep.subr.mxu0 0.0
    %1296 = vmatpush2.msra.mxu0 0.0
    %1297 = vmatprep.subr.mxu0 0.0
    %1298 = vmatpush2.msra.mxu0 0.0
    %1299 = vmatprep.subr.mxu0 0.0
    %1300 = vmatpush2.msra.mxu0 0.0
    %1301 = vmatprep.subr.mxu0 0.0
    %1302 = vmatpush2.msra.mxu0 0.0
    %1303 = vmatprep.subr.mxu0 0.0
    %1304 = vmatpush2.msra.mxu0 0.0
    %1305 = vmatprep.subr.mxu0 0.0
    %1306 = vmatpush2.msra.mxu0 0.0
    %1307 = vmatprep.subr.mxu0 0.0
    %1308 = vmatpush2.msra.mxu0 0.0
    %1309 = vmatprep.subr.mxu0 0.0
    %1310 = vmatpush2.msra.mxu0 0.0
    %1311 = vmatprep.subr.mxu0 0.0
    %1312 = vmatpush2.msra.mxu0 0.0
    %1313 = vmatprep.subr.mxu0 0.0
    %1314 = vmatpush2.msra.mxu0 0.0
    %1315 = vmatprep.subr.mxu0 0.0
    %1316 = vmatpush2.msra.mxu0 0.0
    %1317 = vmatprep.subr.mxu0 0.0
    %1318 = vmatpush2.msra.mxu0 0.0
    %1319 = vmatprep.mubr.f32.mxu0 0.0
    %1320 = vmatmul.mubr.f32.gmra.mxu0 %v315
    %v1321 = vpop.f32.mrf.mxu0
    %v1322 = vadd.f32 %v1253, %v1321
    %v1323 = vpop.f32.mrf.mxu0
    %1324 = vmatprep.mubr.f32.mxu0 0.0
    %1325 = vmatmul.mubr.f32.gmra.mxu0 %v318
    %v1326 = vpop.f32.mrf.mxu0
    %v1327 = vadd.f32 %v1253, %v1326
    %v1328 = vpop.f32.mrf.mxu0
    %1329 = vmatprep.mubr.f32.mxu0 0.0
    %1330 = vmatmul.mubr.f32.gmra.mxu0 %v321
    %v1331 = vpop.f32.mrf.mxu0
    %v1332 = vadd.f32 %v1253, %v1331
    %v1333 = vpop.f32.mrf.mxu0
    %1334 = vmatprep.mubr.f32.mxu0 0.0
    %1335 = vmatmul.mubr.f32.gmra.mxu0 %v324
    %v1336 = vpop.f32.mrf.mxu0
    %v1337 = vadd.f32 %v1253, %v1336
    %v1338 = vpop.f32.mrf.mxu0
    %1339 = vmatprep.mubr.f32.mxu0 0.0
    %1340 = vmatmul.mubr.f32.gmra.mxu0 %v327
    %v1341 = vpop.f32.mrf.mxu0
    %v1342 = vadd.f32 %v1253, %v1341
    %v1343 = vpop.f32.mrf.mxu0
    %1344 = vdwg.mxu0
    %v1346 = vsel %vm621, %v1116, 0
    %v1349 = vsel %vm621, %v1121, 0
    %v1352 = vsel %vm621, %v1126, 0
    %v1355 = vsel %vm621, %v1131, 0
    %v1358 = vsel %vm621, %v1136, 0
    %v1361 = vsel %vm621, %v1219, 0
    %v1364 = vsel %vm621, %v1224, 0
    %v1367 = vsel %vm621, %v1229, 0
    %v1370 = vsel %vm621, %v1234, 0
    %v1373 = vsel %vm621, %v1239, 0
    %1375 = vmatprep.subr.mxu0 0.0
    %1376 = vmatpush1.xpose.msra.mxu0 0.0
    %1377 = vmatprep.subr.mxu0 0.0
    %1378 = vmatpush1.xpose.msra.mxu0 0.0
    %1379 = vmatprep.subr.mxu0 0.0
    %1380 = vmatpush1.xpose.msra.mxu0 0.0
    %1381 = vmatprep.subr.mxu0 0.0
    %1382 = vmatpush1.xpose.msra.mxu0 0.0
    %1383 = vmatprep.subr.mxu0 0.0
    %1384 = vmatpush1.xpose.msra.mxu0 0.0
    %1385 = vmatprep.subr.mxu0 0.0
    %1386 = vmatpush1.xpose.msra.mxu0 0.0
    %1387 = vmatprep.subr.mxu0 0.0
    %1388 = vmatpush1.xpose.msra.mxu0 0.0
    %1389 = vmatprep.subr.mxu0 0.0
    %1390 = vmatpush1.xpose.msra.mxu0 0.0
    %1391 = vmatprep.subr.mxu0 0.0
    %1392 = vmatpush1.xpose.msra.mxu0 0.0
    %1393 = vmatprep.subr.mxu0 0.0
    %1394 = vmatpush1.xpose.msra.mxu0 0.0
    %1395 = vmatprep.subr.mxu0 0.0
    %1396 = vmatpush1.xpose.msra.mxu0 0.0
    %1397 = vmatprep.subr.mxu0 0.0
    %1398 = vmatpush1.xpose.msra.mxu0 %v1373
    %1399 = vmatprep.subr.mxu0 0.0
    %1400 = vmatpush1.xpose.msra.mxu0 %v1370
    %1401 = vmatprep.subr.mxu0 0.0
    %1402 = vmatpush1.xpose.msra.mxu0 %v1367
    %1403 = vmatprep.subr.mxu0 0.0
    %1404 = vmatpush1.xpose.msra.mxu0 %v1364
    %1405 = vmatprep.subr.mxu0 0.0
    %1406 = vmatpush1.xpose.msra.mxu0 %v1361
    %1407 = vmatprep.subr.mxu0 0.0
    %1408 = vmatpush2.xpose.msra.mxu0 0.0
    %1409 = vmatprep.subr.mxu0 0.0
    %1410 = vmatpush2.xpose.msra.mxu0 0.0
    %1411 = vmatprep.subr.mxu0 0.0
    %1412 = vmatpush2.xpose.msra.mxu0 0.0
    %1413 = vmatprep.subr.mxu0 0.0
    %1414 = vmatpush2.xpose.msra.mxu0 0.0
    %1415 = vmatprep.subr.mxu0 0.0
    %1416 = vmatpush2.xpose.msra.mxu0 0.0
    %1417 = vmatprep.subr.mxu0 0.0
    %1418 = vmatpush2.xpose.msra.mxu0 0.0
    %1419 = vmatprep.subr.mxu0 0.0
    %1420 = vmatpush2.xpose.msra.mxu0 0.0
    %1421 = vmatprep.subr.mxu0 0.0
    %1422 = vmatpush2.xpose.msra.mxu0 0.0
    %1423 = vmatprep.subr.mxu0 0.0
    %1424 = vmatpush2.xpose.msra.mxu0 0.0
    %1425 = vmatprep.subr.mxu0 0.0
    %1426 = vmatpush2.xpose.msra.mxu0 0.0
    %1427 = vmatprep.subr.mxu0 0.0
    %1428 = vmatpush2.xpose.msra.mxu0 0.0
    %1429 = vmatprep.subr.mxu0 0.0
    %1430 = vmatpush2.xpose.msra.mxu0 0.0
    %1431 = vmatprep.subr.mxu0 0.0
    %1432 = vmatpush2.xpose.msra.mxu0 0.0
    %1433 = vmatprep.subr.mxu0 0.0
    %1434 = vmatpush2.xpose.msra.mxu0 0.0
    %1435 = vmatprep.subr.mxu0 0.0
    %1436 = vmatpush2.xpose.msra.mxu0 0.0
    %1437 = vmatprep.subr.mxu0 0.0
    %1438 = vmatpush2.xpose.msra.mxu0 0.0
    %1439 = vmatprep.mubr.f32.mxu0 0.0
    %1440 = vmatmul.mubr.f32.gmra.mxu0 %v1346
    %v1441 = vpop.f32.mrf.mxu0
    %v1442 = vadd.f32 0.0, %v1441
    %v1443 = vpop.f32.mrf.mxu0
    %1444 = vmatprep.mubr.f32.mxu0 0.0
    %1445 = vmatmul.mubr.f32.gmra.mxu0 %v1349
    %v1446 = vpop.f32.mrf.mxu0
    %v1447 = vadd.f32 0.0, %v1446
    %v1448 = vpop.f32.mrf.mxu0
    %1449 = vmatprep.mubr.f32.mxu0 0.0
    %1450 = vmatmul.mubr.f32.gmra.mxu0 %v1352
    %v1451 = vpop.f32.mrf.mxu0
    %v1452 = vadd.f32 0.0, %v1451
    %v1453 = vpop.f32.mrf.mxu0
    %1454 = vmatprep.mubr.f32.mxu0 0.0
    %1455 = vmatmul.mubr.f32.gmra.mxu0 %v1355
    %v1456 = vpop.f32.mrf.mxu0
    %v1457 = vadd.f32 0.0, %v1456
    %v1458 = vpop.f32.mrf.mxu0
    %1459 = vmatprep.mubr.f32.mxu0 0.0
    %1460 = vmatmul.mubr.f32.gmra.mxu0 %v1358
    %v1461 = vpop.f32.mrf.mxu0
    %v1462 = vadd.f32 0.0, %v1461
    %v1463 = vpop.f32.mrf.mxu0
    %1464 = vdwg.mxu0
    %v1465 = vmul.f32 %v1442, 0.25
    %v1466 = vmul.f32 %v1447, 0.25
    %v1467 = vmul.f32 %v1452, 0.25
    %v1468 = vmul.f32 %v1457, 0.25
    %v1469 = vmul.f32 %v1462, 0.25
    %v1470 = vadd.f32 %v1465, %v205
    %v1471 = vadd.f32 %v1466, %v206
    %v1472 = vadd.f32 %v1467, %v207
    %v1473 = vadd.f32 %v1468, %v208
    %v1474 = vadd.f32 %v1469, %v209
    %v1475 = vsel %vm752, %v1470, -inf
    %1476 = vmax.xlane.f32.xlu0 %v1475
    %v1477 = vpop.xlane.xlu0 %1476
    %v1478 = vsel %vm752, %v1471, -inf
    %1479 = vmax.xlane.f32.xlu0 %v1478
    %v1480 = vpop.xlane.xlu0 %1479
    %v1481 = vsel %vm752, %v1472, -inf
    %1482 = vmax.xlane.f32.xlu0 %v1481
    %v1483 = vpop.xlane.xlu0 %1482
    %v1484 = vsel %vm752, %v1473, -inf
    %1485 = vmax.xlane.f32.xlu0 %v1484
    %v1486 = vpop.xlane.xlu0 %1485
    %v1487 = vsel %vm765, %v1474, -inf
    %1488 = vmax.xlane.f32.xlu0 %v1487
    %v1489 = vpop.xlane.xlu0 %1488
    %v1490 = vsub.f32 %v1470, %v1477
    %v1491 = vsub.f32 %v1471, %v1480
    %v1492 = vsub.f32 %v1472, %v1483
    %v1493 = vsub.f32 %v1473, %v1486
    %v1494 = vsub.f32 %v1474, %v1489
    %v1495 = vmul.f32 %v1490, 1.442695
    %v1496 = vpow.pop %v1495
    %v1497 = vmul.f32 %v1491, 1.442695
    %v1498 = vpow.pop %v1497
    %v1499 = vmul.f32 %v1492, 1.442695
    %v1500 = vpow.pop %v1499
    %v1501 = vmul.f32 %v1493, 1.442695
    %v1502 = vpow.pop %v1501
    %v1503 = vmul.f32 %v1494, 1.442695
    %v1504 = vpow.pop %v1503
    %v1505 = vsel %vm752, %v1496, 0.0
    %1506 = vadd.xlane.f32.xlu0 %v1505
    %v1507 = vpop.xlane.xlu0 %1506
    %v1508 = vsel %vm752, %v1498, 0.0
    %1509 = vadd.xlane.f32.xlu0 %v1508
    %v1510 = vpop.xlane.xlu0 %1509
    %v1511 = vsel %vm752, %v1500, 0.0
    %1512 = vadd.xlane.f32.xlu0 %v1511
    %v1513 = vpop.xlane.xlu0 %1512
    %v1514 = vsel %vm752, %v1502, 0.0
    %1515 = vadd.xlane.f32.xlu0 %v1514
    %v1516 = vpop.xlane.xlu0 %1515
    %v1517 = vsel %vm765, %v1504, 0.0
    %1518 = vadd.xlane.f32.xlu0 %v1517
    %v1519 = vpop.xlane.xlu0 %1518
    %v1520 = vrcp.pop %v1507
    %v1521 = vmul.f32 %v1496, %v1520
    %v1522 = vrcp.pop %v1510
    %v1523 = vmul.f32 %v1498, %v1522
    %v1524 = vrcp.pop %v1513
    %v1525 = vmul.f32 %v1500, %v1524
    %v1526 = vrcp.pop %v1516
    %v1527 = vmul.f32 %v1502, %v1526
    %v1528 = vrcp.pop %v1519
    %v1529 = vmul.f32 %v1504, %v1528
    %v1531 = vsel %vm752, %v1521, 0
    %v1534 = vsel %vm752, %v1523, 0
    %v1537 = vsel %vm752, %v1525, 0
    %v1540 = vsel %vm752, %v1527, 0
    %v1543 = vsel %vm752, %v1529, 0
    %v1546 = vsel %vm824, %v1342, 0
    %1548 = vmatprep.subr.mxu0 0.0
    %1549 = vmatpush1.msra.mxu0 0.0
    %1550 = vmatprep.subr.mxu0 0.0
    %1551 = vmatpush1.msra.mxu0 0.0
    %1552 = vmatprep.subr.mxu0 0.0
    %1553 = vmatpush1.msra.mxu0 0.0
    %1554 = vmatprep.subr.mxu0 0.0
    %1555 = vmatpush1.msra.mxu0 0.0
    %1556 = vmatprep.subr.mxu0 0.0
    %1557 = vmatpush1.msra.mxu0 0.0
    %1558 = vmatprep.subr.mxu0 0.0
    %1559 = vmatpush1.msra.mxu0 0.0
    %1560 = vmatprep.subr.mxu0 0.0
    %1561 = vmatpush1.msra.mxu0 0.0
    %1562 = vmatprep.subr.mxu0 0.0
    %1563 = vmatpush1.msra.mxu0 0.0
    %1564 = vmatprep.subr.mxu0 0.0
    %1565 = vmatpush1.msra.mxu0 0.0
    %1566 = vmatprep.subr.mxu0 0.0
    %1567 = vmatpush1.msra.mxu0 0.0
    %1568 = vmatprep.subr.mxu0 0.0
    %1569 = vmatpush1.msra.mxu0 0.0
    %1570 = vmatprep.subr.mxu0 0.0
    %1571 = vmatpush1.msra.mxu0 %v1546
    %1572 = vmatprep.subr.mxu0 0.0
    %1573 = vmatpush1.msra.mxu0 %v1337
    %1574 = vmatprep.subr.mxu0 0.0
    %1575 = vmatpush1.msra.mxu0 %v1332
    %1576 = vmatprep.subr.mxu0 0.0
    %1577 = vmatpush1.msra.mxu0 %v1327
    %1578 = vmatprep.subr.mxu0 0.0
    %1579 = vmatpush1.msra.mxu0 %v1322
    %1580 = vmatprep.subr.mxu0 0.0
    %1581 = vmatpush2.msra.mxu0 0.0
    %1582 = vmatprep.subr.mxu0 0.0
    %1583 = vmatpush2.msra.mxu0 0.0
    %1584 = vmatprep.subr.mxu0 0.0
    %1585 = vmatpush2.msra.mxu0 0.0
    %1586 = vmatprep.subr.mxu0 0.0
    %1587 = vmatpush2.msra.mxu0 0.0
    %1588 = vmatprep.subr.mxu0 0.0
    %1589 = vmatpush2.msra.mxu0 0.0
    %1590 = vmatprep.subr.mxu0 0.0
    %1591 = vmatpush2.msra.mxu0 0.0
    %1592 = vmatprep.subr.mxu0 0.0
    %1593 = vmatpush2.msra.mxu0 0.0
    %1594 = vmatprep.subr.mxu0 0.0
    %1595 = vmatpush2.msra.mxu0 0.0
    %1596 = vmatprep.subr.mxu0 0.0
    %1597 = vmatpush2.msra.mxu0 0.0
    %1598 = vmatprep.subr.mxu0 0.0
    %1599 = vmatpush2.msra.mxu0 0.0
    %1600 = vmatprep.subr.mxu0 0.0
    %1601 = vmatpush2.msra.mxu0 0.0
    %1602 = vmatprep.subr.mxu0 0.0
    %1603 = vmatpush2.msra.mxu0 0.0
    %1604 = vmatprep.subr.mxu0 0.0
    %1605 = vmatpush2.msra.mxu0 0.0
    %1606 = vmatprep.subr.mxu0 0.0
    %1607 = vmatpush2.msra.mxu0 0.0
    %1608 = vmatprep.subr.mxu0 0.0
    %1609 = vmatpush2.msra.mxu0 0.0
    %1610 = vmatprep.subr.mxu0 0.0
    %1611 = vmatpush2.msra.mxu0 0.0
    %1612 = vmatprep.mubr.f32.mxu0 0.0
    %1613 = vmatmul.mubr.f32.gmra.mxu0 %v1531
    %v1614 = vpop.f32.mrf.mxu0
    %v1615 = vadd.f32 0.0, %v1614
    %v1616 = vpop.f32.mrf.mxu0
    %1617 = vmatprep.mubr.f32.mxu0 0.0
    %1618 = vmatmul.mubr.f32.gmra.mxu0 %v1534
    %v1619 = vpop.f32.mrf.mxu0
    %v1620 = vadd.f32 0.0, %v1619
    %v1621 = vpop.f32.mrf.mxu0
    %1622 = vmatprep.mubr.f32.mxu0 0.0
    %1623 = vmatmul.mubr.f32.gmra.mxu0 %v1537
    %v1624 = vpop.f32.mrf.mxu0
    %v1625 = vadd.f32 0.0, %v1624
    %v1626 = vpop.f32.mrf.mxu0
    %1627 = vmatprep.mubr.f32.mxu0 0.0
    %1628 = vmatmul.mubr.f32.gmra.mxu0 %v1540
    %v1629 = vpop.f32.mrf.mxu0
    %v1630 = vadd.f32 0.0, %v1629
    %v1631 = vpop.f32.mrf.mxu0
    %1632 = vmatprep.mubr.f32.mxu0 0.0
    %1633 = vmatmul.mubr.f32.gmra.mxu0 %v1543
    %v1634 = vpop.f32.mrf.mxu0
    %v1635 = vadd.f32 0.0, %v1634
    %v1636 = vpop.f32.mrf.mxu0
    %1637 = vdwg.mxu0
    %s1638 = scalar_lea.vmem %s12, 16
    %v1639 = vld [vmem:[%s1638] sm:$0xff]
    %v1640 = vld [vmem:[%s1638 + $0x8] sm:$0xff]
    %v1642 = vsel %vm621, %v1615, 0
    %v1645 = vsel %vm621, %v1620, 0
    %v1648 = vsel %vm621, %v1625, 0
    %v1651 = vsel %vm621, %v1630, 0
    %v1654 = vsel %vm621, %v1635, 0
    %1656 = vmatprep.subr.mxu0 0.0
    %1657 = vmatpush1.msra.mxu0 0.0
    %1658 = vmatprep.subr.mxu0 0.0
    %1659 = vmatpush1.msra.mxu0 0.0
    %1660 = vmatprep.subr.mxu0 0.0
    %1661 = vmatpush1.msra.mxu0 0.0
    %1662 = vmatprep.subr.mxu0 0.0
    %1663 = vmatpush1.msra.mxu0 0.0
    %1664 = vmatprep.subr.mxu0 0.0
    %1665 = vmatpush1.msra.mxu0 0.0
    %1666 = vmatprep.subr.mxu0 0.0
    %1667 = vmatpush1.msra.mxu0 0.0
    %1668 = vmatprep.subr.mxu0 0.0
    %1669 = vmatpush1.msra.mxu0 0.0
    %1670 = vmatprep.subr.mxu0 0.0
    %1671 = vmatpush1.msra.mxu0 0.0
    %1672 = vmatprep.subr.mxu0 0.0
    %1673 = vmatpush1.msra.mxu0 0.0
    %1674 = vmatprep.subr.mxu0 0.0
    %1675 = vmatpush1.msra.mxu0 0.0
    %1676 = vmatprep.subr.mxu0 0.0
    %1677 = vmatpush1.msra.mxu0 0.0
    %1678 = vmatprep.subr.mxu0 0.0
    %1679 = vmatpush1.msra.mxu0 0.0
    %1680 = vmatprep.subr.mxu0 0.0
    %1681 = vmatpush1.msra.mxu0 0.0
    %1682 = vmatprep.subr.mxu0 0.0
    %1683 = vmatpush1.msra.mxu0 0.0
    %1684 = vmatprep.subr.mxu0 0.0
    %1685 = vmatpush1.msra.mxu0 %v1640
    %1686 = vmatprep.subr.mxu0 0.0
    %1687 = vmatpush1.msra.mxu0 %v1639
    %1688 = vmatprep.subr.mxu0 0.0
    %1689 = vmatpush2.msra.mxu0 0.0
    %1690 = vmatprep.subr.mxu0 0.0
    %1691 = vmatpush2.msra.mxu0 0.0
    %1692 = vmatprep.subr.mxu0 0.0
    %1693 = vmatpush2.msra.mxu0 0.0
    %1694 = vmatprep.subr.mxu0 0.0
    %1695 = vmatpush2.msra.mxu0 0.0
    %1696 = vmatprep.subr.mxu0 0.0
    %1697 = vmatpush2.msra.mxu0 0.0
    %1698 = vmatprep.subr.mxu0 0.0
    %1699 = vmatpush2.msra.mxu0 0.0
    %1700 = vmatprep.subr.mxu0 0.0
    %1701 = vmatpush2.msra.mxu0 0.0
    %1702 = vmatprep.subr.mxu0 0.0
    %1703 = vmatpush2.msra.mxu0 0.0
    %1704 = vmatprep.subr.mxu0 0.0
    %1705 = vmatpush2.msra.mxu0 0.0
    %1706 = vmatprep.subr.mxu0 0.0
    %1707 = vmatpush2.msra.mxu0 0.0
    %1708 = vmatprep.subr.mxu0 0.0
    %1709 = vmatpush2.msra.mxu0 0.0
    %1710 = vmatprep.subr.mxu0 0.0
    %1711 = vmatpush2.msra.mxu0 0.0
    %1712 = vmatprep.subr.mxu0 0.0
    %1713 = vmatpush2.msra.mxu0 0.0
    %1714 = vmatprep.subr.mxu0 0.0
    %1715 = vmatpush2.msra.mxu0 0.0
    %1716 = vmatprep.subr.mxu0 0.0
    %1717 = vmatpush2.msra.mxu0 0.0
    %1718 = vmatprep.subr.mxu0 0.0
    %1719 = vmatpush2.msra.mxu0 0.0
    %1720 = vmatprep.mubr.f32.mxu0 0.0
    %1721 = vmatmul.mubr.f32.gmra.mxu0 %v1642
    %v1722 = vpop.f32.mrf.mxu0
    %v1723 = vadd.f32 0.0, %v1722
    %v1724 = vpop.f32.mrf.mxu0
    %1725 = vmatprep.mubr.f32.mxu0 0.0
    %1726 = vmatmul.mubr.f32.gmra.mxu0 %v1645
    %v1727 = vpop.f32.mrf.mxu0
    %v1728 = vadd.f32 0.0, %v1727
    %v1729 = vpop.f32.mrf.mxu0
    %1730 = vmatprep.mubr.f32.mxu0 0.0
    %1731 = vmatmul.mubr.f32.gmra.mxu0 %v1648
    %v1732 = vpop.f32.mrf.mxu0
    %v1733 = vadd.f32 0.0, %v1732
    %v1734 = vpop.f32.mrf.mxu0
    %1735 = vmatprep.mubr.f32.mxu0 0.0
    %1736 = vmatmul.mubr.f32.gmra.mxu0 %v1651
    %v1737 = vpop.f32.mrf.mxu0
    %v1738 = vadd.f32 0.0, %v1737
    %v1739 = vpop.f32.mrf.mxu0
    %1740 = vmatprep.mubr.f32.mxu0 0.0
    %1741 = vmatmul.mubr.f32.gmra.mxu0 %v1654
    %v1742 = vpop.f32.mrf.mxu0
    %v1743 = vadd.f32 0.0, %v1742
    %v1744 = vpop.f32.mrf.mxu0
    %1745 = vdwg.mxu0
    %v1746 = vadd.f32 %v1031, %v1723
    %v1747 = vadd.f32 %v1032, %v1728
    %v1748 = vadd.f32 %v1033, %v1733
    %v1749 = vadd.f32 %v1034, %v1738
    %v1750 = vadd.f32 %v1035, %v1743
    %v1751 = vld [vmem:[%s14] sm:$0x1]
    %v1753 = vlaneseq
    %v1754 = vshrl.u32 %v1753, 7
    %v1755 = vsub.s32 0, %v1754
    %v1756 = vrot.slane %v1751, %v1755
    %v1758 = vmul.f32 %v1756, %v1746
    %v1759 = vmul.f32 %v1756, %v1747
    %v1760 = vmul.f32 %v1756, %v1748
    %v1761 = vmul.f32 %v1756, %v1749
    %v1762 = vmul.f32 %v1756, %v1750
    %v1763 = vadd.f32 %v182, %v1758
    %v1764 = vadd.f32 %v187, %v1759
    %v1765 = vadd.f32 %v192, %v1760
    %v1766 = vadd.f32 %v197, %v1761
    %v1767 = vadd.f32 %v202, %v1762
    %v1768 = vld [vmem:[%s15] sm:$0x1]
    %v1769 = vld [vmem:[%s16] sm:$0x1]
    %v1770 = vsel %vm212, %v1763, 0.0
    %1771 = vadd.xlane.f32.xlu0 %v1770
    %v1772 = vpop.xlane.xlu0 %1771
    %v1773 = vsel %vm212, %v1764, 0.0
    %1774 = vadd.xlane.f32.xlu0 %v1773
    %v1775 = vpop.xlane.xlu0 %1774
    %v1776 = vsel %vm212, %v1765, 0.0
    %1777 = vadd.xlane.f32.xlu0 %v1776
    %v1778 = vpop.xlane.xlu0 %1777
    %v1779 = vsel %vm212, %v1766, 0.0
    %1780 = vadd.xlane.f32.xlu0 %v1779
    %v1781 = vpop.xlane.xlu0 %1780
    %v1782 = vsel %vm225, %v1767, 0.0
    %1783 = vadd.xlane.f32.xlu0 %v1782
    %v1784 = vpop.xlane.xlu0 %1783
    %v1785 = vmul.f32 %v1772, %v229
    %v1786 = vmul.f32 %v1775, %v229
    %v1787 = vmul.f32 %v1778, %v229
    %v1788 = vmul.f32 %v1781, %v229
    %v1789 = vmul.f32 %v1784, %v229
    %v1790 = vsub.f32 %v1763, %v1785
    %v1791 = vsub.f32 %v1764, %v1786
    %v1792 = vsub.f32 %v1765, %v1787
    %v1793 = vsub.f32 %v1766, %v1788
    %v1794 = vsub.f32 %v1767, %v1789
    %v1795 = vmul.f32 %v1790, %v1790
    %v1796 = vmul.f32 %v1791, %v1791
    %v1797 = vmul.f32 %v1792, %v1792
    %v1798 = vmul.f32 %v1793, %v1793
    %v1799 = vmul.f32 %v1794, %v1794
    %v1800 = vsel %vm212, %v1795, 0.0
    %1801 = vadd.xlane.f32.xlu0 %v1800
    %v1802 = vpop.xlane.xlu0 %1801
    %v1803 = vsel %vm212, %v1796, 0.0
    %1804 = vadd.xlane.f32.xlu0 %v1803
    %v1805 = vpop.xlane.xlu0 %1804
    %v1806 = vsel %vm212, %v1797, 0.0
    %1807 = vadd.xlane.f32.xlu0 %v1806
    %v1808 = vpop.xlane.xlu0 %1807
    %v1809 = vsel %vm212, %v1798, 0.0
    %1810 = vadd.xlane.f32.xlu0 %v1809
    %v1811 = vpop.xlane.xlu0 %1810
    %v1812 = vsel %vm225, %v1799, 0.0
    %1813 = vadd.xlane.f32.xlu0 %v1812
    %v1814 = vpop.xlane.xlu0 %1813
    %v1815 = vmul.f32 %v1802, %v229
    %v1816 = vmul.f32 %v1805, %v229
    %v1817 = vmul.f32 %v1808, %v229
    %v1818 = vmul.f32 %v1811, %v229
    %v1819 = vmul.f32 %v1814, %v229
    %v1820 = vadd.f32 %v1815, 1e-06
    %v1821 = vadd.f32 %v1816, 1e-06
    %v1822 = vadd.f32 %v1817, 1e-06
    %v1823 = vadd.f32 %v1818, 1e-06
    %v1824 = vadd.f32 %v1819, 1e-06
    %v1825 = vrsqrt.pop %v1820
    %v1826 = vrsqrt.pop %v1821
    %v1827 = vrsqrt.pop %v1822
    %v1828 = vrsqrt.pop %v1823
    %v1829 = vrsqrt.pop %v1824
    %v1830 = vmul.f32 %v1790, %v1825
    %v1831 = vmul.f32 %v1791, %v1826
    %v1832 = vmul.f32 %v1792, %v1827
    %v1833 = vmul.f32 %v1793, %v1828
    %v1834 = vmul.f32 %v1794, %v1829
    %v1836 = vlaneseq
    %v1837 = vshrl.u32 %v1836, 7
    %v1838 = vsub.s32 0, %v1837
    %v1839 = vrot.slane %v1768, %v1838
    %v1841 = vmul.f32 %v1830, %v1839
    %v1842 = vmul.f32 %v1831, %v1839
    %v1843 = vmul.f32 %v1832, %v1839
    %v1844 = vmul.f32 %v1833, %v1839
    %v1845 = vmul.f32 %v1834, %v1839
    %v1847 = vlaneseq
    %v1848 = vshrl.u32 %v1847, 7
    %v1849 = vsub.s32 0, %v1848
    %v1850 = vrot.slane %v1769, %v1849
    %v1852 = vadd.f32 %v1841, %v1850
    %v1853 = vadd.f32 %v1842, %v1850
    %v1854 = vadd.f32 %v1843, %v1850
    %v1855 = vadd.f32 %v1844, %v1850
    %v1856 = vadd.f32 %v1845, %v1850
    %v1857 = vld [vmem:[%s17] sm:$0xff]
    %v1858 = vld [vmem:[%s17 + $0x8] sm:$0xff]
    %v1859 = vld [vmem:[%s17 + $0x10] sm:$0xff]
    %v1860 = vld [vmem:[%s17 + $0x18] sm:$0xff]
    %v1861 = vld [vmem:[%s18] sm:$0x1]
    %v1863 = vlaneseq
    %v1864 = vshrl.u32 %v1863, 7
    %v1865 = vsub.s32 0, %v1864
    %v1866 = vrot.slane %v1861, %v1865
    %v1869 = vsel %vm212, %v1852, 0
    %v1872 = vsel %vm212, %v1853, 0
    %v1875 = vsel %vm212, %v1854, 0
    %v1878 = vsel %vm212, %v1855, 0
    %v1881 = vsel %vm212, %v1856, 0
    %1883 = vmatprep.subr.mxu0 0.0
    %1884 = vmatpush1.msra.mxu0 0.0
    %1885 = vmatprep.subr.mxu0 0.0
    %1886 = vmatpush1.msra.mxu0 0.0
    %1887 = vmatprep.subr.mxu0 0.0
    %1888 = vmatpush1.msra.mxu0 0.0
    %1889 = vmatprep.subr.mxu0 0.0
    %1890 = vmatpush1.msra.mxu0 0.0
    %1891 = vmatprep.subr.mxu0 0.0
    %1892 = vmatpush1.msra.mxu0 0.0
    %1893 = vmatprep.subr.mxu0 0.0
    %1894 = vmatpush1.msra.mxu0 0.0
    %1895 = vmatprep.subr.mxu0 0.0
    %1896 = vmatpush1.msra.mxu0 0.0
    %1897 = vmatprep.subr.mxu0 0.0
    %1898 = vmatpush1.msra.mxu0 0.0
    %1899 = vmatprep.subr.mxu0 0.0
    %1900 = vmatpush1.msra.mxu0 0.0
    %1901 = vmatprep.subr.mxu0 0.0
    %1902 = vmatpush1.msra.mxu0 0.0
    %1903 = vmatprep.subr.mxu0 0.0
    %1904 = vmatpush1.msra.mxu0 0.0
    %1905 = vmatprep.subr.mxu0 0.0
    %1906 = vmatpush1.msra.mxu0 0.0
    %1907 = vmatprep.subr.mxu0 0.0
    %1908 = vmatpush1.msra.mxu0 %v1860
    %1909 = vmatprep.subr.mxu0 0.0
    %1910 = vmatpush1.msra.mxu0 %v1859
    %1911 = vmatprep.subr.mxu0 0.0
    %1912 = vmatpush1.msra.mxu0 %v1858
    %1913 = vmatprep.subr.mxu0 0.0
    %1914 = vmatpush1.msra.mxu0 %v1857
    %1915 = vmatprep.subr.mxu0 0.0
    %1916 = vmatpush2.msra.mxu0 0.0
    %1917 = vmatprep.subr.mxu0 0.0
    %1918 = vmatpush2.msra.mxu0 0.0
    %1919 = vmatprep.subr.mxu0 0.0
    %1920 = vmatpush2.msra.mxu0 0.0
    %1921 = vmatprep.subr.mxu0 0.0
    %1922 = vmatpush2.msra.mxu0 0.0
    %1923 = vmatprep.subr.mxu0 0.0
    %1924 = vmatpush2.msra.mxu0 0.0
    %1925 = vmatprep.subr.mxu0 0.0
    %1926 = vmatpush2.msra.mxu0 0.0
    %1927 = vmatprep.subr.mxu0 0.0
    %1928 = vmatpush2.msra.mxu0 0.0
    %1929 = vmatprep.subr.mxu0 0.0
    %1930 = vmatpush2.msra.mxu0 0.0
    %1931 = vmatprep.subr.mxu0 0.0
    %1932 = vmatpush2.msra.mxu0 0.0
    %1933 = vmatprep.subr.mxu0 0.0
    %1934 = vmatpush2.msra.mxu0 0.0
    %1935 = vmatprep.subr.mxu0 0.0
    %1936 = vmatpush2.msra.mxu0 0.0
    %1937 = vmatprep.subr.mxu0 0.0
    %1938 = vmatpush2.msra.mxu0 0.0
    %1939 = vmatprep.subr.mxu0 0.0
    %1940 = vmatpush2.msra.mxu0 0.0
    %1941 = vmatprep.subr.mxu0 0.0
    %1942 = vmatpush2.msra.mxu0 0.0
    %1943 = vmatprep.subr.mxu0 0.0
    %1944 = vmatpush2.msra.mxu0 0.0
    %1945 = vmatprep.subr.mxu0 0.0
    %1946 = vmatpush2.msra.mxu0 0.0
    %1947 = vmatprep.mubr.f32.mxu0 0.0
    %1948 = vmatmul.mubr.f32.gmra.mxu0 %v1869
    %v1949 = vpop.f32.mrf.mxu0
    %v1950 = vadd.f32 %v1866, %v1949
    %v1951 = vpop.f32.mrf.mxu0
    %1952 = vmatprep.mubr.f32.mxu0 0.0
    %1953 = vmatmul.mubr.f32.gmra.mxu0 %v1872
    %v1954 = vpop.f32.mrf.mxu0
    %v1955 = vadd.f32 %v1866, %v1954
    %v1956 = vpop.f32.mrf.mxu0
    %1957 = vmatprep.mubr.f32.mxu0 0.0
    %1958 = vmatmul.mubr.f32.gmra.mxu0 %v1875
    %v1959 = vpop.f32.mrf.mxu0
    %v1960 = vadd.f32 %v1866, %v1959
    %v1961 = vpop.f32.mrf.mxu0
    %1962 = vmatprep.mubr.f32.mxu0 0.0
    %1963 = vmatmul.mubr.f32.gmra.mxu0 %v1878
    %v1964 = vpop.f32.mrf.mxu0
    %v1965 = vadd.f32 %v1866, %v1964
    %v1966 = vpop.f32.mrf.mxu0
    %1967 = vmatprep.mubr.f32.mxu0 0.0
    %1968 = vmatmul.mubr.f32.gmra.mxu0 %v1881
    %v1969 = vpop.f32.mrf.mxu0
    %v1970 = vadd.f32 %v1866, %v1969
    %v1971 = vpop.f32.mrf.mxu0
    %1972 = vdwg.mxu0
    %v1973 = vmul.f32 %v1950, 0.5
    %v1974 = vmul.f32 %v1955, 0.5
    %v1975 = vmul.f32 %v1960, 0.5
    %v1976 = vmul.f32 %v1965, 0.5
    %v1977 = vmul.f32 %v1970, 0.5
    %v1978 = vmul.f32 %v1950, 0.70710677
    %v1979 = vmul.f32 %v1955, 0.70710677
    %v1980 = vmul.f32 %v1960, 0.70710677
    %v1981 = vmul.f32 %v1965, 0.70710677
    %v1982 = vmul.f32 %v1970, 0.70710677
    %v1983 = vand.u32 2147483647, %v1978
    %v1984 = vand.u32 2147483647, %v1979
    %v1985 = vand.u32 2147483647, %v1980
    %v1986 = vand.u32 2147483647, %v1981
    %v1987 = vand.u32 2147483647, %v1982
    %v1988 = vmul.f32 %v1983, 0.3275911
    %v1989 = vmul.f32 %v1984, 0.3275911
    %v1990 = vmul.f32 %v1985, 0.3275911
    %v1991 = vmul.f32 %v1986, 0.3275911
    %v1992 = vmul.f32 %v1987, 0.3275911
    %v1993 = vadd.f32 %v1988, 1.0
    %v1994 = vadd.f32 %v1989, 1.0
    %v1995 = vadd.f32 %v1990, 1.0
    %v1996 = vadd.f32 %v1991, 1.0
    %v1997 = vadd.f32 %v1992, 1.0
    %v1998 = vrcp.pop %v1993
    %v1999 = vmul.f32 1.0, %v1998
    %v2000 = vrcp.pop %v1994
    %v2001 = vmul.f32 1.0, %v2000
    %v2002 = vrcp.pop %v1995
    %v2003 = vmul.f32 1.0, %v2002
    %v2004 = vrcp.pop %v1996
    %v2005 = vmul.f32 1.0, %v2004
    %v2006 = vrcp.pop %v1997
    %v2007 = vmul.f32 1.0, %v2006
    %v2008 = vmul.f32 %v1999, 1.0614054
    %v2009 = vmul.f32 %v2001, 1.0614054
    %v2010 = vmul.f32 %v2003, 1.0614054
    %v2011 = vmul.f32 %v2005, 1.0614054
    %v2012 = vmul.f32 %v2007, 1.0614054
    %v2013 = vadd.f32 %v2008, -1.4531521
    %v2014 = vadd.f32 %v2009, -1.4531521
    %v2015 = vadd.f32 %v2010, -1.4531521
    %v2016 = vadd.f32 %v2011, -1.4531521
    %v2017 = vadd.f32 %v2012, -1.4531521
    %v2018 = vmul.f32 %v2013, %v1999
    %v2019 = vmul.f32 %v2014, %v2001
    %v2020 = vmul.f32 %v2015, %v2003
    %v2021 = vmul.f32 %v2016, %v2005
    %v2022 = vmul.f32 %v2017, %v2007
    %v2023 = vadd.f32 %v2018, 1.4214138
    %v2024 = vadd.f32 %v2019, 1.4214138
    %v2025 = vadd.f32 %v2020, 1.4214138
    %v2026 = vadd.f32 %v2021, 1.4214138
    %v2027 = vadd.f32 %v2022, 1.4214138
    %v2028 = vmul.f32 %v2023, %v1999
    %v2029 = vmul.f32 %v2024, %v2001
    %v2030 = vmul.f32 %v2025, %v2003
    %v2031 = vmul.f32 %v2026, %v2005
    %v2032 = vmul.f32 %v2027, %v2007
    %v2033 = vadd.f32 %v2028, -0.28449672
    %v2034 = vadd.f32 %v2029, -0.28449672
    %v2035 = vadd.f32 %v2030, -0.28449672
    %v2036 = vadd.f32 %v2031, -0.28449672
    %v2037 = vadd.f32 %v2032, -0.28449672
    %v2038 = vmul.f32 %v2033, %v1999
    %v2039 = vmul.f32 %v2034, %v2001
    %v2040 = vmul.f32 %v2035, %v2003
    %v2041 = vmul.f32 %v2036, %v2005
    %v2042 = vmul.f32 %v2037, %v2007
    %v2043 = vadd.f32 %v2038, 0.2548296
    %v2044 = vadd.f32 %v2039, 0.2548296
    %v2045 = vadd.f32 %v2040, 0.2548296
    %v2046 = vadd.f32 %v2041, 0.2548296
    %v2047 = vadd.f32 %v2042, 0.2548296
    %v2048 = vmul.f32 %v2043, %v1999
    %v2049 = vmul.f32 %v2044, %v2001
    %v2050 = vmul.f32 %v2045, %v2003
    %v2051 = vmul.f32 %v2046, %v2005
    %v2052 = vmul.f32 %v2047, %v2007
    %v2053 = vsub.f32 0.0, %v1983
    %v2054 = vsub.f32 0.0, %v1984
    %v2055 = vsub.f32 0.0, %v1985
    %v2056 = vsub.f32 0.0, %v1986
    %v2057 = vsub.f32 0.0, %v1987
    %v2058 = vmul.f32 %v2053, %v1983
    %v2059 = vmul.f32 %v2054, %v1984
    %v2060 = vmul.f32 %v2055, %v1985
    %v2061 = vmul.f32 %v2056, %v1986
    %v2062 = vmul.f32 %v2057, %v1987
    %v2063 = vmul.f32 %v2058, 1.442695
    %v2064 = vpow.pop %v2063
    %v2065 = vmul.f32 %v2059, 1.442695
    %v2066 = vpow.pop %v2065
    %v2067 = vmul.f32 %v2060, 1.442695
    %v2068 = vpow.pop %v2067
    %v2069 = vmul.f32 %v2061, 1.442695
    %v2070 = vpow.pop %v2069
    %v2071 = vmul.f32 %v2062, 1.442695
    %v2072 = vpow.pop %v2071
    %v2073 = vmul.f32 %v2048, %v2064
    %v2074 = vmul.f32 %v2049, %v2066
    %v2075 = vmul.f32 %v2050, %v2068
    %v2076 = vmul.f32 %v2051, %v2070
    %v2077 = vmul.f32 %v2052, %v2072
    %v2078 = vsub.f32 1.0, %v2073
    %v2079 = vsub.f32 1.0, %v2074
    %v2080 = vsub.f32 1.0, %v2075
    %v2081 = vsub.f32 1.0, %v2076
    %v2082 = vsub.f32 1.0, %v2077
    %vm2083 = vcmp.ge.f32.partialorder %v1978, 0.0
    %vm2084 = vcmp.ge.f32.partialorder %v1979, 0.0
    %vm2085 = vcmp.ge.f32.partialorder %v1980, 0.0
    %vm2086 = vcmp.ge.f32.partialorder %v1981, 0.0
    %vm2087 = vcmp.ge.f32.partialorder %v1982, 0.0
    %v2088 = vsub.f32 0.0, %v2078
    %v2089 = vsub.f32 0.0, %v2079
    %v2090 = vsub.f32 0.0, %v2080
    %v2091 = vsub.f32 0.0, %v2081
    %v2092 = vsub.f32 0.0, %v2082
    %v2093 = vsel %vm2083, %v2078, %v2088
    %v2094 = vsel %vm2084, %v2079, %v2089
    %v2095 = vsel %vm2085, %v2080, %v2090
    %v2096 = vsel %vm2086, %v2081, %v2091
    %v2097 = vsel %vm2087, %v2082, %v2092
    %v2098 = vadd.f32 %v2093, 1.0
    %v2099 = vadd.f32 %v2094, 1.0
    %v2100 = vadd.f32 %v2095, 1.0
    %v2101 = vadd.f32 %v2096, 1.0
    %v2102 = vadd.f32 %v2097, 1.0
    %v2103 = vmul.f32 %v1973, %v2098
    %v2104 = vmul.f32 %v1974, %v2099
    %v2105 = vmul.f32 %v1975, %v2100
    %v2106 = vmul.f32 %v1976, %v2101
    %v2107 = vmul.f32 %v1977, %v2102
    %v2108 = vld [vmem:[%s19] sm:$0xff]
    %v2109 = vld [vmem:[%s19 + $0x8] sm:$0xff]
    %v2110 = vld [vmem:[%s19 + $0x10] sm:$0xff]
    %v2111 = vld [vmem:[%s19 + $0x18] sm:$0xff]
    %v2112 = vld [vmem:[%s19 + $0x20] sm:$0xff]
    %v2113 = vld [vmem:[%s19 + $0x28] sm:$0xff]
    %v2114 = vld [vmem:[%s19 + $0x30] sm:$0xff]
    %v2115 = vld [vmem:[%s19 + $0x38] sm:$0xff]
    %v2116 = vld [vmem:[%s20] sm:$0x1]
    %v2118 = vlaneseq
    %v2119 = vshrl.u32 %v2118, 7
    %v2120 = vsub.s32 0, %v2119
    %v2121 = vrot.slane %v2116, %v2120
    %vm2123 = vcmask 523264
    %v2125 = vsel %vm2123, %v2103, 0
    %v2128 = vsel %vm2123, %v2104, 0
    %v2131 = vsel %vm2123, %v2105, 0
    %v2134 = vsel %vm2123, %v2106, 0
    %v2137 = vsel %vm2123, %v2107, 0
    %2139 = vmatprep.subr.mxu0 0.0
    %2140 = vmatpush1.msra.mxu0 0.0
    %2141 = vmatprep.subr.mxu0 0.0
    %2142 = vmatpush1.msra.mxu0 0.0
    %2143 = vmatprep.subr.mxu0 0.0
    %2144 = vmatpush1.msra.mxu0 0.0
    %2145 = vmatprep.subr.mxu0 0.0
    %2146 = vmatpush1.msra.mxu0 0.0
    %2147 = vmatprep.subr.mxu0 0.0
    %2148 = vmatpush1.msra.mxu0 0.0
    %2149 = vmatprep.subr.mxu0 0.0
    %2150 = vmatpush1.msra.mxu0 0.0
    %2151 = vmatprep.subr.mxu0 0.0
    %2152 = vmatpush1.msra.mxu0 0.0
    %2153 = vmatprep.subr.mxu0 0.0
    %2154 = vmatpush1.msra.mxu0 0.0
    %2155 = vmatprep.subr.mxu0 0.0
    %2156 = vmatpush1.msra.mxu0 %v2115
    %2157 = vmatprep.subr.mxu0 0.0
    %2158 = vmatpush1.msra.mxu0 %v2114
    %2159 = vmatprep.subr.mxu0 0.0
    %2160 = vmatpush1.msra.mxu0 %v2113
    %2161 = vmatprep.subr.mxu0 0.0
    %2162 = vmatpush1.msra.mxu0 %v2112
    %2163 = vmatprep.subr.mxu0 0.0
    %2164 = vmatpush1.msra.mxu0 %v2111
    %2165 = vmatprep.subr.mxu0 0.0
    %2166 = vmatpush1.msra.mxu0 %v2110
    %2167 = vmatprep.subr.mxu0 0.0
    %2168 = vmatpush1.msra.mxu0 %v2109
    %2169 = vmatprep.subr.mxu0 0.0
    %2170 = vmatpush1.msra.mxu0 %v2108
    %2171 = vmatprep.subr.mxu0 0.0
    %2172 = vmatpush2.msra.mxu0 0.0
    %2173 = vmatprep.subr.mxu0 0.0
    %2174 = vmatpush2.msra.mxu0 0.0
    %2175 = vmatprep.subr.mxu0 0.0
    %2176 = vmatpush2.msra.mxu0 0.0
    %2177 = vmatprep.subr.mxu0 0.0
    %2178 = vmatpush2.msra.mxu0 0.0
    %2179 = vmatprep.subr.mxu0 0.0
    %2180 = vmatpush2.msra.mxu0 0.0
    %2181 = vmatprep.subr.mxu0 0.0
    %2182 = vmatpush2.msra.mxu0 0.0
    %2183 = vmatprep.subr.mxu0 0.0
    %2184 = vmatpush2.msra.mxu0 0.0
    %2185 = vmatprep.subr.mxu0 0.0
    %2186 = vmatpush2.msra.mxu0 0.0
    %2187 = vmatprep.subr.mxu0 0.0
    %2188 = vmatpush2.msra.mxu0 0.0
    %2189 = vmatprep.subr.mxu0 0.0
    %2190 = vmatpush2.msra.mxu0 0.0
    %2191 = vmatprep.subr.mxu0 0.0
    %2192 = vmatpush2.msra.mxu0 0.0
    %2193 = vmatprep.subr.mxu0 0.0
    %2194 = vmatpush2.msra.mxu0 0.0
    %2195 = vmatprep.subr.mxu0 0.0
    %2196 = vmatpush2.msra.mxu0 0.0
    %2197 = vmatprep.subr.mxu0 0.0
    %2198 = vmatpush2.msra.mxu0 0.0
    %2199 = vmatprep.subr.mxu0 0.0
    %2200 = vmatpush2.msra.mxu0 0.0
    %2201 = vmatprep.subr.mxu0 0.0
    %2202 = vmatpush2.msra.mxu0 0.0
    %2203 = vmatprep.mubr.f32.mxu0 0.0
    %2204 = vmatmul.mubr.f32.gmra.mxu0 %v2125
    %v2205 = vpop.f32.mrf.mxu0
    %v2206 = vadd.f32 %v2121, %v2205
    %v2207 = vpop.f32.mrf.mxu0
    %2208 = vmatprep.mubr.f32.mxu0 0.0
    %2209 = vmatmul.mubr.f32.gmra.mxu0 %v2128
    %v2210 = vpop.f32.mrf.mxu0
    %v2211 = vadd.f32 %v2121, %v2210
    %v2212 = vpop.f32.mrf.mxu0
    %2213 = vmatprep.mubr.f32.mxu0 0.0
    %2214 = vmatmul.mubr.f32.gmra.mxu0 %v2131
    %v2215 = vpop.f32.mrf.mxu0
    %v2216 = vadd.f32 %v2121, %v2215
    %v2217 = vpop.f32.mrf.mxu0
    %2218 = vmatprep.mubr.f32.mxu0 0.0
    %2219 = vmatmul.mubr.f32.gmra.mxu0 %v2134
    %v2220 = vpop.f32.mrf.mxu0
    %v2221 = vadd.f32 %v2121, %v2220
    %v2222 = vpop.f32.mrf.mxu0
    %2223 = vmatprep.mubr.f32.mxu0 0.0
    %2224 = vmatmul.mubr.f32.gmra.mxu0 %v2137
    %v2225 = vpop.f32.mrf.mxu0
    %v2226 = vadd.f32 %v2121, %v2225
    %v2227 = vpop.f32.mrf.mxu0
    %2228 = vdwg.mxu0
    %v2229 = vld [vmem:[%s21] sm:$0x1]
    %v2231 = vlaneseq
    %v2232 = vshrl.u32 %v2231, 7
    %v2233 = vsub.s32 0, %v2232
    %v2234 = vrot.slane %v2229, %v2233
    %v2236 = vmul.f32 %v2234, %v2206
    %v2237 = vmul.f32 %v2234, %v2211
    %v2238 = vmul.f32 %v2234, %v2216
    %v2239 = vmul.f32 %v2234, %v2221
    %v2240 = vmul.f32 %v2234, %v2226
    %v2241 = vadd.f32 %v1763, %v2236
    %v2242 = vadd.f32 %v1764, %v2237
    %v2243 = vadd.f32 %v1765, %v2238
    %v2244 = vadd.f32 %v1766, %v2239
    %v2245 = vadd.f32 %v1767, %v2240
    %2246 = vst.msk [vmem:[#allocation2] sm:$0xff] %vm212, %v2241
    %2247 = vst.msk [vmem:[#allocation2 + $0x8] sm:$0xff] %vm212, %v2242
    %2248 = vst.msk [vmem:[#allocation2 + $0x10] sm:$0xff] %vm212, %v2243
    %2249 = vst.msk [vmem:[#allocation2 + $0x18] sm:$0xff] %vm212, %v2244
    %s2250 = scalar_lea.vmem %s4, 1
    %v2251 = vld [vmem:[%s2250] sm:$0x1]
    %s2252 = scalar_lea.vmem %s5, 1
    %v2253 = vld [vmem:[%s2252] sm:$0x1]
    %v2254 = vsel %vm212, %v2241, 0.0
    %2255 = vadd.xlane.f32.xlu0 %v2254
    %v2256 = vpop.xlane.xlu0 %2255
    %v2257 = vsel %vm212, %v2242, 0.0
    %2258 = vadd.xlane.f32.xlu0 %v2257
    %v2259 = vpop.xlane.xlu0 %2258
    %v2260 = vsel %vm212, %v2243, 0.0
    %2261 = vadd.xlane.f32.xlu0 %v2260
    %v2262 = vpop.xlane.xlu0 %2261
    %v2263 = vsel %vm212, %v2244, 0.0
    %2264 = vadd.xlane.f32.xlu0 %v2263
    %v2265 = vpop.xlane.xlu0 %2264
    %v2266 = vsel %vm225, %v2245, 0.0
    %2267 = vadd.xlane.f32.xlu0 %v2266
    %v2268 = vpop.xlane.xlu0 %2267
    %v2269 = vmul.f32 %v2256, %v229
    %v2270 = vmul.f32 %v2259, %v229
    %v2271 = vmul.f32 %v2262, %v229
    %v2272 = vmul.f32 %v2265, %v229
    %v2273 = vmul.f32 %v2268, %v229
    %v2274 = vsub.f32 %v2241, %v2269
    %v2275 = vsub.f32 %v2242, %v2270
    %v2276 = vsub.f32 %v2243, %v2271
    %v2277 = vsub.f32 %v2244, %v2272
    %v2278 = vsub.f32 %v2245, %v2273
    %v2279 = vmul.f32 %v2274, %v2274
    %v2280 = vmul.f32 %v2275, %v2275
    %v2281 = vmul.f32 %v2276, %v2276
    %v2282 = vmul.f32 %v2277, %v2277
    %v2283 = vmul.f32 %v2278, %v2278
    %v2284 = vsel %vm212, %v2279, 0.0
    %2285 = vadd.xlane.f32.xlu0 %v2284
    %v2286 = vpop.xlane.xlu0 %2285
    %v2287 = vsel %vm212, %v2280, 0.0
    %2288 = vadd.xlane.f32.xlu0 %v2287
    %v2289 = vpop.xlane.xlu0 %2288
    %v2290 = vsel %vm212, %v2281, 0.0
    %2291 = vadd.xlane.f32.xlu0 %v2290
    %v2292 = vpop.xlane.xlu0 %2291
    %v2293 = vsel %vm212, %v2282, 0.0
    %2294 = vadd.xlane.f32.xlu0 %v2293
    %v2295 = vpop.xlane.xlu0 %2294
    %v2296 = vsel %vm225, %v2283, 0.0
    %2297 = vadd.xlane.f32.xlu0 %v2296
    %v2298 = vpop.xlane.xlu0 %2297
    %v2299 = vmul.f32 %v2286, %v229
    %v2300 = vmul.f32 %v2289, %v229
    %v2301 = vmul.f32 %v2292, %v229
    %v2302 = vmul.f32 %v2295, %v229
    %v2303 = vmul.f32 %v2298, %v229
    %v2304 = vadd.f32 %v2299, 1e-06
    %v2305 = vadd.f32 %v2300, 1e-06
    %v2306 = vadd.f32 %v2301, 1e-06
    %v2307 = vadd.f32 %v2302, 1e-06
    %v2308 = vadd.f32 %v2303, 1e-06
    %v2309 = vrsqrt.pop %v2304
    %v2310 = vrsqrt.pop %v2305
    %v2311 = vrsqrt.pop %v2306
    %v2312 = vrsqrt.pop %v2307
    %v2313 = vrsqrt.pop %v2308
    %v2314 = vmul.f32 %v2274, %v2309
    %v2315 = vmul.f32 %v2275, %v2310
    %v2316 = vmul.f32 %v2276, %v2311
    %v2317 = vmul.f32 %v2277, %v2312
    %v2318 = vmul.f32 %v2278, %v2313
    %v2320 = vlaneseq
    %v2321 = vshrl.u32 %v2320, 7
    %v2322 = vsub.s32 0, %v2321
    %v2323 = vrot.slane %v2251, %v2322
    %v2325 = vmul.f32 %v2314, %v2323
    %v2326 = vmul.f32 %v2315, %v2323
    %v2327 = vmul.f32 %v2316, %v2323
    %v2328 = vmul.f32 %v2317, %v2323
    %v2329 = vmul.f32 %v2318, %v2323
    %v2331 = vlaneseq
    %v2332 = vshrl.u32 %v2331, 7
    %v2333 = vsub.s32 0, %v2332
    %v2334 = vrot.slane %v2253, %v2333
    %v2336 = vadd.f32 %v2325, %v2334
    %v2337 = vadd.f32 %v2326, %v2334
    %v2338 = vadd.f32 %v2327, %v2334
    %v2339 = vadd.f32 %v2328, %v2334
    %v2340 = vadd.f32 %v2329, %v2334
    %s2341 = scalar_lea.vmem %s13, 1
    %v2342 = vld [vmem:[%s2341] sm:$0x1]
    %s2343 = scalar_lea.vmem %s6, 64
    %v2344 = vld [vmem:[%s2343] sm:$0xff]
    %v2345 = vld [vmem:[%s2343 + $0x8] sm:$0xff]
    %v2346 = vld [vmem:[%s2343 + $0x10] sm:$0xff]
    %v2347 = vld [vmem:[%s2343 + $0x18] sm:$0xff]
    %s2348 = scalar_lea.vmem %s7, 2
    %v2349 = vld [vmem:[%s2348] sm:$0x1]
    %v2351 = vlaneseq
    %v2352 = vshrl.u32 %v2351, 7
    %v2353 = vsub.s32 0, %v2352
    %v2354 = vrot.slane %v2349, %v2353
    %v2357 = vsel %vm212, %v2336, 0
    %v2360 = vsel %vm212, %v2337, 0
    %v2363 = vsel %vm212, %v2338, 0
    %v2366 = vsel %vm212, %v2339, 0
    %v2369 = vsel %vm212, %v2340, 0
    %2371 = vmatprep.subr.mxu0 0.0
    %2372 = vmatpush1.msra.mxu0 0.0
    %2373 = vmatprep.subr.mxu0 0.0
    %2374 = vmatpush1.msra.mxu0 0.0
    %2375 = vmatprep.subr.mxu0 0.0
    %2376 = vmatpush1.msra.mxu0 0.0
    %2377 = vmatprep.subr.mxu0 0.0
    %2378 = vmatpush1.msra.mxu0 0.0
    %2379 = vmatprep.subr.mxu0 0.0
    %2380 = vmatpush1.msra.mxu0 0.0
    %2381 = vmatprep.subr.mxu0 0.0
    %2382 = vmatpush1.msra.mxu0 0.0
    %2383 = vmatprep.subr.mxu0 0.0
    %2384 = vmatpush1.msra.mxu0 0.0
    %2385 = vmatprep.subr.mxu0 0.0
    %2386 = vmatpush1.msra.mxu0 0.0
    %2387 = vmatprep.subr.mxu0 0.0
    %2388 = vmatpush1.msra.mxu0 0.0
    %2389 = vmatprep.subr.mxu0 0.0
    %2390 = vmatpush1.msra.mxu0 0.0
    %2391 = vmatprep.subr.mxu0 0.0
    %2392 = vmatpush1.msra.mxu0 0.0
    %2393 = vmatprep.subr.mxu0 0.0
    %2394 = vmatpush1.msra.mxu0 0.0
    %2395 = vmatprep.subr.mxu0 0.0
    %2396 = vmatpush1.msra.mxu0 %v2347
    %2397 = vmatprep.subr.mxu0 0.0
    %2398 = vmatpush1.msra.mxu0 %v2346
    %2399 = vmatprep.subr.mxu0 0.0
    %2400 = vmatpush1.msra.mxu0 %v2345
    %2401 = vmatprep.subr.mxu0 0.0
    %2402 = vmatpush1.msra.mxu0 %v2344
    %2403 = vmatprep.subr.mxu0 0.0
    %2404 = vmatpush2.msra.mxu0 0.0
    %2405 = vmatprep.subr.mxu0 0.0
    %2406 = vmatpush2.msra.mxu0 0.0
    %2407 = vmatprep.subr.mxu0 0.0
    %2408 = vmatpush2.msra.mxu0 0.0
    %2409 = vmatprep.subr.mxu0 0.0
    %2410 = vmatpush2.msra.mxu0 0.0
    %2411 = vmatprep.subr.mxu0 0.0
    %2412 = vmatpush2.msra.mxu0 0.0
    %2413 = vmatprep.subr.mxu0 0.0
    %2414 = vmatpush2.msra.mxu0 0.0
    %2415 = vmatprep.subr.mxu0 0.0
    %2416 = vmatpush2.msra.mxu0 0.0
    %2417 = vmatprep.subr.mxu0 0.0
    %2418 = vmatpush2.msra.mxu0 0.0
    %2419 = vmatprep.subr.mxu0 0.0
    %2420 = vmatpush2.msra.mxu0 0.0
    %2421 = vmatprep.subr.mxu0 0.0
    %2422 = vmatpush2.msra.mxu0 0.0
    %2423 = vmatprep.subr.mxu0 0.0
    %2424 = vmatpush2.msra.mxu0 0.0
    %2425 = vmatprep.subr.mxu0 0.0
    %2426 = vmatpush2.msra.mxu0 0.0
    %2427 = vmatprep.subr.mxu0 0.0
    %2428 = vmatpush2.msra.mxu0 0.0
    %2429 = vmatprep.subr.mxu0 0.0
    %2430 = vmatpush2.msra.mxu0 0.0
    %2431 = vmatprep.subr.mxu0 0.0
    %2432 = vmatpush2.msra.mxu0 0.0
    %2433 = vmatprep.subr.mxu0 0.0
    %2434 = vmatpush2.msra.mxu0 0.0
    %2435 = vmatprep.mubr.f32.mxu0 0.0
    %2436 = vmatmul.mubr.f32.gmra.mxu0 %v2357
    %v2437 = vpop.f32.mrf.mxu0
    %v2438 = vadd.f32 %v2354, %v2437
    %v2439 = vpop.f32.mrf.mxu0
    %2440 = vmatprep.mubr.f32.mxu0 0.0
    %2441 = vmatmul.mubr.f32.gmra.mxu0 %v2360
    %v2442 = vpop.f32.mrf.mxu0
    %v2443 = vadd.f32 %v2354, %v2442
    %v2444 = vpop.f32.mrf.mxu0
    %2445 = vmatprep.mubr.f32.mxu0 0.0
    %2446 = vmatmul.mubr.f32.gmra.mxu0 %v2363
    %v2447 = vpop.f32.mrf.mxu0
    %v2448 = vadd.f32 %v2354, %v2447
    %v2449 = vpop.f32.mrf.mxu0
    %2450 = vmatprep.mubr.f32.mxu0 0.0
    %2451 = vmatmul.mubr.f32.gmra.mxu0 %v2366
    %v2452 = vpop.f32.mrf.mxu0
    %v2453 = vadd.f32 %v2354, %v2452
    %v2454 = vpop.f32.mrf.mxu0
    %2455 = vmatprep.mubr.f32.mxu0 0.0
    %2456 = vmatmul.mubr.f32.gmra.mxu0 %v2369
    %v2457 = vpop.f32.mrf.mxu0
    %v2458 = vadd.f32 %v2354, %v2457
    %v2459 = vpop.f32.mrf.mxu0
    %2460 = vdwg.mxu0
    %s2461 = scalar_lea.vmem %s8, 64
    %v2462 = vld [vmem:[%s2461] sm:$0xff]
    %v2463 = vld [vmem:[%s2461 + $0x8] sm:$0xff]
    %v2464 = vld [vmem:[%s2461 + $0x10] sm:$0xff]
    %v2465 = vld [vmem:[%s2461 + $0x18] sm:$0xff]
    %s2466 = scalar_lea.vmem %s9, 2
    %v2467 = vld [vmem:[%s2466] sm:$0x1]
    %v2469 = vlaneseq
    %v2470 = vshrl.u32 %v2469, 7
    %v2471 = vsub.s32 0, %v2470
    %v2472 = vrot.slane %v2467, %v2471
    %2474 = vmatprep.subr.mxu0 0.0
    %2475 = vmatpush1.msra.mxu0 0.0
    %2476 = vmatprep.subr.mxu0 0.0
    %2477 = vmatpush1.msra.mxu0 0.0
    %2478 = vmatprep.subr.mxu0 0.0
    %2479 = vmatpush1.msra.mxu0 0.0
    %2480 = vmatprep.subr.mxu0 0.0
    %2481 = vmatpush1.msra.mxu0 0.0
    %2482 = vmatprep.subr.mxu0 0.0
    %2483 = vmatpush1.msra.mxu0 0.0
    %2484 = vmatprep.subr.mxu0 0.0
    %2485 = vmatpush1.msra.mxu0 0.0
    %2486 = vmatprep.subr.mxu0 0.0
    %2487 = vmatpush1.msra.mxu0 0.0
    %2488 = vmatprep.subr.mxu0 0.0
    %2489 = vmatpush1.msra.mxu0 0.0
    %2490 = vmatprep.subr.mxu0 0.0
    %2491 = vmatpush1.msra.mxu0 0.0
    %2492 = vmatprep.subr.mxu0 0.0
    %2493 = vmatpush1.msra.mxu0 0.0
    %2494 = vmatprep.subr.mxu0 0.0
    %2495 = vmatpush1.msra.mxu0 0.0
    %2496 = vmatprep.subr.mxu0 0.0
    %2497 = vmatpush1.msra.mxu0 0.0
    %2498 = vmatprep.subr.mxu0 0.0
    %2499 = vmatpush1.msra.mxu0 %v2465
    %2500 = vmatprep.subr.mxu0 0.0
    %2501 = vmatpush1.msra.mxu0 %v2464
    %2502 = vmatprep.subr.mxu0 0.0
    %2503 = vmatpush1.msra.mxu0 %v2463
    %2504 = vmatprep.subr.mxu0 0.0
    %2505 = vmatpush1.msra.mxu0 %v2462
    %2506 = vmatprep.subr.mxu0 0.0
    %2507 = vmatpush2.msra.mxu0 0.0
    %2508 = vmatprep.subr.mxu0 0.0
    %2509 = vmatpush2.msra.mxu0 0.0
    %2510 = vmatprep.subr.mxu0 0.0
    %2511 = vmatpush2.msra.mxu0 0.0
    %2512 = vmatprep.subr.mxu0 0.0
    %2513 = vmatpush2.msra.mxu0 0.0
    %2514 = vmatprep.subr.mxu0 0.0
    %2515 = vmatpush2.msra.mxu0 0.0
    %2516 = vmatprep.subr.mxu0 0.0
    %2517 = vmatpush2.msra.mxu0 0.0
    %2518 = vmatprep.subr.mxu0 0.0
    %2519 = vmatpush2.msra.mxu0 0.0
    %2520 = vmatprep.subr.mxu0 0.0
    %2521 = vmatpush2.msra.mxu0 0.0
    %2522 = vmatprep.subr.mxu0 0.0
    %2523 = vmatpush2.msra.mxu0 0.0
    %2524 = vmatprep.subr.mxu0 0.0
    %2525 = vmatpush2.msra.mxu0 0.0
    %2526 = vmatprep.subr.mxu0 0.0
    %2527 = vmatpush2.msra.mxu0 0.0
    %2528 = vmatprep.subr.mxu0 0.0
    %2529 = vmatpush2.msra.mxu0 0.0
    %2530 = vmatprep.subr.mxu0 0.0
    %2531 = vmatpush2.msra.mxu0 0.0
    %2532 = vmatprep.subr.mxu0 0.0
    %2533 = vmatpush2.msra.mxu0 0.0
    %2534 = vmatprep.subr.mxu0 0.0
    %2535 = vmatpush2.msra.mxu0 0.0
    %2536 = vmatprep.subr.mxu0 0.0
    %2537 = vmatpush2.msra.mxu0 0.0
    %2538 = vmatprep.mubr.f32.mxu0 0.0
    %2539 = vmatmul.mubr.f32.gmra.mxu0 %v2357
    %v2540 = vpop.f32.mrf.mxu0
    %v2541 = vadd.f32 %v2472, %v2540
    %v2542 = vpop.f32.mrf.mxu0
    %2543 = vmatprep.mubr.f32.mxu0 0.0
    %2544 = vmatmul.mubr.f32.gmra.mxu0 %v2360
    %v2545 = vpop.f32.mrf.mxu0
    %v2546 = vadd.f32 %v2472, %v2545
    %v2547 = vpop.f32.mrf.mxu0
    %2548 = vmatprep.mubr.f32.mxu0 0.0
    %2549 = vmatmul.mubr.f32.gmra.mxu0 %v2363
    %v2550 = vpop.f32.mrf.mxu0
    %v2551 = vadd.f32 %v2472, %v2550
    %v2552 = vpop.f32.mrf.mxu0
    %2553 = vmatprep.mubr.f32.mxu0 0.0
    %2554 = vmatmul.mubr.f32.gmra.mxu0 %v2366
    %v2555 = vpop.f32.mrf.mxu0
    %v2556 = vadd.f32 %v2472, %v2555
    %v2557 = vpop.f32.mrf.mxu0
    %2558 = vmatprep.mubr.f32.mxu0 0.0
    %2559 = vmatmul.mubr.f32.gmra.mxu0 %v2369
    %v2560 = vpop.f32.mrf.mxu0
    %v2561 = vadd.f32 %v2472, %v2560
    %v2562 = vpop.f32.mrf.mxu0
    %2563 = vdwg.mxu0
    %s2564 = scalar_lea.vmem %s10, 64
    %v2565 = vld [vmem:[%s2564] sm:$0xff]
    %v2566 = vld [vmem:[%s2564 + $0x8] sm:$0xff]
    %v2567 = vld [vmem:[%s2564 + $0x10] sm:$0xff]
    %v2568 = vld [vmem:[%s2564 + $0x18] sm:$0xff]
    %s2569 = scalar_lea.vmem %s11, 2
    %v2570 = vld [vmem:[%s2569] sm:$0x1]
    %v2572 = vlaneseq
    %v2573 = vshrl.u32 %v2572, 7
    %v2574 = vsub.s32 0, %v2573
    %v2575 = vrot.slane %v2570, %v2574
    %2577 = vmatprep.subr.mxu0 0.0
    %2578 = vmatpush1.msra.mxu0 0.0
    %2579 = vmatprep.subr.mxu0 0.0
    %2580 = vmatpush1.msra.mxu0 0.0
    %2581 = vmatprep.subr.mxu0 0.0
    %2582 = vmatpush1.msra.mxu0 0.0
    %2583 = vmatprep.subr.mxu0 0.0
    %2584 = vmatpush1.msra.mxu0 0.0
    %2585 = vmatprep.subr.mxu0 0.0
    %2586 = vmatpush1.msra.mxu0 0.0
    %2587 = vmatprep.subr.mxu0 0.0
    %2588 = vmatpush1.msra.mxu0 0.0
    %2589 = vmatprep.subr.mxu0 0.0
    %2590 = vmatpush1.msra.mxu0 0.0
    %2591 = vmatprep.subr.mxu0 0.0
    %2592 = vmatpush1.msra.mxu0 0.0
    %2593 = vmatprep.subr.mxu0 0.0
    %2594 = vmatpush1.msra.mxu0 0.0
    %2595 = vmatprep.subr.mxu0 0.0
    %2596 = vmatpush1.msra.mxu0 0.0
    %2597 = vmatprep.subr.mxu0 0.0
    %2598 = vmatpush1.msra.mxu0 0.0
    %2599 = vmatprep.subr.mxu0 0.0
    %2600 = vmatpush1.msra.mxu0 0.0
    %2601 = vmatprep.subr.mxu0 0.0
    %2602 = vmatpush1.msra.mxu0 %v2568
    %2603 = vmatprep.subr.mxu0 0.0
    %2604 = vmatpush1.msra.mxu0 %v2567
    %2605 = vmatprep.subr.mxu0 0.0
    %2606 = vmatpush1.msra.mxu0 %v2566
    %2607 = vmatprep.subr.mxu0 0.0
    %2608 = vmatpush1.msra.mxu0 %v2565
    %2609 = vmatprep.subr.mxu0 0.0
    %2610 = vmatpush2.msra.mxu0 0.0
    %2611 = vmatprep.subr.mxu0 0.0
    %2612 = vmatpush2.msra.mxu0 0.0
    %2613 = vmatprep.subr.mxu0 0.0
    %2614 = vmatpush2.msra.mxu0 0.0
    %2615 = vmatprep.subr.mxu0 0.0
    %2616 = vmatpush2.msra.mxu0 0.0
    %2617 = vmatprep.subr.mxu0 0.0
    %2618 = vmatpush2.msra.mxu0 0.0
    %2619 = vmatprep.subr.mxu0 0.0
    %2620 = vmatpush2.msra.mxu0 0.0
    %2621 = vmatprep.subr.mxu0 0.0
    %2622 = vmatpush2.msra.mxu0 0.0
    %2623 = vmatprep.subr.mxu0 0.0
    %2624 = vmatpush2.msra.mxu0 0.0
    %2625 = vmatprep.subr.mxu0 0.0
    %2626 = vmatpush2.msra.mxu0 0.0
    %2627 = vmatprep.subr.mxu0 0.0
    %2628 = vmatpush2.msra.mxu0 0.0
    %2629 = vmatprep.subr.mxu0 0.0
    %2630 = vmatpush2.msra.mxu0 0.0
    %2631 = vmatprep.subr.mxu0 0.0
    %2632 = vmatpush2.msra.mxu0 0.0
    %2633 = vmatprep.subr.mxu0 0.0
    %2634 = vmatpush2.msra.mxu0 0.0
    %2635 = vmatprep.subr.mxu0 0.0
    %2636 = vmatpush2.msra.mxu0 0.0
    %2637 = vmatprep.subr.mxu0 0.0
    %2638 = vmatpush2.msra.mxu0 0.0
    %2639 = vmatprep.subr.mxu0 0.0
    %2640 = vmatpush2.msra.mxu0 0.0
    %2641 = vmatprep.mubr.f32.mxu0 0.0
    %2642 = vmatmul.mubr.f32.gmra.mxu0 %v2357
    %v2643 = vpop.f32.mrf.mxu0
    %v2644 = vadd.f32 %v2575, %v2643
    %v2645 = vpop.f32.mrf.mxu0
    %2646 = vmatprep.mubr.f32.mxu0 0.0
    %2647 = vmatmul.mubr.f32.gmra.mxu0 %v2360
    %v2648 = vpop.f32.mrf.mxu0
    %v2649 = vadd.f32 %v2575, %v2648
    %v2650 = vpop.f32.mrf.mxu0
    %2651 = vmatprep.mubr.f32.mxu0 0.0
    %2652 = vmatmul.mubr.f32.gmra.mxu0 %v2363
    %v2653 = vpop.f32.mrf.mxu0
    %v2654 = vadd.f32 %v2575, %v2653
    %v2655 = vpop.f32.mrf.mxu0
    %2656 = vmatprep.mubr.f32.mxu0 0.0
    %2657 = vmatmul.mubr.f32.gmra.mxu0 %v2366
    %v2658 = vpop.f32.mrf.mxu0
    %v2659 = vadd.f32 %v2575, %v2658
    %v2660 = vpop.f32.mrf.mxu0
    %2661 = vmatprep.mubr.f32.mxu0 0.0
    %2662 = vmatmul.mubr.f32.gmra.mxu0 %v2369
    %v2663 = vpop.f32.mrf.mxu0
    %v2664 = vadd.f32 %v2575, %v2663
    %v2665 = vpop.f32.mrf.mxu0
    %2666 = vdwg.mxu0
    %v2668 = vsel %vm621, %v2438, 0
    %v2671 = vsel %vm621, %v2443, 0
    %v2674 = vsel %vm621, %v2448, 0
    %v2677 = vsel %vm621, %v2453, 0
    %v2680 = vsel %vm621, %v2458, 0
    %v2683 = vsel %vm621, %v2541, 0
    %v2686 = vsel %vm621, %v2546, 0
    %v2689 = vsel %vm621, %v2551, 0
    %v2692 = vsel %vm621, %v2556, 0
    %v2695 = vsel %vm621, %v2561, 0
    %2697 = vmatprep.subr.mxu0 0.0
    %2698 = vmatpush1.xpose.msra.mxu0 0.0
    %2699 = vmatprep.subr.mxu0 0.0
    %2700 = vmatpush1.xpose.msra.mxu0 0.0
    %2701 = vmatprep.subr.mxu0 0.0
    %2702 = vmatpush1.xpose.msra.mxu0 0.0
    %2703 = vmatprep.subr.mxu0 0.0
    %2704 = vmatpush1.xpose.msra.mxu0 0.0
    %2705 = vmatprep.subr.mxu0 0.0
    %2706 = vmatpush1.xpose.msra.mxu0 0.0
    %2707 = vmatprep.subr.mxu0 0.0
    %2708 = vmatpush1.xpose.msra.mxu0 0.0
    %2709 = vmatprep.subr.mxu0 0.0
    %2710 = vmatpush1.xpose.msra.mxu0 0.0
    %2711 = vmatprep.subr.mxu0 0.0
    %2712 = vmatpush1.xpose.msra.mxu0 0.0
    %2713 = vmatprep.subr.mxu0 0.0
    %2714 = vmatpush1.xpose.msra.mxu0 0.0
    %2715 = vmatprep.subr.mxu0 0.0
    %2716 = vmatpush1.xpose.msra.mxu0 0.0
    %2717 = vmatprep.subr.mxu0 0.0
    %2718 = vmatpush1.xpose.msra.mxu0 0.0
    %2719 = vmatprep.subr.mxu0 0.0
    %2720 = vmatpush1.xpose.msra.mxu0 %v2695
    %2721 = vmatprep.subr.mxu0 0.0
    %2722 = vmatpush1.xpose.msra.mxu0 %v2692
    %2723 = vmatprep.subr.mxu0 0.0
    %2724 = vmatpush1.xpose.msra.mxu0 %v2689
    %2725 = vmatprep.subr.mxu0 0.0
    %2726 = vmatpush1.xpose.msra.mxu0 %v2686
    %2727 = vmatprep.subr.mxu0 0.0
    %2728 = vmatpush1.xpose.msra.mxu0 %v2683
    %2729 = vmatprep.subr.mxu0 0.0
    %2730 = vmatpush2.xpose.msra.mxu0 0.0
    %2731 = vmatprep.subr.mxu0 0.0
    %2732 = vmatpush2.xpose.msra.mxu0 0.0
    %2733 = vmatprep.subr.mxu0 0.0
    %2734 = vmatpush2.xpose.msra.mxu0 0.0
    %2735 = vmatprep.subr.mxu0 0.0
    %2736 = vmatpush2.xpose.msra.mxu0 0.0
    %2737 = vmatprep.subr.mxu0 0.0
    %2738 = vmatpush2.xpose.msra.mxu0 0.0
    %2739 = vmatprep.subr.mxu0 0.0
    %2740 = vmatpush2.xpose.msra.mxu0 0.0
    %2741 = vmatprep.subr.mxu0 0.0
    %2742 = vmatpush2.xpose.msra.mxu0 0.0
    %2743 = vmatprep.subr.mxu0 0.0
    %2744 = vmatpush2.xpose.msra.mxu0 0.0
    %2745 = vmatprep.subr.mxu0 0.0
    %2746 = vmatpush2.xpose.msra.mxu0 0.0
    %2747 = vmatprep.subr.mxu0 0.0
    %2748 = vmatpush2.xpose.msra.mxu0 0.0
    %2749 = vmatprep.subr.mxu0 0.0
    %2750 = vmatpush2.xpose.msra.mxu0 0.0
    %2751 = vmatprep.subr.mxu0 0.0
    %2752 = vmatpush2.xpose.msra.mxu0 0.0
    %2753 = vmatprep.subr.mxu0 0.0
    %2754 = vmatpush2.xpose.msra.mxu0 0.0
    %2755 = vmatprep.subr.mxu0 0.0
    %2756 = vmatpush2.xpose.msra.mxu0 0.0
    %2757 = vmatprep.subr.mxu0 0.0
    %2758 = vmatpush2.xpose.msra.mxu0 0.0
    %2759 = vmatprep.subr.mxu0 0.0
    %2760 = vmatpush2.xpose.msra.mxu0 0.0
    %2761 = vmatprep.mubr.f32.mxu0 0.0
    %2762 = vmatmul.mubr.f32.gmra.mxu0 %v2668
    %v2763 = vpop.f32.mrf.mxu0
    %v2764 = vadd.f32 0.0, %v2763
    %v2765 = vpop.f32.mrf.mxu0
    %2766 = vmatprep.mubr.f32.mxu0 0.0
    %2767 = vmatmul.mubr.f32.gmra.mxu0 %v2671
    %v2768 = vpop.f32.mrf.mxu0
    %v2769 = vadd.f32 0.0, %v2768
    %v2770 = vpop.f32.mrf.mxu0
    %2771 = vmatprep.mubr.f32.mxu0 0.0
    %2772 = vmatmul.mubr.f32.gmra.mxu0 %v2674
    %v2773 = vpop.f32.mrf.mxu0
    %v2774 = vadd.f32 0.0, %v2773
    %v2775 = vpop.f32.mrf.mxu0
    %2776 = vmatprep.mubr.f32.mxu0 0.0
    %2777 = vmatmul.mubr.f32.gmra.mxu0 %v2677
    %v2778 = vpop.f32.mrf.mxu0
    %v2779 = vadd.f32 0.0, %v2778
    %v2780 = vpop.f32.mrf.mxu0
    %2781 = vmatprep.mubr.f32.mxu0 0.0
    %2782 = vmatmul.mubr.f32.gmra.mxu0 %v2680
    %v2783 = vpop.f32.mrf.mxu0
    %v2784 = vadd.f32 0.0, %v2783
    %v2785 = vpop.f32.mrf.mxu0
    %2786 = vdwg.mxu0
    %v2787 = vmul.f32 %v2764, 0.25
    %v2788 = vmul.f32 %v2769, 0.25
    %v2789 = vmul.f32 %v2774, 0.25
    %v2790 = vmul.f32 %v2779, 0.25
    %v2791 = vmul.f32 %v2784, 0.25
    %v2792 = vadd.f32 %v2787, %v205
    %v2793 = vadd.f32 %v2788, %v206
    %v2794 = vadd.f32 %v2789, %v207
    %v2795 = vadd.f32 %v2790, %v208
    %v2796 = vadd.f32 %v2791, %v209
    %v2797 = vsel %vm752, %v2792, -inf
    %2798 = vmax.xlane.f32.xlu0 %v2797
    %v2799 = vpop.xlane.xlu0 %2798
    %v2800 = vsel %vm752, %v2793, -inf
    %2801 = vmax.xlane.f32.xlu0 %v2800
    %v2802 = vpop.xlane.xlu0 %2801
    %v2803 = vsel %vm752, %v2794, -inf
    %2804 = vmax.xlane.f32.xlu0 %v2803
    %v2805 = vpop.xlane.xlu0 %2804
    %v2806 = vsel %vm752, %v2795, -inf
    %2807 = vmax.xlane.f32.xlu0 %v2806
    %v2808 = vpop.xlane.xlu0 %2807
    %v2809 = vsel %vm765, %v2796, -inf
    %2810 = vmax.xlane.f32.xlu0 %v2809
    %v2811 = vpop.xlane.xlu0 %2810
    %v2812 = vsub.f32 %v2792, %v2799
    %v2813 = vsub.f32 %v2793, %v2802
    %v2814 = vsub.f32 %v2794, %v2805
    %v2815 = vsub.f32 %v2795, %v2808
    %v2816 = vsub.f32 %v2796, %v2811
    %v2817 = vmul.f32 %v2812, 1.442695
    %v2818 = vpow.pop %v2817
    %v2819 = vmul.f32 %v2813, 1.442695
    %v2820 = vpow.pop %v2819
    %v2821 = vmul.f32 %v2814, 1.442695
    %v2822 = vpow.pop %v2821
    %v2823 = vmul.f32 %v2815, 1.442695
    %v2824 = vpow.pop %v2823
    %v2825 = vmul.f32 %v2816, 1.442695
    %v2826 = vpow.pop %v2825
    %v2827 = vsel %vm752, %v2818, 0.0
    %2828 = vadd.xlane.f32.xlu0 %v2827
    %v2829 = vpop.xlane.xlu0 %2828
    %v2830 = vsel %vm752, %v2820, 0.0
    %2831 = vadd.xlane.f32.xlu0 %v2830
    %v2832 = vpop.xlane.xlu0 %2831
    %v2833 = vsel %vm752, %v2822, 0.0
    %2834 = vadd.xlane.f32.xlu0 %v2833
    %v2835 = vpop.xlane.xlu0 %2834
    %v2836 = vsel %vm752, %v2824, 0.0
    %2837 = vadd.xlane.f32.xlu0 %v2836
    %v2838 = vpop.xlane.xlu0 %2837
    %v2839 = vsel %vm765, %v2826, 0.0
    %2840 = vadd.xlane.f32.xlu0 %v2839
    %v2841 = vpop.xlane.xlu0 %2840
    %v2842 = vrcp.pop %v2829
    %v2843 = vmul.f32 %v2818, %v2842
    %v2844 = vrcp.pop %v2832
    %v2845 = vmul.f32 %v2820, %v2844
    %v2846 = vrcp.pop %v2835
    %v2847 = vmul.f32 %v2822, %v2846
    %v2848 = vrcp.pop %v2838
    %v2849 = vmul.f32 %v2824, %v2848
    %v2850 = vrcp.pop %v2841
    %v2851 = vmul.f32 %v2826, %v2850
    %v2853 = vsel %vm752, %v2843, 0
    %v2856 = vsel %vm752, %v2845, 0
    %v2859 = vsel %vm752, %v2847, 0
    %v2862 = vsel %vm752, %v2849, 0
    %v2865 = vsel %vm752, %v2851, 0
    %v2868 = vsel %vm824, %v2664, 0
    %2870 = vmatprep.subr.mxu0 0.0
    %2871 = vmatpush1.msra.mxu0 0.0
    %2872 = vmatprep.subr.mxu0 0.0
    %2873 = vmatpush1.msra.mxu0 0.0
    %2874 = vmatprep.subr.mxu0 0.0
    %2875 = vmatpush1.msra.mxu0 0.0
    %2876 = vmatprep.subr.mxu0 0.0
    %2877 = vmatpush1.msra.mxu0 0.0
    %2878 = vmatprep.subr.mxu0 0.0
    %2879 = vmatpush1.msra.mxu0 0.0
    %2880 = vmatprep.subr.mxu0 0.0
    %2881 = vmatpush1.msra.mxu0 0.0
    %2882 = vmatprep.subr.mxu0 0.0
    %2883 = vmatpush1.msra.mxu0 0.0
    %2884 = vmatprep.subr.mxu0 0.0
    %2885 = vmatpush1.msra.mxu0 0.0
    %2886 = vmatprep.subr.mxu0 0.0
    %2887 = vmatpush1.msra.mxu0 0.0
    %2888 = vmatprep.subr.mxu0 0.0
    %2889 = vmatpush1.msra.mxu0 0.0
    %2890 = vmatprep.subr.mxu0 0.0
    %2891 = vmatpush1.msra.mxu0 0.0
    %2892 = vmatprep.subr.mxu0 0.0
    %2893 = vmatpush1.msra.mxu0 %v2868
    %2894 = vmatprep.subr.mxu0 0.0
    %2895 = vmatpush1.msra.mxu0 %v2659
    %2896 = vmatprep.subr.mxu0 0.0
    %2897 = vmatpush1.msra.mxu0 %v2654
    %2898 = vmatprep.subr.mxu0 0.0
    %2899 = vmatpush1.msra.mxu0 %v2649
    %2900 = vmatprep.subr.mxu0 0.0
    %2901 = vmatpush1.msra.mxu0 %v2644
    %2902 = vmatprep.subr.mxu0 0.0
    %2903 = vmatpush2.msra.mxu0 0.0
    %2904 = vmatprep.subr.mxu0 0.0
    %2905 = vmatpush2.msra.mxu0 0.0
    %2906 = vmatprep.subr.mxu0 0.0
    %2907 = vmatpush2.msra.mxu0 0.0
    %2908 = vmatprep.subr.mxu0 0.0
    %2909 = vmatpush2.msra.mxu0 0.0
    %2910 = vmatprep.subr.mxu0 0.0
    %2911 = vmatpush2.msra.mxu0 0.0
    %2912 = vmatprep.subr.mxu0 0.0
    %2913 = vmatpush2.msra.mxu0 0.0
    %2914 = vmatprep.subr.mxu0 0.0
    %2915 = vmatpush2.msra.mxu0 0.0
    %2916 = vmatprep.subr.mxu0 0.0
    %2917 = vmatpush2.msra.mxu0 0.0
    %2918 = vmatprep.subr.mxu0 0.0
    %2919 = vmatpush2.msra.mxu0 0.0
    %2920 = vmatprep.subr.mxu0 0.0
    %2921 = vmatpush2.msra.mxu0 0.0
    %2922 = vmatprep.subr.mxu0 0.0
    %2923 = vmatpush2.msra.mxu0 0.0
    %2924 = vmatprep.subr.mxu0 0.0
    %2925 = vmatpush2.msra.mxu0 0.0
    %2926 = vmatprep.subr.mxu0 0.0
    %2927 = vmatpush2.msra.mxu0 0.0
    %2928 = vmatprep.subr.mxu0 0.0
    %2929 = vmatpush2.msra.mxu0 0.0
    %2930 = vmatprep.subr.mxu0 0.0
    %2931 = vmatpush2.msra.mxu0 0.0
    %2932 = vmatprep.subr.mxu0 0.0
    %2933 = vmatpush2.msra.mxu0 0.0
    %2934 = vmatprep.mubr.f32.mxu0 0.0
    %2935 = vmatmul.mubr.f32.gmra.mxu0 %v2853
    %v2936 = vpop.f32.mrf.mxu0
    %v2937 = vadd.f32 0.0, %v2936
    %v2938 = vpop.f32.mrf.mxu0
    %2939 = vmatprep.mubr.f32.mxu0 0.0
    %2940 = vmatmul.mubr.f32.gmra.mxu0 %v2856
    %v2941 = vpop.f32.mrf.mxu0
    %v2942 = vadd.f32 0.0, %v2941
    %v2943 = vpop.f32.mrf.mxu0
    %2944 = vmatprep.mubr.f32.mxu0 0.0
    %2945 = vmatmul.mubr.f32.gmra.mxu0 %v2859
    %v2946 = vpop.f32.mrf.mxu0
    %v2947 = vadd.f32 0.0, %v2946
    %v2948 = vpop.f32.mrf.mxu0
    %2949 = vmatprep.mubr.f32.mxu0 0.0
    %2950 = vmatmul.mubr.f32.gmra.mxu0 %v2862
    %v2951 = vpop.f32.mrf.mxu0
    %v2952 = vadd.f32 0.0, %v2951
    %v2953 = vpop.f32.mrf.mxu0
    %2954 = vmatprep.mubr.f32.mxu0 0.0
    %2955 = vmatmul.mubr.f32.gmra.mxu0 %v2865
    %v2956 = vpop.f32.mrf.mxu0
    %v2957 = vadd.f32 0.0, %v2956
    %v2958 = vpop.f32.mrf.mxu0
    %2959 = vdwg.mxu0
    %s2960 = scalar_lea.vmem %s12, 32
    %v2961 = vld [vmem:[%s2960] sm:$0xff]
    %v2962 = vld [vmem:[%s2960 + $0x8] sm:$0xff]
    %v2964 = vsel %vm621, %v2937, 0
    %v2967 = vsel %vm621, %v2942, 0
    %v2970 = vsel %vm621, %v2947, 0
    %v2973 = vsel %vm621, %v2952, 0
    %v2976 = vsel %vm621, %v2957, 0
    %2978 = vmatprep.subr.mxu0 0.0
    %2979 = vmatpush1.msra.mxu0 0.0
    %2980 = vmatprep.subr.mxu0 0.0
    %2981 = vmatpush1.msra.mxu0 0.0
    %2982 = vmatprep.subr.mxu0 0.0
    %2983 = vmatpush1.msra.mxu0 0.0
    %2984 = vmatprep.subr.mxu0 0.0
    %2985 = vmatpush1.msra.mxu0 0.0
    %2986 = vmatprep.subr.mxu0 0.0
    %2987 = vmatpush1.msra.mxu0 0.0
    %2988 = vmatprep.subr.mxu0 0.0
    %2989 = vmatpush1.msra.mxu0 0.0
    %2990 = vmatprep.subr.mxu0 0.0
    %2991 = vmatpush1.msra.mxu0 0.0
    %2992 = vmatprep.subr.mxu0 0.0
    %2993 = vmatpush1.msra.mxu0 0.0
    %2994 = vmatprep.subr.mxu0 0.0
    %2995 = vmatpush1.msra.mxu0 0.0
    %2996 = vmatprep.subr.mxu0 0.0
    %2997 = vmatpush1.msra.mxu0 0.0
    %2998 = vmatprep.subr.mxu0 0.0
    %2999 = vmatpush1.msra.mxu0 0.0
    %3000 = vmatprep.subr.mxu0 0.0
    %3001 = vmatpush1.msra.mxu0 0.0
    %3002 = vmatprep.subr.mxu0 0.0
    %3003 = vmatpush1.msra.mxu0 0.0
    %3004 = vmatprep.subr.mxu0 0.0
    %3005 = vmatpush1.msra.mxu0 0.0
    %3006 = vmatprep.subr.mxu0 0.0
    %3007 = vmatpush1.msra.mxu0 %v2962
    %3008 = vmatprep.subr.mxu0 0.0
    %3009 = vmatpush1.msra.mxu0 %v2961
    %3010 = vmatprep.subr.mxu0 0.0
    %3011 = vmatpush2.msra.mxu0 0.0
    %3012 = vmatprep.subr.mxu0 0.0
    %3013 = vmatpush2.msra.mxu0 0.0
    %3014 = vmatprep.subr.mxu0 0.0
    %3015 = vmatpush2.msra.mxu0 0.0
    %3016 = vmatprep.subr.mxu0 0.0
    %3017 = vmatpush2.msra.mxu0 0.0
    %3018 = vmatprep.subr.mxu0 0.0
    %3019 = vmatpush2.msra.mxu0 0.0
    %3020 = vmatprep.subr.mxu0 0.0
    %3021 = vmatpush2.msra.mxu0 0.0
    %3022 = vmatprep.subr.mxu0 0.0
    %3023 = vmatpush2.msra.mxu0 0.0
    %3024 = vmatprep.subr.mxu0 0.0
    %3025 = vmatpush2.msra.mxu0 0.0
    %3026 = vmatprep.subr.mxu0 0.0
    %3027 = vmatpush2.msra.mxu0 0.0
    %3028 = vmatprep.subr.mxu0 0.0
    %3029 = vmatpush2.msra.mxu0 0.0
    %3030 = vmatprep.subr.mxu0 0.0
    %3031 = vmatpush2.msra.mxu0 0.0
    %3032 = vmatprep.subr.mxu0 0.0
    %3033 = vmatpush2.msra.mxu0 0.0
    %3034 = vmatprep.subr.mxu0 0.0
    %3035 = vmatpush2.msra.mxu0 0.0
    %3036 = vmatprep.subr.mxu0 0.0
    %3037 = vmatpush2.msra.mxu0 0.0
    %3038 = vmatprep.subr.mxu0 0.0
    %3039 = vmatpush2.msra.mxu0 0.0
    %3040 = vmatprep.subr.mxu0 0.0
    %3041 = vmatpush2.msra.mxu0 0.0
    %3042 = vmatprep.mubr.f32.mxu0 0.0
    %3043 = vmatmul.mubr.f32.gmra.mxu0 %v2964
    %v3044 = vpop.f32.mrf.mxu0
    %v3045 = vadd.f32 0.0, %v3044
    %v3046 = vpop.f32.mrf.mxu0
    %3047 = vmatprep.mubr.f32.mxu0 0.0
    %3048 = vmatmul.mubr.f32.gmra.mxu0 %v2967
    %v3049 = vpop.f32.mrf.mxu0
    %v3050 = vadd.f32 0.0, %v3049
    %v3051 = vpop.f32.mrf.mxu0
    %3052 = vmatprep.mubr.f32.mxu0 0.0
    %3053 = vmatmul.mubr.f32.gmra.mxu0 %v2970
    %v3054 = vpop.f32.mrf.mxu0
    %v3055 = vadd.f32 0.0, %v3054
    %v3056 = vpop.f32.mrf.mxu0
    %3057 = vmatprep.mubr.f32.mxu0 0.0
    %3058 = vmatmul.mubr.f32.gmra.mxu0 %v2973
    %v3059 = vpop.f32.mrf.mxu0
    %v3060 = vadd.f32 0.0, %v3059
    %v3061 = vpop.f32.mrf.mxu0
    %3062 = vmatprep.mubr.f32.mxu0 0.0
    %3063 = vmatmul.mubr.f32.gmra.mxu0 %v2976
    %v3064 = vpop.f32.mrf.mxu0
    %v3065 = vadd.f32 0.0, %v3064
    %v3066 = vpop.f32.mrf.mxu0
    %3067 = vdwg.mxu0
    %v3069 = vlaneseq
    %v3070 = vshrl.u32 %v3069, 7
    %v3071 = vsub.s32 0, %v3070
    %v3072 = vrot.slane %v2342, %v3071
    %v3074 = vadd.f32 %v3072, %v3045
    %v3075 = vadd.f32 %v3072, %v3050
    %v3076 = vadd.f32 %v3072, %v3055
    %v3077 = vadd.f32 %v3072, %v3060
    %v3078 = vadd.f32 %v3072, %v3065
    %s3079 = scalar_lea.vmem %s6, 96
    %v3080 = vld [vmem:[%s3079] sm:$0xff]
    %v3081 = vld [vmem:[%s3079 + $0x8] sm:$0xff]
    %v3082 = vld [vmem:[%s3079 + $0x10] sm:$0xff]
    %v3083 = vld [vmem:[%s3079 + $0x18] sm:$0xff]
    %s3084 = scalar_lea.vmem %s7, 3
    %v3085 = vld [vmem:[%s3084] sm:$0x1]
    %v3087 = vlaneseq
    %v3088 = vshrl.u32 %v3087, 7
    %v3089 = vsub.s32 0, %v3088
    %v3090 = vrot.slane %v3085, %v3089
    %3092 = vmatprep.subr.mxu0 0.0
    %3093 = vmatpush1.msra.mxu0 0.0
    %3094 = vmatprep.subr.mxu0 0.0
    %3095 = vmatpush1.msra.mxu0 0.0
    %3096 = vmatprep.subr.mxu0 0.0
    %3097 = vmatpush1.msra.mxu0 0.0
    %3098 = vmatprep.subr.mxu0 0.0
    %3099 = vmatpush1.msra.mxu0 0.0
    %3100 = vmatprep.subr.mxu0 0.0
    %3101 = vmatpush1.msra.mxu0 0.0
    %3102 = vmatprep.subr.mxu0 0.0
    %3103 = vmatpush1.msra.mxu0 0.0
    %3104 = vmatprep.subr.mxu0 0.0
    %3105 = vmatpush1.msra.mxu0 0.0
    %3106 = vmatprep.subr.mxu0 0.0
    %3107 = vmatpush1.msra.mxu0 0.0
    %3108 = vmatprep.subr.mxu0 0.0
    %3109 = vmatpush1.msra.mxu0 0.0
    %3110 = vmatprep.subr.mxu0 0.0
    %3111 = vmatpush1.msra.mxu0 0.0
    %3112 = vmatprep.subr.mxu0 0.0
    %3113 = vmatpush1.msra.mxu0 0.0
    %3114 = vmatprep.subr.mxu0 0.0
    %3115 = vmatpush1.msra.mxu0 0.0
    %3116 = vmatprep.subr.mxu0 0.0
    %3117 = vmatpush1.msra.mxu0 %v3083
    %3118 = vmatprep.subr.mxu0 0.0
    %3119 = vmatpush1.msra.mxu0 %v3082
    %3120 = vmatprep.subr.mxu0 0.0
    %3121 = vmatpush1.msra.mxu0 %v3081
    %3122 = vmatprep.subr.mxu0 0.0
    %3123 = vmatpush1.msra.mxu0 %v3080
    %3124 = vmatprep.subr.mxu0 0.0
    %3125 = vmatpush2.msra.mxu0 0.0
    %3126 = vmatprep.subr.mxu0 0.0
    %3127 = vmatpush2.msra.mxu0 0.0
    %3128 = vmatprep.subr.mxu0 0.0
    %3129 = vmatpush2.msra.mxu0 0.0
    %3130 = vmatprep.subr.mxu0 0.0
    %3131 = vmatpush2.msra.mxu0 0.0
    %3132 = vmatprep.subr.mxu0 0.0
    %3133 = vmatpush2.msra.mxu0 0.0
    %3134 = vmatprep.subr.mxu0 0.0
    %3135 = vmatpush2.msra.mxu0 0.0
    %3136 = vmatprep.subr.mxu0 0.0
    %3137 = vmatpush2.msra.mxu0 0.0
    %3138 = vmatprep.subr.mxu0 0.0
    %3139 = vmatpush2.msra.mxu0 0.0
    %3140 = vmatprep.subr.mxu0 0.0
    %3141 = vmatpush2.msra.mxu0 0.0
    %3142 = vmatprep.subr.mxu0 0.0
    %3143 = vmatpush2.msra.mxu0 0.0
    %3144 = vmatprep.subr.mxu0 0.0
    %3145 = vmatpush2.msra.mxu0 0.0
    %3146 = vmatprep.subr.mxu0 0.0
    %3147 = vmatpush2.msra.mxu0 0.0
    %3148 = vmatprep.subr.mxu0 0.0
    %3149 = vmatpush2.msra.mxu0 0.0
    %3150 = vmatprep.subr.mxu0 0.0
    %3151 = vmatpush2.msra.mxu0 0.0
    %3152 = vmatprep.subr.mxu0 0.0
    %3153 = vmatpush2.msra.mxu0 0.0
    %3154 = vmatprep.subr.mxu0 0.0
    %3155 = vmatpush2.msra.mxu0 0.0
    %3156 = vmatprep.mubr.f32.mxu0 0.0
    %3157 = vmatmul.mubr.f32.gmra.mxu0 %v2357
    %v3158 = vpop.f32.mrf.mxu0
    %v3159 = vadd.f32 %v3090, %v3158
    %v3160 = vpop.f32.mrf.mxu0
    %3161 = vmatprep.mubr.f32.mxu0 0.0
    %3162 = vmatmul.mubr.f32.gmra.mxu0 %v2360
    %v3163 = vpop.f32.mrf.mxu0
    %v3164 = vadd.f32 %v3090, %v3163
    %v3165 = vpop.f32.mrf.mxu0
    %3166 = vmatprep.mubr.f32.mxu0 0.0
    %3167 = vmatmul.mubr.f32.gmra.mxu0 %v2363
    %v3168 = vpop.f32.mrf.mxu0
    %v3169 = vadd.f32 %v3090, %v3168
    %v3170 = vpop.f32.mrf.mxu0
    %3171 = vmatprep.mubr.f32.mxu0 0.0
    %3172 = vmatmul.mubr.f32.gmra.mxu0 %v2366
    %v3173 = vpop.f32.mrf.mxu0
    %v3174 = vadd.f32 %v3090, %v3173
    %v3175 = vpop.f32.mrf.mxu0
    %3176 = vmatprep.mubr.f32.mxu0 0.0
    %3177 = vmatmul.mubr.f32.gmra.mxu0 %v2369
    %v3178 = vpop.f32.mrf.mxu0
    %v3179 = vadd.f32 %v3090, %v3178
    %v3180 = vpop.f32.mrf.mxu0
    %3181 = vdwg.mxu0
    %s3182 = scalar_lea.vmem %s8, 96
    %v3183 = vld [vmem:[%s3182] sm:$0xff]
    %v3184 = vld [vmem:[%s3182 + $0x8] sm:$0xff]
    %v3185 = vld [vmem:[%s3182 + $0x10] sm:$0xff]
    %v3186 = vld [vmem:[%s3182 + $0x18] sm:$0xff]
    %s3187 = scalar_lea.vmem %s9, 3
    %v3188 = vld [vmem:[%s3187] sm:$0x1]
    %v3190 = vlaneseq
    %v3191 = vshrl.u32 %v3190, 7
    %v3192 = vsub.s32 0, %v3191
    %v3193 = vrot.slane %v3188, %v3192
    %3195 = vmatprep.subr.mxu0 0.0
    %3196 = vmatpush1.msra.mxu0 0.0
    %3197 = vmatprep.subr.mxu0 0.0
    %3198 = vmatpush1.msra.mxu0 0.0
    %3199 = vmatprep.subr.mxu0 0.0
    %3200 = vmatpush1.msra.mxu0 0.0
    %3201 = vmatprep.subr.mxu0 0.0
    %3202 = vmatpush1.msra.mxu0 0.0
    %3203 = vmatprep.subr.mxu0 0.0
    %3204 = vmatpush1.msra.mxu0 0.0
    %3205 = vmatprep.subr.mxu0 0.0
    %3206 = vmatpush1.msra.mxu0 0.0
    %3207 = vmatprep.subr.mxu0 0.0
    %3208 = vmatpush1.msra.mxu0 0.0
    %3209 = vmatprep.subr.mxu0 0.0
    %3210 = vmatpush1.msra.mxu0 0.0
    %3211 = vmatprep.subr.mxu0 0.0
    %3212 = vmatpush1.msra.mxu0 0.0
    %3213 = vmatprep.subr.mxu0 0.0
    %3214 = vmatpush1.msra.mxu0 0.0
    %3215 = vmatprep.subr.mxu0 0.0
    %3216 = vmatpush1.msra.mxu0 0.0
    %3217 = vmatprep.subr.mxu0 0.0
    %3218 = vmatpush1.msra.mxu0 0.0
    %3219 = vmatprep.subr.mxu0 0.0
    %3220 = vmatpush1.msra.mxu0 %v3186
    %3221 = vmatprep.subr.mxu0 0.0
    %3222 = vmatpush1.msra.mxu0 %v3185
    %3223 = vmatprep.subr.mxu0 0.0
    %3224 = vmatpush1.msra.mxu0 %v3184
    %3225 = vmatprep.subr.mxu0 0.0
    %3226 = vmatpush1.msra.mxu0 %v3183
    %3227 = vmatprep.subr.mxu0 0.0
    %3228 = vmatpush2.msra.mxu0 0.0
    %3229 = vmatprep.subr.mxu0 0.0
    %3230 = vmatpush2.msra.mxu0 0.0
    %3231 = vmatprep.subr.mxu0 0.0
    %3232 = vmatpush2.msra.mxu0 0.0
    %3233 = vmatprep.subr.mxu0 0.0
    %3234 = vmatpush2.msra.mxu0 0.0
    %3235 = vmatprep.subr.mxu0 0.0
    %3236 = vmatpush2.msra.mxu0 0.0
    %3237 = vmatprep.subr.mxu0 0.0
    %3238 = vmatpush2.msra.mxu0 0.0
    %3239 = vmatprep.subr.mxu0 0.0
    %3240 = vmatpush2.msra.mxu0 0.0
    %3241 = vmatprep.subr.mxu0 0.0
    %3242 = vmatpush2.msra.mxu0 0.0
    %3243 = vmatprep.subr.mxu0 0.0
    %3244 = vmatpush2.msra.mxu0 0.0
    %3245 = vmatprep.subr.mxu0 0.0
    %3246 = vmatpush2.msra.mxu0 0.0
    %3247 = vmatprep.subr.mxu0 0.0
    %3248 = vmatpush2.msra.mxu0 0.0
    %3249 = vmatprep.subr.mxu0 0.0
    %3250 = vmatpush2.msra.mxu0 0.0
    %3251 = vmatprep.subr.mxu0 0.0
    %3252 = vmatpush2.msra.mxu0 0.0
    %3253 = vmatprep.subr.mxu0 0.0
    %3254 = vmatpush2.msra.mxu0 0.0
    %3255 = vmatprep.subr.mxu0 0.0
    %3256 = vmatpush2.msra.mxu0 0.0
    %3257 = vmatprep.subr.mxu0 0.0
    %3258 = vmatpush2.msra.mxu0 0.0
    %3259 = vmatprep.mubr.f32.mxu0 0.0
    %3260 = vmatmul.mubr.f32.gmra.mxu0 %v2357
    %v3261 = vpop.f32.mrf.mxu0
    %v3262 = vadd.f32 %v3193, %v3261
    %v3263 = vpop.f32.mrf.mxu0
    %3264 = vmatprep.mubr.f32.mxu0 0.0
    %3265 = vmatmul.mubr.f32.gmra.mxu0 %v2360
    %v3266 = vpop.f32.mrf.mxu0
    %v3267 = vadd.f32 %v3193, %v3266
    %v3268 = vpop.f32.mrf.mxu0
    %3269 = vmatprep.mubr.f32.mxu0 0.0
    %3270 = vmatmul.mubr.f32.gmra.mxu0 %v2363
    %v3271 = vpop.f32.mrf.mxu0
    %v3272 = vadd.f32 %v3193, %v3271
    %v3273 = vpop.f32.mrf.mxu0
    %3274 = vmatprep.mubr.f32.mxu0 0.0
    %3275 = vmatmul.mubr.f32.gmra.mxu0 %v2366
    %v3276 = vpop.f32.mrf.mxu0
    %v3277 = vadd.f32 %v3193, %v3276
    %v3278 = vpop.f32.mrf.mxu0
    %3279 = vmatprep.mubr.f32.mxu0 0.0
    %3280 = vmatmul.mubr.f32.gmra.mxu0 %v2369
    %v3281 = vpop.f32.mrf.mxu0
    %v3282 = vadd.f32 %v3193, %v3281
    %v3283 = vpop.f32.mrf.mxu0
    %3284 = vdwg.mxu0
    %s3285 = scalar_lea.vmem %s10, 96
    %v3286 = vld [vmem:[%s3285] sm:$0xff]
    %v3287 = vld [vmem:[%s3285 + $0x8] sm:$0xff]
    %v3288 = vld [vmem:[%s3285 + $0x10] sm:$0xff]
    %v3289 = vld [vmem:[%s3285 + $0x18] sm:$0xff]
    %s3290 = scalar_lea.vmem %s11, 3
    %v3291 = vld [vmem:[%s3290] sm:$0x1]
    %v3293 = vlaneseq
    %v3294 = vshrl.u32 %v3293, 7
    %v3295 = vsub.s32 0, %v3294
    %v3296 = vrot.slane %v3291, %v3295
    %3298 = vmatprep.subr.mxu0 0.0
    %3299 = vmatpush1.msra.mxu0 0.0
    %3300 = vmatprep.subr.mxu0 0.0
    %3301 = vmatpush1.msra.mxu0 0.0
    %3302 = vmatprep.subr.mxu0 0.0
    %3303 = vmatpush1.msra.mxu0 0.0
    %3304 = vmatprep.subr.mxu0 0.0
    %3305 = vmatpush1.msra.mxu0 0.0
    %3306 = vmatprep.subr.mxu0 0.0
    %3307 = vmatpush1.msra.mxu0 0.0
    %3308 = vmatprep.subr.mxu0 0.0
    %3309 = vmatpush1.msra.mxu0 0.0
    %3310 = vmatprep.subr.mxu0 0.0
    %3311 = vmatpush1.msra.mxu0 0.0
    %3312 = vmatprep.subr.mxu0 0.0
    %3313 = vmatpush1.msra.mxu0 0.0
    %3314 = vmatprep.subr.mxu0 0.0
    %3315 = vmatpush1.msra.mxu0 0.0
    %3316 = vmatprep.subr.mxu0 0.0
    %3317 = vmatpush1.msra.mxu0 0.0
    %3318 = vmatprep.subr.mxu0 0.0
    %3319 = vmatpush1.msra.mxu0 0.0
    %3320 = vmatprep.subr.mxu0 0.0
    %3321 = vmatpush1.msra.mxu0 0.0
    %3322 = vmatprep.subr.mxu0 0.0
    %3323 = vmatpush1.msra.mxu0 %v3289
    %3324 = vmatprep.subr.mxu0 0.0
    %3325 = vmatpush1.msra.mxu0 %v3288
    %3326 = vmatprep.subr.mxu0 0.0
    %3327 = vmatpush1.msra.mxu0 %v3287
    %3328 = vmatprep.subr.mxu0 0.0
    %3329 = vmatpush1.msra.mxu0 %v3286
    %3330 = vmatprep.subr.mxu0 0.0
    %3331 = vmatpush2.msra.mxu0 0.0
    %3332 = vmatprep.subr.mxu0 0.0
    %3333 = vmatpush2.msra.mxu0 0.0
    %3334 = vmatprep.subr.mxu0 0.0
    %3335 = vmatpush2.msra.mxu0 0.0
    %3336 = vmatprep.subr.mxu0 0.0
    %3337 = vmatpush2.msra.mxu0 0.0
    %3338 = vmatprep.subr.mxu0 0.0
    %3339 = vmatpush2.msra.mxu0 0.0
    %3340 = vmatprep.subr.mxu0 0.0
    %3341 = vmatpush2.msra.mxu0 0.0
    %3342 = vmatprep.subr.mxu0 0.0
    %3343 = vmatpush2.msra.mxu0 0.0
    %3344 = vmatprep.subr.mxu0 0.0
    %3345 = vmatpush2.msra.mxu0 0.0
    %3346 = vmatprep.subr.mxu0 0.0
    %3347 = vmatpush2.msra.mxu0 0.0
    %3348 = vmatprep.subr.mxu0 0.0
    %3349 = vmatpush2.msra.mxu0 0.0
    %3350 = vmatprep.subr.mxu0 0.0
    %3351 = vmatpush2.msra.mxu0 0.0
    %3352 = vmatprep.subr.mxu0 0.0
    %3353 = vmatpush2.msra.mxu0 0.0
    %3354 = vmatprep.subr.mxu0 0.0
    %3355 = vmatpush2.msra.mxu0 0.0
    %3356 = vmatprep.subr.mxu0 0.0
    %3357 = vmatpush2.msra.mxu0 0.0
    %3358 = vmatprep.subr.mxu0 0.0
    %3359 = vmatpush2.msra.mxu0 0.0
    %3360 = vmatprep.subr.mxu0 0.0
    %3361 = vmatpush2.msra.mxu0 0.0
    %3362 = vmatprep.mubr.f32.mxu0 0.0
    %3363 = vmatmul.mubr.f32.gmra.mxu0 %v2357
    %v3364 = vpop.f32.mrf.mxu0
    %v3365 = vadd.f32 %v3296, %v3364
    %v3366 = vpop.f32.mrf.mxu0
    %3367 = vmatprep.mubr.f32.mxu0 0.0
    %3368 = vmatmul.mubr.f32.gmra.mxu0 %v2360
    %v3369 = vpop.f32.mrf.mxu0
    %v3370 = vadd.f32 %v3296, %v3369
    %v3371 = vpop.f32.mrf.mxu0
    %3372 = vmatprep.mubr.f32.mxu0 0.0
    %3373 = vmatmul.mubr.f32.gmra.mxu0 %v2363
    %v3374 = vpop.f32.mrf.mxu0
    %v3375 = vadd.f32 %v3296, %v3374
    %v3376 = vpop.f32.mrf.mxu0
    %3377 = vmatprep.mubr.f32.mxu0 0.0
    %3378 = vmatmul.mubr.f32.gmra.mxu0 %v2366
    %v3379 = vpop.f32.mrf.mxu0
    %v3380 = vadd.f32 %v3296, %v3379
    %v3381 = vpop.f32.mrf.mxu0
    %3382 = vmatprep.mubr.f32.mxu0 0.0
    %3383 = vmatmul.mubr.f32.gmra.mxu0 %v2369
    %v3384 = vpop.f32.mrf.mxu0
    %v3385 = vadd.f32 %v3296, %v3384
    %v3386 = vpop.f32.mrf.mxu0
    %3387 = vdwg.mxu0
    %v3389 = vsel %vm621, %v3159, 0
    %v3392 = vsel %vm621, %v3164, 0
    %v3395 = vsel %vm621, %v3169, 0
    %v3398 = vsel %vm621, %v3174, 0
    %v3401 = vsel %vm621, %v3179, 0
    %v3404 = vsel %vm621, %v3262, 0
    %v3407 = vsel %vm621, %v3267, 0
    %v3410 = vsel %vm621, %v3272, 0
    %v3413 = vsel %vm621, %v3277, 0
    %v3416 = vsel %vm621, %v3282, 0
    %3418 = vmatprep.subr.mxu0 0.0
    %3419 = vmatpush1.xpose.msra.mxu0 0.0
    %3420 = vmatprep.subr.mxu0 0.0
    %3421 = vmatpush1.xpose.msra.mxu0 0.0
    %3422 = vmatprep.subr.mxu0 0.0
    %3423 = vmatpush1.xpose.msra.mxu0 0.0
    %3424 = vmatprep.subr.mxu0 0.0
    %3425 = vmatpush1.xpose.msra.mxu0 0.0
    %3426 = vmatprep.subr.mxu0 0.0
    %3427 = vmatpush1.xpose.msra.mxu0 0.0
    %3428 = vmatprep.subr.mxu0 0.0
    %3429 = vmatpush1.xpose.msra.mxu0 0.0
    %3430 = vmatprep.subr.mxu0 0.0
    %3431 = vmatpush1.xpose.msra.mxu0 0.0
    %3432 = vmatprep.subr.mxu0 0.0
    %3433 = vmatpush1.xpose.msra.mxu0 0.0
    %3434 = vmatprep.subr.mxu0 0.0
    %3435 = vmatpush1.xpose.msra.mxu0 0.0
    %3436 = vmatprep.subr.mxu0 0.0
    %3437 = vmatpush1.xpose.msra.mxu0 0.0
    %3438 = vmatprep.subr.mxu0 0.0
    %3439 = vmatpush1.xpose.msra.mxu0 0.0
    %3440 = vmatprep.subr.mxu0 0.0
    %3441 = vmatpush1.xpose.msra.mxu0 %v3416
    %3442 = vmatprep.subr.mxu0 0.0
    %3443 = vmatpush1.xpose.msra.mxu0 %v3413
    %3444 = vmatprep.subr.mxu0 0.0
    %3445 = vmatpush1.xpose.msra.mxu0 %v3410
    %3446 = vmatprep.subr.mxu0 0.0
    %3447 = vmatpush1.xpose.msra.mxu0 %v3407
    %3448 = vmatprep.subr.mxu0 0.0
    %3449 = vmatpush1.xpose.msra.mxu0 %v3404
    %3450 = vmatprep.subr.mxu0 0.0
    %3451 = vmatpush2.xpose.msra.mxu0 0.0
    %3452 = vmatprep.subr.mxu0 0.0
    %3453 = vmatpush2.xpose.msra.mxu0 0.0
    %3454 = vmatprep.subr.mxu0 0.0
    %3455 = vmatpush2.xpose.msra.mxu0 0.0
    %3456 = vmatprep.subr.mxu0 0.0
    %3457 = vmatpush2.xpose.msra.mxu0 0.0
    %3458 = vmatprep.subr.mxu0 0.0
    %3459 = vmatpush2.xpose.msra.mxu0 0.0
    %3460 = vmatprep.subr.mxu0 0.0
    %3461 = vmatpush2.xpose.msra.mxu0 0.0
    %3462 = vmatprep.subr.mxu0 0.0
    %3463 = vmatpush2.xpose.msra.mxu0 0.0
    %3464 = vmatprep.subr.mxu0 0.0
    %3465 = vmatpush2.xpose.msra.mxu0 0.0
    %3466 = vmatprep.subr.mxu0 0.0
    %3467 = vmatpush2.xpose.msra.mxu0 0.0
    %3468 = vmatprep.subr.mxu0 0.0
    %3469 = vmatpush2.xpose.msra.mxu0 0.0
    %3470 = vmatprep.subr.mxu0 0.0
    %3471 = vmatpush2.xpose.msra.mxu0 0.0
    %3472 = vmatprep.subr.mxu0 0.0
    %3473 = vmatpush2.xpose.msra.mxu0 0.0
    %3474 = vmatprep.subr.mxu0 0.0
    %3475 = vmatpush2.xpose.msra.mxu0 0.0
    %3476 = vmatprep.subr.mxu0 0.0
    %3477 = vmatpush2.xpose.msra.mxu0 0.0
    %3478 = vmatprep.subr.mxu0 0.0
    %3479 = vmatpush2.xpose.msra.mxu0 0.0
    %3480 = vmatprep.subr.mxu0 0.0
    %3481 = vmatpush2.xpose.msra.mxu0 0.0
    %3482 = vmatprep.mubr.f32.mxu0 0.0
    %3483 = vmatmul.mubr.f32.gmra.mxu0 %v3389
    %v3484 = vpop.f32.mrf.mxu0
    %v3485 = vadd.f32 0.0, %v3484
    %v3486 = vpop.f32.mrf.mxu0
    %3487 = vmatprep.mubr.f32.mxu0 0.0
    %3488 = vmatmul.mubr.f32.gmra.mxu0 %v3392
    %v3489 = vpop.f32.mrf.mxu0
    %v3490 = vadd.f32 0.0, %v3489
    %v3491 = vpop.f32.mrf.mxu0
    %3492 = vmatprep.mubr.f32.mxu0 0.0
    %3493 = vmatmul.mubr.f32.gmra.mxu0 %v3395
    %v3494 = vpop.f32.mrf.mxu0
    %v3495 = vadd.f32 0.0, %v3494
    %v3496 = vpop.f32.mrf.mxu0
    %3497 = vmatprep.mubr.f32.mxu0 0.0
    %3498 = vmatmul.mubr.f32.gmra.mxu0 %v3398
    %v3499 = vpop.f32.mrf.mxu0
    %v3500 = vadd.f32 0.0, %v3499
    %v3501 = vpop.f32.mrf.mxu0
    %3502 = vmatprep.mubr.f32.mxu0 0.0
    %3503 = vmatmul.mubr.f32.gmra.mxu0 %v3401
    %v3504 = vpop.f32.mrf.mxu0
    %v3505 = vadd.f32 0.0, %v3504
    %v3506 = vpop.f32.mrf.mxu0
    %3507 = vdwg.mxu0
    %v3508 = vmul.f32 %v3485, 0.25
    %v3509 = vmul.f32 %v3490, 0.25
    %v3510 = vmul.f32 %v3495, 0.25
    %v3511 = vmul.f32 %v3500, 0.25
    %v3512 = vmul.f32 %v3505, 0.25
    %v3513 = vadd.f32 %v3508, %v205
    %v3514 = vadd.f32 %v3509, %v206
    %v3515 = vadd.f32 %v3510, %v207
    %v3516 = vadd.f32 %v3511, %v208
    %v3517 = vadd.f32 %v3512, %v209
    %v3518 = vsel %vm752, %v3513, -inf
    %3519 = vmax.xlane.f32.xlu0 %v3518
    %v3520 = vpop.xlane.xlu0 %3519
    %v3521 = vsel %vm752, %v3514, -inf
    %3522 = vmax.xlane.f32.xlu0 %v3521
    %v3523 = vpop.xlane.xlu0 %3522
    %v3524 = vsel %vm752, %v3515, -inf
    %3525 = vmax.xlane.f32.xlu0 %v3524
    %v3526 = vpop.xlane.xlu0 %3525
    %v3527 = vsel %vm752, %v3516, -inf
    %3528 = vmax.xlane.f32.xlu0 %v3527
    %v3529 = vpop.xlane.xlu0 %3528
    %v3530 = vsel %vm765, %v3517, -inf
    %3531 = vmax.xlane.f32.xlu0 %v3530
    %v3532 = vpop.xlane.xlu0 %3531
    %v3533 = vsub.f32 %v3513, %v3520
    %v3534 = vsub.f32 %v3514, %v3523
    %v3535 = vsub.f32 %v3515, %v3526
    %v3536 = vsub.f32 %v3516, %v3529
    %v3537 = vsub.f32 %v3517, %v3532
    %v3538 = vmul.f32 %v3533, 1.442695
    %v3539 = vpow.pop %v3538
    %v3540 = vmul.f32 %v3534, 1.442695
    %v3541 = vpow.pop %v3540
    %v3542 = vmul.f32 %v3535, 1.442695
    %v3543 = vpow.pop %v3542
    %v3544 = vmul.f32 %v3536, 1.442695
    %v3545 = vpow.pop %v3544
    %v3546 = vmul.f32 %v3537, 1.442695
    %v3547 = vpow.pop %v3546
    %v3548 = vsel %vm752, %v3539, 0.0
    %3549 = vadd.xlane.f32.xlu0 %v3548
    %v3550 = vpop.xlane.xlu0 %3549
    %v3551 = vsel %vm752, %v3541, 0.0
    %3552 = vadd.xlane.f32.xlu0 %v3551
    %v3553 = vpop.xlane.xlu0 %3552
    %v3554 = vsel %vm752, %v3543, 0.0
    %3555 = vadd.xlane.f32.xlu0 %v3554
    %v3556 = vpop.xlane.xlu0 %3555
    %v3557 = vsel %vm752, %v3545, 0.0
    %3558 = vadd.xlane.f32.xlu0 %v3557
    %v3559 = vpop.xlane.xlu0 %3558
    %v3560 = vsel %vm765, %v3547, 0.0
    %3561 = vadd.xlane.f32.xlu0 %v3560
    %v3562 = vpop.xlane.xlu0 %3561
    %v3563 = vrcp.pop %v3550
    %v3564 = vmul.f32 %v3539, %v3563
    %v3565 = vrcp.pop %v3553
    %v3566 = vmul.f32 %v3541, %v3565
    %v3567 = vrcp.pop %v3556
    %v3568 = vmul.f32 %v3543, %v3567
    %v3569 = vrcp.pop %v3559
    %v3570 = vmul.f32 %v3545, %v3569
    %v3571 = vrcp.pop %v3562
    %v3572 = vmul.f32 %v3547, %v3571
    %v3574 = vsel %vm752, %v3564, 0
    %v3577 = vsel %vm752, %v3566, 0
    %v3580 = vsel %vm752, %v3568, 0
    %v3583 = vsel %vm752, %v3570, 0
    %v3586 = vsel %vm752, %v3572, 0
    %v3589 = vsel %vm824, %v3385, 0
    %3591 = vmatprep.subr.mxu0 0.0
    %3592 = vmatpush1.msra.mxu0 0.0
    %3593 = vmatprep.subr.mxu0 0.0
    %3594 = vmatpush1.msra.mxu0 0.0
    %3595 = vmatprep.subr.mxu0 0.0
    %3596 = vmatpush1.msra.mxu0 0.0
    %3597 = vmatprep.subr.mxu0 0.0
    %3598 = vmatpush1.msra.mxu0 0.0
    %3599 = vmatprep.subr.mxu0 0.0
    %3600 = vmatpush1.msra.mxu0 0.0
    %3601 = vmatprep.subr.mxu0 0.0
    %3602 = vmatpush1.msra.mxu0 0.0
    %3603 = vmatprep.subr.mxu0 0.0
    %3604 = vmatpush1.msra.mxu0 0.0
    %3605 = vmatprep.subr.mxu0 0.0
    %3606 = vmatpush1.msra.mxu0 0.0
    %3607 = vmatprep.subr.mxu0 0.0
    %3608 = vmatpush1.msra.mxu0 0.0
    %3609 = vmatprep.subr.mxu0 0.0
    %3610 = vmatpush1.msra.mxu0 0.0
    %3611 = vmatprep.subr.mxu0 0.0
    %3612 = vmatpush1.msra.mxu0 0.0
    %3613 = vmatprep.subr.mxu0 0.0
    %3614 = vmatpush1.msra.mxu0 %v3589
    %3615 = vmatprep.subr.mxu0 0.0
    %3616 = vmatpush1.msra.mxu0 %v3380
    %3617 = vmatprep.subr.mxu0 0.0
    %3618 = vmatpush1.msra.mxu0 %v3375
    %3619 = vmatprep.subr.mxu0 0.0
    %3620 = vmatpush1.msra.mxu0 %v3370
    %3621 = vmatprep.subr.mxu0 0.0
    %3622 = vmatpush1.msra.mxu0 %v3365
    %3623 = vmatprep.subr.mxu0 0.0
    %3624 = vmatpush2.msra.mxu0 0.0
    %3625 = vmatprep.subr.mxu0 0.0
    %3626 = vmatpush2.msra.mxu0 0.0
    %3627 = vmatprep.subr.mxu0 0.0
    %3628 = vmatpush2.msra.mxu0 0.0
    %3629 = vmatprep.subr.mxu0 0.0
    %3630 = vmatpush2.msra.mxu0 0.0
    %3631 = vmatprep.subr.mxu0 0.0
    %3632 = vmatpush2.msra.mxu0 0.0
    %3633 = vmatprep.subr.mxu0 0.0
    %3634 = vmatpush2.msra.mxu0 0.0
    %3635 = vmatprep.subr.mxu0 0.0
    %3636 = vmatpush2.msra.mxu0 0.0
    %3637 = vmatprep.subr.mxu0 0.0
    %3638 = vmatpush2.msra.mxu0 0.0
    %3639 = vmatprep.subr.mxu0 0.0
    %3640 = vmatpush2.msra.mxu0 0.0
    %3641 = vmatprep.subr.mxu0 0.0
    %3642 = vmatpush2.msra.mxu0 0.0
    %3643 = vmatprep.subr.mxu0 0.0
    %3644 = vmatpush2.msra.mxu0 0.0
    %3645 = vmatprep.subr.mxu0 0.0
    %3646 = vmatpush2.msra.mxu0 0.0
    %3647 = vmatprep.subr.mxu0 0.0
    %3648 = vmatpush2.msra.mxu0 0.0
    %3649 = vmatprep.subr.mxu0 0.0
    %3650 = vmatpush2.msra.mxu0 0.0
    %3651 = vmatprep.subr.mxu0 0.0
    %3652 = vmatpush2.msra.mxu0 0.0
    %3653 = vmatprep.subr.mxu0 0.0
    %3654 = vmatpush2.msra.mxu0 0.0
    %3655 = vmatprep.mubr.f32.mxu0 0.0
    %3656 = vmatmul.mubr.f32.gmra.mxu0 %v3574
    %v3657 = vpop.f32.mrf.mxu0
    %v3658 = vadd.f32 0.0, %v3657
    %v3659 = vpop.f32.mrf.mxu0
    %3660 = vmatprep.mubr.f32.mxu0 0.0
    %3661 = vmatmul.mubr.f32.gmra.mxu0 %v3577
    %v3662 = vpop.f32.mrf.mxu0
    %v3663 = vadd.f32 0.0, %v3662
    %v3664 = vpop.f32.mrf.mxu0
    %3665 = vmatprep.mubr.f32.mxu0 0.0
    %3666 = vmatmul.mubr.f32.gmra.mxu0 %v3580
    %v3667 = vpop.f32.mrf.mxu0
    %v3668 = vadd.f32 0.0, %v3667
    %v3669 = vpop.f32.mrf.mxu0
    %3670 = vmatprep.mubr.f32.mxu0 0.0
    %3671 = vmatmul.mubr.f32.gmra.mxu0 %v3583
    %v3672 = vpop.f32.mrf.mxu0
    %v3673 = vadd.f32 0.0, %v3672
    %v3674 = vpop.f32.mrf.mxu0
    %3675 = vmatprep.mubr.f32.mxu0 0.0
    %3676 = vmatmul.mubr.f32.gmra.mxu0 %v3586
    %v3677 = vpop.f32.mrf.mxu0
    %v3678 = vadd.f32 0.0, %v3677
    %v3679 = vpop.f32.mrf.mxu0
    %3680 = vdwg.mxu0
    %s3681 = scalar_lea.vmem %s12, 48
    %v3682 = vld [vmem:[%s3681] sm:$0xff]
    %v3683 = vld [vmem:[%s3681 + $0x8] sm:$0xff]
    %v3685 = vsel %vm621, %v3658, 0
    %v3688 = vsel %vm621, %v3663, 0
    %v3691 = vsel %vm621, %v3668, 0
    %v3694 = vsel %vm621, %v3673, 0
    %v3697 = vsel %vm621, %v3678, 0
    %3699 = vmatprep.subr.mxu0 0.0
    %3700 = vmatpush1.msra.mxu0 0.0
    %3701 = vmatprep.subr.mxu0 0.0
    %3702 = vmatpush1.msra.mxu0 0.0
    %3703 = vmatprep.subr.mxu0 0.0
    %3704 = vmatpush1.msra.mxu0 0.0
    %3705 = vmatprep.subr.mxu0 0.0
    %3706 = vmatpush1.msra.mxu0 0.0
    %3707 = vmatprep.subr.mxu0 0.0
    %3708 = vmatpush1.msra.mxu0 0.0
    %3709 = vmatprep.subr.mxu0 0.0
    %3710 = vmatpush1.msra.mxu0 0.0
    %3711 = vmatprep.subr.mxu0 0.0
    %3712 = vmatpush1.msra.mxu0 0.0
    %3713 = vmatprep.subr.mxu0 0.0
    %3714 = vmatpush1.msra.mxu0 0.0
    %3715 = vmatprep.subr.mxu0 0.0
    %3716 = vmatpush1.msra.mxu0 0.0
    %3717 = vmatprep.subr.mxu0 0.0
    %3718 = vmatpush1.msra.mxu0 0.0
    %3719 = vmatprep.subr.mxu0 0.0
    %3720 = vmatpush1.msra.mxu0 0.0
    %3721 = vmatprep.subr.mxu0 0.0
    %3722 = vmatpush1.msra.mxu0 0.0
    %3723 = vmatprep.subr.mxu0 0.0
    %3724 = vmatpush1.msra.mxu0 0.0
    %3725 = vmatprep.subr.mxu0 0.0
    %3726 = vmatpush1.msra.mxu0 0.0
    %3727 = vmatprep.subr.mxu0 0.0
    %3728 = vmatpush1.msra.mxu0 %v3683
    %3729 = vmatprep.subr.mxu0 0.0
    %3730 = vmatpush1.msra.mxu0 %v3682
    %3731 = vmatprep.subr.mxu0 0.0
    %3732 = vmatpush2.msra.mxu0 0.0
    %3733 = vmatprep.subr.mxu0 0.0
    %3734 = vmatpush2.msra.mxu0 0.0
    %3735 = vmatprep.subr.mxu0 0.0
    %3736 = vmatpush2.msra.mxu0 0.0
    %3737 = vmatprep.subr.mxu0 0.0
    %3738 = vmatpush2.msra.mxu0 0.0
    %3739 = vmatprep.subr.mxu0 0.0
    %3740 = vmatpush2.msra.mxu0 0.0
    %3741 = vmatprep.subr.mxu0 0.0
    %3742 = vmatpush2.msra.mxu0 0.0
    %3743 = vmatprep.subr.mxu0 0.0
    %3744 = vmatpush2.msra.mxu0 0.0
    %3745 = vmatprep.subr.mxu0 0.0
    %3746 = vmatpush2.msra.mxu0 0.0
    %3747 = vmatprep.subr.mxu0 0.0
    %3748 = vmatpush2.msra.mxu0 0.0
    %3749 = vmatprep.subr.mxu0 0.0
    %3750 = vmatpush2.msra.mxu0 0.0
    %3751 = vmatprep.subr.mxu0 0.0
    %3752 = vmatpush2.msra.mxu0 0.0
    %3753 = vmatprep.subr.mxu0 0.0
    %3754 = vmatpush2.msra.mxu0 0.0
    %3755 = vmatprep.subr.mxu0 0.0
    %3756 = vmatpush2.msra.mxu0 0.0
    %3757 = vmatprep.subr.mxu0 0.0
    %3758 = vmatpush2.msra.mxu0 0.0
    %3759 = vmatprep.subr.mxu0 0.0
    %3760 = vmatpush2.msra.mxu0 0.0
    %3761 = vmatprep.subr.mxu0 0.0
    %3762 = vmatpush2.msra.mxu0 0.0
    %3763 = vmatprep.mubr.f32.mxu0 0.0
    %3764 = vmatmul.mubr.f32.gmra.mxu0 %v3685
    %v3765 = vpop.f32.mrf.mxu0
    %v3766 = vadd.f32 0.0, %v3765
    %v3767 = vpop.f32.mrf.mxu0
    %3768 = vmatprep.mubr.f32.mxu0 0.0
    %3769 = vmatmul.mubr.f32.gmra.mxu0 %v3688
    %v3770 = vpop.f32.mrf.mxu0
    %v3771 = vadd.f32 0.0, %v3770
    %v3772 = vpop.f32.mrf.mxu0
    %3773 = vmatprep.mubr.f32.mxu0 0.0
    %3774 = vmatmul.mubr.f32.gmra.mxu0 %v3691
    %v3775 = vpop.f32.mrf.mxu0
    %v3776 = vadd.f32 0.0, %v3775
    %v3777 = vpop.f32.mrf.mxu0
    %3778 = vmatprep.mubr.f32.mxu0 0.0
    %3779 = vmatmul.mubr.f32.gmra.mxu0 %v3694
    %v3780 = vpop.f32.mrf.mxu0
    %v3781 = vadd.f32 0.0, %v3780
    %v3782 = vpop.f32.mrf.mxu0
    %3783 = vmatprep.mubr.f32.mxu0 0.0
    %3784 = vmatmul.mubr.f32.gmra.mxu0 %v3697
    %v3785 = vpop.f32.mrf.mxu0
    %v3786 = vadd.f32 0.0, %v3785
    %v3787 = vpop.f32.mrf.mxu0
    %3788 = vdwg.mxu0
    %v3789 = vadd.f32 %v3074, %v3766
    %v3790 = vadd.f32 %v3075, %v3771
    %v3791 = vadd.f32 %v3076, %v3776
    %v3792 = vadd.f32 %v3077, %v3781
    %v3793 = vadd.f32 %v3078, %v3786
    %s3794 = scalar_lea.vmem %s14, 1
    %v3795 = vld [vmem:[%s3794] sm:$0x1]
    %v3797 = vlaneseq
    %v3798 = vshrl.u32 %v3797, 7
    %v3799 = vsub.s32 0, %v3798
    %v3800 = vrot.slane %v3795, %v3799
    %v3802 = vmul.f32 %v3800, %v3789
    %v3803 = vmul.f32 %v3800, %v3790
    %v3804 = vmul.f32 %v3800, %v3791
    %v3805 = vmul.f32 %v3800, %v3792
    %v3806 = vmul.f32 %v3800, %v3793
    %v3807 = vadd.f32 %v2241, %v3802
    %v3808 = vadd.f32 %v2242, %v3803
    %v3809 = vadd.f32 %v2243, %v3804
    %v3810 = vadd.f32 %v2244, %v3805
    %v3811 = vadd.f32 %v2245, %v3806
    %s3812 = scalar_lea.vmem %s15, 1
    %v3813 = vld [vmem:[%s3812] sm:$0x1]
    %s3814 = scalar_lea.vmem %s16, 1
    %v3815 = vld [vmem:[%s3814] sm:$0x1]
    %v3816 = vsel %vm212, %v3807, 0.0
    %3817 = vadd.xlane.f32.xlu0 %v3816
    %v3818 = vpop.xlane.xlu0 %3817
    %v3819 = vsel %vm212, %v3808, 0.0
    %3820 = vadd.xlane.f32.xlu0 %v3819
    %v3821 = vpop.xlane.xlu0 %3820
    %v3822 = vsel %vm212, %v3809, 0.0
    %3823 = vadd.xlane.f32.xlu0 %v3822
    %v3824 = vpop.xlane.xlu0 %3823
    %v3825 = vsel %vm212, %v3810, 0.0
    %3826 = vadd.xlane.f32.xlu0 %v3825
    %v3827 = vpop.xlane.xlu0 %3826
    %v3828 = vsel %vm225, %v3811, 0.0
    %3829 = vadd.xlane.f32.xlu0 %v3828
    %v3830 = vpop.xlane.xlu0 %3829
    %v3831 = vmul.f32 %v3818, %v229
    %v3832 = vmul.f32 %v3821, %v229
    %v3833 = vmul.f32 %v3824, %v229
    %v3834 = vmul.f32 %v3827, %v229
    %v3835 = vmul.f32 %v3830, %v229
    %v3836 = vsub.f32 %v3807, %v3831
    %v3837 = vsub.f32 %v3808, %v3832
    %v3838 = vsub.f32 %v3809, %v3833
    %v3839 = vsub.f32 %v3810, %v3834
    %v3840 = vsub.f32 %v3811, %v3835
    %v3841 = vmul.f32 %v3836, %v3836
    %v3842 = vmul.f32 %v3837, %v3837
    %v3843 = vmul.f32 %v3838, %v3838
    %v3844 = vmul.f32 %v3839, %v3839
    %v3845 = vmul.f32 %v3840, %v3840
    %v3846 = vsel %vm212, %v3841, 0.0
    %3847 = vadd.xlane.f32.xlu0 %v3846
    %v3848 = vpop.xlane.xlu0 %3847
    %v3849 = vsel %vm212, %v3842, 0.0
    %3850 = vadd.xlane.f32.xlu0 %v3849
    %v3851 = vpop.xlane.xlu0 %3850
    %v3852 = vsel %vm212, %v3843, 0.0
    %3853 = vadd.xlane.f32.xlu0 %v3852
    %v3854 = vpop.xlane.xlu0 %3853
    %v3855 = vsel %vm212, %v3844, 0.0
    %3856 = vadd.xlane.f32.xlu0 %v3855
    %v3857 = vpop.xlane.xlu0 %3856
    %v3858 = vsel %vm225, %v3845, 0.0
    %3859 = vadd.xlane.f32.xlu0 %v3858
    %v3860 = vpop.xlane.xlu0 %3859
    %v3861 = vmul.f32 %v3848, %v229
    %v3862 = vmul.f32 %v3851, %v229
    %v3863 = vmul.f32 %v3854, %v229
    %v3864 = vmul.f32 %v3857, %v229
    %v3865 = vmul.f32 %v3860, %v229
    %v3866 = vadd.f32 %v3861, 1e-06
    %v3867 = vadd.f32 %v3862, 1e-06
    %v3868 = vadd.f32 %v3863, 1e-06
    %v3869 = vadd.f32 %v3864, 1e-06
    %v3870 = vadd.f32 %v3865, 1e-06
    %v3871 = vrsqrt.pop %v3866
    %v3872 = vrsqrt.pop %v3867
    %v3873 = vrsqrt.pop %v3868
    %v3874 = vrsqrt.pop %v3869
    %v3875 = vrsqrt.pop %v3870
    %v3876 = vmul.f32 %v3836, %v3871
    %v3877 = vmul.f32 %v3837, %v3872
    %v3878 = vmul.f32 %v3838, %v3873
    %v3879 = vmul.f32 %v3839, %v3874
    %v3880 = vmul.f32 %v3840, %v3875
    %v3882 = vlaneseq
    %v3883 = vshrl.u32 %v3882, 7
    %v3884 = vsub.s32 0, %v3883
    %v3885 = vrot.slane %v3813, %v3884
    %v3887 = vmul.f32 %v3876, %v3885
    %v3888 = vmul.f32 %v3877, %v3885
    %v3889 = vmul.f32 %v3878, %v3885
    %v3890 = vmul.f32 %v3879, %v3885
    %v3891 = vmul.f32 %v3880, %v3885
    %v3893 = vlaneseq
    %v3894 = vshrl.u32 %v3893, 7
    %v3895 = vsub.s32 0, %v3894
    %v3896 = vrot.slane %v3815, %v3895
    %v3898 = vadd.f32 %v3887, %v3896
    %v3899 = vadd.f32 %v3888, %v3896
    %v3900 = vadd.f32 %v3889, %v3896
    %v3901 = vadd.f32 %v3890, %v3896
    %v3902 = vadd.f32 %v3891, %v3896
    %s3903 = scalar_lea.vmem %s17, 32
    %v3904 = vld [vmem:[%s3903] sm:$0xff]
    %v3905 = vld [vmem:[%s3903 + $0x8] sm:$0xff]
    %v3906 = vld [vmem:[%s3903 + $0x10] sm:$0xff]
    %v3907 = vld [vmem:[%s3903 + $0x18] sm:$0xff]
    %s3908 = scalar_lea.vmem %s18, 1
    %v3909 = vld [vmem:[%s3908] sm:$0x1]
    %v3911 = vlaneseq
    %v3912 = vshrl.u32 %v3911, 7
    %v3913 = vsub.s32 0, %v3912
    %v3914 = vrot.slane %v3909, %v3913
    %v3917 = vsel %vm212, %v3898, 0
    %v3920 = vsel %vm212, %v3899, 0
    %v3923 = vsel %vm212, %v3900, 0
    %v3926 = vsel %vm212, %v3901, 0
    %v3929 = vsel %vm212, %v3902, 0
    %3931 = vmatprep.subr.mxu0 0.0
    %3932 = vmatpush1.msra.mxu0 0.0
    %3933 = vmatprep.subr.mxu0 0.0
    %3934 = vmatpush1.msra.mxu0 0.0
    %3935 = vmatprep.subr.mxu0 0.0
    %3936 = vmatpush1.msra.mxu0 0.0
    %3937 = vmatprep.subr.mxu0 0.0
    %3938 = vmatpush1.msra.mxu0 0.0
    %3939 = vmatprep.subr.mxu0 0.0
    %3940 = vmatpush1.msra.mxu0 0.0
    %3941 = vmatprep.subr.mxu0 0.0
    %3942 = vmatpush1.msra.mxu0 0.0
    %3943 = vmatprep.subr.mxu0 0.0
    %3944 = vmatpush1.msra.mxu0 0.0
    %3945 = vmatprep.subr.mxu0 0.0
    %3946 = vmatpush1.msra.mxu0 0.0
    %3947 = vmatprep.subr.mxu0 0.0
    %3948 = vmatpush1.msra.mxu0 0.0
    %3949 = vmatprep.subr.mxu0 0.0
    %3950 = vmatpush1.msra.mxu0 0.0
    %3951 = vmatprep.subr.mxu0 0.0
    %3952 = vmatpush1.msra.mxu0 0.0
    %3953 = vmatprep.subr.mxu0 0.0
    %3954 = vmatpush1.msra.mxu0 0.0
    %3955 = vmatprep.subr.mxu0 0.0
    %3956 = vmatpush1.msra.mxu0 %v3907
    %3957 = vmatprep.subr.mxu0 0.0
    %3958 = vmatpush1.msra.mxu0 %v3906
    %3959 = vmatprep.subr.mxu0 0.0
    %3960 = vmatpush1.msra.mxu0 %v3905
    %3961 = vmatprep.subr.mxu0 0.0
    %3962 = vmatpush1.msra.mxu0 %v3904
    %3963 = vmatprep.subr.mxu0 0.0
    %3964 = vmatpush2.msra.mxu0 0.0
    %3965 = vmatprep.subr.mxu0 0.0
    %3966 = vmatpush2.msra.mxu0 0.0
    %3967 = vmatprep.subr.mxu0 0.0
    %3968 = vmatpush2.msra.mxu0 0.0
    %3969 = vmatprep.subr.mxu0 0.0
    %3970 = vmatpush2.msra.mxu0 0.0
    %3971 = vmatprep.subr.mxu0 0.0
    %3972 = vmatpush2.msra.mxu0 0.0
    %3973 = vmatprep.subr.mxu0 0.0
    %3974 = vmatpush2.msra.mxu0 0.0
    %3975 = vmatprep.subr.mxu0 0.0
    %3976 = vmatpush2.msra.mxu0 0.0
    %3977 = vmatprep.subr.mxu0 0.0
    %3978 = vmatpush2.msra.mxu0 0.0
    %3979 = vmatprep.subr.mxu0 0.0
    %3980 = vmatpush2.msra.mxu0 0.0
    %3981 = vmatprep.subr.mxu0 0.0
    %3982 = vmatpush2.msra.mxu0 0.0
    %3983 = vmatprep.subr.mxu0 0.0
    %3984 = vmatpush2.msra.mxu0 0.0
    %3985 = vmatprep.subr.mxu0 0.0
    %3986 = vmatpush2.msra.mxu0 0.0
    %3987 = vmatprep.subr.mxu0 0.0
    %3988 = vmatpush2.msra.mxu0 0.0
    %3989 = vmatprep.subr.mxu0 0.0
    %3990 = vmatpush2.msra.mxu0 0.0
    %3991 = vmatprep.subr.mxu0 0.0
    %3992 = vmatpush2.msra.mxu0 0.0
    %3993 = vmatprep.subr.mxu0 0.0
    %3994 = vmatpush2.msra.mxu0 0.0
    %3995 = vmatprep.mubr.f32.mxu0 0.0
    %3996 = vmatmul.mubr.f32.gmra.mxu0 %v3917
    %v3997 = vpop.f32.mrf.mxu0
    %v3998 = vadd.f32 %v3914, %v3997
    %v3999 = vpop.f32.mrf.mxu0
    %4000 = vmatprep.mubr.f32.mxu0 0.0
    %4001 = vmatmul.mubr.f32.gmra.mxu0 %v3920
    %v4002 = vpop.f32.mrf.mxu0
    %v4003 = vadd.f32 %v3914, %v4002
    %v4004 = vpop.f32.mrf.mxu0
    %4005 = vmatprep.mubr.f32.mxu0 0.0
    %4006 = vmatmul.mubr.f32.gmra.mxu0 %v3923
    %v4007 = vpop.f32.mrf.mxu0
    %v4008 = vadd.f32 %v3914, %v4007
    %v4009 = vpop.f32.mrf.mxu0
    %4010 = vmatprep.mubr.f32.mxu0 0.0
    %4011 = vmatmul.mubr.f32.gmra.mxu0 %v3926
    %v4012 = vpop.f32.mrf.mxu0
    %v4013 = vadd.f32 %v3914, %v4012
    %v4014 = vpop.f32.mrf.mxu0
    %4015 = vmatprep.mubr.f32.mxu0 0.0
    %4016 = vmatmul.mubr.f32.gmra.mxu0 %v3929
    %v4017 = vpop.f32.mrf.mxu0
    %v4018 = vadd.f32 %v3914, %v4017
    %v4019 = vpop.f32.mrf.mxu0
    %4020 = vdwg.mxu0
    %v4021 = vmul.f32 %v3998, 0.5
    %v4022 = vmul.f32 %v4003, 0.5
    %v4023 = vmul.f32 %v4008, 0.5
    %v4024 = vmul.f32 %v4013, 0.5
    %v4025 = vmul.f32 %v4018, 0.5
    %v4026 = vmul.f32 %v3998, 0.70710677
    %v4027 = vmul.f32 %v4003, 0.70710677
    %v4028 = vmul.f32 %v4008, 0.70710677
    %v4029 = vmul.f32 %v4013, 0.70710677
    %v4030 = vmul.f32 %v4018, 0.70710677
    %v4031 = vand.u32 2147483647, %v4026
    %v4032 = vand.u32 2147483647, %v4027
    %v4033 = vand.u32 2147483647, %v4028
    %v4034 = vand.u32 2147483647, %v4029
    %v4035 = vand.u32 2147483647, %v4030
    %v4036 = vmul.f32 %v4031, 0.3275911
    %v4037 = vmul.f32 %v4032, 0.3275911
    %v4038 = vmul.f32 %v4033, 0.3275911
    %v4039 = vmul.f32 %v4034, 0.3275911
    %v4040 = vmul.f32 %v4035, 0.3275911
    %v4041 = vadd.f32 %v4036, 1.0
    %v4042 = vadd.f32 %v4037, 1.0
    %v4043 = vadd.f32 %v4038, 1.0
    %v4044 = vadd.f32 %v4039, 1.0
    %v4045 = vadd.f32 %v4040, 1.0
    %v4046 = vrcp.pop %v4041
    %v4047 = vmul.f32 1.0, %v4046
    %v4048 = vrcp.pop %v4042
    %v4049 = vmul.f32 1.0, %v4048
    %v4050 = vrcp.pop %v4043
    %v4051 = vmul.f32 1.0, %v4050
    %v4052 = vrcp.pop %v4044
    %v4053 = vmul.f32 1.0, %v4052
    %v4054 = vrcp.pop %v4045
    %v4055 = vmul.f32 1.0, %v4054
    %v4056 = vmul.f32 %v4047, 1.0614054
    %v4057 = vmul.f32 %v4049, 1.0614054
    %v4058 = vmul.f32 %v4051, 1.0614054
    %v4059 = vmul.f32 %v4053, 1.0614054
    %v4060 = vmul.f32 %v4055, 1.0614054
    %v4061 = vadd.f32 %v4056, -1.4531521
    %v4062 = vadd.f32 %v4057, -1.4531521
    %v4063 = vadd.f32 %v4058, -1.4531521
    %v4064 = vadd.f32 %v4059, -1.4531521
    %v4065 = vadd.f32 %v4060, -1.4531521
    %v4066 = vmul.f32 %v4061, %v4047
    %v4067 = vmul.f32 %v4062, %v4049
    %v4068 = vmul.f32 %v4063, %v4051
    %v4069 = vmul.f32 %v4064, %v4053
    %v4070 = vmul.f32 %v4065, %v4055
    %v4071 = vadd.f32 %v4066, 1.4214138
    %v4072 = vadd.f32 %v4067, 1.4214138
    %v4073 = vadd.f32 %v4068, 1.4214138
    %v4074 = vadd.f32 %v4069, 1.4214138
    %v4075 = vadd.f32 %v4070, 1.4214138
    %v4076 = vmul.f32 %v4071, %v4047
    %v4077 = vmul.f32 %v4072, %v4049
    %v4078 = vmul.f32 %v4073, %v4051
    %v4079 = vmul.f32 %v4074, %v4053
    %v4080 = vmul.f32 %v4075, %v4055
    %v4081 = vadd.f32 %v4076, -0.28449672
    %v4082 = vadd.f32 %v4077, -0.28449672
    %v4083 = vadd.f32 %v4078, -0.28449672
    %v4084 = vadd.f32 %v4079, -0.28449672
    %v4085 = vadd.f32 %v4080, -0.28449672
    %v4086 = vmul.f32 %v4081, %v4047
    %v4087 = vmul.f32 %v4082, %v4049
    %v4088 = vmul.f32 %v4083, %v4051
    %v4089 = vmul.f32 %v4084, %v4053
    %v4090 = vmul.f32 %v4085, %v4055
    %v4091 = vadd.f32 %v4086, 0.2548296
    %v4092 = vadd.f32 %v4087, 0.2548296
    %v4093 = vadd.f32 %v4088, 0.2548296
    %v4094 = vadd.f32 %v4089, 0.2548296
    %v4095 = vadd.f32 %v4090, 0.2548296
    %v4096 = vmul.f32 %v4091, %v4047
    %v4097 = vmul.f32 %v4092, %v4049
    %v4098 = vmul.f32 %v4093, %v4051
    %v4099 = vmul.f32 %v4094, %v4053
    %v4100 = vmul.f32 %v4095, %v4055
    %v4101 = vsub.f32 0.0, %v4031
    %v4102 = vsub.f32 0.0, %v4032
    %v4103 = vsub.f32 0.0, %v4033
    %v4104 = vsub.f32 0.0, %v4034
    %v4105 = vsub.f32 0.0, %v4035
    %v4106 = vmul.f32 %v4101, %v4031
    %v4107 = vmul.f32 %v4102, %v4032
    %v4108 = vmul.f32 %v4103, %v4033
    %v4109 = vmul.f32 %v4104, %v4034
    %v4110 = vmul.f32 %v4105, %v4035
    %v4111 = vmul.f32 %v4106, 1.442695
    %v4112 = vpow.pop %v4111
    %v4113 = vmul.f32 %v4107, 1.442695
    %v4114 = vpow.pop %v4113
    %v4115 = vmul.f32 %v4108, 1.442695
    %v4116 = vpow.pop %v4115
    %v4117 = vmul.f32 %v4109, 1.442695
    %v4118 = vpow.pop %v4117
    %v4119 = vmul.f32 %v4110, 1.442695
    %v4120 = vpow.pop %v4119
    %v4121 = vmul.f32 %v4096, %v4112
    %v4122 = vmul.f32 %v4097, %v4114
    %v4123 = vmul.f32 %v4098, %v4116
    %v4124 = vmul.f32 %v4099, %v4118
    %v4125 = vmul.f32 %v4100, %v4120
    %v4126 = vsub.f32 1.0, %v4121
    %v4127 = vsub.f32 1.0, %v4122
    %v4128 = vsub.f32 1.0, %v4123
    %v4129 = vsub.f32 1.0, %v4124
    %v4130 = vsub.f32 1.0, %v4125
    %vm4131 = vcmp.ge.f32.partialorder %v4026, 0.0
    %vm4132 = vcmp.ge.f32.partialorder %v4027, 0.0
    %vm4133 = vcmp.ge.f32.partialorder %v4028, 0.0
    %vm4134 = vcmp.ge.f32.partialorder %v4029, 0.0
    %vm4135 = vcmp.ge.f32.partialorder %v4030, 0.0
    %v4136 = vsub.f32 0.0, %v4126
    %v4137 = vsub.f32 0.0, %v4127
    %v4138 = vsub.f32 0.0, %v4128
    %v4139 = vsub.f32 0.0, %v4129
    %v4140 = vsub.f32 0.0, %v4130
    %v4141 = vsel %vm4131, %v4126, %v4136
    %v4142 = vsel %vm4132, %v4127, %v4137
    %v4143 = vsel %vm4133, %v4128, %v4138
    %v4144 = vsel %vm4134, %v4129, %v4139
    %v4145 = vsel %vm4135, %v4130, %v4140
    %v4146 = vadd.f32 %v4141, 1.0
    %v4147 = vadd.f32 %v4142, 1.0
    %v4148 = vadd.f32 %v4143, 1.0
    %v4149 = vadd.f32 %v4144, 1.0
    %v4150 = vadd.f32 %v4145, 1.0
    %v4151 = vmul.f32 %v4021, %v4146
    %v4152 = vmul.f32 %v4022, %v4147
    %v4153 = vmul.f32 %v4023, %v4148
    %v4154 = vmul.f32 %v4024, %v4149
    %v4155 = vmul.f32 %v4025, %v4150
    %s4156 = scalar_lea.vmem %s19, 64
    %v4157 = vld [vmem:[%s4156] sm:$0xff]
    %v4158 = vld [vmem:[%s4156 + $0x8] sm:$0xff]
    %v4159 = vld [vmem:[%s4156 + $0x10] sm:$0xff]
    %v4160 = vld [vmem:[%s4156 + $0x18] sm:$0xff]
    %v4161 = vld [vmem:[%s4156 + $0x20] sm:$0xff]
    %v4162 = vld [vmem:[%s4156 + $0x28] sm:$0xff]
    %v4163 = vld [vmem:[%s4156 + $0x30] sm:$0xff]
    %v4164 = vld [vmem:[%s4156 + $0x38] sm:$0xff]
    %s4165 = scalar_lea.vmem %s20, 1
    %v4166 = vld [vmem:[%s4165] sm:$0x1]
    %v4168 = vlaneseq
    %v4169 = vshrl.u32 %v4168, 7
    %v4170 = vsub.s32 0, %v4169
    %v4171 = vrot.slane %v4166, %v4170
    %v4174 = vsel %vm2123, %v4151, 0
    %v4177 = vsel %vm2123, %v4152, 0
    %v4180 = vsel %vm2123, %v4153, 0
    %v4183 = vsel %vm2123, %v4154, 0
    %v4186 = vsel %vm2123, %v4155, 0
    %4188 = vmatprep.subr.mxu0 0.0
    %4189 = vmatpush1.msra.mxu0 0.0
    %4190 = vmatprep.subr.mxu0 0.0
    %4191 = vmatpush1.msra.mxu0 0.0
    %4192 = vmatprep.subr.mxu0 0.0
    %4193 = vmatpush1.msra.mxu0 0.0
    %4194 = vmatprep.subr.mxu0 0.0
    %4195 = vmatpush1.msra.mxu0 0.0
    %4196 = vmatprep.subr.mxu0 0.0
    %4197 = vmatpush1.msra.mxu0 0.0
    %4198 = vmatprep.subr.mxu0 0.0
    %4199 = vmatpush1.msra.mxu0 0.0
    %4200 = vmatprep.subr.mxu0 0.0
    %4201 = vmatpush1.msra.mxu0 0.0
    %4202 = vmatprep.subr.mxu0 0.0
    %4203 = vmatpush1.msra.mxu0 0.0
    %4204 = vmatprep.subr.mxu0 0.0
    %4205 = vmatpush1.msra.mxu0 %v4164
    %4206 = vmatprep.subr.mxu0 0.0
    %4207 = vmatpush1.msra.mxu0 %v4163
    %4208 = vmatprep.subr.mxu0 0.0
    %4209 = vmatpush1.msra.mxu0 %v4162
    %4210 = vmatprep.subr.mxu0 0.0
    %4211 = vmatpush1.msra.mxu0 %v4161
    %4212 = vmatprep.subr.mxu0 0.0
    %4213 = vmatpush1.msra.mxu0 %v4160
    %4214 = vmatprep.subr.mxu0 0.0
    %4215 = vmatpush1.msra.mxu0 %v4159
    %4216 = vmatprep.subr.mxu0 0.0
    %4217 = vmatpush1.msra.mxu0 %v4158
    %4218 = vmatprep.subr.mxu0 0.0
    %4219 = vmatpush1.msra.mxu0 %v4157
    %4220 = vmatprep.subr.mxu0 0.0
    %4221 = vmatpush2.msra.mxu0 0.0
    %4222 = vmatprep.subr.mxu0 0.0
    %4223 = vmatpush2.msra.mxu0 0.0
    %4224 = vmatprep.subr.mxu0 0.0
    %4225 = vmatpush2.msra.mxu0 0.0
    %4226 = vmatprep.subr.mxu0 0.0
    %4227 = vmatpush2.msra.mxu0 0.0
    %4228 = vmatprep.subr.mxu0 0.0
    %4229 = vmatpush2.msra.mxu0 0.0
    %4230 = vmatprep.subr.mxu0 0.0
    %4231 = vmatpush2.msra.mxu0 0.0
    %4232 = vmatprep.subr.mxu0 0.0
    %4233 = vmatpush2.msra.mxu0 0.0
    %4234 = vmatprep.subr.mxu0 0.0
    %4235 = vmatpush2.msra.mxu0 0.0
    %4236 = vmatprep.subr.mxu0 0.0
    %4237 = vmatpush2.msra.mxu0 0.0
    %4238 = vmatprep.subr.mxu0 0.0
    %4239 = vmatpush2.msra.mxu0 0.0
    %4240 = vmatprep.subr.mxu0 0.0
    %4241 = vmatpush2.msra.mxu0 0.0
    %4242 = vmatprep.subr.mxu0 0.0
    %4243 = vmatpush2.msra.mxu0 0.0
    %4244 = vmatprep.subr.mxu0 0.0
    %4245 = vmatpush2.msra.mxu0 0.0
    %4246 = vmatprep.subr.mxu0 0.0
    %4247 = vmatpush2.msra.mxu0 0.0
    %4248 = vmatprep.subr.mxu0 0.0
    %4249 = vmatpush2.msra.mxu0 0.0
    %4250 = vmatprep.subr.mxu0 0.0
    %4251 = vmatpush2.msra.mxu0 0.0
    %4252 = vmatprep.mubr.f32.mxu0 0.0
    %4253 = vmatmul.mubr.f32.gmra.mxu0 %v4174
    %v4254 = vpop.f32.mrf.mxu0
    %v4255 = vadd.f32 %v4171, %v4254
    %v4256 = vpop.f32.mrf.mxu0
    %4257 = vmatprep.mubr.f32.mxu0 0.0
    %4258 = vmatmul.mubr.f32.gmra.mxu0 %v4177
    %v4259 = vpop.f32.mrf.mxu0
    %v4260 = vadd.f32 %v4171, %v4259
    %v4261 = vpop.f32.mrf.mxu0
    %4262 = vmatprep.mubr.f32.mxu0 0.0
    %4263 = vmatmul.mubr.f32.gmra.mxu0 %v4180
    %v4264 = vpop.f32.mrf.mxu0
    %v4265 = vadd.f32 %v4171, %v4264
    %v4266 = vpop.f32.mrf.mxu0
    %4267 = vmatprep.mubr.f32.mxu0 0.0
    %4268 = vmatmul.mubr.f32.gmra.mxu0 %v4183
    %v4269 = vpop.f32.mrf.mxu0
    %v4270 = vadd.f32 %v4171, %v4269
    %v4271 = vpop.f32.mrf.mxu0
    %4272 = vmatprep.mubr.f32.mxu0 0.0
    %4273 = vmatmul.mubr.f32.gmra.mxu0 %v4186
    %v4274 = vpop.f32.mrf.mxu0
    %v4275 = vadd.f32 %v4171, %v4274
    %v4276 = vpop.f32.mrf.mxu0
    %4277 = vdwg.mxu0
    %s4278 = scalar_lea.vmem %s21, 1
    %v4279 = vld [vmem:[%s4278] sm:$0x1]
    %v4281 = vlaneseq
    %v4282 = vshrl.u32 %v4281, 7
    %v4283 = vsub.s32 0, %v4282
    %v4284 = vrot.slane %v4279, %v4283
    %v4286 = vmul.f32 %v4284, %v4255
    %v4287 = vmul.f32 %v4284, %v4260
    %v4288 = vmul.f32 %v4284, %v4265
    %v4289 = vmul.f32 %v4284, %v4270
    %v4290 = vmul.f32 %v4284, %v4275
    %v4291 = vadd.f32 %v3807, %v4286
    %v4292 = vadd.f32 %v3808, %v4287
    %v4293 = vadd.f32 %v3809, %v4288
    %v4294 = vadd.f32 %v3810, %v4289
    %v4295 = vadd.f32 %v3811, %v4290
    %4300 = vrot.lane.b32.xlu0 %v4291, 32
    %v4301 = vpop.permute.xlu0 %4300
    %4302 = vrot.lane.b32.xlu0 %v4292, 32
    %v4303 = vpop.permute.xlu0 %4302
    %4304 = vrot.lane.b32.xlu0 %v4293, 32
    %v4305 = vpop.permute.xlu0 %4304
    %4306 = vrot.lane.b32.xlu0 %v4294, 32
    %v4307 = vpop.permute.xlu0 %4306
    %vm4312 = vcmask 523520
    %4313 = vst.msk [vmem:[#allocation2] sm:$0xff] %vm4312, %v4301
    %4314 = vst.msk [vmem:[#allocation2 + $0x8] sm:$0xff] %vm4312, %v4303
    %4315 = vst.msk [vmem:[#allocation2 + $0x10] sm:$0xff] %vm4312, %v4305
    %4316 = vst.msk [vmem:[#allocation2 + $0x18] sm:$0xff] %vm4312, %v4307
    %s4317 = scalar_lea.vmem %s4, 2
    %v4318 = vld [vmem:[%s4317] sm:$0x1]
    %s4319 = scalar_lea.vmem %s5, 2
    %v4320 = vld [vmem:[%s4319] sm:$0x1]
    %v4321 = vsel %vm212, %v4291, 0.0
    %4322 = vadd.xlane.f32.xlu0 %v4321
    %v4323 = vpop.xlane.xlu0 %4322
    %v4324 = vsel %vm212, %v4292, 0.0
    %4325 = vadd.xlane.f32.xlu0 %v4324
    %v4326 = vpop.xlane.xlu0 %4325
    %v4327 = vsel %vm212, %v4293, 0.0
    %4328 = vadd.xlane.f32.xlu0 %v4327
    %v4329 = vpop.xlane.xlu0 %4328
    %v4330 = vsel %vm212, %v4294, 0.0
    %4331 = vadd.xlane.f32.xlu0 %v4330
    %v4332 = vpop.xlane.xlu0 %4331
    %v4333 = vsel %vm225, %v4295, 0.0
    %4334 = vadd.xlane.f32.xlu0 %v4333
    %v4335 = vpop.xlane.xlu0 %4334
    %v4336 = vmul.f32 %v4323, %v229
    %v4337 = vmul.f32 %v4326, %v229
    %v4338 = vmul.f32 %v4329, %v229
    %v4339 = vmul.f32 %v4332, %v229
    %v4340 = vmul.f32 %v4335, %v229
    %v4341 = vsub.f32 %v4291, %v4336
    %v4342 = vsub.f32 %v4292, %v4337
    %v4343 = vsub.f32 %v4293, %v4338
    %v4344 = vsub.f32 %v4294, %v4339
    %v4345 = vsub.f32 %v4295, %v4340
    %v4346 = vmul.f32 %v4341, %v4341
    %v4347 = vmul.f32 %v4342, %v4342
    %v4348 = vmul.f32 %v4343, %v4343
    %v4349 = vmul.f32 %v4344, %v4344
    %v4350 = vmul.f32 %v4345, %v4345
    %v4351 = vsel %vm212, %v4346, 0.0
    %4352 = vadd.xlane.f32.xlu0 %v4351
    %v4353 = vpop.xlane.xlu0 %4352
    %v4354 = vsel %vm212, %v4347, 0.0
    %4355 = vadd.xlane.f32.xlu0 %v4354
    %v4356 = vpop.xlane.xlu0 %4355
    %v4357 = vsel %vm212, %v4348, 0.0
    %4358 = vadd.xlane.f32.xlu0 %v4357
    %v4359 = vpop.xlane.xlu0 %4358
    %v4360 = vsel %vm212, %v4349, 0.0
    %4361 = vadd.xlane.f32.xlu0 %v4360
    %v4362 = vpop.xlane.xlu0 %4361
    %v4363 = vsel %vm225, %v4350, 0.0
    %4364 = vadd.xlane.f32.xlu0 %v4363
    %v4365 = vpop.xlane.xlu0 %4364
    %v4366 = vmul.f32 %v4353, %v229
    %v4367 = vmul.f32 %v4356, %v229
    %v4368 = vmul.f32 %v4359, %v229
    %v4369 = vmul.f32 %v4362, %v229
    %v4370 = vmul.f32 %v4365, %v229
    %v4371 = vadd.f32 %v4366, 1e-06
    %v4372 = vadd.f32 %v4367, 1e-06
    %v4373 = vadd.f32 %v4368, 1e-06
    %v4374 = vadd.f32 %v4369, 1e-06
    %v4375 = vadd.f32 %v4370, 1e-06
    %v4376 = vrsqrt.pop %v4371
    %v4377 = vrsqrt.pop %v4372
    %v4378 = vrsqrt.pop %v4373
    %v4379 = vrsqrt.pop %v4374
    %v4380 = vrsqrt.pop %v4375
    %v4381 = vmul.f32 %v4341, %v4376
    %v4382 = vmul.f32 %v4342, %v4377
    %v4383 = vmul.f32 %v4343, %v4378
    %v4384 = vmul.f32 %v4344, %v4379
    %v4385 = vmul.f32 %v4345, %v4380
    %v4387 = vlaneseq
    %v4388 = vshrl.u32 %v4387, 7
    %v4389 = vsub.s32 0, %v4388
    %v4390 = vrot.slane %v4318, %v4389
    %v4392 = vmul.f32 %v4381, %v4390
    %v4393 = vmul.f32 %v4382, %v4390
    %v4394 = vmul.f32 %v4383, %v4390
    %v4395 = vmul.f32 %v4384, %v4390
    %v4396 = vmul.f32 %v4385, %v4390
    %v4398 = vlaneseq
    %v4399 = vshrl.u32 %v4398, 7
    %v4400 = vsub.s32 0, %v4399
    %v4401 = vrot.slane %v4320, %v4400
    %v4403 = vadd.f32 %v4392, %v4401
    %v4404 = vadd.f32 %v4393, %v4401
    %v4405 = vadd.f32 %v4394, %v4401
    %v4406 = vadd.f32 %v4395, %v4401
    %v4407 = vadd.f32 %v4396, %v4401
    %s4408 = scalar_lea.vmem %s13, 2
    %v4409 = vld [vmem:[%s4408] sm:$0x1]
    %s4410 = scalar_lea.vmem %s6, 128
    %v4411 = vld [vmem:[%s4410] sm:$0xff]
    %v4412 = vld [vmem:[%s4410 + $0x8] sm:$0xff]
    %v4413 = vld [vmem:[%s4410 + $0x10] sm:$0xff]
    %v4414 = vld [vmem:[%s4410 + $0x18] sm:$0xff]
    %s4415 = scalar_lea.vmem %s7, 4
    %v4416 = vld [vmem:[%s4415] sm:$0x1]
    %v4418 = vlaneseq
    %v4419 = vshrl.u32 %v4418, 7
    %v4420 = vsub.s32 0, %v4419
    %v4421 = vrot.slane %v4416, %v4420
    %v4424 = vsel %vm212, %v4403, 0
    %v4427 = vsel %vm212, %v4404, 0
    %v4430 = vsel %vm212, %v4405, 0
    %v4433 = vsel %vm212, %v4406, 0
    %v4436 = vsel %vm212, %v4407, 0
    %4438 = vmatprep.subr.mxu0 0.0
    %4439 = vmatpush1.msra.mxu0 0.0
    %4440 = vmatprep.subr.mxu0 0.0
    %4441 = vmatpush1.msra.mxu0 0.0
    %4442 = vmatprep.subr.mxu0 0.0
    %4443 = vmatpush1.msra.mxu0 0.0
    %4444 = vmatprep.subr.mxu0 0.0
    %4445 = vmatpush1.msra.mxu0 0.0
    %4446 = vmatprep.subr.mxu0 0.0
    %4447 = vmatpush1.msra.mxu0 0.0
    %4448 = vmatprep.subr.mxu0 0.0
    %4449 = vmatpush1.msra.mxu0 0.0
    %4450 = vmatprep.subr.mxu0 0.0
    %4451 = vmatpush1.msra.mxu0 0.0
    %4452 = vmatprep.subr.mxu0 0.0
    %4453 = vmatpush1.msra.mxu0 0.0
    %4454 = vmatprep.subr.mxu0 0.0
    %4455 = vmatpush1.msra.mxu0 0.0
    %4456 = vmatprep.subr.mxu0 0.0
    %4457 = vmatpush1.msra.mxu0 0.0
    %4458 = vmatprep.subr.mxu0 0.0
    %4459 = vmatpush1.msra.mxu0 0.0
    %4460 = vmatprep.subr.mxu0 0.0
    %4461 = vmatpush1.msra.mxu0 0.0
    %4462 = vmatprep.subr.mxu0 0.0
    %4463 = vmatpush1.msra.mxu0 %v4414
    %4464 = vmatprep.subr.mxu0 0.0
    %4465 = vmatpush1.msra.mxu0 %v4413
    %4466 = vmatprep.subr.mxu0 0.0
    %4467 = vmatpush1.msra.mxu0 %v4412
    %4468 = vmatprep.subr.mxu0 0.0
    %4469 = vmatpush1.msra.mxu0 %v4411
    %4470 = vmatprep.subr.mxu0 0.0
    %4471 = vmatpush2.msra.mxu0 0.0
    %4472 = vmatprep.subr.mxu0 0.0
    %4473 = vmatpush2.msra.mxu0 0.0
    %4474 = vmatprep.subr.mxu0 0.0
    %4475 = vmatpush2.msra.mxu0 0.0
    %4476 = vmatprep.subr.mxu0 0.0
    %4477 = vmatpush2.msra.mxu0 0.0
    %4478 = vmatprep.subr.mxu0 0.0
    %4479 = vmatpush2.msra.mxu0 0.0
    %4480 = vmatprep.subr.mxu0 0.0
    %4481 = vmatpush2.msra.mxu0 0.0
    %4482 = vmatprep.subr.mxu0 0.0
    %4483 = vmatpush2.msra.mxu0 0.0
    %4484 = vmatprep.subr.mxu0 0.0
    %4485 = vmatpush2.msra.mxu0 0.0
    %4486 = vmatprep.subr.mxu0 0.0
    %4487 = vmatpush2.msra.mxu0 0.0
    %4488 = vmatprep.subr.mxu0 0.0
    %4489 = vmatpush2.msra.mxu0 0.0
    %4490 = vmatprep.subr.mxu0 0.0
    %4491 = vmatpush2.msra.mxu0 0.0
    %4492 = vmatprep.subr.mxu0 0.0
    %4493 = vmatpush2.msra.mxu0 0.0
    %4494 = vmatprep.subr.mxu0 0.0
    %4495 = vmatpush2.msra.mxu0 0.0
    %4496 = vmatprep.subr.mxu0 0.0
    %4497 = vmatpush2.msra.mxu0 0.0
    %4498 = vmatprep.subr.mxu0 0.0
    %4499 = vmatpush2.msra.mxu0 0.0
    %4500 = vmatprep.subr.mxu0 0.0
    %4501 = vmatpush2.msra.mxu0 0.0
    %4502 = vmatprep.mubr.f32.mxu0 0.0
    %4503 = vmatmul.mubr.f32.gmra.mxu0 %v4424
    %v4504 = vpop.f32.mrf.mxu0
    %v4505 = vadd.f32 %v4421, %v4504
    %v4506 = vpop.f32.mrf.mxu0
    %4507 = vmatprep.mubr.f32.mxu0 0.0
    %4508 = vmatmul.mubr.f32.gmra.mxu0 %v4427
    %v4509 = vpop.f32.mrf.mxu0
    %v4510 = vadd.f32 %v4421, %v4509
    %v4511 = vpop.f32.mrf.mxu0
    %4512 = vmatprep.mubr.f32.mxu0 0.0
    %4513 = vmatmul.mubr.f32.gmra.mxu0 %v4430
    %v4514 = vpop.f32.mrf.mxu0
    %v4515 = vadd.f32 %v4421, %v4514
    %v4516 = vpop.f32.mrf.mxu0
    %4517 = vmatprep.mubr.f32.mxu0 0.0
    %4518 = vmatmul.mubr.f32.gmra.mxu0 %v4433
    %v4519 = vpop.f32.mrf.mxu0
    %v4520 = vadd.f32 %v4421, %v4519
    %v4521 = vpop.f32.mrf.mxu0
    %4522 = vmatprep.mubr.f32.mxu0 0.0
    %4523 = vmatmul.mubr.f32.gmra.mxu0 %v4436
    %v4524 = vpop.f32.mrf.mxu0
    %v4525 = vadd.f32 %v4421, %v4524
    %v4526 = vpop.f32.mrf.mxu0
    %4527 = vdwg.mxu0
    %s4528 = scalar_lea.vmem %s8, 128
    %v4529 = vld [vmem:[%s4528] sm:$0xff]
    %v4530 = vld [vmem:[%s4528 + $0x8] sm:$0xff]
    %v4531 = vld [vmem:[%s4528 + $0x10] sm:$0xff]
    %v4532 = vld [vmem:[%s4528 + $0x18] sm:$0xff]
    %s4533 = scalar_lea.vmem %s9, 4
    %v4534 = vld [vmem:[%s4533] sm:$0x1]
    %v4536 = vlaneseq
    %v4537 = vshrl.u32 %v4536, 7
    %v4538 = vsub.s32 0, %v4537
    %v4539 = vrot.slane %v4534, %v4538
    %4541 = vmatprep.subr.mxu0 0.0
    %4542 = vmatpush1.msra.mxu0 0.0
    %4543 = vmatprep.subr.mxu0 0.0
    %4544 = vmatpush1.msra.mxu0 0.0
    %4545 = vmatprep.subr.mxu0 0.0
    %4546 = vmatpush1.msra.mxu0 0.0
    %4547 = vmatprep.subr.mxu0 0.0
    %4548 = vmatpush1.msra.mxu0 0.0
    %4549 = vmatprep.subr.mxu0 0.0
    %4550 = vmatpush1.msra.mxu0 0.0
    %4551 = vmatprep.subr.mxu0 0.0
    %4552 = vmatpush1.msra.mxu0 0.0
    %4553 = vmatprep.subr.mxu0 0.0
    %4554 = vmatpush1.msra.mxu0 0.0
    %4555 = vmatprep.subr.mxu0 0.0
    %4556 = vmatpush1.msra.mxu0 0.0
    %4557 = vmatprep.subr.mxu0 0.0
    %4558 = vmatpush1.msra.mxu0 0.0
    %4559 = vmatprep.subr.mxu0 0.0
    %4560 = vmatpush1.msra.mxu0 0.0
    %4561 = vmatprep.subr.mxu0 0.0
    %4562 = vmatpush1.msra.mxu0 0.0
    %4563 = vmatprep.subr.mxu0 0.0
    %4564 = vmatpush1.msra.mxu0 0.0
    %4565 = vmatprep.subr.mxu0 0.0
    %4566 = vmatpush1.msra.mxu0 %v4532
    %4567 = vmatprep.subr.mxu0 0.0
    %4568 = vmatpush1.msra.mxu0 %v4531
    %4569 = vmatprep.subr.mxu0 0.0
    %4570 = vmatpush1.msra.mxu0 %v4530
    %4571 = vmatprep.subr.mxu0 0.0
    %4572 = vmatpush1.msra.mxu0 %v4529
    %4573 = vmatprep.subr.mxu0 0.0
    %4574 = vmatpush2.msra.mxu0 0.0
    %4575 = vmatprep.subr.mxu0 0.0
    %4576 = vmatpush2.msra.mxu0 0.0
    %4577 = vmatprep.subr.mxu0 0.0
    %4578 = vmatpush2.msra.mxu0 0.0
    %4579 = vmatprep.subr.mxu0 0.0
    %4580 = vmatpush2.msra.mxu0 0.0
    %4581 = vmatprep.subr.mxu0 0.0
    %4582 = vmatpush2.msra.mxu0 0.0
    %4583 = vmatprep.subr.mxu0 0.0
    %4584 = vmatpush2.msra.mxu0 0.0
    %4585 = vmatprep.subr.mxu0 0.0
    %4586 = vmatpush2.msra.mxu0 0.0
    %4587 = vmatprep.subr.mxu0 0.0
    %4588 = vmatpush2.msra.mxu0 0.0
    %4589 = vmatprep.subr.mxu0 0.0
    %4590 = vmatpush2.msra.mxu0 0.0
    %4591 = vmatprep.subr.mxu0 0.0
    %4592 = vmatpush2.msra.mxu0 0.0
    %4593 = vmatprep.subr.mxu0 0.0
    %4594 = vmatpush2.msra.mxu0 0.0
    %4595 = vmatprep.subr.mxu0 0.0
    %4596 = vmatpush2.msra.mxu0 0.0
    %4597 = vmatprep.subr.mxu0 0.0
    %4598 = vmatpush2.msra.mxu0 0.0
    %4599 = vmatprep.subr.mxu0 0.0
    %4600 = vmatpush2.msra.mxu0 0.0
    %4601 = vmatprep.subr.mxu0 0.0
    %4602 = vmatpush2.msra.mxu0 0.0
    %4603 = vmatprep.subr.mxu0 0.0
    %4604 = vmatpush2.msra.mxu0 0.0
    %4605 = vmatprep.mubr.f32.mxu0 0.0
    %4606 = vmatmul.mubr.f32.gmra.mxu0 %v4424
    %v4607 = vpop.f32.mrf.mxu0
    %v4608 = vadd.f32 %v4539, %v4607
    %v4609 = vpop.f32.mrf.mxu0
    %4610 = vmatprep.mubr.f32.mxu0 0.0
    %4611 = vmatmul.mubr.f32.gmra.mxu0 %v4427
    %v4612 = vpop.f32.mrf.mxu0
    %v4613 = vadd.f32 %v4539, %v4612
    %v4614 = vpop.f32.mrf.mxu0
    %4615 = vmatprep.mubr.f32.mxu0 0.0
    %4616 = vmatmul.mubr.f32.gmra.mxu0 %v4430
    %v4617 = vpop.f32.mrf.mxu0
    %v4618 = vadd.f32 %v4539, %v4617
    %v4619 = vpop.f32.mrf.mxu0
    %4620 = vmatprep.mubr.f32.mxu0 0.0
    %4621 = vmatmul.mubr.f32.gmra.mxu0 %v4433
    %v4622 = vpop.f32.mrf.mxu0
    %v4623 = vadd.f32 %v4539, %v4622
    %v4624 = vpop.f32.mrf.mxu0
    %4625 = vmatprep.mubr.f32.mxu0 0.0
    %4626 = vmatmul.mubr.f32.gmra.mxu0 %v4436
    %v4627 = vpop.f32.mrf.mxu0
    %v4628 = vadd.f32 %v4539, %v4627
    %v4629 = vpop.f32.mrf.mxu0
    %4630 = vdwg.mxu0
    %s4631 = scalar_lea.vmem %s10, 128
    %v4632 = vld [vmem:[%s4631] sm:$0xff]
    %v4633 = vld [vmem:[%s4631 + $0x8] sm:$0xff]
    %v4634 = vld [vmem:[%s4631 + $0x10] sm:$0xff]
    %v4635 = vld [vmem:[%s4631 + $0x18] sm:$0xff]
    %s4636 = scalar_lea.vmem %s11, 4
    %v4637 = vld [vmem:[%s4636] sm:$0x1]
    %v4639 = vlaneseq
    %v4640 = vshrl.u32 %v4639, 7
    %v4641 = vsub.s32 0, %v4640
    %v4642 = vrot.slane %v4637, %v4641
    %4644 = vmatprep.subr.mxu0 0.0
    %4645 = vmatpush1.msra.mxu0 0.0
    %4646 = vmatprep.subr.mxu0 0.0
    %4647 = vmatpush1.msra.mxu0 0.0
    %4648 = vmatprep.subr.mxu0 0.0
    %4649 = vmatpush1.msra.mxu0 0.0
    %4650 = vmatprep.subr.mxu0 0.0
    %4651 = vmatpush1.msra.mxu0 0.0
    %4652 = vmatprep.subr.mxu0 0.0
    %4653 = vmatpush1.msra.mxu0 0.0
    %4654 = vmatprep.subr.mxu0 0.0
    %4655 = vmatpush1.msra.mxu0 0.0
    %4656 = vmatprep.subr.mxu0 0.0
    %4657 = vmatpush1.msra.mxu0 0.0
    %4658 = vmatprep.subr.mxu0 0.0
    %4659 = vmatpush1.msra.mxu0 0.0
    %4660 = vmatprep.subr.mxu0 0.0
    %4661 = vmatpush1.msra.mxu0 0.0
    %4662 = vmatprep.subr.mxu0 0.0
    %4663 = vmatpush1.msra.mxu0 0.0
    %4664 = vmatprep.subr.mxu0 0.0
    %4665 = vmatpush1.msra.mxu0 0.0
    %4666 = vmatprep.subr.mxu0 0.0
    %4667 = vmatpush1.msra.mxu0 0.0
    %4668 = vmatprep.subr.mxu0 0.0
    %4669 = vmatpush1.msra.mxu0 %v4635
    %4670 = vmatprep.subr.mxu0 0.0
    %4671 = vmatpush1.msra.mxu0 %v4634
    %4672 = vmatprep.subr.mxu0 0.0
    %4673 = vmatpush1.msra.mxu0 %v4633
    %4674 = vmatprep.subr.mxu0 0.0
    %4675 = vmatpush1.msra.mxu0 %v4632
    %4676 = vmatprep.subr.mxu0 0.0
    %4677 = vmatpush2.msra.mxu0 0.0
    %4678 = vmatprep.subr.mxu0 0.0
    %4679 = vmatpush2.msra.mxu0 0.0
    %4680 = vmatprep.subr.mxu0 0.0
    %4681 = vmatpush2.msra.mxu0 0.0
    %4682 = vmatprep.subr.mxu0 0.0
    %4683 = vmatpush2.msra.mxu0 0.0
    %4684 = vmatprep.subr.mxu0 0.0
    %4685 = vmatpush2.msra.mxu0 0.0
    %4686 = vmatprep.subr.mxu0 0.0
    %4687 = vmatpush2.msra.mxu0 0.0
    %4688 = vmatprep.subr.mxu0 0.0
    %4689 = vmatpush2.msra.mxu0 0.0
    %4690 = vmatprep.subr.mxu0 0.0
    %4691 = vmatpush2.msra.mxu0 0.0
    %4692 = vmatprep.subr.mxu0 0.0
    %4693 = vmatpush2.msra.mxu0 0.0
    %4694 = vmatprep.subr.mxu0 0.0
    %4695 = vmatpush2.msra.mxu0 0.0
    %4696 = vmatprep.subr.mxu0 0.0
    %4697 = vmatpush2.msra.mxu0 0.0
    %4698 = vmatprep.subr.mxu0 0.0
    %4699 = vmatpush2.msra.mxu0 0.0
    %4700 = vmatprep.subr.mxu0 0.0
    %4701 = vmatpush2.msra.mxu0 0.0
    %4702 = vmatprep.subr.mxu0 0.0
    %4703 = vmatpush2.msra.mxu0 0.0
    %4704 = vmatprep.subr.mxu0 0.0
    %4705 = vmatpush2.msra.mxu0 0.0
    %4706 = vmatprep.subr.mxu0 0.0
    %4707 = vmatpush2.msra.mxu0 0.0
    %4708 = vmatprep.mubr.f32.mxu0 0.0
    %4709 = vmatmul.mubr.f32.gmra.mxu0 %v4424
    %v4710 = vpop.f32.mrf.mxu0
    %v4711 = vadd.f32 %v4642, %v4710
    %v4712 = vpop.f32.mrf.mxu0
    %4713 = vmatprep.mubr.f32.mxu0 0.0
    %4714 = vmatmul.mubr.f32.gmra.mxu0 %v4427
    %v4715 = vpop.f32.mrf.mxu0
    %v4716 = vadd.f32 %v4642, %v4715
    %v4717 = vpop.f32.mrf.mxu0
    %4718 = vmatprep.mubr.f32.mxu0 0.0
    %4719 = vmatmul.mubr.f32.gmra.mxu0 %v4430
    %v4720 = vpop.f32.mrf.mxu0
    %v4721 = vadd.f32 %v4642, %v4720
    %v4722 = vpop.f32.mrf.mxu0
    %4723 = vmatprep.mubr.f32.mxu0 0.0
    %4724 = vmatmul.mubr.f32.gmra.mxu0 %v4433
    %v4725 = vpop.f32.mrf.mxu0
    %v4726 = vadd.f32 %v4642, %v4725
    %v4727 = vpop.f32.mrf.mxu0
    %4728 = vmatprep.mubr.f32.mxu0 0.0
    %4729 = vmatmul.mubr.f32.gmra.mxu0 %v4436
    %v4730 = vpop.f32.mrf.mxu0
    %v4731 = vadd.f32 %v4642, %v4730
    %v4732 = vpop.f32.mrf.mxu0
    %4733 = vdwg.mxu0
    %v4735 = vsel %vm621, %v4505, 0
    %v4738 = vsel %vm621, %v4510, 0
    %v4741 = vsel %vm621, %v4515, 0
    %v4744 = vsel %vm621, %v4520, 0
    %v4747 = vsel %vm621, %v4525, 0
    %v4750 = vsel %vm621, %v4608, 0
    %v4753 = vsel %vm621, %v4613, 0
    %v4756 = vsel %vm621, %v4618, 0
    %v4759 = vsel %vm621, %v4623, 0
    %v4762 = vsel %vm621, %v4628, 0
    %4764 = vmatprep.subr.mxu0 0.0
    %4765 = vmatpush1.xpose.msra.mxu0 0.0
    %4766 = vmatprep.subr.mxu0 0.0
    %4767 = vmatpush1.xpose.msra.mxu0 0.0
    %4768 = vmatprep.subr.mxu0 0.0
    %4769 = vmatpush1.xpose.msra.mxu0 0.0
    %4770 = vmatprep.subr.mxu0 0.0
    %4771 = vmatpush1.xpose.msra.mxu0 0.0
    %4772 = vmatprep.subr.mxu0 0.0
    %4773 = vmatpush1.xpose.msra.mxu0 0.0
    %4774 = vmatprep.subr.mxu0 0.0
    %4775 = vmatpush1.xpose.msra.mxu0 0.0
    %4776 = vmatprep.subr.mxu0 0.0
    %4777 = vmatpush1.xpose.msra.mxu0 0.0
    %4778 = vmatprep.subr.mxu0 0.0
    %4779 = vmatpush1.xpose.msra.mxu0 0.0
    %4780 = vmatprep.subr.mxu0 0.0
    %4781 = vmatpush1.xpose.msra.mxu0 0.0
    %4782 = vmatprep.subr.mxu0 0.0
    %4783 = vmatpush1.xpose.msra.mxu0 0.0
    %4784 = vmatprep.subr.mxu0 0.0
    %4785 = vmatpush1.xpose.msra.mxu0 0.0
    %4786 = vmatprep.subr.mxu0 0.0
    %4787 = vmatpush1.xpose.msra.mxu0 %v4762
    %4788 = vmatprep.subr.mxu0 0.0
    %4789 = vmatpush1.xpose.msra.mxu0 %v4759
    %4790 = vmatprep.subr.mxu0 0.0
    %4791 = vmatpush1.xpose.msra.mxu0 %v4756
    %4792 = vmatprep.subr.mxu0 0.0
    %4793 = vmatpush1.xpose.msra.mxu0 %v4753
    %4794 = vmatprep.subr.mxu0 0.0
    %4795 = vmatpush1.xpose.msra.mxu0 %v4750
    %4796 = vmatprep.subr.mxu0 0.0
    %4797 = vmatpush2.xpose.msra.mxu0 0.0
    %4798 = vmatprep.subr.mxu0 0.0
    %4799 = vmatpush2.xpose.msra.mxu0 0.0
    %4800 = vmatprep.subr.mxu0 0.0
    %4801 = vmatpush2.xpose.msra.mxu0 0.0
    %4802 = vmatprep.subr.mxu0 0.0
    %4803 = vmatpush2.xpose.msra.mxu0 0.0
    %4804 = vmatprep.subr.mxu0 0.0
    %4805 = vmatpush2.xpose.msra.mxu0 0.0
    %4806 = vmatprep.subr.mxu0 0.0
    %4807 = vmatpush2.xpose.msra.mxu0 0.0
    %4808 = vmatprep.subr.mxu0 0.0
    %4809 = vmatpush2.xpose.msra.mxu0 0.0
    %4810 = vmatprep.subr.mxu0 0.0
    %4811 = vmatpush2.xpose.msra.mxu0 0.0
    %4812 = vmatprep.subr.mxu0 0.0
    %4813 = vmatpush2.xpose.msra.mxu0 0.0
    %4814 = vmatprep.subr.mxu0 0.0
    %4815 = vmatpush2.xpose.msra.mxu0 0.0
    %4816 = vmatprep.subr.mxu0 0.0
    %4817 = vmatpush2.xpose.msra.mxu0 0.0
    %4818 = vmatprep.subr.mxu0 0.0
    %4819 = vmatpush2.xpose.msra.mxu0 0.0
    %4820 = vmatprep.subr.mxu0 0.0
    %4821 = vmatpush2.xpose.msra.mxu0 0.0
    %4822 = vmatprep.subr.mxu0 0.0
    %4823 = vmatpush2.xpose.msra.mxu0 0.0
    %4824 = vmatprep.subr.mxu0 0.0
    %4825 = vmatpush2.xpose.msra.mxu0 0.0
    %4826 = vmatprep.subr.mxu0 0.0
    %4827 = vmatpush2.xpose.msra.mxu0 0.0
    %4828 = vmatprep.mubr.f32.mxu0 0.0
    %4829 = vmatmul.mubr.f32.gmra.mxu0 %v4735
    %v4830 = vpop.f32.mrf.mxu0
    %v4831 = vadd.f32 0.0, %v4830
    %v4832 = vpop.f32.mrf.mxu0
    %4833 = vmatprep.mubr.f32.mxu0 0.0
    %4834 = vmatmul.mubr.f32.gmra.mxu0 %v4738
    %v4835 = vpop.f32.mrf.mxu0
    %v4836 = vadd.f32 0.0, %v4835
    %v4837 = vpop.f32.mrf.mxu0
    %4838 = vmatprep.mubr.f32.mxu0 0.0
    %4839 = vmatmul.mubr.f32.gmra.mxu0 %v4741
    %v4840 = vpop.f32.mrf.mxu0
    %v4841 = vadd.f32 0.0, %v4840
    %v4842 = vpop.f32.mrf.mxu0
    %4843 = vmatprep.mubr.f32.mxu0 0.0
    %4844 = vmatmul.mubr.f32.gmra.mxu0 %v4744
    %v4845 = vpop.f32.mrf.mxu0
    %v4846 = vadd.f32 0.0, %v4845
    %v4847 = vpop.f32.mrf.mxu0
    %4848 = vmatprep.mubr.f32.mxu0 0.0
    %4849 = vmatmul.mubr.f32.gmra.mxu0 %v4747
    %v4850 = vpop.f32.mrf.mxu0
    %v4851 = vadd.f32 0.0, %v4850
    %v4852 = vpop.f32.mrf.mxu0
    %4853 = vdwg.mxu0
    %v4854 = vmul.f32 %v4831, 0.25
    %v4855 = vmul.f32 %v4836, 0.25
    %v4856 = vmul.f32 %v4841, 0.25
    %v4857 = vmul.f32 %v4846, 0.25
    %v4858 = vmul.f32 %v4851, 0.25
    %v4859 = vadd.f32 %v4854, %v205
    %v4860 = vadd.f32 %v4855, %v206
    %v4861 = vadd.f32 %v4856, %v207
    %v4862 = vadd.f32 %v4857, %v208
    %v4863 = vadd.f32 %v4858, %v209
    %v4864 = vsel %vm752, %v4859, -inf
    %4865 = vmax.xlane.f32.xlu0 %v4864
    %v4866 = vpop.xlane.xlu0 %4865
    %v4867 = vsel %vm752, %v4860, -inf
    %4868 = vmax.xlane.f32.xlu0 %v4867
    %v4869 = vpop.xlane.xlu0 %4868
    %v4870 = vsel %vm752, %v4861, -inf
    %4871 = vmax.xlane.f32.xlu0 %v4870
    %v4872 = vpop.xlane.xlu0 %4871
    %v4873 = vsel %vm752, %v4862, -inf
    %4874 = vmax.xlane.f32.xlu0 %v4873
    %v4875 = vpop.xlane.xlu0 %4874
    %v4876 = vsel %vm765, %v4863, -inf
    %4877 = vmax.xlane.f32.xlu0 %v4876
    %v4878 = vpop.xlane.xlu0 %4877
    %v4879 = vsub.f32 %v4859, %v4866
    %v4880 = vsub.f32 %v4860, %v4869
    %v4881 = vsub.f32 %v4861, %v4872
    %v4882 = vsub.f32 %v4862, %v4875
    %v4883 = vsub.f32 %v4863, %v4878
    %v4884 = vmul.f32 %v4879, 1.442695
    %v4885 = vpow.pop %v4884
    %v4886 = vmul.f32 %v4880, 1.442695
    %v4887 = vpow.pop %v4886
    %v4888 = vmul.f32 %v4881, 1.442695
    %v4889 = vpow.pop %v4888
    %v4890 = vmul.f32 %v4882, 1.442695
    %v4891 = vpow.pop %v4890
    %v4892 = vmul.f32 %v4883, 1.442695
    %v4893 = vpow.pop %v4892
    %v4894 = vsel %vm752, %v4885, 0.0
    %4895 = vadd.xlane.f32.xlu0 %v4894
    %v4896 = vpop.xlane.xlu0 %4895
    %v4897 = vsel %vm752, %v4887, 0.0
    %4898 = vadd.xlane.f32.xlu0 %v4897
    %v4899 = vpop.xlane.xlu0 %4898
    %v4900 = vsel %vm752, %v4889, 0.0
    %4901 = vadd.xlane.f32.xlu0 %v4900
    %v4902 = vpop.xlane.xlu0 %4901
    %v4903 = vsel %vm752, %v4891, 0.0
    %4904 = vadd.xlane.f32.xlu0 %v4903
    %v4905 = vpop.xlane.xlu0 %4904
    %v4906 = vsel %vm765, %v4893, 0.0
    %4907 = vadd.xlane.f32.xlu0 %v4906
    %v4908 = vpop.xlane.xlu0 %4907
    %v4909 = vrcp.pop %v4896
    %v4910 = vmul.f32 %v4885, %v4909
    %v4911 = vrcp.pop %v4899
    %v4912 = vmul.f32 %v4887, %v4911
    %v4913 = vrcp.pop %v4902
    %v4914 = vmul.f32 %v4889, %v4913
    %v4915 = vrcp.pop %v4905
    %v4916 = vmul.f32 %v4891, %v4915
    %v4917 = vrcp.pop %v4908
    %v4918 = vmul.f32 %v4893, %v4917
    %v4920 = vsel %vm752, %v4910, 0
    %v4923 = vsel %vm752, %v4912, 0
    %v4926 = vsel %vm752, %v4914, 0
    %v4929 = vsel %vm752, %v4916, 0
    %v4932 = vsel %vm752, %v4918, 0
    %v4935 = vsel %vm824, %v4731, 0
    %4937 = vmatprep.subr.mxu0 0.0
    %4938 = vmatpush1.msra.mxu0 0.0
    %4939 = vmatprep.subr.mxu0 0.0
    %4940 = vmatpush1.msra.mxu0 0.0
    %4941 = vmatprep.subr.mxu0 0.0
    %4942 = vmatpush1.msra.mxu0 0.0
    %4943 = vmatprep.subr.mxu0 0.0
    %4944 = vmatpush1.msra.mxu0 0.0
    %4945 = vmatprep.subr.mxu0 0.0
    %4946 = vmatpush1.msra.mxu0 0.0
    %4947 = vmatprep.subr.mxu0 0.0
    %4948 = vmatpush1.msra.mxu0 0.0
    %4949 = vmatprep.subr.mxu0 0.0
    %4950 = vmatpush1.msra.mxu0 0.0
    %4951 = vmatprep.subr.mxu0 0.0
    %4952 = vmatpush1.msra.mxu0 0.0
    %4953 = vmatprep.subr.mxu0 0.0
    %4954 = vmatpush1.msra.mxu0 0.0
    %4955 = vmatprep.subr.mxu0 0.0
    %4956 = vmatpush1.msra.mxu0 0.0
    %4957 = vmatprep.subr.mxu0 0.0
    %4958 = vmatpush1.msra.mxu0 0.0
    %4959 = vmatprep.subr.mxu0 0.0
    %4960 = vmatpush1.msra.mxu0 %v4935
    %4961 = vmatprep.subr.mxu0 0.0
    %4962 = vmatpush1.msra.mxu0 %v4726
    %4963 = vmatprep.subr.mxu0 0.0
    %4964 = vmatpush1.msra.mxu0 %v4721
    %4965 = vmatprep.subr.mxu0 0.0
    %4966 = vmatpush1.msra.mxu0 %v4716
    %4967 = vmatprep.subr.mxu0 0.0
    %4968 = vmatpush1.msra.mxu0 %v4711
    %4969 = vmatprep.subr.mxu0 0.0
    %4970 = vmatpush2.msra.mxu0 0.0
    %4971 = vmatprep.subr.mxu0 0.0
    %4972 = vmatpush2.msra.mxu0 0.0
    %4973 = vmatprep.subr.mxu0 0.0
    %4974 = vmatpush2.msra.mxu0 0.0
    %4975 = vmatprep.subr.mxu0 0.0
    %4976 = vmatpush2.msra.mxu0 0.0
    %4977 = vmatprep.subr.mxu0 0.0
    %4978 = vmatpush2.msra.mxu0 0.0
    %4979 = vmatprep.subr.mxu0 0.0
    %4980 = vmatpush2.msra.mxu0 0.0
    %4981 = vmatprep.subr.mxu0 0.0
    %4982 = vmatpush2.msra.mxu0 0.0
    %4983 = vmatprep.subr.mxu0 0.0
    %4984 = vmatpush2.msra.mxu0 0.0
    %4985 = vmatprep.subr.mxu0 0.0
    %4986 = vmatpush2.msra.mxu0 0.0
    %4987 = vmatprep.subr.mxu0 0.0
    %4988 = vmatpush2.msra.mxu0 0.0
    %4989 = vmatprep.subr.mxu0 0.0
    %4990 = vmatpush2.msra.mxu0 0.0
    %4991 = vmatprep.subr.mxu0 0.0
    %4992 = vmatpush2.msra.mxu0 0.0
    %4993 = vmatprep.subr.mxu0 0.0
    %4994 = vmatpush2.msra.mxu0 0.0
    %4995 = vmatprep.subr.mxu0 0.0
    %4996 = vmatpush2.msra.mxu0 0.0
    %4997 = vmatprep.subr.mxu0 0.0
    %4998 = vmatpush2.msra.mxu0 0.0
    %4999 = vmatprep.subr.mxu0 0.0
    %5000 = vmatpush2.msra.mxu0 0.0
    %5001 = vmatprep.mubr.f32.mxu0 0.0
    %5002 = vmatmul.mubr.f32.gmra.mxu0 %v4920
    %v5003 = vpop.f32.mrf.mxu0
    %v5004 = vadd.f32 0.0, %v5003
    %v5005 = vpop.f32.mrf.mxu0
    %5006 = vmatprep.mubr.f32.mxu0 0.0
    %5007 = vmatmul.mubr.f32.gmra.mxu0 %v4923
    %v5008 = vpop.f32.mrf.mxu0
    %v5009 = vadd.f32 0.0, %v5008
    %v5010 = vpop.f32.mrf.mxu0
    %5011 = vmatprep.mubr.f32.mxu0 0.0
    %5012 = vmatmul.mubr.f32.gmra.mxu0 %v4926
    %v5013 = vpop.f32.mrf.mxu0
    %v5014 = vadd.f32 0.0, %v5013
    %v5015 = vpop.f32.mrf.mxu0
    %5016 = vmatprep.mubr.f32.mxu0 0.0
    %5017 = vmatmul.mubr.f32.gmra.mxu0 %v4929
    %v5018 = vpop.f32.mrf.mxu0
    %v5019 = vadd.f32 0.0, %v5018
    %v5020 = vpop.f32.mrf.mxu0
    %5021 = vmatprep.mubr.f32.mxu0 0.0
    %5022 = vmatmul.mubr.f32.gmra.mxu0 %v4932
    %v5023 = vpop.f32.mrf.mxu0
    %v5024 = vadd.f32 0.0, %v5023
    %v5025 = vpop.f32.mrf.mxu0
    %5026 = vdwg.mxu0
    %s5027 = scalar_lea.vmem %s12, 64
    %v5028 = vld [vmem:[%s5027] sm:$0xff]
    %v5029 = vld [vmem:[%s5027 + $0x8] sm:$0xff]
    %v5031 = vsel %vm621, %v5004, 0
    %v5034 = vsel %vm621, %v5009, 0
    %v5037 = vsel %vm621, %v5014, 0
    %v5040 = vsel %vm621, %v5019, 0
    %v5043 = vsel %vm621, %v5024, 0
    %5045 = vmatprep.subr.mxu0 0.0
    %5046 = vmatpush1.msra.mxu0 0.0
    %5047 = vmatprep.subr.mxu0 0.0
    %5048 = vmatpush1.msra.mxu0 0.0
    %5049 = vmatprep.subr.mxu0 0.0
    %5050 = vmatpush1.msra.mxu0 0.0
    %5051 = vmatprep.subr.mxu0 0.0
    %5052 = vmatpush1.msra.mxu0 0.0
    %5053 = vmatprep.subr.mxu0 0.0
    %5054 = vmatpush1.msra.mxu0 0.0
    %5055 = vmatprep.subr.mxu0 0.0
    %5056 = vmatpush1.msra.mxu0 0.0
    %5057 = vmatprep.subr.mxu0 0.0
    %5058 = vmatpush1.msra.mxu0 0.0
    %5059 = vmatprep.subr.mxu0 0.0
    %5060 = vmatpush1.msra.mxu0 0.0
    %5061 = vmatprep.subr.mxu0 0.0
    %5062 = vmatpush1.msra.mxu0 0.0
    %5063 = vmatprep.subr.mxu0 0.0
    %5064 = vmatpush1.msra.mxu0 0.0
    %5065 = vmatprep.subr.mxu0 0.0
    %5066 = vmatpush1.msra.mxu0 0.0
    %5067 = vmatprep.subr.mxu0 0.0
    %5068 = vmatpush1.msra.mxu0 0.0
    %5069 = vmatprep.subr.mxu0 0.0
    %5070 = vmatpush1.msra.mxu0 0.0
    %5071 = vmatprep.subr.mxu0 0.0
    %5072 = vmatpush1.msra.mxu0 0.0
    %5073 = vmatprep.subr.mxu0 0.0
    %5074 = vmatpush1.msra.mxu0 %v5029
    %5075 = vmatprep.subr.mxu0 0.0
    %5076 = vmatpush1.msra.mxu0 %v5028
    %5077 = vmatprep.subr.mxu0 0.0
    %5078 = vmatpush2.msra.mxu0 0.0
    %5079 = vmatprep.subr.mxu0 0.0
    %5080 = vmatpush2.msra.mxu0 0.0
    %5081 = vmatprep.subr.mxu0 0.0
    %5082 = vmatpush2.msra.mxu0 0.0
    %5083 = vmatprep.subr.mxu0 0.0
    %5084 = vmatpush2.msra.mxu0 0.0
    %5085 = vmatprep.subr.mxu0 0.0
    %5086 = vmatpush2.msra.mxu0 0.0
    %5087 = vmatprep.subr.mxu0 0.0
    %5088 = vmatpush2.msra.mxu0 0.0
    %5089 = vmatprep.subr.mxu0 0.0
    %5090 = vmatpush2.msra.mxu0 0.0
    %5091 = vmatprep.subr.mxu0 0.0
    %5092 = vmatpush2.msra.mxu0 0.0
    %5093 = vmatprep.subr.mxu0 0.0
    %5094 = vmatpush2.msra.mxu0 0.0
    %5095 = vmatprep.subr.mxu0 0.0
    %5096 = vmatpush2.msra.mxu0 0.0
    %5097 = vmatprep.subr.mxu0 0.0
    %5098 = vmatpush2.msra.mxu0 0.0
    %5099 = vmatprep.subr.mxu0 0.0
    %5100 = vmatpush2.msra.mxu0 0.0
    %5101 = vmatprep.subr.mxu0 0.0
    %5102 = vmatpush2.msra.mxu0 0.0
    %5103 = vmatprep.subr.mxu0 0.0
    %5104 = vmatpush2.msra.mxu0 0.0
    %5105 = vmatprep.subr.mxu0 0.0
    %5106 = vmatpush2.msra.mxu0 0.0
    %5107 = vmatprep.subr.mxu0 0.0
    %5108 = vmatpush2.msra.mxu0 0.0
    %5109 = vmatprep.mubr.f32.mxu0 0.0
    %5110 = vmatmul.mubr.f32.gmra.mxu0 %v5031
    %v5111 = vpop.f32.mrf.mxu0
    %v5112 = vadd.f32 0.0, %v5111
    %v5113 = vpop.f32.mrf.mxu0
    %5114 = vmatprep.mubr.f32.mxu0 0.0
    %5115 = vmatmul.mubr.f32.gmra.mxu0 %v5034
    %v5116 = vpop.f32.mrf.mxu0
    %v5117 = vadd.f32 0.0, %v5116
    %v5118 = vpop.f32.mrf.mxu0
    %5119 = vmatprep.mubr.f32.mxu0 0.0
    %5120 = vmatmul.mubr.f32.gmra.mxu0 %v5037
    %v5121 = vpop.f32.mrf.mxu0
    %v5122 = vadd.f32 0.0, %v5121
    %v5123 = vpop.f32.mrf.mxu0
    %5124 = vmatprep.mubr.f32.mxu0 0.0
    %5125 = vmatmul.mubr.f32.gmra.mxu0 %v5040
    %v5126 = vpop.f32.mrf.mxu0
    %v5127 = vadd.f32 0.0, %v5126
    %v5128 = vpop.f32.mrf.mxu0
    %5129 = vmatprep.mubr.f32.mxu0 0.0
    %5130 = vmatmul.mubr.f32.gmra.mxu0 %v5043
    %v5131 = vpop.f32.mrf.mxu0
    %v5132 = vadd.f32 0.0, %v5131
    %v5133 = vpop.f32.mrf.mxu0
    %5134 = vdwg.mxu0
    %v5136 = vlaneseq
    %v5137 = vshrl.u32 %v5136, 7
    %v5138 = vsub.s32 0, %v5137
    %v5139 = vrot.slane %v4409, %v5138
    %v5141 = vadd.f32 %v5139, %v5112
    %v5142 = vadd.f32 %v5139, %v5117
    %v5143 = vadd.f32 %v5139, %v5122
    %v5144 = vadd.f32 %v5139, %v5127
    %v5145 = vadd.f32 %v5139, %v5132
    %s5146 = scalar_lea.vmem %s6, 160
    %v5147 = vld [vmem:[%s5146] sm:$0xff]
    %v5148 = vld [vmem:[%s5146 + $0x8] sm:$0xff]
    %v5149 = vld [vmem:[%s5146 + $0x10] sm:$0xff]
    %v5150 = vld [vmem:[%s5146 + $0x18] sm:$0xff]
    %s5151 = scalar_lea.vmem %s7, 5
    %v5152 = vld [vmem:[%s5151] sm:$0x1]
    %v5154 = vlaneseq
    %v5155 = vshrl.u32 %v5154, 7
    %v5156 = vsub.s32 0, %v5155
    %v5157 = vrot.slane %v5152, %v5156
    %5159 = vmatprep.subr.mxu0 0.0
    %5160 = vmatpush1.msra.mxu0 0.0
    %5161 = vmatprep.subr.mxu0 0.0
    %5162 = vmatpush1.msra.mxu0 0.0
    %5163 = vmatprep.subr.mxu0 0.0
    %5164 = vmatpush1.msra.mxu0 0.0
    %5165 = vmatprep.subr.mxu0 0.0
    %5166 = vmatpush1.msra.mxu0 0.0
    %5167 = vmatprep.subr.mxu0 0.0
    %5168 = vmatpush1.msra.mxu0 0.0
    %5169 = vmatprep.subr.mxu0 0.0
    %5170 = vmatpush1.msra.mxu0 0.0
    %5171 = vmatprep.subr.mxu0 0.0
    %5172 = vmatpush1.msra.mxu0 0.0
    %5173 = vmatprep.subr.mxu0 0.0
    %5174 = vmatpush1.msra.mxu0 0.0
    %5175 = vmatprep.subr.mxu0 0.0
    %5176 = vmatpush1.msra.mxu0 0.0
    %5177 = vmatprep.subr.mxu0 0.0
    %5178 = vmatpush1.msra.mxu0 0.0
    %5179 = vmatprep.subr.mxu0 0.0
    %5180 = vmatpush1.msra.mxu0 0.0
    %5181 = vmatprep.subr.mxu0 0.0
    %5182 = vmatpush1.msra.mxu0 0.0
    %5183 = vmatprep.subr.mxu0 0.0
    %5184 = vmatpush1.msra.mxu0 %v5150
    %5185 = vmatprep.subr.mxu0 0.0
    %5186 = vmatpush1.msra.mxu0 %v5149
    %5187 = vmatprep.subr.mxu0 0.0
    %5188 = vmatpush1.msra.mxu0 %v5148
    %5189 = vmatprep.subr.mxu0 0.0
    %5190 = vmatpush1.msra.mxu0 %v5147
    %5191 = vmatprep.subr.mxu0 0.0
    %5192 = vmatpush2.msra.mxu0 0.0
    %5193 = vmatprep.subr.mxu0 0.0
    %5194 = vmatpush2.msra.mxu0 0.0
    %5195 = vmatprep.subr.mxu0 0.0
    %5196 = vmatpush2.msra.mxu0 0.0
    %5197 = vmatprep.subr.mxu0 0.0
    %5198 = vmatpush2.msra.mxu0 0.0
    %5199 = vmatprep.subr.mxu0 0.0
    %5200 = vmatpush2.msra.mxu0 0.0
    %5201 = vmatprep.subr.mxu0 0.0
    %5202 = vmatpush2.msra.mxu0 0.0
    %5203 = vmatprep.subr.mxu0 0.0
    %5204 = vmatpush2.msra.mxu0 0.0
    %5205 = vmatprep.subr.mxu0 0.0
    %5206 = vmatpush2.msra.mxu0 0.0
    %5207 = vmatprep.subr.mxu0 0.0
    %5208 = vmatpush2.msra.mxu0 0.0
    %5209 = vmatprep.subr.mxu0 0.0
    %5210 = vmatpush2.msra.mxu0 0.0
    %5211 = vmatprep.subr.mxu0 0.0
    %5212 = vmatpush2.msra.mxu0 0.0
    %5213 = vmatprep.subr.mxu0 0.0
    %5214 = vmatpush2.msra.mxu0 0.0
    %5215 = vmatprep.subr.mxu0 0.0
    %5216 = vmatpush2.msra.mxu0 0.0
    %5217 = vmatprep.subr.mxu0 0.0
    %5218 = vmatpush2.msra.mxu0 0.0
    %5219 = vmatprep.subr.mxu0 0.0
    %5220 = vmatpush2.msra.mxu0 0.0
    %5221 = vmatprep.subr.mxu0 0.0
    %5222 = vmatpush2.msra.mxu0 0.0
    %5223 = vmatprep.mubr.f32.mxu0 0.0
    %5224 = vmatmul.mubr.f32.gmra.mxu0 %v4424
    %v5225 = vpop.f32.mrf.mxu0
    %v5226 = vadd.f32 %v5157, %v5225
    %v5227 = vpop.f32.mrf.mxu0
    %5228 = vmatprep.mubr.f32.mxu0 0.0
    %5229 = vmatmul.mubr.f32.gmra.mxu0 %v4427
    %v5230 = vpop.f32.mrf.mxu0
    %v5231 = vadd.f32 %v5157, %v5230
    %v5232 = vpop.f32.mrf.mxu0
    %5233 = vmatprep.mubr.f32.mxu0 0.0
    %5234 = vmatmul.mubr.f32.gmra.mxu0 %v4430
    %v5235 = vpop.f32.mrf.mxu0
    %v5236 = vadd.f32 %v5157, %v5235
    %v5237 = vpop.f32.mrf.mxu0
    %5238 = vmatprep.mubr.f32.mxu0 0.0
    %5239 = vmatmul.mubr.f32.gmra.mxu0 %v4433
    %v5240 = vpop.f32.mrf.mxu0
    %v5241 = vadd.f32 %v5157, %v5240
    %v5242 = vpop.f32.mrf.mxu0
    %5243 = vmatprep.mubr.f32.mxu0 0.0
    %5244 = vmatmul.mubr.f32.gmra.mxu0 %v4436
    %v5245 = vpop.f32.mrf.mxu0
    %v5246 = vadd.f32 %v5157, %v5245
    %v5247 = vpop.f32.mrf.mxu0
    %5248 = vdwg.mxu0
    %s5249 = scalar_lea.vmem %s8, 160
    %v5250 = vld [vmem:[%s5249] sm:$0xff]
    %v5251 = vld [vmem:[%s5249 + $0x8] sm:$0xff]
    %v5252 = vld [vmem:[%s5249 + $0x10] sm:$0xff]
    %v5253 = vld [vmem:[%s5249 + $0x18] sm:$0xff]
    %s5254 = scalar_lea.vmem %s9, 5
    %v5255 = vld [vmem:[%s5254] sm:$0x1]
    %v5257 = vlaneseq
    %v5258 = vshrl.u32 %v5257, 7
    %v5259 = vsub.s32 0, %v5258
    %v5260 = vrot.slane %v5255, %v5259
    %5262 = vmatprep.subr.mxu0 0.0
    %5263 = vmatpush1.msra.mxu0 0.0
    %5264 = vmatprep.subr.mxu0 0.0
    %5265 = vmatpush1.msra.mxu0 0.0
    %5266 = vmatprep.subr.mxu0 0.0
    %5267 = vmatpush1.msra.mxu0 0.0
    %5268 = vmatprep.subr.mxu0 0.0
    %5269 = vmatpush1.msra.mxu0 0.0
    %5270 = vmatprep.subr.mxu0 0.0
    %5271 = vmatpush1.msra.mxu0 0.0
    %5272 = vmatprep.subr.mxu0 0.0
    %5273 = vmatpush1.msra.mxu0 0.0
    %5274 = vmatprep.subr.mxu0 0.0
    %5275 = vmatpush1.msra.mxu0 0.0
    %5276 = vmatprep.subr.mxu0 0.0
    %5277 = vmatpush1.msra.mxu0 0.0
    %5278 = vmatprep.subr.mxu0 0.0
    %5279 = vmatpush1.msra.mxu0 0.0
    %5280 = vmatprep.subr.mxu0 0.0
    %5281 = vmatpush1.msra.mxu0 0.0
    %5282 = vmatprep.subr.mxu0 0.0
    %5283 = vmatpush1.msra.mxu0 0.0
    %5284 = vmatprep.subr.mxu0 0.0
    %5285 = vmatpush1.msra.mxu0 0.0
    %5286 = vmatprep.subr.mxu0 0.0
    %5287 = vmatpush1.msra.mxu0 %v5253
    %5288 = vmatprep.subr.mxu0 0.0
    %5289 = vmatpush1.msra.mxu0 %v5252
    %5290 = vmatprep.subr.mxu0 0.0
    %5291 = vmatpush1.msra.mxu0 %v5251
    %5292 = vmatprep.subr.mxu0 0.0
    %5293 = vmatpush1.msra.mxu0 %v5250
    %5294 = vmatprep.subr.mxu0 0.0
    %5295 = vmatpush2.msra.mxu0 0.0
    %5296 = vmatprep.subr.mxu0 0.0
    %5297 = vmatpush2.msra.mxu0 0.0
    %5298 = vmatprep.subr.mxu0 0.0
    %5299 = vmatpush2.msra.mxu0 0.0
    %5300 = vmatprep.subr.mxu0 0.0
    %5301 = vmatpush2.msra.mxu0 0.0
    %5302 = vmatprep.subr.mxu0 0.0
    %5303 = vmatpush2.msra.mxu0 0.0
    %5304 = vmatprep.subr.mxu0 0.0
    %5305 = vmatpush2.msra.mxu0 0.0
    %5306 = vmatprep.subr.mxu0 0.0
    %5307 = vmatpush2.msra.mxu0 0.0
    %5308 = vmatprep.subr.mxu0 0.0
    %5309 = vmatpush2.msra.mxu0 0.0
    %5310 = vmatprep.subr.mxu0 0.0
    %5311 = vmatpush2.msra.mxu0 0.0
    %5312 = vmatprep.subr.mxu0 0.0
    %5313 = vmatpush2.msra.mxu0 0.0
    %5314 = vmatprep.subr.mxu0 0.0
    %5315 = vmatpush2.msra.mxu0 0.0
    %5316 = vmatprep.subr.mxu0 0.0
    %5317 = vmatpush2.msra.mxu0 0.0
    %5318 = vmatprep.subr.mxu0 0.0
    %5319 = vmatpush2.msra.mxu0 0.0
    %5320 = vmatprep.subr.mxu0 0.0
    %5321 = vmatpush2.msra.mxu0 0.0
    %5322 = vmatprep.subr.mxu0 0.0
    %5323 = vmatpush2.msra.mxu0 0.0
    %5324 = vmatprep.subr.mxu0 0.0
    %5325 = vmatpush2.msra.mxu0 0.0
    %5326 = vmatprep.mubr.f32.mxu0 0.0
    %5327 = vmatmul.mubr.f32.gmra.mxu0 %v4424
    %v5328 = vpop.f32.mrf.mxu0
    %v5329 = vadd.f32 %v5260, %v5328
    %v5330 = vpop.f32.mrf.mxu0
    %5331 = vmatprep.mubr.f32.mxu0 0.0
    %5332 = vmatmul.mubr.f32.gmra.mxu0 %v4427
    %v5333 = vpop.f32.mrf.mxu0
    %v5334 = vadd.f32 %v5260, %v5333
    %v5335 = vpop.f32.mrf.mxu0
    %5336 = vmatprep.mubr.f32.mxu0 0.0
    %5337 = vmatmul.mubr.f32.gmra.mxu0 %v4430
    %v5338 = vpop.f32.mrf.mxu0
    %v5339 = vadd.f32 %v5260, %v5338
    %v5340 = vpop.f32.mrf.mxu0
    %5341 = vmatprep.mubr.f32.mxu0 0.0
    %5342 = vmatmul.mubr.f32.gmra.mxu0 %v4433
    %v5343 = vpop.f32.mrf.mxu0
    %v5344 = vadd.f32 %v5260, %v5343
    %v5345 = vpop.f32.mrf.mxu0
    %5346 = vmatprep.mubr.f32.mxu0 0.0
    %5347 = vmatmul.mubr.f32.gmra.mxu0 %v4436
    %v5348 = vpop.f32.mrf.mxu0
    %v5349 = vadd.f32 %v5260, %v5348
    %v5350 = vpop.f32.mrf.mxu0
    %5351 = vdwg.mxu0
    %s5352 = scalar_lea.vmem %s10, 160
    %v5353 = vld [vmem:[%s5352] sm:$0xff]
    %v5354 = vld [vmem:[%s5352 + $0x8] sm:$0xff]
    %v5355 = vld [vmem:[%s5352 + $0x10] sm:$0xff]
    %v5356 = vld [vmem:[%s5352 + $0x18] sm:$0xff]
    %s5357 = scalar_lea.vmem %s11, 5
    %v5358 = vld [vmem:[%s5357] sm:$0x1]
    %v5360 = vlaneseq
    %v5361 = vshrl.u32 %v5360, 7
    %v5362 = vsub.s32 0, %v5361
    %v5363 = vrot.slane %v5358, %v5362
    %5365 = vmatprep.subr.mxu0 0.0
    %5366 = vmatpush1.msra.mxu0 0.0
    %5367 = vmatprep.subr.mxu0 0.0
    %5368 = vmatpush1.msra.mxu0 0.0
    %5369 = vmatprep.subr.mxu0 0.0
    %5370 = vmatpush1.msra.mxu0 0.0
    %5371 = vmatprep.subr.mxu0 0.0
    %5372 = vmatpush1.msra.mxu0 0.0
    %5373 = vmatprep.subr.mxu0 0.0
    %5374 = vmatpush1.msra.mxu0 0.0
    %5375 = vmatprep.subr.mxu0 0.0
    %5376 = vmatpush1.msra.mxu0 0.0
    %5377 = vmatprep.subr.mxu0 0.0
    %5378 = vmatpush1.msra.mxu0 0.0
    %5379 = vmatprep.subr.mxu0 0.0
    %5380 = vmatpush1.msra.mxu0 0.0
    %5381 = vmatprep.subr.mxu0 0.0
    %5382 = vmatpush1.msra.mxu0 0.0
    %5383 = vmatprep.subr.mxu0 0.0
    %5384 = vmatpush1.msra.mxu0 0.0
    %5385 = vmatprep.subr.mxu0 0.0
    %5386 = vmatpush1.msra.mxu0 0.0
    %5387 = vmatprep.subr.mxu0 0.0
    %5388 = vmatpush1.msra.mxu0 0.0
    %5389 = vmatprep.subr.mxu0 0.0
    %5390 = vmatpush1.msra.mxu0 %v5356
    %5391 = vmatprep.subr.mxu0 0.0
    %5392 = vmatpush1.msra.mxu0 %v5355
    %5393 = vmatprep.subr.mxu0 0.0
    %5394 = vmatpush1.msra.mxu0 %v5354
    %5395 = vmatprep.subr.mxu0 0.0
    %5396 = vmatpush1.msra.mxu0 %v5353
    %5397 = vmatprep.subr.mxu0 0.0
    %5398 = vmatpush2.msra.mxu0 0.0
    %5399 = vmatprep.subr.mxu0 0.0
    %5400 = vmatpush2.msra.mxu0 0.0
    %5401 = vmatprep.subr.mxu0 0.0
    %5402 = vmatpush2.msra.mxu0 0.0
    %5403 = vmatprep.subr.mxu0 0.0
    %5404 = vmatpush2.msra.mxu0 0.0
    %5405 = vmatprep.subr.mxu0 0.0
    %5406 = vmatpush2.msra.mxu0 0.0
    %5407 = vmatprep.subr.mxu0 0.0
    %5408 = vmatpush2.msra.mxu0 0.0
    %5409 = vmatprep.subr.mxu0 0.0
    %5410 = vmatpush2.msra.mxu0 0.0
    %5411 = vmatprep.subr.mxu0 0.0
    %5412 = vmatpush2.msra.mxu0 0.0
    %5413 = vmatprep.subr.mxu0 0.0
    %5414 = vmatpush2.msra.mxu0 0.0
    %5415 = vmatprep.subr.mxu0 0.0
    %5416 = vmatpush2.msra.mxu0 0.0
    %5417 = vmatprep.subr.mxu0 0.0
    %5418 = vmatpush2.msra.mxu0 0.0
    %5419 = vmatprep.subr.mxu0 0.0
    %5420 = vmatpush2.msra.mxu0 0.0
    %5421 = vmatprep.subr.mxu0 0.0
    %5422 = vmatpush2.msra.mxu0 0.0
    %5423 = vmatprep.subr.mxu0 0.0
    %5424 = vmatpush2.msra.mxu0 0.0
    %5425 = vmatprep.subr.mxu0 0.0
    %5426 = vmatpush2.msra.mxu0 0.0
    %5427 = vmatprep.subr.mxu0 0.0
    %5428 = vmatpush2.msra.mxu0 0.0
    %5429 = vmatprep.mubr.f32.mxu0 0.0
    %5430 = vmatmul.mubr.f32.gmra.mxu0 %v4424
    %v5431 = vpop.f32.mrf.mxu0
    %v5432 = vadd.f32 %v5363, %v5431
    %v5433 = vpop.f32.mrf.mxu0
    %5434 = vmatprep.mubr.f32.mxu0 0.0
    %5435 = vmatmul.mubr.f32.gmra.mxu0 %v4427
    %v5436 = vpop.f32.mrf.mxu0
    %v5437 = vadd.f32 %v5363, %v5436
    %v5438 = vpop.f32.mrf.mxu0
    %5439 = vmatprep.mubr.f32.mxu0 0.0
    %5440 = vmatmul.mubr.f32.gmra.mxu0 %v4430
    %v5441 = vpop.f32.mrf.mxu0
    %v5442 = vadd.f32 %v5363, %v5441
    %v5443 = vpop.f32.mrf.mxu0
    %5444 = vmatprep.mubr.f32.mxu0 0.0
    %5445 = vmatmul.mubr.f32.gmra.mxu0 %v4433
    %v5446 = vpop.f32.mrf.mxu0
    %v5447 = vadd.f32 %v5363, %v5446
    %v5448 = vpop.f32.mrf.mxu0
    %5449 = vmatprep.mubr.f32.mxu0 0.0
    %5450 = vmatmul.mubr.f32.gmra.mxu0 %v4436
    %v5451 = vpop.f32.mrf.mxu0
    %v5452 = vadd.f32 %v5363, %v5451
    %v5453 = vpop.f32.mrf.mxu0
    %5454 = vdwg.mxu0
    %v5456 = vsel %vm621, %v5226, 0
    %v5459 = vsel %vm621, %v5231, 0
    %v5462 = vsel %vm621, %v5236, 0
    %v5465 = vsel %vm621, %v5241, 0
    %v5468 = vsel %vm621, %v5246, 0
    %v5471 = vsel %vm621, %v5329, 0
    %v5474 = vsel %vm621, %v5334, 0
    %v5477 = vsel %vm621, %v5339, 0
    %v5480 = vsel %vm621, %v5344, 0
    %v5483 = vsel %vm621, %v5349, 0
    %5485 = vmatprep.subr.mxu0 0.0
    %5486 = vmatpush1.xpose.msra.mxu0 0.0
    %5487 = vmatprep.subr.mxu0 0.0
    %5488 = vmatpush1.xpose.msra.mxu0 0.0
    %5489 = vmatprep.subr.mxu0 0.0
    %5490 = vmatpush1.xpose.msra.mxu0 0.0
    %5491 = vmatprep.subr.mxu0 0.0
    %5492 = vmatpush1.xpose.msra.mxu0 0.0
    %5493 = vmatprep.subr.mxu0 0.0
    %5494 = vmatpush1.xpose.msra.mxu0 0.0
    %5495 = vmatprep.subr.mxu0 0.0
    %5496 = vmatpush1.xpose.msra.mxu0 0.0
    %5497 = vmatprep.subr.mxu0 0.0
    %5498 = vmatpush1.xpose.msra.mxu0 0.0
    %5499 = vmatprep.subr.mxu0 0.0
    %5500 = vmatpush1.xpose.msra.mxu0 0.0
    %5501 = vmatprep.subr.mxu0 0.0
    %5502 = vmatpush1.xpose.msra.mxu0 0.0
    %5503 = vmatprep.subr.mxu0 0.0
    %5504 = vmatpush1.xpose.msra.mxu0 0.0
    %5505 = vmatprep.subr.mxu0 0.0
    %5506 = vmatpush1.xpose.msra.mxu0 0.0
    %5507 = vmatprep.subr.mxu0 0.0
    %5508 = vmatpush1.xpose.msra.mxu0 %v5483
    %5509 = vmatprep.subr.mxu0 0.0
    %5510 = vmatpush1.xpose.msra.mxu0 %v5480
    %5511 = vmatprep.subr.mxu0 0.0
    %5512 = vmatpush1.xpose.msra.mxu0 %v5477
    %5513 = vmatprep.subr.mxu0 0.0
    %5514 = vmatpush1.xpose.msra.mxu0 %v5474
    %5515 = vmatprep.subr.mxu0 0.0
    %5516 = vmatpush1.xpose.msra.mxu0 %v5471
    %5517 = vmatprep.subr.mxu0 0.0
    %5518 = vmatpush2.xpose.msra.mxu0 0.0
    %5519 = vmatprep.subr.mxu0 0.0
    %5520 = vmatpush2.xpose.msra.mxu0 0.0
    %5521 = vmatprep.subr.mxu0 0.0
    %5522 = vmatpush2.xpose.msra.mxu0 0.0
    %5523 = vmatprep.subr.mxu0 0.0
    %5524 = vmatpush2.xpose.msra.mxu0 0.0
    %5525 = vmatprep.subr.mxu0 0.0
    %5526 = vmatpush2.xpose.msra.mxu0 0.0
    %5527 = vmatprep.subr.mxu0 0.0
    %5528 = vmatpush2.xpose.msra.mxu0 0.0
    %5529 = vmatprep.subr.mxu0 0.0
    %5530 = vmatpush2.xpose.msra.mxu0 0.0
    %5531 = vmatprep.subr.mxu0 0.0
    %5532 = vmatpush2.xpose.msra.mxu0 0.0
    %5533 = vmatprep.subr.mxu0 0.0
    %5534 = vmatpush2.xpose.msra.mxu0 0.0
    %5535 = vmatprep.subr.mxu0 0.0
    %5536 = vmatpush2.xpose.msra.mxu0 0.0
    %5537 = vmatprep.subr.mxu0 0.0
    %5538 = vmatpush2.xpose.msra.mxu0 0.0
    %5539 = vmatprep.subr.mxu0 0.0
    %5540 = vmatpush2.xpose.msra.mxu0 0.0
    %5541 = vmatprep.subr.mxu0 0.0
    %5542 = vmatpush2.xpose.msra.mxu0 0.0
    %5543 = vmatprep.subr.mxu0 0.0
    %5544 = vmatpush2.xpose.msra.mxu0 0.0
    %5545 = vmatprep.subr.mxu0 0.0
    %5546 = vmatpush2.xpose.msra.mxu0 0.0
    %5547 = vmatprep.subr.mxu0 0.0
    %5548 = vmatpush2.xpose.msra.mxu0 0.0
    %5549 = vmatprep.mubr.f32.mxu0 0.0
    %5550 = vmatmul.mubr.f32.gmra.mxu0 %v5456
    %v5551 = vpop.f32.mrf.mxu0
    %v5552 = vadd.f32 0.0, %v5551
    %v5553 = vpop.f32.mrf.mxu0
    %5554 = vmatprep.mubr.f32.mxu0 0.0
    %5555 = vmatmul.mubr.f32.gmra.mxu0 %v5459
    %v5556 = vpop.f32.mrf.mxu0
    %v5557 = vadd.f32 0.0, %v5556
    %v5558 = vpop.f32.mrf.mxu0
    %5559 = vmatprep.mubr.f32.mxu0 0.0
    %5560 = vmatmul.mubr.f32.gmra.mxu0 %v5462
    %v5561 = vpop.f32.mrf.mxu0
    %v5562 = vadd.f32 0.0, %v5561
    %v5563 = vpop.f32.mrf.mxu0
    %5564 = vmatprep.mubr.f32.mxu0 0.0
    %5565 = vmatmul.mubr.f32.gmra.mxu0 %v5465
    %v5566 = vpop.f32.mrf.mxu0
    %v5567 = vadd.f32 0.0, %v5566
    %v5568 = vpop.f32.mrf.mxu0
    %5569 = vmatprep.mubr.f32.mxu0 0.0
    %5570 = vmatmul.mubr.f32.gmra.mxu0 %v5468
    %v5571 = vpop.f32.mrf.mxu0
    %v5572 = vadd.f32 0.0, %v5571
    %v5573 = vpop.f32.mrf.mxu0
    %5574 = vdwg.mxu0
    %v5575 = vmul.f32 %v5552, 0.25
    %v5576 = vmul.f32 %v5557, 0.25
    %v5577 = vmul.f32 %v5562, 0.25
    %v5578 = vmul.f32 %v5567, 0.25
    %v5579 = vmul.f32 %v5572, 0.25
    %v5580 = vadd.f32 %v5575, %v205
    %v5581 = vadd.f32 %v5576, %v206
    %v5582 = vadd.f32 %v5577, %v207
    %v5583 = vadd.f32 %v5578, %v208
    %v5584 = vadd.f32 %v5579, %v209
    %v5585 = vsel %vm752, %v5580, -inf
    %5586 = vmax.xlane.f32.xlu0 %v5585
    %v5587 = vpop.xlane.xlu0 %5586
    %v5588 = vsel %vm752, %v5581, -inf
    %5589 = vmax.xlane.f32.xlu0 %v5588
    %v5590 = vpop.xlane.xlu0 %5589
    %v5591 = vsel %vm752, %v5582, -inf
    %5592 = vmax.xlane.f32.xlu0 %v5591
    %v5593 = vpop.xlane.xlu0 %5592
    %v5594 = vsel %vm752, %v5583, -inf
    %5595 = vmax.xlane.f32.xlu0 %v5594
    %v5596 = vpop.xlane.xlu0 %5595
    %v5597 = vsel %vm765, %v5584, -inf
    %5598 = vmax.xlane.f32.xlu0 %v5597
    %v5599 = vpop.xlane.xlu0 %5598
    %v5600 = vsub.f32 %v5580, %v5587
    %v5601 = vsub.f32 %v5581, %v5590
    %v5602 = vsub.f32 %v5582, %v5593
    %v5603 = vsub.f32 %v5583, %v5596
    %v5604 = vsub.f32 %v5584, %v5599
    %v5605 = vmul.f32 %v5600, 1.442695
    %v5606 = vpow.pop %v5605
    %v5607 = vmul.f32 %v5601, 1.442695
    %v5608 = vpow.pop %v5607
    %v5609 = vmul.f32 %v5602, 1.442695
    %v5610 = vpow.pop %v5609
    %v5611 = vmul.f32 %v5603, 1.442695
    %v5612 = vpow.pop %v5611
    %v5613 = vmul.f32 %v5604, 1.442695
    %v5614 = vpow.pop %v5613
    %v5615 = vsel %vm752, %v5606, 0.0
    %5616 = vadd.xlane.f32.xlu0 %v5615
    %v5617 = vpop.xlane.xlu0 %5616
    %v5618 = vsel %vm752, %v5608, 0.0
    %5619 = vadd.xlane.f32.xlu0 %v5618
    %v5620 = vpop.xlane.xlu0 %5619
    %v5621 = vsel %vm752, %v5610, 0.0
    %5622 = vadd.xlane.f32.xlu0 %v5621
    %v5623 = vpop.xlane.xlu0 %5622
    %v5624 = vsel %vm752, %v5612, 0.0
    %5625 = vadd.xlane.f32.xlu0 %v5624
    %v5626 = vpop.xlane.xlu0 %5625
    %v5627 = vsel %vm765, %v5614, 0.0
    %5628 = vadd.xlane.f32.xlu0 %v5627
    %v5629 = vpop.xlane.xlu0 %5628
    %v5630 = vrcp.pop %v5617
    %v5631 = vmul.f32 %v5606, %v5630
    %v5632 = vrcp.pop %v5620
    %v5633 = vmul.f32 %v5608, %v5632
    %v5634 = vrcp.pop %v5623
    %v5635 = vmul.f32 %v5610, %v5634
    %v5636 = vrcp.pop %v5626
    %v5637 = vmul.f32 %v5612, %v5636
    %v5638 = vrcp.pop %v5629
    %v5639 = vmul.f32 %v5614, %v5638
    %v5641 = vsel %vm752, %v5631, 0
    %v5644 = vsel %vm752, %v5633, 0
    %v5647 = vsel %vm752, %v5635, 0
    %v5650 = vsel %vm752, %v5637, 0
    %v5653 = vsel %vm752, %v5639, 0
    %v5656 = vsel %vm824, %v5452, 0
    %5658 = vmatprep.subr.mxu0 0.0
    %5659 = vmatpush1.msra.mxu0 0.0
    %5660 = vmatprep.subr.mxu0 0.0
    %5661 = vmatpush1.msra.mxu0 0.0
    %5662 = vmatprep.subr.mxu0 0.0
    %5663 = vmatpush1.msra.mxu0 0.0
    %5664 = vmatprep.subr.mxu0 0.0
    %5665 = vmatpush1.msra.mxu0 0.0
    %5666 = vmatprep.subr.mxu0 0.0
    %5667 = vmatpush1.msra.mxu0 0.0
    %5668 = vmatprep.subr.mxu0 0.0
    %5669 = vmatpush1.msra.mxu0 0.0
    %5670 = vmatprep.subr.mxu0 0.0
    %5671 = vmatpush1.msra.mxu0 0.0
    %5672 = vmatprep.subr.mxu0 0.0
    %5673 = vmatpush1.msra.mxu0 0.0
    %5674 = vmatprep.subr.mxu0 0.0
    %5675 = vmatpush1.msra.mxu0 0.0
    %5676 = vmatprep.subr.mxu0 0.0
    %5677 = vmatpush1.msra.mxu0 0.0
    %5678 = vmatprep.subr.mxu0 0.0
    %5679 = vmatpush1.msra.mxu0 0.0
    %5680 = vmatprep.subr.mxu0 0.0
    %5681 = vmatpush1.msra.mxu0 %v5656
    %5682 = vmatprep.subr.mxu0 0.0
    %5683 = vmatpush1.msra.mxu0 %v5447
    %5684 = vmatprep.subr.mxu0 0.0
    %5685 = vmatpush1.msra.mxu0 %v5442
    %5686 = vmatprep.subr.mxu0 0.0
    %5687 = vmatpush1.msra.mxu0 %v5437
    %5688 = vmatprep.subr.mxu0 0.0
    %5689 = vmatpush1.msra.mxu0 %v5432
    %5690 = vmatprep.subr.mxu0 0.0
    %5691 = vmatpush2.msra.mxu0 0.0
    %5692 = vmatprep.subr.mxu0 0.0
    %5693 = vmatpush2.msra.mxu0 0.0
    %5694 = vmatprep.subr.mxu0 0.0
    %5695 = vmatpush2.msra.mxu0 0.0
    %5696 = vmatprep.subr.mxu0 0.0
    %5697 = vmatpush2.msra.mxu0 0.0
    %5698 = vmatprep.subr.mxu0 0.0
    %5699 = vmatpush2.msra.mxu0 0.0
    %5700 = vmatprep.subr.mxu0 0.0
    %5701 = vmatpush2.msra.mxu0 0.0
    %5702 = vmatprep.subr.mxu0 0.0
    %5703 = vmatpush2.msra.mxu0 0.0
    %5704 = vmatprep.subr.mxu0 0.0
    %5705 = vmatpush2.msra.mxu0 0.0
    %5706 = vmatprep.subr.mxu0 0.0
    %5707 = vmatpush2.msra.mxu0 0.0
    %5708 = vmatprep.subr.mxu0 0.0
    %5709 = vmatpush2.msra.mxu0 0.0
    %5710 = vmatprep.subr.mxu0 0.0
    %5711 = vmatpush2.msra.mxu0 0.0
    %5712 = vmatprep.subr.mxu0 0.0
    %5713 = vmatpush2.msra.mxu0 0.0
    %5714 = vmatprep.subr.mxu0 0.0
    %5715 = vmatpush2.msra.mxu0 0.0
    %5716 = vmatprep.subr.mxu0 0.0
    %5717 = vmatpush2.msra.mxu0 0.0
    %5718 = vmatprep.subr.mxu0 0.0
    %5719 = vmatpush2.msra.mxu0 0.0
    %5720 = vmatprep.subr.mxu0 0.0
    %5721 = vmatpush2.msra.mxu0 0.0
    %5722 = vmatprep.mubr.f32.mxu0 0.0
    %5723 = vmatmul.mubr.f32.gmra.mxu0 %v5641
    %v5724 = vpop.f32.mrf.mxu0
    %v5725 = vadd.f32 0.0, %v5724
    %v5726 = vpop.f32.mrf.mxu0
    %5727 = vmatprep.mubr.f32.mxu0 0.0
    %5728 = vmatmul.mubr.f32.gmra.mxu0 %v5644
    %v5729 = vpop.f32.mrf.mxu0
    %v5730 = vadd.f32 0.0, %v5729
    %v5731 = vpop.f32.mrf.mxu0
    %5732 = vmatprep.mubr.f32.mxu0 0.0
    %5733 = vmatmul.mubr.f32.gmra.mxu0 %v5647
    %v5734 = vpop.f32.mrf.mxu0
    %v5735 = vadd.f32 0.0, %v5734
    %v5736 = vpop.f32.mrf.mxu0
    %5737 = vmatprep.mubr.f32.mxu0 0.0
    %5738 = vmatmul.mubr.f32.gmra.mxu0 %v5650
    %v5739 = vpop.f32.mrf.mxu0
    %v5740 = vadd.f32 0.0, %v5739
    %v5741 = vpop.f32.mrf.mxu0
    %5742 = vmatprep.mubr.f32.mxu0 0.0
    %5743 = vmatmul.mubr.f32.gmra.mxu0 %v5653
    %v5744 = vpop.f32.mrf.mxu0
    %v5745 = vadd.f32 0.0, %v5744
    %v5746 = vpop.f32.mrf.mxu0
    %5747 = vdwg.mxu0
    %s5748 = scalar_lea.vmem %s12, 80
    %v5749 = vld [vmem:[%s5748] sm:$0xff]
    %v5750 = vld [vmem:[%s5748 + $0x8] sm:$0xff]
    %v5752 = vsel %vm621, %v5725, 0
    %v5755 = vsel %vm621, %v5730, 0
    %v5758 = vsel %vm621, %v5735, 0
    %v5761 = vsel %vm621, %v5740, 0
    %v5764 = vsel %vm621, %v5745, 0
    %5766 = vmatprep.subr.mxu0 0.0
    %5767 = vmatpush1.msra.mxu0 0.0
    %5768 = vmatprep.subr.mxu0 0.0
    %5769 = vmatpush1.msra.mxu0 0.0
    %5770 = vmatprep.subr.mxu0 0.0
    %5771 = vmatpush1.msra.mxu0 0.0
    %5772 = vmatprep.subr.mxu0 0.0
    %5773 = vmatpush1.msra.mxu0 0.0
    %5774 = vmatprep.subr.mxu0 0.0
    %5775 = vmatpush1.msra.mxu0 0.0
    %5776 = vmatprep.subr.mxu0 0.0
    %5777 = vmatpush1.msra.mxu0 0.0
    %5778 = vmatprep.subr.mxu0 0.0
    %5779 = vmatpush1.msra.mxu0 0.0
    %5780 = vmatprep.subr.mxu0 0.0
    %5781 = vmatpush1.msra.mxu0 0.0
    %5782 = vmatprep.subr.mxu0 0.0
    %5783 = vmatpush1.msra.mxu0 0.0
    %5784 = vmatprep.subr.mxu0 0.0
    %5785 = vmatpush1.msra.mxu0 0.0
    %5786 = vmatprep.subr.mxu0 0.0
    %5787 = vmatpush1.msra.mxu0 0.0
    %5788 = vmatprep.subr.mxu0 0.0
    %5789 = vmatpush1.msra.mxu0 0.0
    %5790 = vmatprep.subr.mxu0 0.0
    %5791 = vmatpush1.msra.mxu0 0.0
    %5792 = vmatprep.subr.mxu0 0.0
    %5793 = vmatpush1.msra.mxu0 0.0
    %5794 = vmatprep.subr.mxu0 0.0
    %5795 = vmatpush1.msra.mxu0 %v5750
    %5796 = vmatprep.subr.mxu0 0.0
    %5797 = vmatpush1.msra.mxu0 %v5749
    %5798 = vmatprep.subr.mxu0 0.0
    %5799 = vmatpush2.msra.mxu0 0.0
    %5800 = vmatprep.subr.mxu0 0.0
    %5801 = vmatpush2.msra.mxu0 0.0
    %5802 = vmatprep.subr.mxu0 0.0
    %5803 = vmatpush2.msra.mxu0 0.0
    %5804 = vmatprep.subr.mxu0 0.0
    %5805 = vmatpush2.msra.mxu0 0.0
    %5806 = vmatprep.subr.mxu0 0.0
    %5807 = vmatpush2.msra.mxu0 0.0
    %5808 = vmatprep.subr.mxu0 0.0
    %5809 = vmatpush2.msra.mxu0 0.0
    %5810 = vmatprep.subr.mxu0 0.0
    %5811 = vmatpush2.msra.mxu0 0.0
    %5812 = vmatprep.subr.mxu0 0.0
    %5813 = vmatpush2.msra.mxu0 0.0
    %5814 = vmatprep.subr.mxu0 0.0
    %5815 = vmatpush2.msra.mxu0 0.0
    %5816 = vmatprep.subr.mxu0 0.0
    %5817 = vmatpush2.msra.mxu0 0.0
    %5818 = vmatprep.subr.mxu0 0.0
    %5819 = vmatpush2.msra.mxu0 0.0
    %5820 = vmatprep.subr.mxu0 0.0
    %5821 = vmatpush2.msra.mxu0 0.0
    %5822 = vmatprep.subr.mxu0 0.0
    %5823 = vmatpush2.msra.mxu0 0.0
    %5824 = vmatprep.subr.mxu0 0.0
    %5825 = vmatpush2.msra.mxu0 0.0
    %5826 = vmatprep.subr.mxu0 0.0
    %5827 = vmatpush2.msra.mxu0 0.0
    %5828 = vmatprep.subr.mxu0 0.0
    %5829 = vmatpush2.msra.mxu0 0.0
    %5830 = vmatprep.mubr.f32.mxu0 0.0
    %5831 = vmatmul.mubr.f32.gmra.mxu0 %v5752
    %v5832 = vpop.f32.mrf.mxu0
    %v5833 = vadd.f32 0.0, %v5832
    %v5834 = vpop.f32.mrf.mxu0
    %5835 = vmatprep.mubr.f32.mxu0 0.0
    %5836 = vmatmul.mubr.f32.gmra.mxu0 %v5755
    %v5837 = vpop.f32.mrf.mxu0
    %v5838 = vadd.f32 0.0, %v5837
    %v5839 = vpop.f32.mrf.mxu0
    %5840 = vmatprep.mubr.f32.mxu0 0.0
    %5841 = vmatmul.mubr.f32.gmra.mxu0 %v5758
    %v5842 = vpop.f32.mrf.mxu0
    %v5843 = vadd.f32 0.0, %v5842
    %v5844 = vpop.f32.mrf.mxu0
    %5845 = vmatprep.mubr.f32.mxu0 0.0
    %5846 = vmatmul.mubr.f32.gmra.mxu0 %v5761
    %v5847 = vpop.f32.mrf.mxu0
    %v5848 = vadd.f32 0.0, %v5847
    %v5849 = vpop.f32.mrf.mxu0
    %5850 = vmatprep.mubr.f32.mxu0 0.0
    %5851 = vmatmul.mubr.f32.gmra.mxu0 %v5764
    %v5852 = vpop.f32.mrf.mxu0
    %v5853 = vadd.f32 0.0, %v5852
    %v5854 = vpop.f32.mrf.mxu0
    %5855 = vdwg.mxu0
    %v5856 = vadd.f32 %v5141, %v5833
    %v5857 = vadd.f32 %v5142, %v5838
    %v5858 = vadd.f32 %v5143, %v5843
    %v5859 = vadd.f32 %v5144, %v5848
    %v5860 = vadd.f32 %v5145, %v5853
    %s5861 = scalar_lea.vmem %s14, 2
    %v5862 = vld [vmem:[%s5861] sm:$0x1]
    %v5864 = vlaneseq
    %v5865 = vshrl.u32 %v5864, 7
    %v5866 = vsub.s32 0, %v5865
    %v5867 = vrot.slane %v5862, %v5866
    %v5869 = vmul.f32 %v5867, %v5856
    %v5870 = vmul.f32 %v5867, %v5857
    %v5871 = vmul.f32 %v5867, %v5858
    %v5872 = vmul.f32 %v5867, %v5859
    %v5873 = vmul.f32 %v5867, %v5860
    %v5874 = vadd.f32 %v4291, %v5869
    %v5875 = vadd.f32 %v4292, %v5870
    %v5876 = vadd.f32 %v4293, %v5871
    %v5877 = vadd.f32 %v4294, %v5872
    %v5878 = vadd.f32 %v4295, %v5873
    %s5879 = scalar_lea.vmem %s15, 2
    %v5880 = vld [vmem:[%s5879] sm:$0x1]
    %s5881 = scalar_lea.vmem %s16, 2
    %v5882 = vld [vmem:[%s5881] sm:$0x1]
    %v5883 = vsel %vm212, %v5874, 0.0
    %5884 = vadd.xlane.f32.xlu0 %v5883
    %v5885 = vpop.xlane.xlu0 %5884
    %v5886 = vsel %vm212, %v5875, 0.0
    %5887 = vadd.xlane.f32.xlu0 %v5886
    %v5888 = vpop.xlane.xlu0 %5887
    %v5889 = vsel %vm212, %v5876, 0.0
    %5890 = vadd.xlane.f32.xlu0 %v5889
    %v5891 = vpop.xlane.xlu0 %5890
    %v5892 = vsel %vm212, %v5877, 0.0
    %5893 = vadd.xlane.f32.xlu0 %v5892
    %v5894 = vpop.xlane.xlu0 %5893
    %v5895 = vsel %vm225, %v5878, 0.0
    %5896 = vadd.xlane.f32.xlu0 %v5895
    %v5897 = vpop.xlane.xlu0 %5896
    %v5898 = vmul.f32 %v5885, %v229
    %v5899 = vmul.f32 %v5888, %v229
    %v5900 = vmul.f32 %v5891, %v229
    %v5901 = vmul.f32 %v5894, %v229
    %v5902 = vmul.f32 %v5897, %v229
    %v5903 = vsub.f32 %v5874, %v5898
    %v5904 = vsub.f32 %v5875, %v5899
    %v5905 = vsub.f32 %v5876, %v5900
    %v5906 = vsub.f32 %v5877, %v5901
    %v5907 = vsub.f32 %v5878, %v5902
    %v5908 = vmul.f32 %v5903, %v5903
    %v5909 = vmul.f32 %v5904, %v5904
    %v5910 = vmul.f32 %v5905, %v5905
    %v5911 = vmul.f32 %v5906, %v5906
    %v5912 = vmul.f32 %v5907, %v5907
    %v5913 = vsel %vm212, %v5908, 0.0
    %5914 = vadd.xlane.f32.xlu0 %v5913
    %v5915 = vpop.xlane.xlu0 %5914
    %v5916 = vsel %vm212, %v5909, 0.0
    %5917 = vadd.xlane.f32.xlu0 %v5916
    %v5918 = vpop.xlane.xlu0 %5917
    %v5919 = vsel %vm212, %v5910, 0.0
    %5920 = vadd.xlane.f32.xlu0 %v5919
    %v5921 = vpop.xlane.xlu0 %5920
    %v5922 = vsel %vm212, %v5911, 0.0
    %5923 = vadd.xlane.f32.xlu0 %v5922
    %v5924 = vpop.xlane.xlu0 %5923
    %v5925 = vsel %vm225, %v5912, 0.0
    %5926 = vadd.xlane.f32.xlu0 %v5925
    %v5927 = vpop.xlane.xlu0 %5926
    %v5928 = vmul.f32 %v5915, %v229
    %v5929 = vmul.f32 %v5918, %v229
    %v5930 = vmul.f32 %v5921, %v229
    %v5931 = vmul.f32 %v5924, %v229
    %v5932 = vmul.f32 %v5927, %v229
    %v5933 = vadd.f32 %v5928, 1e-06
    %v5934 = vadd.f32 %v5929, 1e-06
    %v5935 = vadd.f32 %v5930, 1e-06
    %v5936 = vadd.f32 %v5931, 1e-06
    %v5937 = vadd.f32 %v5932, 1e-06
    %v5938 = vrsqrt.pop %v5933
    %v5939 = vrsqrt.pop %v5934
    %v5940 = vrsqrt.pop %v5935
    %v5941 = vrsqrt.pop %v5936
    %v5942 = vrsqrt.pop %v5937
    %v5943 = vmul.f32 %v5903, %v5938
    %v5944 = vmul.f32 %v5904, %v5939
    %v5945 = vmul.f32 %v5905, %v5940
    %v5946 = vmul.f32 %v5906, %v5941
    %v5947 = vmul.f32 %v5907, %v5942
    %v5949 = vlaneseq
    %v5950 = vshrl.u32 %v5949, 7
    %v5951 = vsub.s32 0, %v5950
    %v5952 = vrot.slane %v5880, %v5951
    %v5954 = vmul.f32 %v5943, %v5952
    %v5955 = vmul.f32 %v5944, %v5952
    %v5956 = vmul.f32 %v5945, %v5952
    %v5957 = vmul.f32 %v5946, %v5952
    %v5958 = vmul.f32 %v5947, %v5952
    %v5960 = vlaneseq
    %v5961 = vshrl.u32 %v5960, 7
    %v5962 = vsub.s32 0, %v5961
    %v5963 = vrot.slane %v5882, %v5962
    %v5965 = vadd.f32 %v5954, %v5963
    %v5966 = vadd.f32 %v5955, %v5963
    %v5967 = vadd.f32 %v5956, %v5963
    %v5968 = vadd.f32 %v5957, %v5963
    %v5969 = vadd.f32 %v5958, %v5963
    %s5970 = scalar_lea.vmem %s17, 64
    %v5971 = vld [vmem:[%s5970] sm:$0xff]
    %v5972 = vld [vmem:[%s5970 + $0x8] sm:$0xff]
    %v5973 = vld [vmem:[%s5970 + $0x10] sm:$0xff]
    %v5974 = vld [vmem:[%s5970 + $0x18] sm:$0xff]
    %s5975 = scalar_lea.vmem %s18, 2
    %v5976 = vld [vmem:[%s5975] sm:$0x1]
    %v5978 = vlaneseq
    %v5979 = vshrl.u32 %v5978, 7
    %v5980 = vsub.s32 0, %v5979
    %v5981 = vrot.slane %v5976, %v5980
    %v5984 = vsel %vm212, %v5965, 0
    %v5987 = vsel %vm212, %v5966, 0
    %v5990 = vsel %vm212, %v5967, 0
    %v5993 = vsel %vm212, %v5968, 0
    %v5996 = vsel %vm212, %v5969, 0
    %5998 = vmatprep.subr.mxu0 0.0
    %5999 = vmatpush1.msra.mxu0 0.0
    %6000 = vmatprep.subr.mxu0 0.0
    %6001 = vmatpush1.msra.mxu0 0.0
    %6002 = vmatprep.subr.mxu0 0.0
    %6003 = vmatpush1.msra.mxu0 0.0
    %6004 = vmatprep.subr.mxu0 0.0
    %6005 = vmatpush1.msra.mxu0 0.0
    %6006 = vmatprep.subr.mxu0 0.0
    %6007 = vmatpush1.msra.mxu0 0.0
    %6008 = vmatprep.subr.mxu0 0.0
    %6009 = vmatpush1.msra.mxu0 0.0
    %6010 = vmatprep.subr.mxu0 0.0
    %6011 = vmatpush1.msra.mxu0 0.0
    %6012 = vmatprep.subr.mxu0 0.0
    %6013 = vmatpush1.msra.mxu0 0.0
    %6014 = vmatprep.subr.mxu0 0.0
    %6015 = vmatpush1.msra.mxu0 0.0
    %6016 = vmatprep.subr.mxu0 0.0
    %6017 = vmatpush1.msra.mxu0 0.0
    %6018 = vmatprep.subr.mxu0 0.0
    %6019 = vmatpush1.msra.mxu0 0.0
    %6020 = vmatprep.subr.mxu0 0.0
    %6021 = vmatpush1.msra.mxu0 0.0
    %6022 = vmatprep.subr.mxu0 0.0
    %6023 = vmatpush1.msra.mxu0 %v5974
    %6024 = vmatprep.subr.mxu0 0.0
    %6025 = vmatpush1.msra.mxu0 %v5973
    %6026 = vmatprep.subr.mxu0 0.0
    %6027 = vmatpush1.msra.mxu0 %v5972
    %6028 = vmatprep.subr.mxu0 0.0
    %6029 = vmatpush1.msra.mxu0 %v5971
    %6030 = vmatprep.subr.mxu0 0.0
    %6031 = vmatpush2.msra.mxu0 0.0
    %6032 = vmatprep.subr.mxu0 0.0
    %6033 = vmatpush2.msra.mxu0 0.0
    %6034 = vmatprep.subr.mxu0 0.0
    %6035 = vmatpush2.msra.mxu0 0.0
    %6036 = vmatprep.subr.mxu0 0.0
    %6037 = vmatpush2.msra.mxu0 0.0
    %6038 = vmatprep.subr.mxu0 0.0
    %6039 = vmatpush2.msra.mxu0 0.0
    %6040 = vmatprep.subr.mxu0 0.0
    %6041 = vmatpush2.msra.mxu0 0.0
    %6042 = vmatprep.subr.mxu0 0.0
    %6043 = vmatpush2.msra.mxu0 0.0
    %6044 = vmatprep.subr.mxu0 0.0
    %6045 = vmatpush2.msra.mxu0 0.0
    %6046 = vmatprep.subr.mxu0 0.0
    %6047 = vmatpush2.msra.mxu0 0.0
    %6048 = vmatprep.subr.mxu0 0.0
    %6049 = vmatpush2.msra.mxu0 0.0
    %6050 = vmatprep.subr.mxu0 0.0
    %6051 = vmatpush2.msra.mxu0 0.0
    %6052 = vmatprep.subr.mxu0 0.0
    %6053 = vmatpush2.msra.mxu0 0.0
    %6054 = vmatprep.subr.mxu0 0.0
    %6055 = vmatpush2.msra.mxu0 0.0
    %6056 = vmatprep.subr.mxu0 0.0
    %6057 = vmatpush2.msra.mxu0 0.0
    %6058 = vmatprep.subr.mxu0 0.0
    %6059 = vmatpush2.msra.mxu0 0.0
    %6060 = vmatprep.subr.mxu0 0.0
    %6061 = vmatpush2.msra.mxu0 0.0
    %6062 = vmatprep.mubr.f32.mxu0 0.0
    %6063 = vmatmul.mubr.f32.gmra.mxu0 %v5984
    %v6064 = vpop.f32.mrf.mxu0
    %v6065 = vadd.f32 %v5981, %v6064
    %v6066 = vpop.f32.mrf.mxu0
    %6067 = vmatprep.mubr.f32.mxu0 0.0
    %6068 = vmatmul.mubr.f32.gmra.mxu0 %v5987
    %v6069 = vpop.f32.mrf.mxu0
    %v6070 = vadd.f32 %v5981, %v6069
    %v6071 = vpop.f32.mrf.mxu0
    %6072 = vmatprep.mubr.f32.mxu0 0.0
    %6073 = vmatmul.mubr.f32.gmra.mxu0 %v5990
    %v6074 = vpop.f32.mrf.mxu0
    %v6075 = vadd.f32 %v5981, %v6074
    %v6076 = vpop.f32.mrf.mxu0
    %6077 = vmatprep.mubr.f32.mxu0 0.0
    %6078 = vmatmul.mubr.f32.gmra.mxu0 %v5993
    %v6079 = vpop.f32.mrf.mxu0
    %v6080 = vadd.f32 %v5981, %v6079
    %v6081 = vpop.f32.mrf.mxu0
    %6082 = vmatprep.mubr.f32.mxu0 0.0
    %6083 = vmatmul.mubr.f32.gmra.mxu0 %v5996
    %v6084 = vpop.f32.mrf.mxu0
    %v6085 = vadd.f32 %v5981, %v6084
    %v6086 = vpop.f32.mrf.mxu0
    %6087 = vdwg.mxu0
    %v6088 = vmul.f32 %v6065, 0.5
    %v6089 = vmul.f32 %v6070, 0.5
    %v6090 = vmul.f32 %v6075, 0.5
    %v6091 = vmul.f32 %v6080, 0.5
    %v6092 = vmul.f32 %v6085, 0.5
    %v6093 = vmul.f32 %v6065, 0.70710677
    %v6094 = vmul.f32 %v6070, 0.70710677
    %v6095 = vmul.f32 %v6075, 0.70710677
    %v6096 = vmul.f32 %v6080, 0.70710677
    %v6097 = vmul.f32 %v6085, 0.70710677
    %v6098 = vand.u32 2147483647, %v6093
    %v6099 = vand.u32 2147483647, %v6094
    %v6100 = vand.u32 2147483647, %v6095
    %v6101 = vand.u32 2147483647, %v6096
    %v6102 = vand.u32 2147483647, %v6097
    %v6103 = vmul.f32 %v6098, 0.3275911
    %v6104 = vmul.f32 %v6099, 0.3275911
    %v6105 = vmul.f32 %v6100, 0.3275911
    %v6106 = vmul.f32 %v6101, 0.3275911
    %v6107 = vmul.f32 %v6102, 0.3275911
    %v6108 = vadd.f32 %v6103, 1.0
    %v6109 = vadd.f32 %v6104, 1.0
    %v6110 = vadd.f32 %v6105, 1.0
    %v6111 = vadd.f32 %v6106, 1.0
    %v6112 = vadd.f32 %v6107, 1.0
    %v6113 = vrcp.pop %v6108
    %v6114 = vmul.f32 1.0, %v6113
    %v6115 = vrcp.pop %v6109
    %v6116 = vmul.f32 1.0, %v6115
    %v6117 = vrcp.pop %v6110
    %v6118 = vmul.f32 1.0, %v6117
    %v6119 = vrcp.pop %v6111
    %v6120 = vmul.f32 1.0, %v6119
    %v6121 = vrcp.pop %v6112
    %v6122 = vmul.f32 1.0, %v6121
    %v6123 = vmul.f32 %v6114, 1.0614054
    %v6124 = vmul.f32 %v6116, 1.0614054
    %v6125 = vmul.f32 %v6118, 1.0614054
    %v6126 = vmul.f32 %v6120, 1.0614054
    %v6127 = vmul.f32 %v6122, 1.0614054
    %v6128 = vadd.f32 %v6123, -1.4531521
    %v6129 = vadd.f32 %v6124, -1.4531521
    %v6130 = vadd.f32 %v6125, -1.4531521
    %v6131 = vadd.f32 %v6126, -1.4531521
    %v6132 = vadd.f32 %v6127, -1.4531521
    %v6133 = vmul.f32 %v6128, %v6114
    %v6134 = vmul.f32 %v6129, %v6116
    %v6135 = vmul.f32 %v6130, %v6118
    %v6136 = vmul.f32 %v6131, %v6120
    %v6137 = vmul.f32 %v6132, %v6122
    %v6138 = vadd.f32 %v6133, 1.4214138
    %v6139 = vadd.f32 %v6134, 1.4214138
    %v6140 = vadd.f32 %v6135, 1.4214138
    %v6141 = vadd.f32 %v6136, 1.4214138
    %v6142 = vadd.f32 %v6137, 1.4214138
    %v6143 = vmul.f32 %v6138, %v6114
    %v6144 = vmul.f32 %v6139, %v6116
    %v6145 = vmul.f32 %v6140, %v6118
    %v6146 = vmul.f32 %v6141, %v6120
    %v6147 = vmul.f32 %v6142, %v6122
    %v6148 = vadd.f32 %v6143, -0.28449672
    %v6149 = vadd.f32 %v6144, -0.28449672
    %v6150 = vadd.f32 %v6145, -0.28449672
    %v6151 = vadd.f32 %v6146, -0.28449672
    %v6152 = vadd.f32 %v6147, -0.28449672
    %v6153 = vmul.f32 %v6148, %v6114
    %v6154 = vmul.f32 %v6149, %v6116
    %v6155 = vmul.f32 %v6150, %v6118
    %v6156 = vmul.f32 %v6151, %v6120
    %v6157 = vmul.f32 %v6152, %v6122
    %v6158 = vadd.f32 %v6153, 0.2548296
    %v6159 = vadd.f32 %v6154, 0.2548296
    %v6160 = vadd.f32 %v6155, 0.2548296
    %v6161 = vadd.f32 %v6156, 0.2548296
    %v6162 = vadd.f32 %v6157, 0.2548296
    %v6163 = vmul.f32 %v6158, %v6114
    %v6164 = vmul.f32 %v6159, %v6116
    %v6165 = vmul.f32 %v6160, %v6118
    %v6166 = vmul.f32 %v6161, %v6120
    %v6167 = vmul.f32 %v6162, %v6122
    %v6168 = vsub.f32 0.0, %v6098
    %v6169 = vsub.f32 0.0, %v6099
    %v6170 = vsub.f32 0.0, %v6100
    %v6171 = vsub.f32 0.0, %v6101
    %v6172 = vsub.f32 0.0, %v6102
    %v6173 = vmul.f32 %v6168, %v6098
    %v6174 = vmul.f32 %v6169, %v6099
    %v6175 = vmul.f32 %v6170, %v6100
    %v6176 = vmul.f32 %v6171, %v6101
    %v6177 = vmul.f32 %v6172, %v6102
    %v6178 = vmul.f32 %v6173, 1.442695
    %v6179 = vpow.pop %v6178
    %v6180 = vmul.f32 %v6174, 1.442695
    %v6181 = vpow.pop %v6180
    %v6182 = vmul.f32 %v6175, 1.442695
    %v6183 = vpow.pop %v6182
    %v6184 = vmul.f32 %v6176, 1.442695
    %v6185 = vpow.pop %v6184
    %v6186 = vmul.f32 %v6177, 1.442695
    %v6187 = vpow.pop %v6186
    %v6188 = vmul.f32 %v6163, %v6179
    %v6189 = vmul.f32 %v6164, %v6181
    %v6190 = vmul.f32 %v6165, %v6183
    %v6191 = vmul.f32 %v6166, %v6185
    %v6192 = vmul.f32 %v6167, %v6187
    %v6193 = vsub.f32 1.0, %v6188
    %v6194 = vsub.f32 1.0, %v6189
    %v6195 = vsub.f32 1.0, %v6190
    %v6196 = vsub.f32 1.0, %v6191
    %v6197 = vsub.f32 1.0, %v6192
    %vm6198 = vcmp.ge.f32.partialorder %v6093, 0.0
    %vm6199 = vcmp.ge.f32.partialorder %v6094, 0.0
    %vm6200 = vcmp.ge.f32.partialorder %v6095, 0.0
    %vm6201 = vcmp.ge.f32.partialorder %v6096, 0.0
    %vm6202 = vcmp.ge.f32.partialorder %v6097, 0.0
    %v6203 = vsub.f32 0.0, %v6193
    %v6204 = vsub.f32 0.0, %v6194
    %v6205 = vsub.f32 0.0, %v6195
    %v6206 = vsub.f32 0.0, %v6196
    %v6207 = vsub.f32 0.0, %v6197
    %v6208 = vsel %vm6198, %v6193, %v6203
    %v6209 = vsel %vm6199, %v6194, %v6204
    %v6210 = vsel %vm6200, %v6195, %v6205
    %v6211 = vsel %vm6201, %v6196, %v6206
    %v6212 = vsel %vm6202, %v6197, %v6207
    %v6213 = vadd.f32 %v6208, 1.0
    %v6214 = vadd.f32 %v6209, 1.0
    %v6215 = vadd.f32 %v6210, 1.0
    %v6216 = vadd.f32 %v6211, 1.0
    %v6217 = vadd.f32 %v6212, 1.0
    %v6218 = vmul.f32 %v6088, %v6213
    %v6219 = vmul.f32 %v6089, %v6214
    %v6220 = vmul.f32 %v6090, %v6215
    %v6221 = vmul.f32 %v6091, %v6216
    %v6222 = vmul.f32 %v6092, %v6217
    %s6223 = scalar_lea.vmem %s19, 128
    %v6224 = vld [vmem:[%s6223] sm:$0xff]
    %v6225 = vld [vmem:[%s6223 + $0x8] sm:$0xff]
    %v6226 = vld [vmem:[%s6223 + $0x10] sm:$0xff]
    %v6227 = vld [vmem:[%s6223 + $0x18] sm:$0xff]
    %v6228 = vld [vmem:[%s6223 + $0x20] sm:$0xff]
    %v6229 = vld [vmem:[%s6223 + $0x28] sm:$0xff]
    %v6230 = vld [vmem:[%s6223 + $0x30] sm:$0xff]
    %v6231 = vld [vmem:[%s6223 + $0x38] sm:$0xff]
    %s6232 = scalar_lea.vmem %s20, 2
    %v6233 = vld [vmem:[%s6232] sm:$0x1]
    %v6235 = vlaneseq
    %v6236 = vshrl.u32 %v6235, 7
    %v6237 = vsub.s32 0, %v6236
    %v6238 = vrot.slane %v6233, %v6237
    %v6241 = vsel %vm2123, %v6218, 0
    %v6244 = vsel %vm2123, %v6219, 0
    %v6247 = vsel %vm2123, %v6220, 0
    %v6250 = vsel %vm2123, %v6221, 0
    %v6253 = vsel %vm2123, %v6222, 0
    %6255 = vmatprep.subr.mxu0 0.0
    %6256 = vmatpush1.msra.mxu0 0.0
    %6257 = vmatprep.subr.mxu0 0.0
    %6258 = vmatpush1.msra.mxu0 0.0
    %6259 = vmatprep.subr.mxu0 0.0
    %6260 = vmatpush1.msra.mxu0 0.0
    %6261 = vmatprep.subr.mxu0 0.0
    %6262 = vmatpush1.msra.mxu0 0.0
    %6263 = vmatprep.subr.mxu0 0.0
    %6264 = vmatpush1.msra.mxu0 0.0
    %6265 = vmatprep.subr.mxu0 0.0
    %6266 = vmatpush1.msra.mxu0 0.0
    %6267 = vmatprep.subr.mxu0 0.0
    %6268 = vmatpush1.msra.mxu0 0.0
    %6269 = vmatprep.subr.mxu0 0.0
    %6270 = vmatpush1.msra.mxu0 0.0
    %6271 = vmatprep.subr.mxu0 0.0
    %6272 = vmatpush1.msra.mxu0 %v6231
    %6273 = vmatprep.subr.mxu0 0.0
    %6274 = vmatpush1.msra.mxu0 %v6230
    %6275 = vmatprep.subr.mxu0 0.0
    %6276 = vmatpush1.msra.mxu0 %v6229
    %6277 = vmatprep.subr.mxu0 0.0
    %6278 = vmatpush1.msra.mxu0 %v6228
    %6279 = vmatprep.subr.mxu0 0.0
    %6280 = vmatpush1.msra.mxu0 %v6227
    %6281 = vmatprep.subr.mxu0 0.0
    %6282 = vmatpush1.msra.mxu0 %v6226
    %6283 = vmatprep.subr.mxu0 0.0
    %6284 = vmatpush1.msra.mxu0 %v6225
    %6285 = vmatprep.subr.mxu0 0.0
    %6286 = vmatpush1.msra.mxu0 %v6224
    %6287 = vmatprep.subr.mxu0 0.0
    %6288 = vmatpush2.msra.mxu0 0.0
    %6289 = vmatprep.subr.mxu0 0.0
    %6290 = vmatpush2.msra.mxu0 0.0
    %6291 = vmatprep.subr.mxu0 0.0
    %6292 = vmatpush2.msra.mxu0 0.0
    %6293 = vmatprep.subr.mxu0 0.0
    %6294 = vmatpush2.msra.mxu0 0.0
    %6295 = vmatprep.subr.mxu0 0.0
    %6296 = vmatpush2.msra.mxu0 0.0
    %6297 = vmatprep.subr.mxu0 0.0
    %6298 = vmatpush2.msra.mxu0 0.0
    %6299 = vmatprep.subr.mxu0 0.0
    %6300 = vmatpush2.msra.mxu0 0.0
    %6301 = vmatprep.subr.mxu0 0.0
    %6302 = vmatpush2.msra.mxu0 0.0
    %6303 = vmatprep.subr.mxu0 0.0
    %6304 = vmatpush2.msra.mxu0 0.0
    %6305 = vmatprep.subr.mxu0 0.0
    %6306 = vmatpush2.msra.mxu0 0.0
    %6307 = vmatprep.subr.mxu0 0.0
    %6308 = vmatpush2.msra.mxu0 0.0
    %6309 = vmatprep.subr.mxu0 0.0
    %6310 = vmatpush2.msra.mxu0 0.0
    %6311 = vmatprep.subr.mxu0 0.0
    %6312 = vmatpush2.msra.mxu0 0.0
    %6313 = vmatprep.subr.mxu0 0.0
    %6314 = vmatpush2.msra.mxu0 0.0
    %6315 = vmatprep.subr.mxu0 0.0
    %6316 = vmatpush2.msra.mxu0 0.0
    %6317 = vmatprep.subr.mxu0 0.0
    %6318 = vmatpush2.msra.mxu0 0.0
    %6319 = vmatprep.mubr.f32.mxu0 0.0
    %6320 = vmatmul.mubr.f32.gmra.mxu0 %v6241
    %v6321 = vpop.f32.mrf.mxu0
    %v6322 = vadd.f32 %v6238, %v6321
    %v6323 = vpop.f32.mrf.mxu0
    %6324 = vmatprep.mubr.f32.mxu0 0.0
    %6325 = vmatmul.mubr.f32.gmra.mxu0 %v6244
    %v6326 = vpop.f32.mrf.mxu0
    %v6327 = vadd.f32 %v6238, %v6326
    %v6328 = vpop.f32.mrf.mxu0
    %6329 = vmatprep.mubr.f32.mxu0 0.0
    %6330 = vmatmul.mubr.f32.gmra.mxu0 %v6247
    %v6331 = vpop.f32.mrf.mxu0
    %v6332 = vadd.f32 %v6238, %v6331
    %v6333 = vpop.f32.mrf.mxu0
    %6334 = vmatprep.mubr.f32.mxu0 0.0
    %6335 = vmatmul.mubr.f32.gmra.mxu0 %v6250
    %v6336 = vpop.f32.mrf.mxu0
    %v6337 = vadd.f32 %v6238, %v6336
    %v6338 = vpop.f32.mrf.mxu0
    %6339 = vmatprep.mubr.f32.mxu0 0.0
    %6340 = vmatmul.mubr.f32.gmra.mxu0 %v6253
    %v6341 = vpop.f32.mrf.mxu0
    %v6342 = vadd.f32 %v6238, %v6341
    %v6343 = vpop.f32.mrf.mxu0
    %6344 = vdwg.mxu0
    %s6345 = scalar_lea.vmem %s21, 2
    %v6346 = vld [vmem:[%s6345] sm:$0x1]
    %v6348 = vlaneseq
    %v6349 = vshrl.u32 %v6348, 7
    %v6350 = vsub.s32 0, %v6349
    %v6351 = vrot.slane %v6346, %v6350
    %v6353 = vmul.f32 %v6351, %v6322
    %v6354 = vmul.f32 %v6351, %v6327
    %v6355 = vmul.f32 %v6351, %v6332
    %v6356 = vmul.f32 %v6351, %v6337
    %v6357 = vmul.f32 %v6351, %v6342
    %v6358 = vadd.f32 %v5874, %v6353
    %v6359 = vadd.f32 %v5875, %v6354
    %v6360 = vadd.f32 %v5876, %v6355
    %v6361 = vadd.f32 %v5877, %v6356
    %v6362 = vadd.f32 %v5878, %v6357
    %6367 = vrot.lane.b32.xlu0 %v6358, 64
    %v6368 = vpop.permute.xlu0 %6367
    %6369 = vrot.lane.b32.xlu0 %v6359, 64
    %v6370 = vpop.permute.xlu0 %6369
    %6371 = vrot.lane.b32.xlu0 %v6360, 64
    %v6372 = vpop.permute.xlu0 %6371
    %6373 = vrot.lane.b32.xlu0 %v6361, 64
    %v6374 = vpop.permute.xlu0 %6373
    %vm6379 = vcmask 785920
    %6380 = vst.msk [vmem:[#allocation2] sm:$0xff] %vm6379, %v6368
    %6381 = vst.msk [vmem:[#allocation2 + $0x8] sm:$0xff] %vm6379, %v6370
    %6382 = vst.msk [vmem:[#allocation2 + $0x10] sm:$0xff] %vm6379, %v6372
    %6383 = vst.msk [vmem:[#allocation2 + $0x18] sm:$0xff] %vm6379, %v6374
    %s6384 = scalar_lea.vmem %s4, 3
    %v6385 = vld [vmem:[%s6384] sm:$0x1]
    %s6386 = scalar_lea.vmem %s5, 3
    %v6387 = vld [vmem:[%s6386] sm:$0x1]
    %v6388 = vsel %vm212, %v6358, 0.0
    %6389 = vadd.xlane.f32.xlu0 %v6388
    %v6390 = vpop.xlane.xlu0 %6389
    %v6391 = vsel %vm212, %v6359, 0.0
    %6392 = vadd.xlane.f32.xlu0 %v6391
    %v6393 = vpop.xlane.xlu0 %6392
    %v6394 = vsel %vm212, %v6360, 0.0
    %6395 = vadd.xlane.f32.xlu0 %v6394
    %v6396 = vpop.xlane.xlu0 %6395
    %v6397 = vsel %vm212, %v6361, 0.0
    %6398 = vadd.xlane.f32.xlu0 %v6397
    %v6399 = vpop.xlane.xlu0 %6398
    %v6400 = vsel %vm225, %v6362, 0.0
    %6401 = vadd.xlane.f32.xlu0 %v6400
    %v6402 = vpop.xlane.xlu0 %6401
    %v6403 = vmul.f32 %v6390, %v229
    %v6404 = vmul.f32 %v6393, %v229
    %v6405 = vmul.f32 %v6396, %v229
    %v6406 = vmul.f32 %v6399, %v229
    %v6407 = vmul.f32 %v6402, %v229
    %v6408 = vsub.f32 %v6358, %v6403
    %v6409 = vsub.f32 %v6359, %v6404
    %v6410 = vsub.f32 %v6360, %v6405
    %v6411 = vsub.f32 %v6361, %v6406
    %v6412 = vsub.f32 %v6362, %v6407
    %v6413 = vmul.f32 %v6408, %v6408
    %v6414 = vmul.f32 %v6409, %v6409
    %v6415 = vmul.f32 %v6410, %v6410
    %v6416 = vmul.f32 %v6411, %v6411
    %v6417 = vmul.f32 %v6412, %v6412
    %v6418 = vsel %vm212, %v6413, 0.0
    %6419 = vadd.xlane.f32.xlu0 %v6418
    %v6420 = vpop.xlane.xlu0 %6419
    %v6421 = vsel %vm212, %v6414, 0.0
    %6422 = vadd.xlane.f32.xlu0 %v6421
    %v6423 = vpop.xlane.xlu0 %6422
    %v6424 = vsel %vm212, %v6415, 0.0
    %6425 = vadd.xlane.f32.xlu0 %v6424
    %v6426 = vpop.xlane.xlu0 %6425
    %v6427 = vsel %vm212, %v6416, 0.0
    %6428 = vadd.xlane.f32.xlu0 %v6427
    %v6429 = vpop.xlane.xlu0 %6428
    %v6430 = vsel %vm225, %v6417, 0.0
    %6431 = vadd.xlane.f32.xlu0 %v6430
    %v6432 = vpop.xlane.xlu0 %6431
    %v6433 = vmul.f32 %v6420, %v229
    %v6434 = vmul.f32 %v6423, %v229
    %v6435 = vmul.f32 %v6426, %v229
    %v6436 = vmul.f32 %v6429, %v229
    %v6437 = vmul.f32 %v6432, %v229
    %v6438 = vadd.f32 %v6433, 1e-06
    %v6439 = vadd.f32 %v6434, 1e-06
    %v6440 = vadd.f32 %v6435, 1e-06
    %v6441 = vadd.f32 %v6436, 1e-06
    %v6442 = vadd.f32 %v6437, 1e-06
    %v6443 = vrsqrt.pop %v6438
    %v6444 = vrsqrt.pop %v6439
    %v6445 = vrsqrt.pop %v6440
    %v6446 = vrsqrt.pop %v6441
    %v6447 = vrsqrt.pop %v6442
    %v6448 = vmul.f32 %v6408, %v6443
    %v6449 = vmul.f32 %v6409, %v6444
    %v6450 = vmul.f32 %v6410, %v6445
    %v6451 = vmul.f32 %v6411, %v6446
    %v6452 = vmul.f32 %v6412, %v6447
    %v6454 = vlaneseq
    %v6455 = vshrl.u32 %v6454, 7
    %v6456 = vsub.s32 0, %v6455
    %v6457 = vrot.slane %v6385, %v6456
    %v6459 = vmul.f32 %v6448, %v6457
    %v6460 = vmul.f32 %v6449, %v6457
    %v6461 = vmul.f32 %v6450, %v6457
    %v6462 = vmul.f32 %v6451, %v6457
    %v6463 = vmul.f32 %v6452, %v6457
    %v6465 = vlaneseq
    %v6466 = vshrl.u32 %v6465, 7
    %v6467 = vsub.s32 0, %v6466
    %v6468 = vrot.slane %v6387, %v6467
    %v6470 = vadd.f32 %v6459, %v6468
    %v6471 = vadd.f32 %v6460, %v6468
    %v6472 = vadd.f32 %v6461, %v6468
    %v6473 = vadd.f32 %v6462, %v6468
    %v6474 = vadd.f32 %v6463, %v6468
    %s6475 = scalar_lea.vmem %s13, 3
    %v6476 = vld [vmem:[%s6475] sm:$0x1]
    %s6477 = scalar_lea.vmem %s6, 192
    %v6478 = vld [vmem:[%s6477] sm:$0xff]
    %v6479 = vld [vmem:[%s6477 + $0x8] sm:$0xff]
    %v6480 = vld [vmem:[%s6477 + $0x10] sm:$0xff]
    %v6481 = vld [vmem:[%s6477 + $0x18] sm:$0xff]
    %s6482 = scalar_lea.vmem %s7, 6
    %v6483 = vld [vmem:[%s6482] sm:$0x1]
    %v6485 = vlaneseq
    %v6486 = vshrl.u32 %v6485, 7
    %v6487 = vsub.s32 0, %v6486
    %v6488 = vrot.slane %v6483, %v6487
    %v6491 = vsel %vm212, %v6470, 0
    %v6494 = vsel %vm212, %v6471, 0
    %v6497 = vsel %vm212, %v6472, 0
    %v6500 = vsel %vm212, %v6473, 0
    %v6503 = vsel %vm212, %v6474, 0
    %6505 = vmatprep.subr.mxu0 0.0
    %6506 = vmatpush1.msra.mxu0 0.0
    %6507 = vmatprep.subr.mxu0 0.0
    %6508 = vmatpush1.msra.mxu0 0.0
    %6509 = vmatprep.subr.mxu0 0.0
    %6510 = vmatpush1.msra.mxu0 0.0
    %6511 = vmatprep.subr.mxu0 0.0
    %6512 = vmatpush1.msra.mxu0 0.0
    %6513 = vmatprep.subr.mxu0 0.0
    %6514 = vmatpush1.msra.mxu0 0.0
    %6515 = vmatprep.subr.mxu0 0.0
    %6516 = vmatpush1.msra.mxu0 0.0
    %6517 = vmatprep.subr.mxu0 0.0
    %6518 = vmatpush1.msra.mxu0 0.0
    %6519 = vmatprep.subr.mxu0 0.0
    %6520 = vmatpush1.msra.mxu0 0.0
    %6521 = vmatprep.subr.mxu0 0.0
    %6522 = vmatpush1.msra.mxu0 0.0
    %6523 = vmatprep.subr.mxu0 0.0
    %6524 = vmatpush1.msra.mxu0 0.0
    %6525 = vmatprep.subr.mxu0 0.0
    %6526 = vmatpush1.msra.mxu0 0.0
    %6527 = vmatprep.subr.mxu0 0.0
    %6528 = vmatpush1.msra.mxu0 0.0
    %6529 = vmatprep.subr.mxu0 0.0
    %6530 = vmatpush1.msra.mxu0 %v6481
    %6531 = vmatprep.subr.mxu0 0.0
    %6532 = vmatpush1.msra.mxu0 %v6480
    %6533 = vmatprep.subr.mxu0 0.0
    %6534 = vmatpush1.msra.mxu0 %v6479
    %6535 = vmatprep.subr.mxu0 0.0
    %6536 = vmatpush1.msra.mxu0 %v6478
    %6537 = vmatprep.subr.mxu0 0.0
    %6538 = vmatpush2.msra.mxu0 0.0
    %6539 = vmatprep.subr.mxu0 0.0
    %6540 = vmatpush2.msra.mxu0 0.0
    %6541 = vmatprep.subr.mxu0 0.0
    %6542 = vmatpush2.msra.mxu0 0.0
    %6543 = vmatprep.subr.mxu0 0.0
    %6544 = vmatpush2.msra.mxu0 0.0
    %6545 = vmatprep.subr.mxu0 0.0
    %6546 = vmatpush2.msra.mxu0 0.0
    %6547 = vmatprep.subr.mxu0 0.0
    %6548 = vmatpush2.msra.mxu0 0.0
    %6549 = vmatprep.subr.mxu0 0.0
    %6550 = vmatpush2.msra.mxu0 0.0
    %6551 = vmatprep.subr.mxu0 0.0
    %6552 = vmatpush2.msra.mxu0 0.0
    %6553 = vmatprep.subr.mxu0 0.0
    %6554 = vmatpush2.msra.mxu0 0.0
    %6555 = vmatprep.subr.mxu0 0.0
    %6556 = vmatpush2.msra.mxu0 0.0
    %6557 = vmatprep.subr.mxu0 0.0
    %6558 = vmatpush2.msra.mxu0 0.0
    %6559 = vmatprep.subr.mxu0 0.0
    %6560 = vmatpush2.msra.mxu0 0.0
    %6561 = vmatprep.subr.mxu0 0.0
    %6562 = vmatpush2.msra.mxu0 0.0
    %6563 = vmatprep.subr.mxu0 0.0
    %6564 = vmatpush2.msra.mxu0 0.0
    %6565 = vmatprep.subr.mxu0 0.0
    %6566 = vmatpush2.msra.mxu0 0.0
    %6567 = vmatprep.subr.mxu0 0.0
    %6568 = vmatpush2.msra.mxu0 0.0
    %6569 = vmatprep.mubr.f32.mxu0 0.0
    %6570 = vmatmul.mubr.f32.gmra.mxu0 %v6491
    %v6571 = vpop.f32.mrf.mxu0
    %v6572 = vadd.f32 %v6488, %v6571
    %v6573 = vpop.f32.mrf.mxu0
    %6574 = vmatprep.mubr.f32.mxu0 0.0
    %6575 = vmatmul.mubr.f32.gmra.mxu0 %v6494
    %v6576 = vpop.f32.mrf.mxu0
    %v6577 = vadd.f32 %v6488, %v6576
    %v6578 = vpop.f32.mrf.mxu0
    %6579 = vmatprep.mubr.f32.mxu0 0.0
    %6580 = vmatmul.mubr.f32.gmra.mxu0 %v6497
    %v6581 = vpop.f32.mrf.mxu0
    %v6582 = vadd.f32 %v6488, %v6581
    %v6583 = vpop.f32.mrf.mxu0
    %6584 = vmatprep.mubr.f32.mxu0 0.0
    %6585 = vmatmul.mubr.f32.gmra.mxu0 %v6500
    %v6586 = vpop.f32.mrf.mxu0
    %v6587 = vadd.f32 %v6488, %v6586
    %v6588 = vpop.f32.mrf.mxu0
    %6589 = vmatprep.mubr.f32.mxu0 0.0
    %6590 = vmatmul.mubr.f32.gmra.mxu0 %v6503
    %v6591 = vpop.f32.mrf.mxu0
    %v6592 = vadd.f32 %v6488, %v6591
    %v6593 = vpop.f32.mrf.mxu0
    %6594 = vdwg.mxu0
    %s6595 = scalar_lea.vmem %s8, 192
    %v6596 = vld [vmem:[%s6595] sm:$0xff]
    %v6597 = vld [vmem:[%s6595 + $0x8] sm:$0xff]
    %v6598 = vld [vmem:[%s6595 + $0x10] sm:$0xff]
    %v6599 = vld [vmem:[%s6595 + $0x18] sm:$0xff]
    %s6600 = scalar_lea.vmem %s9, 6
    %v6601 = vld [vmem:[%s6600] sm:$0x1]
    %v6603 = vlaneseq
    %v6604 = vshrl.u32 %v6603, 7
    %v6605 = vsub.s32 0, %v6604
    %v6606 = vrot.slane %v6601, %v6605
    %6608 = vmatprep.subr.mxu0 0.0
    %6609 = vmatpush1.msra.mxu0 0.0
    %6610 = vmatprep.subr.mxu0 0.0
    %6611 = vmatpush1.msra.mxu0 0.0
    %6612 = vmatprep.subr.mxu0 0.0
    %6613 = vmatpush1.msra.mxu0 0.0
    %6614 = vmatprep.subr.mxu0 0.0
    %6615 = vmatpush1.msra.mxu0 0.0
    %6616 = vmatprep.subr.mxu0 0.0
    %6617 = vmatpush1.msra.mxu0 0.0
    %6618 = vmatprep.subr.mxu0 0.0
    %6619 = vmatpush1.msra.mxu0 0.0
    %6620 = vmatprep.subr.mxu0 0.0
    %6621 = vmatpush1.msra.mxu0 0.0
    %6622 = vmatprep.subr.mxu0 0.0
    %6623 = vmatpush1.msra.mxu0 0.0
    %6624 = vmatprep.subr.mxu0 0.0
    %6625 = vmatpush1.msra.mxu0 0.0
    %6626 = vmatprep.subr.mxu0 0.0
    %6627 = vmatpush1.msra.mxu0 0.0
    %6628 = vmatprep.subr.mxu0 0.0
    %6629 = vmatpush1.msra.mxu0 0.0
    %6630 = vmatprep.subr.mxu0 0.0
    %6631 = vmatpush1.msra.mxu0 0.0
    %6632 = vmatprep.subr.mxu0 0.0
    %6633 = vmatpush1.msra.mxu0 %v6599
    %6634 = vmatprep.subr.mxu0 0.0
    %6635 = vmatpush1.msra.mxu0 %v6598
    %6636 = vmatprep.subr.mxu0 0.0
    %6637 = vmatpush1.msra.mxu0 %v6597
    %6638 = vmatprep.subr.mxu0 0.0
    %6639 = vmatpush1.msra.mxu0 %v6596
    %6640 = vmatprep.subr.mxu0 0.0
    %6641 = vmatpush2.msra.mxu0 0.0
    %6642 = vmatprep.subr.mxu0 0.0
    %6643 = vmatpush2.msra.mxu0 0.0
    %6644 = vmatprep.subr.mxu0 0.0
    %6645 = vmatpush2.msra.mxu0 0.0
    %6646 = vmatprep.subr.mxu0 0.0
    %6647 = vmatpush2.msra.mxu0 0.0
    %6648 = vmatprep.subr.mxu0 0.0
    %6649 = vmatpush2.msra.mxu0 0.0
    %6650 = vmatprep.subr.mxu0 0.0
    %6651 = vmatpush2.msra.mxu0 0.0
    %6652 = vmatprep.subr.mxu0 0.0
    %6653 = vmatpush2.msra.mxu0 0.0
    %6654 = vmatprep.subr.mxu0 0.0
    %6655 = vmatpush2.msra.mxu0 0.0
    %6656 = vmatprep.subr.mxu0 0.0
    %6657 = vmatpush2.msra.mxu0 0.0
    %6658 = vmatprep.subr.mxu0 0.0
    %6659 = vmatpush2.msra.mxu0 0.0
    %6660 = vmatprep.subr.mxu0 0.0
    %6661 = vmatpush2.msra.mxu0 0.0
    %6662 = vmatprep.subr.mxu0 0.0
    %6663 = vmatpush2.msra.mxu0 0.0
    %6664 = vmatprep.subr.mxu0 0.0
    %6665 = vmatpush2.msra.mxu0 0.0
    %6666 = vmatprep.subr.mxu0 0.0
    %6667 = vmatpush2.msra.mxu0 0.0
    %6668 = vmatprep.subr.mxu0 0.0
    %6669 = vmatpush2.msra.mxu0 0.0
    %6670 = vmatprep.subr.mxu0 0.0
    %6671 = vmatpush2.msra.mxu0 0.0
    %6672 = vmatprep.mubr.f32.mxu0 0.0
    %6673 = vmatmul.mubr.f32.gmra.mxu0 %v6491
    %v6674 = vpop.f32.mrf.mxu0
    %v6675 = vadd.f32 %v6606, %v6674
    %v6676 = vpop.f32.mrf.mxu0
    %6677 = vmatprep.mubr.f32.mxu0 0.0
    %6678 = vmatmul.mubr.f32.gmra.mxu0 %v6494
    %v6679 = vpop.f32.mrf.mxu0
    %v6680 = vadd.f32 %v6606, %v6679
    %v6681 = vpop.f32.mrf.mxu0
    %6682 = vmatprep.mubr.f32.mxu0 0.0
    %6683 = vmatmul.mubr.f32.gmra.mxu0 %v6497
    %v6684 = vpop.f32.mrf.mxu0
    %v6685 = vadd.f32 %v6606, %v6684
    %v6686 = vpop.f32.mrf.mxu0
    %6687 = vmatprep.mubr.f32.mxu0 0.0
    %6688 = vmatmul.mubr.f32.gmra.mxu0 %v6500
    %v6689 = vpop.f32.mrf.mxu0
    %v6690 = vadd.f32 %v6606, %v6689
    %v6691 = vpop.f32.mrf.mxu0
    %6692 = vmatprep.mubr.f32.mxu0 0.0
    %6693 = vmatmul.mubr.f32.gmra.mxu0 %v6503
    %v6694 = vpop.f32.mrf.mxu0
    %v6695 = vadd.f32 %v6606, %v6694
    %v6696 = vpop.f32.mrf.mxu0
    %6697 = vdwg.mxu0
    %s6698 = scalar_lea.vmem %s10, 192
    %v6699 = vld [vmem:[%s6698] sm:$0xff]
    %v6700 = vld [vmem:[%s6698 + $0x8] sm:$0xff]
    %v6701 = vld [vmem:[%s6698 + $0x10] sm:$0xff]
    %v6702 = vld [vmem:[%s6698 + $0x18] sm:$0xff]
    %s6703 = scalar_lea.vmem %s11, 6
    %v6704 = vld [vmem:[%s6703] sm:$0x1]
    %v6706 = vlaneseq
    %v6707 = vshrl.u32 %v6706, 7
    %v6708 = vsub.s32 0, %v6707
    %v6709 = vrot.slane %v6704, %v6708
    %6711 = vmatprep.subr.mxu0 0.0
    %6712 = vmatpush1.msra.mxu0 0.0
    %6713 = vmatprep.subr.mxu0 0.0
    %6714 = vmatpush1.msra.mxu0 0.0
    %6715 = vmatprep.subr.mxu0 0.0
    %6716 = vmatpush1.msra.mxu0 0.0
    %6717 = vmatprep.subr.mxu0 0.0
    %6718 = vmatpush1.msra.mxu0 0.0
    %6719 = vmatprep.subr.mxu0 0.0
    %6720 = vmatpush1.msra.mxu0 0.0
    %6721 = vmatprep.subr.mxu0 0.0
    %6722 = vmatpush1.msra.mxu0 0.0
    %6723 = vmatprep.subr.mxu0 0.0
    %6724 = vmatpush1.msra.mxu0 0.0
    %6725 = vmatprep.subr.mxu0 0.0
    %6726 = vmatpush1.msra.mxu0 0.0
    %6727 = vmatprep.subr.mxu0 0.0
    %6728 = vmatpush1.msra.mxu0 0.0
    %6729 = vmatprep.subr.mxu0 0.0
    %6730 = vmatpush1.msra.mxu0 0.0
    %6731 = vmatprep.subr.mxu0 0.0
    %6732 = vmatpush1.msra.mxu0 0.0
    %6733 = vmatprep.subr.mxu0 0.0
    %6734 = vmatpush1.msra.mxu0 0.0
    %6735 = vmatprep.subr.mxu0 0.0
    %6736 = vmatpush1.msra.mxu0 %v6702
    %6737 = vmatprep.subr.mxu0 0.0
    %6738 = vmatpush1.msra.mxu0 %v6701
    %6739 = vmatprep.subr.mxu0 0.0
    %6740 = vmatpush1.msra.mxu0 %v6700
    %6741 = vmatprep.subr.mxu0 0.0
    %6742 = vmatpush1.msra.mxu0 %v6699
    %6743 = vmatprep.subr.mxu0 0.0
    %6744 = vmatpush2.msra.mxu0 0.0
    %6745 = vmatprep.subr.mxu0 0.0
    %6746 = vmatpush2.msra.mxu0 0.0
    %6747 = vmatprep.subr.mxu0 0.0
    %6748 = vmatpush2.msra.mxu0 0.0
    %6749 = vmatprep.subr.mxu0 0.0
    %6750 = vmatpush2.msra.mxu0 0.0
    %6751 = vmatprep.subr.mxu0 0.0
    %6752 = vmatpush2.msra.mxu0 0.0
    %6753 = vmatprep.subr.mxu0 0.0
    %6754 = vmatpush2.msra.mxu0 0.0
    %6755 = vmatprep.subr.mxu0 0.0
    %6756 = vmatpush2.msra.mxu0 0.0
    %6757 = vmatprep.subr.mxu0 0.0
    %6758 = vmatpush2.msra.mxu0 0.0
    %6759 = vmatprep.subr.mxu0 0.0
    %6760 = vmatpush2.msra.mxu0 0.0
    %6761 = vmatprep.subr.mxu0 0.0
    %6762 = vmatpush2.msra.mxu0 0.0
    %6763 = vmatprep.subr.mxu0 0.0
    %6764 = vmatpush2.msra.mxu0 0.0
    %6765 = vmatprep.subr.mxu0 0.0
    %6766 = vmatpush2.msra.mxu0 0.0
    %6767 = vmatprep.subr.mxu0 0.0
    %6768 = vmatpush2.msra.mxu0 0.0
    %6769 = vmatprep.subr.mxu0 0.0
    %6770 = vmatpush2.msra.mxu0 0.0
    %6771 = vmatprep.subr.mxu0 0.0
    %6772 = vmatpush2.msra.mxu0 0.0
    %6773 = vmatprep.subr.mxu0 0.0
    %6774 = vmatpush2.msra.mxu0 0.0
    %6775 = vmatprep.mubr.f32.mxu0 0.0
    %6776 = vmatmul.mubr.f32.gmra.mxu0 %v6491
    %v6777 = vpop.f32.mrf.mxu0
    %v6778 = vadd.f32 %v6709, %v6777
    %v6779 = vpop.f32.mrf.mxu0
    %6780 = vmatprep.mubr.f32.mxu0 0.0
    %6781 = vmatmul.mubr.f32.gmra.mxu0 %v6494
    %v6782 = vpop.f32.mrf.mxu0
    %v6783 = vadd.f32 %v6709, %v6782
    %v6784 = vpop.f32.mrf.mxu0
    %6785 = vmatprep.mubr.f32.mxu0 0.0
    %6786 = vmatmul.mubr.f32.gmra.mxu0 %v6497
    %v6787 = vpop.f32.mrf.mxu0
    %v6788 = vadd.f32 %v6709, %v6787
    %v6789 = vpop.f32.mrf.mxu0
    %6790 = vmatprep.mubr.f32.mxu0 0.0
    %6791 = vmatmul.mubr.f32.gmra.mxu0 %v6500
    %v6792 = vpop.f32.mrf.mxu0
    %v6793 = vadd.f32 %v6709, %v6792
    %v6794 = vpop.f32.mrf.mxu0
    %6795 = vmatprep.mubr.f32.mxu0 0.0
    %6796 = vmatmul.mubr.f32.gmra.mxu0 %v6503
    %v6797 = vpop.f32.mrf.mxu0
    %v6798 = vadd.f32 %v6709, %v6797
    %v6799 = vpop.f32.mrf.mxu0
    %6800 = vdwg.mxu0
    %v6802 = vsel %vm621, %v6572, 0
    %v6805 = vsel %vm621, %v6577, 0
    %v6808 = vsel %vm621, %v6582, 0
    %v6811 = vsel %vm621, %v6587, 0
    %v6814 = vsel %vm621, %v6592, 0
    %v6817 = vsel %vm621, %v6675, 0
    %v6820 = vsel %vm621, %v6680, 0
    %v6823 = vsel %vm621, %v6685, 0
    %v6826 = vsel %vm621, %v6690, 0
    %v6829 = vsel %vm621, %v6695, 0
    %6831 = vmatprep.subr.mxu0 0.0
    %6832 = vmatpush1.xpose.msra.mxu0 0.0
    %6833 = vmatprep.subr.mxu0 0.0
    %6834 = vmatpush1.xpose.msra.mxu0 0.0
    %6835 = vmatprep.subr.mxu0 0.0
    %6836 = vmatpush1.xpose.msra.mxu0 0.0
    %6837 = vmatprep.subr.mxu0 0.0
    %6838 = vmatpush1.xpose.msra.mxu0 0.0
    %6839 = vmatprep.subr.mxu0 0.0
    %6840 = vmatpush1.xpose.msra.mxu0 0.0
    %6841 = vmatprep.subr.mxu0 0.0
    %6842 = vmatpush1.xpose.msra.mxu0 0.0
    %6843 = vmatprep.subr.mxu0 0.0
    %6844 = vmatpush1.xpose.msra.mxu0 0.0
    %6845 = vmatprep.subr.mxu0 0.0
    %6846 = vmatpush1.xpose.msra.mxu0 0.0
    %6847 = vmatprep.subr.mxu0 0.0
    %6848 = vmatpush1.xpose.msra.mxu0 0.0
    %6849 = vmatprep.subr.mxu0 0.0
    %6850 = vmatpush1.xpose.msra.mxu0 0.0
    %6851 = vmatprep.subr.mxu0 0.0
    %6852 = vmatpush1.xpose.msra.mxu0 0.0
    %6853 = vmatprep.subr.mxu0 0.0
    %6854 = vmatpush1.xpose.msra.mxu0 %v6829
    %6855 = vmatprep.subr.mxu0 0.0
    %6856 = vmatpush1.xpose.msra.mxu0 %v6826
    %6857 = vmatprep.subr.mxu0 0.0
    %6858 = vmatpush1.xpose.msra.mxu0 %v6823
    %6859 = vmatprep.subr.mxu0 0.0
    %6860 = vmatpush1.xpose.msra.mxu0 %v6820
    %6861 = vmatprep.subr.mxu0 0.0
    %6862 = vmatpush1.xpose.msra.mxu0 %v6817
    %6863 = vmatprep.subr.mxu0 0.0
    %6864 = vmatpush2.xpose.msra.mxu0 0.0
    %6865 = vmatprep.subr.mxu0 0.0
    %6866 = vmatpush2.xpose.msra.mxu0 0.0
    %6867 = vmatprep.subr.mxu0 0.0
    %6868 = vmatpush2.xpose.msra.mxu0 0.0
    %6869 = vmatprep.subr.mxu0 0.0
    %6870 = vmatpush2.xpose.msra.mxu0 0.0
    %6871 = vmatprep.subr.mxu0 0.0
    %6872 = vmatpush2.xpose.msra.mxu0 0.0
    %6873 = vmatprep.subr.mxu0 0.0
    %6874 = vmatpush2.xpose.msra.mxu0 0.0
    %6875 = vmatprep.subr.mxu0 0.0
    %6876 = vmatpush2.xpose.msra.mxu0 0.0
    %6877 = vmatprep.subr.mxu0 0.0
    %6878 = vmatpush2.xpose.msra.mxu0 0.0
    %6879 = vmatprep.subr.mxu0 0.0
    %6880 = vmatpush2.xpose.msra.mxu0 0.0
    %6881 = vmatprep.subr.mxu0 0.0
    %6882 = vmatpush2.xpose.msra.mxu0 0.0
    %6883 = vmatprep.subr.mxu0 0.0
    %6884 = vmatpush2.xpose.msra.mxu0 0.0
    %6885 = vmatprep.subr.mxu0 0.0
    %6886 = vmatpush2.xpose.msra.mxu0 0.0
    %6887 = vmatprep.subr.mxu0 0.0
    %6888 = vmatpush2.xpose.msra.mxu0 0.0
    %6889 = vmatprep.subr.mxu0 0.0
    %6890 = vmatpush2.xpose.msra.mxu0 0.0
    %6891 = vmatprep.subr.mxu0 0.0
    %6892 = vmatpush2.xpose.msra.mxu0 0.0
    %6893 = vmatprep.subr.mxu0 0.0
    %6894 = vmatpush2.xpose.msra.mxu0 0.0
    %6895 = vmatprep.mubr.f32.mxu0 0.0
    %6896 = vmatmul.mubr.f32.gmra.mxu0 %v6802
    %v6897 = vpop.f32.mrf.mxu0
    %v6898 = vadd.f32 0.0, %v6897
    %v6899 = vpop.f32.mrf.mxu0
    %6900 = vmatprep.mubr.f32.mxu0 0.0
    %6901 = vmatmul.mubr.f32.gmra.mxu0 %v6805
    %v6902 = vpop.f32.mrf.mxu0
    %v6903 = vadd.f32 0.0, %v6902
    %v6904 = vpop.f32.mrf.mxu0
    %6905 = vmatprep.mubr.f32.mxu0 0.0
    %6906 = vmatmul.mubr.f32.gmra.mxu0 %v6808
    %v6907 = vpop.f32.mrf.mxu0
    %v6908 = vadd.f32 0.0, %v6907
    %v6909 = vpop.f32.mrf.mxu0
    %6910 = vmatprep.mubr.f32.mxu0 0.0
    %6911 = vmatmul.mubr.f32.gmra.mxu0 %v6811
    %v6912 = vpop.f32.mrf.mxu0
    %v6913 = vadd.f32 0.0, %v6912
    %v6914 = vpop.f32.mrf.mxu0
    %6915 = vmatprep.mubr.f32.mxu0 0.0
    %6916 = vmatmul.mubr.f32.gmra.mxu0 %v6814
    %v6917 = vpop.f32.mrf.mxu0
    %v6918 = vadd.f32 0.0, %v6917
    %v6919 = vpop.f32.mrf.mxu0
    %6920 = vdwg.mxu0
    %v6921 = vmul.f32 %v6898, 0.25
    %v6922 = vmul.f32 %v6903, 0.25
    %v6923 = vmul.f32 %v6908, 0.25
    %v6924 = vmul.f32 %v6913, 0.25
    %v6925 = vmul.f32 %v6918, 0.25
    %v6926 = vadd.f32 %v6921, %v205
    %v6927 = vadd.f32 %v6922, %v206
    %v6928 = vadd.f32 %v6923, %v207
    %v6929 = vadd.f32 %v6924, %v208
    %v6930 = vadd.f32 %v6925, %v209
    %v6931 = vsel %vm752, %v6926, -inf
    %6932 = vmax.xlane.f32.xlu0 %v6931
    %v6933 = vpop.xlane.xlu0 %6932
    %v6934 = vsel %vm752, %v6927, -inf
    %6935 = vmax.xlane.f32.xlu0 %v6934
    %v6936 = vpop.xlane.xlu0 %6935
    %v6937 = vsel %vm752, %v6928, -inf
    %6938 = vmax.xlane.f32.xlu0 %v6937
    %v6939 = vpop.xlane.xlu0 %6938
    %v6940 = vsel %vm752, %v6929, -inf
    %6941 = vmax.xlane.f32.xlu0 %v6940
    %v6942 = vpop.xlane.xlu0 %6941
    %v6943 = vsel %vm765, %v6930, -inf
    %6944 = vmax.xlane.f32.xlu0 %v6943
    %v6945 = vpop.xlane.xlu0 %6944
    %v6946 = vsub.f32 %v6926, %v6933
    %v6947 = vsub.f32 %v6927, %v6936
    %v6948 = vsub.f32 %v6928, %v6939
    %v6949 = vsub.f32 %v6929, %v6942
    %v6950 = vsub.f32 %v6930, %v6945
    %v6951 = vmul.f32 %v6946, 1.442695
    %v6952 = vpow.pop %v6951
    %v6953 = vmul.f32 %v6947, 1.442695
    %v6954 = vpow.pop %v6953
    %v6955 = vmul.f32 %v6948, 1.442695
    %v6956 = vpow.pop %v6955
    %v6957 = vmul.f32 %v6949, 1.442695
    %v6958 = vpow.pop %v6957
    %v6959 = vmul.f32 %v6950, 1.442695
    %v6960 = vpow.pop %v6959
    %v6961 = vsel %vm752, %v6952, 0.0
    %6962 = vadd.xlane.f32.xlu0 %v6961
    %v6963 = vpop.xlane.xlu0 %6962
    %v6964 = vsel %vm752, %v6954, 0.0
    %6965 = vadd.xlane.f32.xlu0 %v6964
    %v6966 = vpop.xlane.xlu0 %6965
    %v6967 = vsel %vm752, %v6956, 0.0
    %6968 = vadd.xlane.f32.xlu0 %v6967
    %v6969 = vpop.xlane.xlu0 %6968
    %v6970 = vsel %vm752, %v6958, 0.0
    %6971 = vadd.xlane.f32.xlu0 %v6970
    %v6972 = vpop.xlane.xlu0 %6971
    %v6973 = vsel %vm765, %v6960, 0.0
    %6974 = vadd.xlane.f32.xlu0 %v6973
    %v6975 = vpop.xlane.xlu0 %6974
    %v6976 = vrcp.pop %v6963
    %v6977 = vmul.f32 %v6952, %v6976
    %v6978 = vrcp.pop %v6966
    %v6979 = vmul.f32 %v6954, %v6978
    %v6980 = vrcp.pop %v6969
    %v6981 = vmul.f32 %v6956, %v6980
    %v6982 = vrcp.pop %v6972
    %v6983 = vmul.f32 %v6958, %v6982
    %v6984 = vrcp.pop %v6975
    %v6985 = vmul.f32 %v6960, %v6984
    %v6987 = vsel %vm752, %v6977, 0
    %v6990 = vsel %vm752, %v6979, 0
    %v6993 = vsel %vm752, %v6981, 0
    %v6996 = vsel %vm752, %v6983, 0
    %v6999 = vsel %vm752, %v6985, 0
    %v7002 = vsel %vm824, %v6798, 0
    %7004 = vmatprep.subr.mxu0 0.0
    %7005 = vmatpush1.msra.mxu0 0.0
    %7006 = vmatprep.subr.mxu0 0.0
    %7007 = vmatpush1.msra.mxu0 0.0
    %7008 = vmatprep.subr.mxu0 0.0
    %7009 = vmatpush1.msra.mxu0 0.0
    %7010 = vmatprep.subr.mxu0 0.0
    %7011 = vmatpush1.msra.mxu0 0.0
    %7012 = vmatprep.subr.mxu0 0.0
    %7013 = vmatpush1.msra.mxu0 0.0
    %7014 = vmatprep.subr.mxu0 0.0
    %7015 = vmatpush1.msra.mxu0 0.0
    %7016 = vmatprep.subr.mxu0 0.0
    %7017 = vmatpush1.msra.mxu0 0.0
    %7018 = vmatprep.subr.mxu0 0.0
    %7019 = vmatpush1.msra.mxu0 0.0
    %7020 = vmatprep.subr.mxu0 0.0
    %7021 = vmatpush1.msra.mxu0 0.0
    %7022 = vmatprep.subr.mxu0 0.0
    %7023 = vmatpush1.msra.mxu0 0.0
    %7024 = vmatprep.subr.mxu0 0.0
    %7025 = vmatpush1.msra.mxu0 0.0
    %7026 = vmatprep.subr.mxu0 0.0
    %7027 = vmatpush1.msra.mxu0 %v7002
    %7028 = vmatprep.subr.mxu0 0.0
    %7029 = vmatpush1.msra.mxu0 %v6793
    %7030 = vmatprep.subr.mxu0 0.0
    %7031 = vmatpush1.msra.mxu0 %v6788
    %7032 = vmatprep.subr.mxu0 0.0
    %7033 = vmatpush1.msra.mxu0 %v6783
    %7034 = vmatprep.subr.mxu0 0.0
    %7035 = vmatpush1.msra.mxu0 %v6778
    %7036 = vmatprep.subr.mxu0 0.0
    %7037 = vmatpush2.msra.mxu0 0.0
    %7038 = vmatprep.subr.mxu0 0.0
    %7039 = vmatpush2.msra.mxu0 0.0
    %7040 = vmatprep.subr.mxu0 0.0
    %7041 = vmatpush2.msra.mxu0 0.0
    %7042 = vmatprep.subr.mxu0 0.0
    %7043 = vmatpush2.msra.mxu0 0.0
    %7044 = vmatprep.subr.mxu0 0.0
    %7045 = vmatpush2.msra.mxu0 0.0
    %7046 = vmatprep.subr.mxu0 0.0
    %7047 = vmatpush2.msra.mxu0 0.0
    %7048 = vmatprep.subr.mxu0 0.0
    %7049 = vmatpush2.msra.mxu0 0.0
    %7050 = vmatprep.subr.mxu0 0.0
    %7051 = vmatpush2.msra.mxu0 0.0
    %7052 = vmatprep.subr.mxu0 0.0
    %7053 = vmatpush2.msra.mxu0 0.0
    %7054 = vmatprep.subr.mxu0 0.0
    %7055 = vmatpush2.msra.mxu0 0.0
    %7056 = vmatprep.subr.mxu0 0.0
    %7057 = vmatpush2.msra.mxu0 0.0
    %7058 = vmatprep.subr.mxu0 0.0
    %7059 = vmatpush2.msra.mxu0 0.0
    %7060 = vmatprep.subr.mxu0 0.0
    %7061 = vmatpush2.msra.mxu0 0.0
    %7062 = vmatprep.subr.mxu0 0.0
    %7063 = vmatpush2.msra.mxu0 0.0
    %7064 = vmatprep.subr.mxu0 0.0
    %7065 = vmatpush2.msra.mxu0 0.0
    %7066 = vmatprep.subr.mxu0 0.0
    %7067 = vmatpush2.msra.mxu0 0.0
    %7068 = vmatprep.mubr.f32.mxu0 0.0
    %7069 = vmatmul.mubr.f32.gmra.mxu0 %v6987
    %v7070 = vpop.f32.mrf.mxu0
    %v7071 = vadd.f32 0.0, %v7070
    %v7072 = vpop.f32.mrf.mxu0
    %7073 = vmatprep.mubr.f32.mxu0 0.0
    %7074 = vmatmul.mubr.f32.gmra.mxu0 %v6990
    %v7075 = vpop.f32.mrf.mxu0
    %v7076 = vadd.f32 0.0, %v7075
    %v7077 = vpop.f32.mrf.mxu0
    %7078 = vmatprep.mubr.f32.mxu0 0.0
    %7079 = vmatmul.mubr.f32.gmra.mxu0 %v6993
    %v7080 = vpop.f32.mrf.mxu0
    %v7081 = vadd.f32 0.0, %v7080
    %v7082 = vpop.f32.mrf.mxu0
    %7083 = vmatprep.mubr.f32.mxu0 0.0
    %7084 = vmatmul.mubr.f32.gmra.mxu0 %v6996
    %v7085 = vpop.f32.mrf.mxu0
    %v7086 = vadd.f32 0.0, %v7085
    %v7087 = vpop.f32.mrf.mxu0
    %7088 = vmatprep.mubr.f32.mxu0 0.0
    %7089 = vmatmul.mubr.f32.gmra.mxu0 %v6999
    %v7090 = vpop.f32.mrf.mxu0
    %v7091 = vadd.f32 0.0, %v7090
    %v7092 = vpop.f32.mrf.mxu0
    %7093 = vdwg.mxu0
    %s7094 = scalar_lea.vmem %s12, 96
    %v7095 = vld [vmem:[%s7094] sm:$0xff]
    %v7096 = vld [vmem:[%s7094 + $0x8] sm:$0xff]
    %v7098 = vsel %vm621, %v7071, 0
    %v7101 = vsel %vm621, %v7076, 0
    %v7104 = vsel %vm621, %v7081, 0
    %v7107 = vsel %vm621, %v7086, 0
    %v7110 = vsel %vm621, %v7091, 0
    %7112 = vmatprep.subr.mxu0 0.0
    %7113 = vmatpush1.msra.mxu0 0.0
    %7114 = vmatprep.subr.mxu0 0.0
    %7115 = vmatpush1.msra.mxu0 0.0
    %7116 = vmatprep.subr.mxu0 0.0
    %7117 = vmatpush1.msra.mxu0 0.0
    %7118 = vmatprep.subr.mxu0 0.0
    %7119 = vmatpush1.msra.mxu0 0.0
    %7120 = vmatprep.subr.mxu0 0.0
    %7121 = vmatpush1.msra.mxu0 0.0
    %7122 = vmatprep.subr.mxu0 0.0
    %7123 = vmatpush1.msra.mxu0 0.0
    %7124 = vmatprep.subr.mxu0 0.0
    %7125 = vmatpush1.msra.mxu0 0.0
    %7126 = vmatprep.subr.mxu0 0.0
    %7127 = vmatpush1.msra.mxu0 0.0
    %7128 = vmatprep.subr.mxu0 0.0
    %7129 = vmatpush1.msra.mxu0 0.0
    %7130 = vmatprep.subr.mxu0 0.0
    %7131 = vmatpush1.msra.mxu0 0.0
    %7132 = vmatprep.subr.mxu0 0.0
    %7133 = vmatpush1.msra.mxu0 0.0
    %7134 = vmatprep.subr.mxu0 0.0
    %7135 = vmatpush1.msra.mxu0 0.0
    %7136 = vmatprep.subr.mxu0 0.0
    %7137 = vmatpush1.msra.mxu0 0.0
    %7138 = vmatprep.subr.mxu0 0.0
    %7139 = vmatpush1.msra.mxu0 0.0
    %7140 = vmatprep.subr.mxu0 0.0
    %7141 = vmatpush1.msra.mxu0 %v7096
    %7142 = vmatprep.subr.mxu0 0.0
    %7143 = vmatpush1.msra.mxu0 %v7095
    %7144 = vmatprep.subr.mxu0 0.0
    %7145 = vmatpush2.msra.mxu0 0.0
    %7146 = vmatprep.subr.mxu0 0.0
    %7147 = vmatpush2.msra.mxu0 0.0
    %7148 = vmatprep.subr.mxu0 0.0
    %7149 = vmatpush2.msra.mxu0 0.0
    %7150 = vmatprep.subr.mxu0 0.0
    %7151 = vmatpush2.msra.mxu0 0.0
    %7152 = vmatprep.subr.mxu0 0.0
    %7153 = vmatpush2.msra.mxu0 0.0
    %7154 = vmatprep.subr.mxu0 0.0
    %7155 = vmatpush2.msra.mxu0 0.0
    %7156 = vmatprep.subr.mxu0 0.0
    %7157 = vmatpush2.msra.mxu0 0.0
    %7158 = vmatprep.subr.mxu0 0.0
    %7159 = vmatpush2.msra.mxu0 0.0
    %7160 = vmatprep.subr.mxu0 0.0
    %7161 = vmatpush2.msra.mxu0 0.0
    %7162 = vmatprep.subr.mxu0 0.0
    %7163 = vmatpush2.msra.mxu0 0.0
    %7164 = vmatprep.subr.mxu0 0.0
    %7165 = vmatpush2.msra.mxu0 0.0
    %7166 = vmatprep.subr.mxu0 0.0
    %7167 = vmatpush2.msra.mxu0 0.0
    %7168 = vmatprep.subr.mxu0 0.0
    %7169 = vmatpush2.msra.mxu0 0.0
    %7170 = vmatprep.subr.mxu0 0.0
    %7171 = vmatpush2.msra.mxu0 0.0
    %7172 = vmatprep.subr.mxu0 0.0
    %7173 = vmatpush2.msra.mxu0 0.0
    %7174 = vmatprep.subr.mxu0 0.0
    %7175 = vmatpush2.msra.mxu0 0.0
    %7176 = vmatprep.mubr.f32.mxu0 0.0
    %7177 = vmatmul.mubr.f32.gmra.mxu0 %v7098
    %v7178 = vpop.f32.mrf.mxu0
    %v7179 = vadd.f32 0.0, %v7178
    %v7180 = vpop.f32.mrf.mxu0
    %7181 = vmatprep.mubr.f32.mxu0 0.0
    %7182 = vmatmul.mubr.f32.gmra.mxu0 %v7101
    %v7183 = vpop.f32.mrf.mxu0
    %v7184 = vadd.f32 0.0, %v7183
    %v7185 = vpop.f32.mrf.mxu0
    %7186 = vmatprep.mubr.f32.mxu0 0.0
    %7187 = vmatmul.mubr.f32.gmra.mxu0 %v7104
    %v7188 = vpop.f32.mrf.mxu0
    %v7189 = vadd.f32 0.0, %v7188
    %v7190 = vpop.f32.mrf.mxu0
    %7191 = vmatprep.mubr.f32.mxu0 0.0
    %7192 = vmatmul.mubr.f32.gmra.mxu0 %v7107
    %v7193 = vpop.f32.mrf.mxu0
    %v7194 = vadd.f32 0.0, %v7193
    %v7195 = vpop.f32.mrf.mxu0
    %7196 = vmatprep.mubr.f32.mxu0 0.0
    %7197 = vmatmul.mubr.f32.gmra.mxu0 %v7110
    %v7198 = vpop.f32.mrf.mxu0
    %v7199 = vadd.f32 0.0, %v7198
    %v7200 = vpop.f32.mrf.mxu0
    %7201 = vdwg.mxu0
    %v7203 = vlaneseq
    %v7204 = vshrl.u32 %v7203, 7
    %v7205 = vsub.s32 0, %v7204
    %v7206 = vrot.slane %v6476, %v7205
    %v7208 = vadd.f32 %v7206, %v7179
    %v7209 = vadd.f32 %v7206, %v7184
    %v7210 = vadd.f32 %v7206, %v7189
    %v7211 = vadd.f32 %v7206, %v7194
    %v7212 = vadd.f32 %v7206, %v7199
    %s7213 = scalar_lea.vmem %s6, 224
    %v7214 = vld [vmem:[%s7213] sm:$0xff]
    %v7215 = vld [vmem:[%s7213 + $0x8] sm:$0xff]
    %v7216 = vld [vmem:[%s7213 + $0x10] sm:$0xff]
    %v7217 = vld [vmem:[%s7213 + $0x18] sm:$0xff]
    %s7218 = scalar_lea.vmem %s7, 7
    %v7219 = vld [vmem:[%s7218] sm:$0x1]
    %v7221 = vlaneseq
    %v7222 = vshrl.u32 %v7221, 7
    %v7223 = vsub.s32 0, %v7222
    %v7224 = vrot.slane %v7219, %v7223
    %7226 = vmatprep.subr.mxu0 0.0
    %7227 = vmatpush1.msra.mxu0 0.0
    %7228 = vmatprep.subr.mxu0 0.0
    %7229 = vmatpush1.msra.mxu0 0.0
    %7230 = vmatprep.subr.mxu0 0.0
    %7231 = vmatpush1.msra.mxu0 0.0
    %7232 = vmatprep.subr.mxu0 0.0
    %7233 = vmatpush1.msra.mxu0 0.0
    %7234 = vmatprep.subr.mxu0 0.0
    %7235 = vmatpush1.msra.mxu0 0.0
    %7236 = vmatprep.subr.mxu0 0.0
    %7237 = vmatpush1.msra.mxu0 0.0
    %7238 = vmatprep.subr.mxu0 0.0
    %7239 = vmatpush1.msra.mxu0 0.0
    %7240 = vmatprep.subr.mxu0 0.0
    %7241 = vmatpush1.msra.mxu0 0.0
    %7242 = vmatprep.subr.mxu0 0.0
    %7243 = vmatpush1.msra.mxu0 0.0
    %7244 = vmatprep.subr.mxu0 0.0
    %7245 = vmatpush1.msra.mxu0 0.0
    %7246 = vmatprep.subr.mxu0 0.0
    %7247 = vmatpush1.msra.mxu0 0.0
    %7248 = vmatprep.subr.mxu0 0.0
    %7249 = vmatpush1.msra.mxu0 0.0
    %7250 = vmatprep.subr.mxu0 0.0
    %7251 = vmatpush1.msra.mxu0 %v7217
    %7252 = vmatprep.subr.mxu0 0.0
    %7253 = vmatpush1.msra.mxu0 %v7216
    %7254 = vmatprep.subr.mxu0 0.0
    %7255 = vmatpush1.msra.mxu0 %v7215
    %7256 = vmatprep.subr.mxu0 0.0
    %7257 = vmatpush1.msra.mxu0 %v7214
    %7258 = vmatprep.subr.mxu0 0.0
    %7259 = vmatpush2.msra.mxu0 0.0
    %7260 = vmatprep.subr.mxu0 0.0
    %7261 = vmatpush2.msra.mxu0 0.0
    %7262 = vmatprep.subr.mxu0 0.0
    %7263 = vmatpush2.msra.mxu0 0.0
    %7264 = vmatprep.subr.mxu0 0.0
    %7265 = vmatpush2.msra.mxu0 0.0
    %7266 = vmatprep.subr.mxu0 0.0
    %7267 = vmatpush2.msra.mxu0 0.0
    %7268 = vmatprep.subr.mxu0 0.0
    %7269 = vmatpush2.msra.mxu0 0.0
    %7270 = vmatprep.subr.mxu0 0.0
    %7271 = vmatpush2.msra.mxu0 0.0
    %7272 = vmatprep.subr.mxu0 0.0
    %7273 = vmatpush2.msra.mxu0 0.0
    %7274 = vmatprep.subr.mxu0 0.0
    %7275 = vmatpush2.msra.mxu0 0.0
    %7276 = vmatprep.subr.mxu0 0.0
    %7277 = vmatpush2.msra.mxu0 0.0
    %7278 = vmatprep.subr.mxu0 0.0
    %7279 = vmatpush2.msra.mxu0 0.0
    %7280 = vmatprep.subr.mxu0 0.0
    %7281 = vmatpush2.msra.mxu0 0.0
    %7282 = vmatprep.subr.mxu0 0.0
    %7283 = vmatpush2.msra.mxu0 0.0
    %7284 = vmatprep.subr.mxu0 0.0
    %7285 = vmatpush2.msra.mxu0 0.0
    %7286 = vmatprep.subr.mxu0 0.0
    %7287 = vmatpush2.msra.mxu0 0.0
    %7288 = vmatprep.subr.mxu0 0.0
    %7289 = vmatpush2.msra.mxu0 0.0
    %7290 = vmatprep.mubr.f32.mxu0 0.0
    %7291 = vmatmul.mubr.f32.gmra.mxu0 %v6491
    %v7292 = vpop.f32.mrf.mxu0
    %v7293 = vadd.f32 %v7224, %v7292
    %v7294 = vpop.f32.mrf.mxu0
    %7295 = vmatprep.mubr.f32.mxu0 0.0
    %7296 = vmatmul.mubr.f32.gmra.mxu0 %v6494
    %v7297 = vpop.f32.mrf.mxu0
    %v7298 = vadd.f32 %v7224, %v7297
    %v7299 = vpop.f32.mrf.mxu0
    %7300 = vmatprep.mubr.f32.mxu0 0.0
    %7301 = vmatmul.mubr.f32.gmra.mxu0 %v6497
    %v7302 = vpop.f32.mrf.mxu0
    %v7303 = vadd.f32 %v7224, %v7302
    %v7304 = vpop.f32.mrf.mxu0
    %7305 = vmatprep.mubr.f32.mxu0 0.0
    %7306 = vmatmul.mubr.f32.gmra.mxu0 %v6500
    %v7307 = vpop.f32.mrf.mxu0
    %v7308 = vadd.f32 %v7224, %v7307
    %v7309 = vpop.f32.mrf.mxu0
    %7310 = vmatprep.mubr.f32.mxu0 0.0
    %7311 = vmatmul.mubr.f32.gmra.mxu0 %v6503
    %v7312 = vpop.f32.mrf.mxu0
    %v7313 = vadd.f32 %v7224, %v7312
    %v7314 = vpop.f32.mrf.mxu0
    %7315 = vdwg.mxu0
    %s7316 = scalar_lea.vmem %s8, 224
    %v7317 = vld [vmem:[%s7316] sm:$0xff]
    %v7318 = vld [vmem:[%s7316 + $0x8] sm:$0xff]
    %v7319 = vld [vmem:[%s7316 + $0x10] sm:$0xff]
    %v7320 = vld [vmem:[%s7316 + $0x18] sm:$0xff]
    %s7321 = scalar_lea.vmem %s9, 7
    %v7322 = vld [vmem:[%s7321] sm:$0x1]
    %v7324 = vlaneseq
    %v7325 = vshrl.u32 %v7324, 7
    %v7326 = vsub.s32 0, %v7325
    %v7327 = vrot.slane %v7322, %v7326
    %7329 = vmatprep.subr.mxu0 0.0
    %7330 = vmatpush1.msra.mxu0 0.0
    %7331 = vmatprep.subr.mxu0 0.0
    %7332 = vmatpush1.msra.mxu0 0.0
    %7333 = vmatprep.subr.mxu0 0.0
    %7334 = vmatpush1.msra.mxu0 0.0
    %7335 = vmatprep.subr.mxu0 0.0
    %7336 = vmatpush1.msra.mxu0 0.0
    %7337 = vmatprep.subr.mxu0 0.0
    %7338 = vmatpush1.msra.mxu0 0.0
    %7339 = vmatprep.subr.mxu0 0.0
    %7340 = vmatpush1.msra.mxu0 0.0
    %7341 = vmatprep.subr.mxu0 0.0
    %7342 = vmatpush1.msra.mxu0 0.0
    %7343 = vmatprep.subr.mxu0 0.0
    %7344 = vmatpush1.msra.mxu0 0.0
    %7345 = vmatprep.subr.mxu0 0.0
    %7346 = vmatpush1.msra.mxu0 0.0
    %7347 = vmatprep.subr.mxu0 0.0
    %7348 = vmatpush1.msra.mxu0 0.0
    %7349 = vmatprep.subr.mxu0 0.0
    %7350 = vmatpush1.msra.mxu0 0.0
    %7351 = vmatprep.subr.mxu0 0.0
    %7352 = vmatpush1.msra.mxu0 0.0
    %7353 = vmatprep.subr.mxu0 0.0
    %7354 = vmatpush1.msra.mxu0 %v7320
    %7355 = vmatprep.subr.mxu0 0.0
    %7356 = vmatpush1.msra.mxu0 %v7319
    %7357 = vmatprep.subr.mxu0 0.0
    %7358 = vmatpush1.msra.mxu0 %v7318
    %7359 = vmatprep.subr.mxu0 0.0
    %7360 = vmatpush1.msra.mxu0 %v7317
    %7361 = vmatprep.subr.mxu0 0.0
    %7362 = vmatpush2.msra.mxu0 0.0
    %7363 = vmatprep.subr.mxu0 0.0
    %7364 = vmatpush2.msra.mxu0 0.0
    %7365 = vmatprep.subr.mxu0 0.0
    %7366 = vmatpush2.msra.mxu0 0.0
    %7367 = vmatprep.subr.mxu0 0.0
    %7368 = vmatpush2.msra.mxu0 0.0
    %7369 = vmatprep.subr.mxu0 0.0
    %7370 = vmatpush2.msra.mxu0 0.0
    %7371 = vmatprep.subr.mxu0 0.0
    %7372 = vmatpush2.msra.mxu0 0.0
    %7373 = vmatprep.subr.mxu0 0.0
    %7374 = vmatpush2.msra.mxu0 0.0
    %7375 = vmatprep.subr.mxu0 0.0
    %7376 = vmatpush2.msra.mxu0 0.0
    %7377 = vmatprep.subr.mxu0 0.0
    %7378 = vmatpush2.msra.mxu0 0.0
    %7379 = vmatprep.subr.mxu0 0.0
    %7380 = vmatpush2.msra.mxu0 0.0
    %7381 = vmatprep.subr.mxu0 0.0
    %7382 = vmatpush2.msra.mxu0 0.0
    %7383 = vmatprep.subr.mxu0 0.0
    %7384 = vmatpush2.msra.mxu0 0.0
    %7385 = vmatprep.subr.mxu0 0.0
    %7386 = vmatpush2.msra.mxu0 0.0
    %7387 = vmatprep.subr.mxu0 0.0
    %7388 = vmatpush2.msra.mxu0 0.0
    %7389 = vmatprep.subr.mxu0 0.0
    %7390 = vmatpush2.msra.mxu0 0.0
    %7391 = vmatprep.subr.mxu0 0.0
    %7392 = vmatpush2.msra.mxu0 0.0
    %7393 = vmatprep.mubr.f32.mxu0 0.0
    %7394 = vmatmul.mubr.f32.gmra.mxu0 %v6491
    %v7395 = vpop.f32.mrf.mxu0
    %v7396 = vadd.f32 %v7327, %v7395
    %v7397 = vpop.f32.mrf.mxu0
    %7398 = vmatprep.mubr.f32.mxu0 0.0
    %7399 = vmatmul.mubr.f32.gmra.mxu0 %v6494
    %v7400 = vpop.f32.mrf.mxu0
    %v7401 = vadd.f32 %v7327, %v7400
    %v7402 = vpop.f32.mrf.mxu0
    %7403 = vmatprep.mubr.f32.mxu0 0.0
    %7404 = vmatmul.mubr.f32.gmra.mxu0 %v6497
    %v7405 = vpop.f32.mrf.mxu0
    %v7406 = vadd.f32 %v7327, %v7405
    %v7407 = vpop.f32.mrf.mxu0
    %7408 = vmatprep.mubr.f32.mxu0 0.0
    %7409 = vmatmul.mubr.f32.gmra.mxu0 %v6500
    %v7410 = vpop.f32.mrf.mxu0
    %v7411 = vadd.f32 %v7327, %v7410
    %v7412 = vpop.f32.mrf.mxu0
    %7413 = vmatprep.mubr.f32.mxu0 0.0
    %7414 = vmatmul.mubr.f32.gmra.mxu0 %v6503
    %v7415 = vpop.f32.mrf.mxu0
    %v7416 = vadd.f32 %v7327, %v7415
    %v7417 = vpop.f32.mrf.mxu0
    %7418 = vdwg.mxu0
    %s7419 = scalar_lea.vmem %s10, 224
    %v7420 = vld [vmem:[%s7419] sm:$0xff]
    %v7421 = vld [vmem:[%s7419 + $0x8] sm:$0xff]
    %v7422 = vld [vmem:[%s7419 + $0x10] sm:$0xff]
    %v7423 = vld [vmem:[%s7419 + $0x18] sm:$0xff]
    %s7424 = scalar_lea.vmem %s11, 7
    %v7425 = vld [vmem:[%s7424] sm:$0x1]
    %v7427 = vlaneseq
    %v7428 = vshrl.u32 %v7427, 7
    %v7429 = vsub.s32 0, %v7428
    %v7430 = vrot.slane %v7425, %v7429
    %7432 = vmatprep.subr.mxu0 0.0
    %7433 = vmatpush1.msra.mxu0 0.0
    %7434 = vmatprep.subr.mxu0 0.0
    %7435 = vmatpush1.msra.mxu0 0.0
    %7436 = vmatprep.subr.mxu0 0.0
    %7437 = vmatpush1.msra.mxu0 0.0
    %7438 = vmatprep.subr.mxu0 0.0
    %7439 = vmatpush1.msra.mxu0 0.0
    %7440 = vmatprep.subr.mxu0 0.0
    %7441 = vmatpush1.msra.mxu0 0.0
    %7442 = vmatprep.subr.mxu0 0.0
    %7443 = vmatpush1.msra.mxu0 0.0
    %7444 = vmatprep.subr.mxu0 0.0
    %7445 = vmatpush1.msra.mxu0 0.0
    %7446 = vmatprep.subr.mxu0 0.0
    %7447 = vmatpush1.msra.mxu0 0.0
    %7448 = vmatprep.subr.mxu0 0.0
    %7449 = vmatpush1.msra.mxu0 0.0
    %7450 = vmatprep.subr.mxu0 0.0
    %7451 = vmatpush1.msra.mxu0 0.0
    %7452 = vmatprep.subr.mxu0 0.0
    %7453 = vmatpush1.msra.mxu0 0.0
    %7454 = vmatprep.subr.mxu0 0.0
    %7455 = vmatpush1.msra.mxu0 0.0
    %7456 = vmatprep.subr.mxu0 0.0
    %7457 = vmatpush1.msra.mxu0 %v7423
    %7458 = vmatprep.subr.mxu0 0.0
    %7459 = vmatpush1.msra.mxu0 %v7422
    %7460 = vmatprep.subr.mxu0 0.0
    %7461 = vmatpush1.msra.mxu0 %v7421
    %7462 = vmatprep.subr.mxu0 0.0
    %7463 = vmatpush1.msra.mxu0 %v7420
    %7464 = vmatprep.subr.mxu0 0.0
    %7465 = vmatpush2.msra.mxu0 0.0
    %7466 = vmatprep.subr.mxu0 0.0
    %7467 = vmatpush2.msra.mxu0 0.0
    %7468 = vmatprep.subr.mxu0 0.0
    %7469 = vmatpush2.msra.mxu0 0.0
    %7470 = vmatprep.subr.mxu0 0.0
    %7471 = vmatpush2.msra.mxu0 0.0
    %7472 = vmatprep.subr.mxu0 0.0
    %7473 = vmatpush2.msra.mxu0 0.0
    %7474 = vmatprep.subr.mxu0 0.0
    %7475 = vmatpush2.msra.mxu0 0.0
    %7476 = vmatprep.subr.mxu0 0.0
    %7477 = vmatpush2.msra.mxu0 0.0
    %7478 = vmatprep.subr.mxu0 0.0
    %7479 = vmatpush2.msra.mxu0 0.0
    %7480 = vmatprep.subr.mxu0 0.0
    %7481 = vmatpush2.msra.mxu0 0.0
    %7482 = vmatprep.subr.mxu0 0.0
    %7483 = vmatpush2.msra.mxu0 0.0
    %7484 = vmatprep.subr.mxu0 0.0
    %7485 = vmatpush2.msra.mxu0 0.0
    %7486 = vmatprep.subr.mxu0 0.0
    %7487 = vmatpush2.msra.mxu0 0.0
    %7488 = vmatprep.subr.mxu0 0.0
    %7489 = vmatpush2.msra.mxu0 0.0
    %7490 = vmatprep.subr.mxu0 0.0
    %7491 = vmatpush2.msra.mxu0 0.0
    %7492 = vmatprep.subr.mxu0 0.0
    %7493 = vmatpush2.msra.mxu0 0.0
    %7494 = vmatprep.subr.mxu0 0.0
    %7495 = vmatpush2.msra.mxu0 0.0
    %7496 = vmatprep.mubr.f32.mxu0 0.0
    %7497 = vmatmul.mubr.f32.gmra.mxu0 %v6491
    %v7498 = vpop.f32.mrf.mxu0
    %v7499 = vadd.f32 %v7430, %v7498
    %v7500 = vpop.f32.mrf.mxu0
    %7501 = vmatprep.mubr.f32.mxu0 0.0
    %7502 = vmatmul.mubr.f32.gmra.mxu0 %v6494
    %v7503 = vpop.f32.mrf.mxu0
    %v7504 = vadd.f32 %v7430, %v7503
    %v7505 = vpop.f32.mrf.mxu0
    %7506 = vmatprep.mubr.f32.mxu0 0.0
    %7507 = vmatmul.mubr.f32.gmra.mxu0 %v6497
    %v7508 = vpop.f32.mrf.mxu0
    %v7509 = vadd.f32 %v7430, %v7508
    %v7510 = vpop.f32.mrf.mxu0
    %7511 = vmatprep.mubr.f32.mxu0 0.0
    %7512 = vmatmul.mubr.f32.gmra.mxu0 %v6500
    %v7513 = vpop.f32.mrf.mxu0
    %v7514 = vadd.f32 %v7430, %v7513
    %v7515 = vpop.f32.mrf.mxu0
    %7516 = vmatprep.mubr.f32.mxu0 0.0
    %7517 = vmatmul.mubr.f32.gmra.mxu0 %v6503
    %v7518 = vpop.f32.mrf.mxu0
    %v7519 = vadd.f32 %v7430, %v7518
    %v7520 = vpop.f32.mrf.mxu0
    %7521 = vdwg.mxu0
    %v7523 = vsel %vm621, %v7293, 0
    %v7526 = vsel %vm621, %v7298, 0
    %v7529 = vsel %vm621, %v7303, 0
    %v7532 = vsel %vm621, %v7308, 0
    %v7535 = vsel %vm621, %v7313, 0
    %v7538 = vsel %vm621, %v7396, 0
    %v7541 = vsel %vm621, %v7401, 0
    %v7544 = vsel %vm621, %v7406, 0
    %v7547 = vsel %vm621, %v7411, 0
    %v7550 = vsel %vm621, %v7416, 0
    %7552 = vmatprep.subr.mxu0 0.0
    %7553 = vmatpush1.xpose.msra.mxu0 0.0
    %7554 = vmatprep.subr.mxu0 0.0
    %7555 = vmatpush1.xpose.msra.mxu0 0.0
    %7556 = vmatprep.subr.mxu0 0.0
    %7557 = vmatpush1.xpose.msra.mxu0 0.0
    %7558 = vmatprep.subr.mxu0 0.0
    %7559 = vmatpush1.xpose.msra.mxu0 0.0
    %7560 = vmatprep.subr.mxu0 0.0
    %7561 = vmatpush1.xpose.msra.mxu0 0.0
    %7562 = vmatprep.subr.mxu0 0.0
    %7563 = vmatpush1.xpose.msra.mxu0 0.0
    %7564 = vmatprep.subr.mxu0 0.0
    %7565 = vmatpush1.xpose.msra.mxu0 0.0
    %7566 = vmatprep.subr.mxu0 0.0
    %7567 = vmatpush1.xpose.msra.mxu0 0.0
    %7568 = vmatprep.subr.mxu0 0.0
    %7569 = vmatpush1.xpose.msra.mxu0 0.0
    %7570 = vmatprep.subr.mxu0 0.0
    %7571 = vmatpush1.xpose.msra.mxu0 0.0
    %7572 = vmatprep.subr.mxu0 0.0
    %7573 = vmatpush1.xpose.msra.mxu0 0.0
    %7574 = vmatprep.subr.mxu0 0.0
    %7575 = vmatpush1.xpose.msra.mxu0 %v7550
    %7576 = vmatprep.subr.mxu0 0.0
    %7577 = vmatpush1.xpose.msra.mxu0 %v7547
    %7578 = vmatprep.subr.mxu0 0.0
    %7579 = vmatpush1.xpose.msra.mxu0 %v7544
    %7580 = vmatprep.subr.mxu0 0.0
    %7581 = vmatpush1.xpose.msra.mxu0 %v7541
    %7582 = vmatprep.subr.mxu0 0.0
    %7583 = vmatpush1.xpose.msra.mxu0 %v7538
    %7584 = vmatprep.subr.mxu0 0.0
    %7585 = vmatpush2.xpose.msra.mxu0 0.0
    %7586 = vmatprep.subr.mxu0 0.0
    %7587 = vmatpush2.xpose.msra.mxu0 0.0
    %7588 = vmatprep.subr.mxu0 0.0
    %7589 = vmatpush2.xpose.msra.mxu0 0.0
    %7590 = vmatprep.subr.mxu0 0.0
    %7591 = vmatpush2.xpose.msra.mxu0 0.0
    %7592 = vmatprep.subr.mxu0 0.0
    %7593 = vmatpush2.xpose.msra.mxu0 0.0
    %7594 = vmatprep.subr.mxu0 0.0
    %7595 = vmatpush2.xpose.msra.mxu0 0.0
    %7596 = vmatprep.subr.mxu0 0.0
    %7597 = vmatpush2.xpose.msra.mxu0 0.0
    %7598 = vmatprep.subr.mxu0 0.0
    %7599 = vmatpush2.xpose.msra.mxu0 0.0
    %7600 = vmatprep.subr.mxu0 0.0
    %7601 = vmatpush2.xpose.msra.mxu0 0.0
    %7602 = vmatprep.subr.mxu0 0.0
    %7603 = vmatpush2.xpose.msra.mxu0 0.0
    %7604 = vmatprep.subr.mxu0 0.0
    %7605 = vmatpush2.xpose.msra.mxu0 0.0
    %7606 = vmatprep.subr.mxu0 0.0
    %7607 = vmatpush2.xpose.msra.mxu0 0.0
    %7608 = vmatprep.subr.mxu0 0.0
    %7609 = vmatpush2.xpose.msra.mxu0 0.0
    %7610 = vmatprep.subr.mxu0 0.0
    %7611 = vmatpush2.xpose.msra.mxu0 0.0
    %7612 = vmatprep.subr.mxu0 0.0
    %7613 = vmatpush2.xpose.msra.mxu0 0.0
    %7614 = vmatprep.subr.mxu0 0.0
    %7615 = vmatpush2.xpose.msra.mxu0 0.0
    %7616 = vmatprep.mubr.f32.mxu0 0.0
    %7617 = vmatmul.mubr.f32.gmra.mxu0 %v7523
    %v7618 = vpop.f32.mrf.mxu0
    %v7619 = vadd.f32 0.0, %v7618
    %v7620 = vpop.f32.mrf.mxu0
    %7621 = vmatprep.mubr.f32.mxu0 0.0
    %7622 = vmatmul.mubr.f32.gmra.mxu0 %v7526
    %v7623 = vpop.f32.mrf.mxu0
    %v7624 = vadd.f32 0.0, %v7623
    %v7625 = vpop.f32.mrf.mxu0
    %7626 = vmatprep.mubr.f32.mxu0 0.0
    %7627 = vmatmul.mubr.f32.gmra.mxu0 %v7529
    %v7628 = vpop.f32.mrf.mxu0
    %v7629 = vadd.f32 0.0, %v7628
    %v7630 = vpop.f32.mrf.mxu0
    %7631 = vmatprep.mubr.f32.mxu0 0.0
    %7632 = vmatmul.mubr.f32.gmra.mxu0 %v7532
    %v7633 = vpop.f32.mrf.mxu0
    %v7634 = vadd.f32 0.0, %v7633
    %v7635 = vpop.f32.mrf.mxu0
    %7636 = vmatprep.mubr.f32.mxu0 0.0
    %7637 = vmatmul.mubr.f32.gmra.mxu0 %v7535
    %v7638 = vpop.f32.mrf.mxu0
    %v7639 = vadd.f32 0.0, %v7638
    %v7640 = vpop.f32.mrf.mxu0
    %7641 = vdwg.mxu0
    %v7642 = vmul.f32 %v7619, 0.25
    %v7643 = vmul.f32 %v7624, 0.25
    %v7644 = vmul.f32 %v7629, 0.25
    %v7645 = vmul.f32 %v7634, 0.25
    %v7646 = vmul.f32 %v7639, 0.25
    %v7647 = vadd.f32 %v7642, %v205
    %v7648 = vadd.f32 %v7643, %v206
    %v7649 = vadd.f32 %v7644, %v207
    %v7650 = vadd.f32 %v7645, %v208
    %v7651 = vadd.f32 %v7646, %v209
    %v7652 = vsel %vm752, %v7647, -inf
    %7653 = vmax.xlane.f32.xlu0 %v7652
    %v7654 = vpop.xlane.xlu0 %7653
    %v7655 = vsel %vm752, %v7648, -inf
    %7656 = vmax.xlane.f32.xlu0 %v7655
    %v7657 = vpop.xlane.xlu0 %7656
    %v7658 = vsel %vm752, %v7649, -inf
    %7659 = vmax.xlane.f32.xlu0 %v7658
    %v7660 = vpop.xlane.xlu0 %7659
    %v7661 = vsel %vm752, %v7650, -inf
    %7662 = vmax.xlane.f32.xlu0 %v7661
    %v7663 = vpop.xlane.xlu0 %7662
    %v7664 = vsel %vm765, %v7651, -inf
    %7665 = vmax.xlane.f32.xlu0 %v7664
    %v7666 = vpop.xlane.xlu0 %7665
    %v7667 = vsub.f32 %v7647, %v7654
    %v7668 = vsub.f32 %v7648, %v7657
    %v7669 = vsub.f32 %v7649, %v7660
    %v7670 = vsub.f32 %v7650, %v7663
    %v7671 = vsub.f32 %v7651, %v7666
    %v7672 = vmul.f32 %v7667, 1.442695
    %v7673 = vpow.pop %v7672
    %v7674 = vmul.f32 %v7668, 1.442695
    %v7675 = vpow.pop %v7674
    %v7676 = vmul.f32 %v7669, 1.442695
    %v7677 = vpow.pop %v7676
    %v7678 = vmul.f32 %v7670, 1.442695
    %v7679 = vpow.pop %v7678
    %v7680 = vmul.f32 %v7671, 1.442695
    %v7681 = vpow.pop %v7680
    %v7682 = vsel %vm752, %v7673, 0.0
    %7683 = vadd.xlane.f32.xlu0 %v7682
    %v7684 = vpop.xlane.xlu0 %7683
    %v7685 = vsel %vm752, %v7675, 0.0
    %7686 = vadd.xlane.f32.xlu0 %v7685
    %v7687 = vpop.xlane.xlu0 %7686
    %v7688 = vsel %vm752, %v7677, 0.0
    %7689 = vadd.xlane.f32.xlu0 %v7688
    %v7690 = vpop.xlane.xlu0 %7689
    %v7691 = vsel %vm752, %v7679, 0.0
    %7692 = vadd.xlane.f32.xlu0 %v7691
    %v7693 = vpop.xlane.xlu0 %7692
    %v7694 = vsel %vm765, %v7681, 0.0
    %7695 = vadd.xlane.f32.xlu0 %v7694
    %v7696 = vpop.xlane.xlu0 %7695
    %v7697 = vrcp.pop %v7684
    %v7698 = vmul.f32 %v7673, %v7697
    %v7699 = vrcp.pop %v7687
    %v7700 = vmul.f32 %v7675, %v7699
    %v7701 = vrcp.pop %v7690
    %v7702 = vmul.f32 %v7677, %v7701
    %v7703 = vrcp.pop %v7693
    %v7704 = vmul.f32 %v7679, %v7703
    %v7705 = vrcp.pop %v7696
    %v7706 = vmul.f32 %v7681, %v7705
    %v7708 = vsel %vm752, %v7698, 0
    %v7711 = vsel %vm752, %v7700, 0
    %v7714 = vsel %vm752, %v7702, 0
    %v7717 = vsel %vm752, %v7704, 0
    %v7720 = vsel %vm752, %v7706, 0
    %v7723 = vsel %vm824, %v7519, 0
    %7725 = vmatprep.subr.mxu0 0.0
    %7726 = vmatpush1.msra.mxu0 0.0
    %7727 = vmatprep.subr.mxu0 0.0
    %7728 = vmatpush1.msra.mxu0 0.0
    %7729 = vmatprep.subr.mxu0 0.0
    %7730 = vmatpush1.msra.mxu0 0.0
    %7731 = vmatprep.subr.mxu0 0.0
    %7732 = vmatpush1.msra.mxu0 0.0
    %7733 = vmatprep.subr.mxu0 0.0
    %7734 = vmatpush1.msra.mxu0 0.0
    %7735 = vmatprep.subr.mxu0 0.0
    %7736 = vmatpush1.msra.mxu0 0.0
    %7737 = vmatprep.subr.mxu0 0.0
    %7738 = vmatpush1.msra.mxu0 0.0
    %7739 = vmatprep.subr.mxu0 0.0
    %7740 = vmatpush1.msra.mxu0 0.0
    %7741 = vmatprep.subr.mxu0 0.0
    %7742 = vmatpush1.msra.mxu0 0.0
    %7743 = vmatprep.subr.mxu0 0.0
    %7744 = vmatpush1.msra.mxu0 0.0
    %7745 = vmatprep.subr.mxu0 0.0
    %7746 = vmatpush1.msra.mxu0 0.0
    %7747 = vmatprep.subr.mxu0 0.0
    %7748 = vmatpush1.msra.mxu0 %v7723
    %7749 = vmatprep.subr.mxu0 0.0
    %7750 = vmatpush1.msra.mxu0 %v7514
    %7751 = vmatprep.subr.mxu0 0.0
    %7752 = vmatpush1.msra.mxu0 %v7509
    %7753 = vmatprep.subr.mxu0 0.0
    %7754 = vmatpush1.msra.mxu0 %v7504
    %7755 = vmatprep.subr.mxu0 0.0
    %7756 = vmatpush1.msra.mxu0 %v7499
    %7757 = vmatprep.subr.mxu0 0.0
    %7758 = vmatpush2.msra.mxu0 0.0
    %7759 = vmatprep.subr.mxu0 0.0
    %7760 = vmatpush2.msra.mxu0 0.0
    %7761 = vmatprep.subr.mxu0 0.0
    %7762 = vmatpush2.msra.mxu0 0.0
    %7763 = vmatprep.subr.mxu0 0.0
    %7764 = vmatpush2.msra.mxu0 0.0
    %7765 = vmatprep.subr.mxu0 0.0
    %7766 = vmatpush2.msra.mxu0 0.0
    %7767 = vmatprep.subr.mxu0 0.0
    %7768 = vmatpush2.msra.mxu0 0.0
    %7769 = vmatprep.subr.mxu0 0.0
    %7770 = vmatpush2.msra.mxu0 0.0
    %7771 = vmatprep.subr.mxu0 0.0
    %7772 = vmatpush2.msra.mxu0 0.0
    %7773 = vmatprep.subr.mxu0 0.0
    %7774 = vmatpush2.msra.mxu0 0.0
    %7775 = vmatprep.subr.mxu0 0.0
    %7776 = vmatpush2.msra.mxu0 0.0
    %7777 = vmatprep.subr.mxu0 0.0
    %7778 = vmatpush2.msra.mxu0 0.0
    %7779 = vmatprep.subr.mxu0 0.0
    %7780 = vmatpush2.msra.mxu0 0.0
    %7781 = vmatprep.subr.mxu0 0.0
    %7782 = vmatpush2.msra.mxu0 0.0
    %7783 = vmatprep.subr.mxu0 0.0
    %7784 = vmatpush2.msra.mxu0 0.0
    %7785 = vmatprep.subr.mxu0 0.0
    %7786 = vmatpush2.msra.mxu0 0.0
    %7787 = vmatprep.subr.mxu0 0.0
    %7788 = vmatpush2.msra.mxu0 0.0
    %7789 = vmatprep.mubr.f32.mxu0 0.0
    %7790 = vmatmul.mubr.f32.gmra.mxu0 %v7708
    %v7791 = vpop.f32.mrf.mxu0
    %v7792 = vadd.f32 0.0, %v7791
    %v7793 = vpop.f32.mrf.mxu0
    %7794 = vmatprep.mubr.f32.mxu0 0.0
    %7795 = vmatmul.mubr.f32.gmra.mxu0 %v7711
    %v7796 = vpop.f32.mrf.mxu0
    %v7797 = vadd.f32 0.0, %v7796
    %v7798 = vpop.f32.mrf.mxu0
    %7799 = vmatprep.mubr.f32.mxu0 0.0
    %7800 = vmatmul.mubr.f32.gmra.mxu0 %v7714
    %v7801 = vpop.f32.mrf.mxu0
    %v7802 = vadd.f32 0.0, %v7801
    %v7803 = vpop.f32.mrf.mxu0
    %7804 = vmatprep.mubr.f32.mxu0 0.0
    %7805 = vmatmul.mubr.f32.gmra.mxu0 %v7717
    %v7806 = vpop.f32.mrf.mxu0
    %v7807 = vadd.f32 0.0, %v7806
    %v7808 = vpop.f32.mrf.mxu0
    %7809 = vmatprep.mubr.f32.mxu0 0.0
    %7810 = vmatmul.mubr.f32.gmra.mxu0 %v7720
    %v7811 = vpop.f32.mrf.mxu0
    %v7812 = vadd.f32 0.0, %v7811
    %v7813 = vpop.f32.mrf.mxu0
    %7814 = vdwg.mxu0
    %s7815 = scalar_lea.vmem %s12, 112
    %v7816 = vld [vmem:[%s7815] sm:$0xff]
    %v7817 = vld [vmem:[%s7815 + $0x8] sm:$0xff]
    %v7819 = vsel %vm621, %v7792, 0
    %v7822 = vsel %vm621, %v7797, 0
    %v7825 = vsel %vm621, %v7802, 0
    %v7828 = vsel %vm621, %v7807, 0
    %v7831 = vsel %vm621, %v7812, 0
    %7833 = vmatprep.subr.mxu0 0.0
    %7834 = vmatpush1.msra.mxu0 0.0
    %7835 = vmatprep.subr.mxu0 0.0
    %7836 = vmatpush1.msra.mxu0 0.0
    %7837 = vmatprep.subr.mxu0 0.0
    %7838 = vmatpush1.msra.mxu0 0.0
    %7839 = vmatprep.subr.mxu0 0.0
    %7840 = vmatpush1.msra.mxu0 0.0
    %7841 = vmatprep.subr.mxu0 0.0
    %7842 = vmatpush1.msra.mxu0 0.0
    %7843 = vmatprep.subr.mxu0 0.0
    %7844 = vmatpush1.msra.mxu0 0.0
    %7845 = vmatprep.subr.mxu0 0.0
    %7846 = vmatpush1.msra.mxu0 0.0
    %7847 = vmatprep.subr.mxu0 0.0
    %7848 = vmatpush1.msra.mxu0 0.0
    %7849 = vmatprep.subr.mxu0 0.0
    %7850 = vmatpush1.msra.mxu0 0.0
    %7851 = vmatprep.subr.mxu0 0.0
    %7852 = vmatpush1.msra.mxu0 0.0
    %7853 = vmatprep.subr.mxu0 0.0
    %7854 = vmatpush1.msra.mxu0 0.0
    %7855 = vmatprep.subr.mxu0 0.0
    %7856 = vmatpush1.msra.mxu0 0.0
    %7857 = vmatprep.subr.mxu0 0.0
    %7858 = vmatpush1.msra.mxu0 0.0
    %7859 = vmatprep.subr.mxu0 0.0
    %7860 = vmatpush1.msra.mxu0 0.0
    %7861 = vmatprep.subr.mxu0 0.0
    %7862 = vmatpush1.msra.mxu0 %v7817
    %7863 = vmatprep.subr.mxu0 0.0
    %7864 = vmatpush1.msra.mxu0 %v7816
    %7865 = vmatprep.subr.mxu0 0.0
    %7866 = vmatpush2.msra.mxu0 0.0
    %7867 = vmatprep.subr.mxu0 0.0
    %7868 = vmatpush2.msra.mxu0 0.0
    %7869 = vmatprep.subr.mxu0 0.0
    %7870 = vmatpush2.msra.mxu0 0.0
    %7871 = vmatprep.subr.mxu0 0.0
    %7872 = vmatpush2.msra.mxu0 0.0
    %7873 = vmatprep.subr.mxu0 0.0
    %7874 = vmatpush2.msra.mxu0 0.0
    %7875 = vmatprep.subr.mxu0 0.0
    %7876 = vmatpush2.msra.mxu0 0.0
    %7877 = vmatprep.subr.mxu0 0.0
    %7878 = vmatpush2.msra.mxu0 0.0
    %7879 = vmatprep.subr.mxu0 0.0
    %7880 = vmatpush2.msra.mxu0 0.0
    %7881 = vmatprep.subr.mxu0 0.0
    %7882 = vmatpush2.msra.mxu0 0.0
    %7883 = vmatprep.subr.mxu0 0.0
    %7884 = vmatpush2.msra.mxu0 0.0
    %7885 = vmatprep.subr.mxu0 0.0
    %7886 = vmatpush2.msra.mxu0 0.0
    %7887 = vmatprep.subr.mxu0 0.0
    %7888 = vmatpush2.msra.mxu0 0.0
    %7889 = vmatprep.subr.mxu0 0.0
    %7890 = vmatpush2.msra.mxu0 0.0
    %7891 = vmatprep.subr.mxu0 0.0
    %7892 = vmatpush2.msra.mxu0 0.0
    %7893 = vmatprep.subr.mxu0 0.0
    %7894 = vmatpush2.msra.mxu0 0.0
    %7895 = vmatprep.subr.mxu0 0.0
    %7896 = vmatpush2.msra.mxu0 0.0
    %7897 = vmatprep.mubr.f32.mxu0 0.0
    %7898 = vmatmul.mubr.f32.gmra.mxu0 %v7819
    %v7899 = vpop.f32.mrf.mxu0
    %v7900 = vadd.f32 0.0, %v7899
    %v7901 = vpop.f32.mrf.mxu0
    %7902 = vmatprep.mubr.f32.mxu0 0.0
    %7903 = vmatmul.mubr.f32.gmra.mxu0 %v7822
    %v7904 = vpop.f32.mrf.mxu0
    %v7905 = vadd.f32 0.0, %v7904
    %v7906 = vpop.f32.mrf.mxu0
    %7907 = vmatprep.mubr.f32.mxu0 0.0
    %7908 = vmatmul.mubr.f32.gmra.mxu0 %v7825
    %v7909 = vpop.f32.mrf.mxu0
    %v7910 = vadd.f32 0.0, %v7909
    %v7911 = vpop.f32.mrf.mxu0
    %7912 = vmatprep.mubr.f32.mxu0 0.0
    %7913 = vmatmul.mubr.f32.gmra.mxu0 %v7828
    %v7914 = vpop.f32.mrf.mxu0
    %v7915 = vadd.f32 0.0, %v7914
    %v7916 = vpop.f32.mrf.mxu0
    %7917 = vmatprep.mubr.f32.mxu0 0.0
    %7918 = vmatmul.mubr.f32.gmra.mxu0 %v7831
    %v7919 = vpop.f32.mrf.mxu0
    %v7920 = vadd.f32 0.0, %v7919
    %v7921 = vpop.f32.mrf.mxu0
    %7922 = vdwg.mxu0
    %v7923 = vadd.f32 %v7208, %v7900
    %v7924 = vadd.f32 %v7209, %v7905
    %v7925 = vadd.f32 %v7210, %v7910
    %v7926 = vadd.f32 %v7211, %v7915
    %v7927 = vadd.f32 %v7212, %v7920
    %s7928 = scalar_lea.vmem %s14, 3
    %v7929 = vld [vmem:[%s7928] sm:$0x1]
    %v7931 = vlaneseq
    %v7932 = vshrl.u32 %v7931, 7
    %v7933 = vsub.s32 0, %v7932
    %v7934 = vrot.slane %v7929, %v7933
    %v7936 = vmul.f32 %v7934, %v7923
    %v7937 = vmul.f32 %v7934, %v7924
    %v7938 = vmul.f32 %v7934, %v7925
    %v7939 = vmul.f32 %v7934, %v7926
    %v7940 = vmul.f32 %v7934, %v7927
    %v7941 = vadd.f32 %v6358, %v7936
    %v7942 = vadd.f32 %v6359, %v7937
    %v7943 = vadd.f32 %v6360, %v7938
    %v7944 = vadd.f32 %v6361, %v7939
    %v7945 = vadd.f32 %v6362, %v7940
    %s7946 = scalar_lea.vmem %s15, 3
    %v7947 = vld [vmem:[%s7946] sm:$0x1]
    %s7948 = scalar_lea.vmem %s16, 3
    %v7949 = vld [vmem:[%s7948] sm:$0x1]
    %v7950 = vsel %vm212, %v7941, 0.0
    %7951 = vadd.xlane.f32.xlu0 %v7950
    %v7952 = vpop.xlane.xlu0 %7951
    %v7953 = vsel %vm212, %v7942, 0.0
    %7954 = vadd.xlane.f32.xlu0 %v7953
    %v7955 = vpop.xlane.xlu0 %7954
    %v7956 = vsel %vm212, %v7943, 0.0
    %7957 = vadd.xlane.f32.xlu0 %v7956
    %v7958 = vpop.xlane.xlu0 %7957
    %v7959 = vsel %vm212, %v7944, 0.0
    %7960 = vadd.xlane.f32.xlu0 %v7959
    %v7961 = vpop.xlane.xlu0 %7960
    %v7962 = vsel %vm225, %v7945, 0.0
    %7963 = vadd.xlane.f32.xlu0 %v7962
    %v7964 = vpop.xlane.xlu0 %7963
    %v7965 = vmul.f32 %v7952, %v229
    %v7966 = vmul.f32 %v7955, %v229
    %v7967 = vmul.f32 %v7958, %v229
    %v7968 = vmul.f32 %v7961, %v229
    %v7969 = vmul.f32 %v7964, %v229
    %v7970 = vsub.f32 %v7941, %v7965
    %v7971 = vsub.f32 %v7942, %v7966
    %v7972 = vsub.f32 %v7943, %v7967
    %v7973 = vsub.f32 %v7944, %v7968
    %v7974 = vsub.f32 %v7945, %v7969
    %v7975 = vmul.f32 %v7970, %v7970
    %v7976 = vmul.f32 %v7971, %v7971
    %v7977 = vmul.f32 %v7972, %v7972
    %v7978 = vmul.f32 %v7973, %v7973
    %v7979 = vmul.f32 %v7974, %v7974
    %v7980 = vsel %vm212, %v7975, 0.0
    %7981 = vadd.xlane.f32.xlu0 %v7980
    %v7982 = vpop.xlane.xlu0 %7981
    %v7983 = vsel %vm212, %v7976, 0.0
    %7984 = vadd.xlane.f32.xlu0 %v7983
    %v7985 = vpop.xlane.xlu0 %7984
    %v7986 = vsel %vm212, %v7977, 0.0
    %7987 = vadd.xlane.f32.xlu0 %v7986
    %v7988 = vpop.xlane.xlu0 %7987
    %v7989 = vsel %vm212, %v7978, 0.0
    %7990 = vadd.xlane.f32.xlu0 %v7989
    %v7991 = vpop.xlane.xlu0 %7990
    %v7992 = vsel %vm225, %v7979, 0.0
    %7993 = vadd.xlane.f32.xlu0 %v7992
    %v7994 = vpop.xlane.xlu0 %7993
    %v7995 = vmul.f32 %v7982, %v229
    %v7996 = vmul.f32 %v7985, %v229
    %v7997 = vmul.f32 %v7988, %v229
    %v7998 = vmul.f32 %v7991, %v229
    %v7999 = vmul.f32 %v7994, %v229
    %v8000 = vadd.f32 %v7995, 1e-06
    %v8001 = vadd.f32 %v7996, 1e-06
    %v8002 = vadd.f32 %v7997, 1e-06
    %v8003 = vadd.f32 %v7998, 1e-06
    %v8004 = vadd.f32 %v7999, 1e-06
    %v8005 = vrsqrt.pop %v8000
    %v8006 = vrsqrt.pop %v8001
    %v8007 = vrsqrt.pop %v8002
    %v8008 = vrsqrt.pop %v8003
    %v8009 = vrsqrt.pop %v8004
    %v8010 = vmul.f32 %v7970, %v8005
    %v8011 = vmul.f32 %v7971, %v8006
    %v8012 = vmul.f32 %v7972, %v8007
    %v8013 = vmul.f32 %v7973, %v8008
    %v8014 = vmul.f32 %v7974, %v8009
    %v8016 = vlaneseq
    %v8017 = vshrl.u32 %v8016, 7
    %v8018 = vsub.s32 0, %v8017
    %v8019 = vrot.slane %v7947, %v8018
    %v8021 = vmul.f32 %v8010, %v8019
    %v8022 = vmul.f32 %v8011, %v8019
    %v8023 = vmul.f32 %v8012, %v8019
    %v8024 = vmul.f32 %v8013, %v8019
    %v8025 = vmul.f32 %v8014, %v8019
    %v8027 = vlaneseq
    %v8028 = vshrl.u32 %v8027, 7
    %v8029 = vsub.s32 0, %v8028
    %v8030 = vrot.slane %v7949, %v8029
    %v8032 = vadd.f32 %v8021, %v8030
    %v8033 = vadd.f32 %v8022, %v8030
    %v8034 = vadd.f32 %v8023, %v8030
    %v8035 = vadd.f32 %v8024, %v8030
    %v8036 = vadd.f32 %v8025, %v8030
    %s8037 = scalar_lea.vmem %s17, 96
    %v8038 = vld [vmem:[%s8037] sm:$0xff]
    %v8039 = vld [vmem:[%s8037 + $0x8] sm:$0xff]
    %v8040 = vld [vmem:[%s8037 + $0x10] sm:$0xff]
    %v8041 = vld [vmem:[%s8037 + $0x18] sm:$0xff]
    %s8042 = scalar_lea.vmem %s18, 3
    %v8043 = vld [vmem:[%s8042] sm:$0x1]
    %v8045 = vlaneseq
    %v8046 = vshrl.u32 %v8045, 7
    %v8047 = vsub.s32 0, %v8046
    %v8048 = vrot.slane %v8043, %v8047
    %v8051 = vsel %vm212, %v8032, 0
    %v8054 = vsel %vm212, %v8033, 0
    %v8057 = vsel %vm212, %v8034, 0
    %v8060 = vsel %vm212, %v8035, 0
    %v8063 = vsel %vm212, %v8036, 0
    %8065 = vmatprep.subr.mxu0 0.0
    %8066 = vmatpush1.msra.mxu0 0.0
    %8067 = vmatprep.subr.mxu0 0.0
    %8068 = vmatpush1.msra.mxu0 0.0
    %8069 = vmatprep.subr.mxu0 0.0
    %8070 = vmatpush1.msra.mxu0 0.0
    %8071 = vmatprep.subr.mxu0 0.0
    %8072 = vmatpush1.msra.mxu0 0.0
    %8073 = vmatprep.subr.mxu0 0.0
    %8074 = vmatpush1.msra.mxu0 0.0
    %8075 = vmatprep.subr.mxu0 0.0
    %8076 = vmatpush1.msra.mxu0 0.0
    %8077 = vmatprep.subr.mxu0 0.0
    %8078 = vmatpush1.msra.mxu0 0.0
    %8079 = vmatprep.subr.mxu0 0.0
    %8080 = vmatpush1.msra.mxu0 0.0
    %8081 = vmatprep.subr.mxu0 0.0
    %8082 = vmatpush1.msra.mxu0 0.0
    %8083 = vmatprep.subr.mxu0 0.0
    %8084 = vmatpush1.msra.mxu0 0.0
    %8085 = vmatprep.subr.mxu0 0.0
    %8086 = vmatpush1.msra.mxu0 0.0
    %8087 = vmatprep.subr.mxu0 0.0
    %8088 = vmatpush1.msra.mxu0 0.0
    %8089 = vmatprep.subr.mxu0 0.0
    %8090 = vmatpush1.msra.mxu0 %v8041
    %8091 = vmatprep.subr.mxu0 0.0
    %8092 = vmatpush1.msra.mxu0 %v8040
    %8093 = vmatprep.subr.mxu0 0.0
    %8094 = vmatpush1.msra.mxu0 %v8039
    %8095 = vmatprep.subr.mxu0 0.0
    %8096 = vmatpush1.msra.mxu0 %v8038
    %8097 = vmatprep.subr.mxu0 0.0
    %8098 = vmatpush2.msra.mxu0 0.0
    %8099 = vmatprep.subr.mxu0 0.0
    %8100 = vmatpush2.msra.mxu0 0.0
    %8101 = vmatprep.subr.mxu0 0.0
    %8102 = vmatpush2.msra.mxu0 0.0
    %8103 = vmatprep.subr.mxu0 0.0
    %8104 = vmatpush2.msra.mxu0 0.0
    %8105 = vmatprep.subr.mxu0 0.0
    %8106 = vmatpush2.msra.mxu0 0.0
    %8107 = vmatprep.subr.mxu0 0.0
    %8108 = vmatpush2.msra.mxu0 0.0
    %8109 = vmatprep.subr.mxu0 0.0
    %8110 = vmatpush2.msra.mxu0 0.0
    %8111 = vmatprep.subr.mxu0 0.0
    %8112 = vmatpush2.msra.mxu0 0.0
    %8113 = vmatprep.subr.mxu0 0.0
    %8114 = vmatpush2.msra.mxu0 0.0
    %8115 = vmatprep.subr.mxu0 0.0
    %8116 = vmatpush2.msra.mxu0 0.0
    %8117 = vmatprep.subr.mxu0 0.0
    %8118 = vmatpush2.msra.mxu0 0.0
    %8119 = vmatprep.subr.mxu0 0.0
    %8120 = vmatpush2.msra.mxu0 0.0
    %8121 = vmatprep.subr.mxu0 0.0
    %8122 = vmatpush2.msra.mxu0 0.0
    %8123 = vmatprep.subr.mxu0 0.0
    %8124 = vmatpush2.msra.mxu0 0.0
    %8125 = vmatprep.subr.mxu0 0.0
    %8126 = vmatpush2.msra.mxu0 0.0
    %8127 = vmatprep.subr.mxu0 0.0
    %8128 = vmatpush2.msra.mxu0 0.0
    %8129 = vmatprep.mubr.f32.mxu0 0.0
    %8130 = vmatmul.mubr.f32.gmra.mxu0 %v8051
    %v8131 = vpop.f32.mrf.mxu0
    %v8132 = vadd.f32 %v8048, %v8131
    %v8133 = vpop.f32.mrf.mxu0
    %8134 = vmatprep.mubr.f32.mxu0 0.0
    %8135 = vmatmul.mubr.f32.gmra.mxu0 %v8054
    %v8136 = vpop.f32.mrf.mxu0
    %v8137 = vadd.f32 %v8048, %v8136
    %v8138 = vpop.f32.mrf.mxu0
    %8139 = vmatprep.mubr.f32.mxu0 0.0
    %8140 = vmatmul.mubr.f32.gmra.mxu0 %v8057
    %v8141 = vpop.f32.mrf.mxu0
    %v8142 = vadd.f32 %v8048, %v8141
    %v8143 = vpop.f32.mrf.mxu0
    %8144 = vmatprep.mubr.f32.mxu0 0.0
    %8145 = vmatmul.mubr.f32.gmra.mxu0 %v8060
    %v8146 = vpop.f32.mrf.mxu0
    %v8147 = vadd.f32 %v8048, %v8146
    %v8148 = vpop.f32.mrf.mxu0
    %8149 = vmatprep.mubr.f32.mxu0 0.0
    %8150 = vmatmul.mubr.f32.gmra.mxu0 %v8063
    %v8151 = vpop.f32.mrf.mxu0
    %v8152 = vadd.f32 %v8048, %v8151
    %v8153 = vpop.f32.mrf.mxu0
    %8154 = vdwg.mxu0
    %v8155 = vmul.f32 %v8132, 0.5
    %v8156 = vmul.f32 %v8137, 0.5
    %v8157 = vmul.f32 %v8142, 0.5
    %v8158 = vmul.f32 %v8147, 0.5
    %v8159 = vmul.f32 %v8152, 0.5
    %v8160 = vmul.f32 %v8132, 0.70710677
    %v8161 = vmul.f32 %v8137, 0.70710677
    %v8162 = vmul.f32 %v8142, 0.70710677
    %v8163 = vmul.f32 %v8147, 0.70710677
    %v8164 = vmul.f32 %v8152, 0.70710677
    %v8165 = vand.u32 2147483647, %v8160
    %v8166 = vand.u32 2147483647, %v8161
    %v8167 = vand.u32 2147483647, %v8162
    %v8168 = vand.u32 2147483647, %v8163
    %v8169 = vand.u32 2147483647, %v8164
    %v8170 = vmul.f32 %v8165, 0.3275911
    %v8171 = vmul.f32 %v8166, 0.3275911
    %v8172 = vmul.f32 %v8167, 0.3275911
    %v8173 = vmul.f32 %v8168, 0.3275911
    %v8174 = vmul.f32 %v8169, 0.3275911
    %v8175 = vadd.f32 %v8170, 1.0
    %v8176 = vadd.f32 %v8171, 1.0
    %v8177 = vadd.f32 %v8172, 1.0
    %v8178 = vadd.f32 %v8173, 1.0
    %v8179 = vadd.f32 %v8174, 1.0
    %v8180 = vrcp.pop %v8175
    %v8181 = vmul.f32 1.0, %v8180
    %v8182 = vrcp.pop %v8176
    %v8183 = vmul.f32 1.0, %v8182
    %v8184 = vrcp.pop %v8177
    %v8185 = vmul.f32 1.0, %v8184
    %v8186 = vrcp.pop %v8178
    %v8187 = vmul.f32 1.0, %v8186
    %v8188 = vrcp.pop %v8179
    %v8189 = vmul.f32 1.0, %v8188
    %v8190 = vmul.f32 %v8181, 1.0614054
    %v8191 = vmul.f32 %v8183, 1.0614054
    %v8192 = vmul.f32 %v8185, 1.0614054
    %v8193 = vmul.f32 %v8187, 1.0614054
    %v8194 = vmul.f32 %v8189, 1.0614054
    %v8195 = vadd.f32 %v8190, -1.4531521
    %v8196 = vadd.f32 %v8191, -1.4531521
    %v8197 = vadd.f32 %v8192, -1.4531521
    %v8198 = vadd.f32 %v8193, -1.4531521
    %v8199 = vadd.f32 %v8194, -1.4531521
    %v8200 = vmul.f32 %v8195, %v8181
    %v8201 = vmul.f32 %v8196, %v8183
    %v8202 = vmul.f32 %v8197, %v8185
    %v8203 = vmul.f32 %v8198, %v8187
    %v8204 = vmul.f32 %v8199, %v8189
    %v8205 = vadd.f32 %v8200, 1.4214138
    %v8206 = vadd.f32 %v8201, 1.4214138
    %v8207 = vadd.f32 %v8202, 1.4214138
    %v8208 = vadd.f32 %v8203, 1.4214138
    %v8209 = vadd.f32 %v8204, 1.4214138
    %v8210 = vmul.f32 %v8205, %v8181
    %v8211 = vmul.f32 %v8206, %v8183
    %v8212 = vmul.f32 %v8207, %v8185
    %v8213 = vmul.f32 %v8208, %v8187
    %v8214 = vmul.f32 %v8209, %v8189
    %v8215 = vadd.f32 %v8210, -0.28449672
    %v8216 = vadd.f32 %v8211, -0.28449672
    %v8217 = vadd.f32 %v8212, -0.28449672
    %v8218 = vadd.f32 %v8213, -0.28449672
    %v8219 = vadd.f32 %v8214, -0.28449672
    %v8220 = vmul.f32 %v8215, %v8181
    %v8221 = vmul.f32 %v8216, %v8183
    %v8222 = vmul.f32 %v8217, %v8185
    %v8223 = vmul.f32 %v8218, %v8187
    %v8224 = vmul.f32 %v8219, %v8189
    %v8225 = vadd.f32 %v8220, 0.2548296
    %v8226 = vadd.f32 %v8221, 0.2548296
    %v8227 = vadd.f32 %v8222, 0.2548296
    %v8228 = vadd.f32 %v8223, 0.2548296
    %v8229 = vadd.f32 %v8224, 0.2548296
    %v8230 = vmul.f32 %v8225, %v8181
    %v8231 = vmul.f32 %v8226, %v8183
    %v8232 = vmul.f32 %v8227, %v8185
    %v8233 = vmul.f32 %v8228, %v8187
    %v8234 = vmul.f32 %v8229, %v8189
    %v8235 = vsub.f32 0.0, %v8165
    %v8236 = vsub.f32 0.0, %v8166
    %v8237 = vsub.f32 0.0, %v8167
    %v8238 = vsub.f32 0.0, %v8168
    %v8239 = vsub.f32 0.0, %v8169
    %v8240 = vmul.f32 %v8235, %v8165
    %v8241 = vmul.f32 %v8236, %v8166
    %v8242 = vmul.f32 %v8237, %v8167
    %v8243 = vmul.f32 %v8238, %v8168
    %v8244 = vmul.f32 %v8239, %v8169
    %v8245 = vmul.f32 %v8240, 1.442695
    %v8246 = vpow.pop %v8245
    %v8247 = vmul.f32 %v8241, 1.442695
    %v8248 = vpow.pop %v8247
    %v8249 = vmul.f32 %v8242, 1.442695
    %v8250 = vpow.pop %v8249
    %v8251 = vmul.f32 %v8243, 1.442695
    %v8252 = vpow.pop %v8251
    %v8253 = vmul.f32 %v8244, 1.442695
    %v8254 = vpow.pop %v8253
    %v8255 = vmul.f32 %v8230, %v8246
    %v8256 = vmul.f32 %v8231, %v8248
    %v8257 = vmul.f32 %v8232, %v8250
    %v8258 = vmul.f32 %v8233, %v8252
    %v8259 = vmul.f32 %v8234, %v8254
    %v8260 = vsub.f32 1.0, %v8255
    %v8261 = vsub.f32 1.0, %v8256
    %v8262 = vsub.f32 1.0, %v8257
    %v8263 = vsub.f32 1.0, %v8258
    %v8264 = vsub.f32 1.0, %v8259
    %vm8265 = vcmp.ge.f32.partialorder %v8160, 0.0
    %vm8266 = vcmp.ge.f32.partialorder %v8161, 0.0
    %vm8267 = vcmp.ge.f32.partialorder %v8162, 0.0
    %vm8268 = vcmp.ge.f32.partialorder %v8163, 0.0
    %vm8269 = vcmp.ge.f32.partialorder %v8164, 0.0
    %v8270 = vsub.f32 0.0, %v8260
    %v8271 = vsub.f32 0.0, %v8261
    %v8272 = vsub.f32 0.0, %v8262
    %v8273 = vsub.f32 0.0, %v8263
    %v8274 = vsub.f32 0.0, %v8264
    %v8275 = vsel %vm8265, %v8260, %v8270
    %v8276 = vsel %vm8266, %v8261, %v8271
    %v8277 = vsel %vm8267, %v8262, %v8272
    %v8278 = vsel %vm8268, %v8263, %v8273
    %v8279 = vsel %vm8269, %v8264, %v8274
    %v8280 = vadd.f32 %v8275, 1.0
    %v8281 = vadd.f32 %v8276, 1.0
    %v8282 = vadd.f32 %v8277, 1.0
    %v8283 = vadd.f32 %v8278, 1.0
    %v8284 = vadd.f32 %v8279, 1.0
    %v8285 = vmul.f32 %v8155, %v8280
    %v8286 = vmul.f32 %v8156, %v8281
    %v8287 = vmul.f32 %v8157, %v8282
    %v8288 = vmul.f32 %v8158, %v8283
    %v8289 = vmul.f32 %v8159, %v8284
    %s8290 = scalar_lea.vmem %s19, 192
    %v8291 = vld [vmem:[%s8290] sm:$0xff]
    %v8292 = vld [vmem:[%s8290 + $0x8] sm:$0xff]
    %v8293 = vld [vmem:[%s8290 + $0x10] sm:$0xff]
    %v8294 = vld [vmem:[%s8290 + $0x18] sm:$0xff]
    %v8295 = vld [vmem:[%s8290 + $0x20] sm:$0xff]
    %v8296 = vld [vmem:[%s8290 + $0x28] sm:$0xff]
    %v8297 = vld [vmem:[%s8290 + $0x30] sm:$0xff]
    %v8298 = vld [vmem:[%s8290 + $0x38] sm:$0xff]
    %s8299 = scalar_lea.vmem %s20, 3
    %v8300 = vld [vmem:[%s8299] sm:$0x1]
    %v8302 = vlaneseq
    %v8303 = vshrl.u32 %v8302, 7
    %v8304 = vsub.s32 0, %v8303
    %v8305 = vrot.slane %v8300, %v8304
    %v8308 = vsel %vm2123, %v8285, 0
    %v8311 = vsel %vm2123, %v8286, 0
    %v8314 = vsel %vm2123, %v8287, 0
    %v8317 = vsel %vm2123, %v8288, 0
    %v8320 = vsel %vm2123, %v8289, 0
    %8322 = vmatprep.subr.mxu0 0.0
    %8323 = vmatpush1.msra.mxu0 0.0
    %8324 = vmatprep.subr.mxu0 0.0
    %8325 = vmatpush1.msra.mxu0 0.0
    %8326 = vmatprep.subr.mxu0 0.0
    %8327 = vmatpush1.msra.mxu0 0.0
    %8328 = vmatprep.subr.mxu0 0.0
    %8329 = vmatpush1.msra.mxu0 0.0
    %8330 = vmatprep.subr.mxu0 0.0
    %8331 = vmatpush1.msra.mxu0 0.0
    %8332 = vmatprep.subr.mxu0 0.0
    %8333 = vmatpush1.msra.mxu0 0.0
    %8334 = vmatprep.subr.mxu0 0.0
    %8335 = vmatpush1.msra.mxu0 0.0
    %8336 = vmatprep.subr.mxu0 0.0
    %8337 = vmatpush1.msra.mxu0 0.0
    %8338 = vmatprep.subr.mxu0 0.0
    %8339 = vmatpush1.msra.mxu0 %v8298
    %8340 = vmatprep.subr.mxu0 0.0
    %8341 = vmatpush1.msra.mxu0 %v8297
    %8342 = vmatprep.subr.mxu0 0.0
    %8343 = vmatpush1.msra.mxu0 %v8296
    %8344 = vmatprep.subr.mxu0 0.0
    %8345 = vmatpush1.msra.mxu0 %v8295
    %8346 = vmatprep.subr.mxu0 0.0
    %8347 = vmatpush1.msra.mxu0 %v8294
    %8348 = vmatprep.subr.mxu0 0.0
    %8349 = vmatpush1.msra.mxu0 %v8293
    %8350 = vmatprep.subr.mxu0 0.0
    %8351 = vmatpush1.msra.mxu0 %v8292
    %8352 = vmatprep.subr.mxu0 0.0
    %8353 = vmatpush1.msra.mxu0 %v8291
    %8354 = vmatprep.subr.mxu0 0.0
    %8355 = vmatpush2.msra.mxu0 0.0
    %8356 = vmatprep.subr.mxu0 0.0
    %8357 = vmatpush2.msra.mxu0 0.0
    %8358 = vmatprep.subr.mxu0 0.0
    %8359 = vmatpush2.msra.mxu0 0.0
    %8360 = vmatprep.subr.mxu0 0.0
    %8361 = vmatpush2.msra.mxu0 0.0
    %8362 = vmatprep.subr.mxu0 0.0
    %8363 = vmatpush2.msra.mxu0 0.0
    %8364 = vmatprep.subr.mxu0 0.0
    %8365 = vmatpush2.msra.mxu0 0.0
    %8366 = vmatprep.subr.mxu0 0.0
    %8367 = vmatpush2.msra.mxu0 0.0
    %8368 = vmatprep.subr.mxu0 0.0
    %8369 = vmatpush2.msra.mxu0 0.0
    %8370 = vmatprep.subr.mxu0 0.0
    %8371 = vmatpush2.msra.mxu0 0.0
    %8372 = vmatprep.subr.mxu0 0.0
    %8373 = vmatpush2.msra.mxu0 0.0
    %8374 = vmatprep.subr.mxu0 0.0
    %8375 = vmatpush2.msra.mxu0 0.0
    %8376 = vmatprep.subr.mxu0 0.0
    %8377 = vmatpush2.msra.mxu0 0.0
    %8378 = vmatprep.subr.mxu0 0.0
    %8379 = vmatpush2.msra.mxu0 0.0
    %8380 = vmatprep.subr.mxu0 0.0
    %8381 = vmatpush2.msra.mxu0 0.0
    %8382 = vmatprep.subr.mxu0 0.0
    %8383 = vmatpush2.msra.mxu0 0.0
    %8384 = vmatprep.subr.mxu0 0.0
    %8385 = vmatpush2.msra.mxu0 0.0
    %8386 = vmatprep.mubr.f32.mxu0 0.0
    %8387 = vmatmul.mubr.f32.gmra.mxu0 %v8308
    %v8388 = vpop.f32.mrf.mxu0
    %v8389 = vadd.f32 %v8305, %v8388
    %v8390 = vpop.f32.mrf.mxu0
    %8391 = vmatprep.mubr.f32.mxu0 0.0
    %8392 = vmatmul.mubr.f32.gmra.mxu0 %v8311
    %v8393 = vpop.f32.mrf.mxu0
    %v8394 = vadd.f32 %v8305, %v8393
    %v8395 = vpop.f32.mrf.mxu0
    %8396 = vmatprep.mubr.f32.mxu0 0.0
    %8397 = vmatmul.mubr.f32.gmra.mxu0 %v8314
    %v8398 = vpop.f32.mrf.mxu0
    %v8399 = vadd.f32 %v8305, %v8398
    %v8400 = vpop.f32.mrf.mxu0
    %8401 = vmatprep.mubr.f32.mxu0 0.0
    %8402 = vmatmul.mubr.f32.gmra.mxu0 %v8317
    %v8403 = vpop.f32.mrf.mxu0
    %v8404 = vadd.f32 %v8305, %v8403
    %v8405 = vpop.f32.mrf.mxu0
    %8406 = vmatprep.mubr.f32.mxu0 0.0
    %8407 = vmatmul.mubr.f32.gmra.mxu0 %v8320
    %v8408 = vpop.f32.mrf.mxu0
    %v8409 = vpop.f32.mrf.mxu0
    %8410 = vdwg.mxu0
    %s8411 = scalar_lea.vmem %s21, 3
    %v8412 = vld [vmem:[%s8411] sm:$0x1]
    %v8414 = vlaneseq
    %v8415 = vshrl.u32 %v8414, 7
    %v8416 = vsub.s32 0, %v8415
    %v8417 = vrot.slane %v8412, %v8416
    %v8419 = vmul.f32 %v8417, %v8389
    %v8420 = vmul.f32 %v8417, %v8394
    %v8421 = vmul.f32 %v8417, %v8399
    %v8422 = vmul.f32 %v8417, %v8404
    %v8423 = vadd.f32 %v7941, %v8419
    %v8424 = vadd.f32 %v7942, %v8420
    %v8425 = vadd.f32 %v7943, %v8421
    %v8426 = vadd.f32 %v7944, %v8422
    %8431 = vrot.lane.b32.xlu0 %v8423, 96
    %v8432 = vpop.permute.xlu0 %8431
    %8433 = vrot.lane.b32.xlu0 %v8424, 96
    %v8434 = vpop.permute.xlu0 %8433
    %8435 = vrot.lane.b32.xlu0 %v8425, 96
    %v8436 = vpop.permute.xlu0 %8435
    %8437 = vrot.lane.b32.xlu0 %v8426, 96
    %v8438 = vpop.permute.xlu0 %8437
    %vm8443 = vcmask 1048320
    %8444 = vst.msk [vmem:[#allocation2] sm:$0xff] %vm8443, %v8432
    %8445 = vst.msk [vmem:[#allocation2 + $0x8] sm:$0xff] %vm8443, %v8434
    %8446 = vst.msk [vmem:[#allocation2 + $0x10] sm:$0xff] %vm8443, %v8436
    %8447 = vst.msk [vmem:[#allocation2 + $0x18] sm:$0xff] %vm8443, %v8438
    %v8448 = vld [vmem:[#allocation2] sm:$0xff]
    %v8449 = vld [vmem:[#allocation2 + $0x8] sm:$0xff]
    %v8450 = vld [vmem:[#allocation2 + $0x10] sm:$0xff]
    %v8451 = vld [vmem:[#allocation2 + $0x18] sm:$0xff]
    %v8452 = vld [vmem:[%s22] sm:$0xff]
    %v8453 = vld [vmem:[%s22 + $0x8] sm:$0xff]
    %v8454 = vld [vmem:[%s22 + $0x10] sm:$0xff]
    %v8455 = vld [vmem:[%s22 + $0x18] sm:$0xff]
    %v8456 = vld [vmem:[%s22 + $0x20] sm:$0xff]
    %v8457 = vld [vmem:[%s22 + $0x28] sm:$0xff]
    %v8458 = vld [vmem:[%s22 + $0x30] sm:$0xff]
    %v8459 = vld [vmem:[%s22 + $0x38] sm:$0xff]
    %v8460 = vld [vmem:[%s22 + $0x40] sm:$0xff]
    %v8461 = vld [vmem:[%s22 + $0x48] sm:$0xff]
    %v8462 = vld [vmem:[%s22 + $0x50] sm:$0xff]
    %v8463 = vld [vmem:[%s22 + $0x58] sm:$0xff]
    %v8464 = vld [vmem:[%s22 + $0x60] sm:$0xff]
    %v8465 = vld [vmem:[%s22 + $0x68] sm:$0xff]
    %v8466 = vld [vmem:[%s22 + $0x70] sm:$0xff]
    %v8467 = vld [vmem:[%s22 + $0x78] sm:$0xff]
    %v8468 = vld [vmem:[%s23] sm:$0x1]
    %v8470 = vlaneseq
    %v8471 = vshrl.u32 %v8470, 7
    %v8472 = vsub.s32 0, %v8471
    %v8473 = vrot.slane %v8468, %v8472
    %8475 = vmatprep.subr.mxu0 0.0
    %8476 = vmatpush1.msra.mxu0 %v8467
    %8477 = vmatprep.subr.mxu0 0.0
    %8478 = vmatpush1.msra.mxu0 %v8466
    %8479 = vmatprep.subr.mxu0 0.0
    %8480 = vmatpush1.msra.mxu0 %v8465
    %8481 = vmatprep.subr.mxu0 0.0
    %8482 = vmatpush1.msra.mxu0 %v8464
    %8483 = vmatprep.subr.mxu0 0.0
    %8484 = vmatpush1.msra.mxu0 %v8463
    %8485 = vmatprep.subr.mxu0 0.0
    %8486 = vmatpush1.msra.mxu0 %v8462
    %8487 = vmatprep.subr.mxu0 0.0
    %8488 = vmatpush1.msra.mxu0 %v8461
    %8489 = vmatprep.subr.mxu0 0.0
    %8490 = vmatpush1.msra.mxu0 %v8460
    %8491 = vmatprep.subr.mxu0 0.0
    %8492 = vmatpush1.msra.mxu0 %v8459
    %8493 = vmatprep.subr.mxu0 0.0
    %8494 = vmatpush1.msra.mxu0 %v8458
    %8495 = vmatprep.subr.mxu0 0.0
    %8496 = vmatpush1.msra.mxu0 %v8457
    %8497 = vmatprep.subr.mxu0 0.0
    %8498 = vmatpush1.msra.mxu0 %v8456
    %8499 = vmatprep.subr.mxu0 0.0
    %8500 = vmatpush1.msra.mxu0 %v8455
    %8501 = vmatprep.subr.mxu0 0.0
    %8502 = vmatpush1.msra.mxu0 %v8454
    %8503 = vmatprep.subr.mxu0 0.0
    %8504 = vmatpush1.msra.mxu0 %v8453
    %8505 = vmatprep.subr.mxu0 0.0
    %8506 = vmatpush1.msra.mxu0 %v8452
    %8507 = vmatprep.subr.mxu0 0.0
    %8508 = vmatpush2.msra.mxu0 0.0
    %8509 = vmatprep.subr.mxu0 0.0
    %8510 = vmatpush2.msra.mxu0 0.0
    %8511 = vmatprep.subr.mxu0 0.0
    %8512 = vmatpush2.msra.mxu0 0.0
    %8513 = vmatprep.subr.mxu0 0.0
    %8514 = vmatpush2.msra.mxu0 0.0
    %8515 = vmatprep.subr.mxu0 0.0
    %8516 = vmatpush2.msra.mxu0 0.0
    %8517 = vmatprep.subr.mxu0 0.0
    %8518 = vmatpush2.msra.mxu0 0.0
    %8519 = vmatprep.subr.mxu0 0.0
    %8520 = vmatpush2.msra.mxu0 0.0
    %8521 = vmatprep.subr.mxu0 0.0
    %8522 = vmatpush2.msra.mxu0 0.0
    %8523 = vmatprep.subr.mxu0 0.0
    %8524 = vmatpush2.msra.mxu0 0.0
    %8525 = vmatprep.subr.mxu0 0.0
    %8526 = vmatpush2.msra.mxu0 0.0
    %8527 = vmatprep.subr.mxu0 0.0
    %8528 = vmatpush2.msra.mxu0 0.0
    %8529 = vmatprep.subr.mxu0 0.0
    %8530 = vmatpush2.msra.mxu0 0.0
    %8531 = vmatprep.subr.mxu0 0.0
    %8532 = vmatpush2.msra.mxu0 0.0
    %8533 = vmatprep.subr.mxu0 0.0
    %8534 = vmatpush2.msra.mxu0 0.0
    %8535 = vmatprep.subr.mxu0 0.0
    %8536 = vmatpush2.msra.mxu0 0.0
    %8537 = vmatprep.subr.mxu0 0.0
    %8538 = vmatpush2.msra.mxu0 0.0
    %8539 = vmatprep.mubr.f32.mxu0 0.0
    %8540 = vmatmul.mubr.f32.gmra.mxu0 %v8448
    %v8541 = vpop.f32.mrf.mxu0
    %v8542 = vadd.f32 %v8473, %v8541
    %v8543 = vpop.f32.mrf.mxu0
    %8544 = vmatprep.mubr.f32.mxu0 0.0
    %8545 = vmatmul.mubr.f32.gmra.mxu0 %v8449
    %v8546 = vpop.f32.mrf.mxu0
    %v8547 = vadd.f32 %v8473, %v8546
    %v8548 = vpop.f32.mrf.mxu0
    %8549 = vmatprep.mubr.f32.mxu0 0.0
    %8550 = vmatmul.mubr.f32.gmra.mxu0 %v8450
    %v8551 = vpop.f32.mrf.mxu0
    %v8552 = vadd.f32 %v8473, %v8551
    %v8553 = vpop.f32.mrf.mxu0
    %8554 = vmatprep.mubr.f32.mxu0 0.0
    %8555 = vmatmul.mubr.f32.gmra.mxu0 %v8451
    %v8556 = vpop.f32.mrf.mxu0
    %v8557 = vadd.f32 %v8473, %v8556
    %v8558 = vpop.f32.mrf.mxu0
    %8559 = vdwg.mxu0
    %v8560 = vmax.f32 %v8542, 0.0
    %v8561 = vmax.f32 %v8547, 0.0
    %v8562 = vmax.f32 %v8552, 0.0
    %v8563 = vmax.f32 %v8557, 0.0
    %v8564 = vld [vmem:[%s24] sm:$0xff]
    %v8565 = vld [vmem:[%s24 + $0x8] sm:$0xff]
    %v8566 = vld [vmem:[%s24 + $0x10] sm:$0xff]
    %v8567 = vld [vmem:[%s24 + $0x18] sm:$0xff]
    %v8568 = vld [vmem:[%s24 + $0x20] sm:$0xff]
    %v8569 = vld [vmem:[%s24 + $0x28] sm:$0xff]
    %v8570 = vld [vmem:[%s24 + $0x30] sm:$0xff]
    %v8571 = vld [vmem:[%s24 + $0x38] sm:$0xff]
    %v8572 = vld [vmem:[%s24 + $0x40] sm:$0xff]
    %v8573 = vld [vmem:[%s24 + $0x48] sm:$0xff]
    %v8574 = vld [vmem:[%s24 + $0x50] sm:$0xff]
    %v8575 = vld [vmem:[%s24 + $0x58] sm:$0xff]
    %v8576 = vld [vmem:[%s24 + $0x60] sm:$0xff]
    %v8577 = vld [vmem:[%s24 + $0x68] sm:$0xff]
    %v8578 = vld [vmem:[%s24 + $0x70] sm:$0xff]
    %v8579 = vld [vmem:[%s24 + $0x78] sm:$0xff]
    %v8580 = vld [vmem:[%s24 + $0x80] sm:$0xff]
    %v8581 = vld [vmem:[%s24 + $0x88] sm:$0xff]
    %v8582 = vld [vmem:[%s24 + $0x90] sm:$0xff]
    %v8583 = vld [vmem:[%s24 + $0x98] sm:$0xff]
    %v8584 = vld [vmem:[%s24 + $0xa0] sm:$0xff]
    %v8585 = vld [vmem:[%s24 + $0xa8] sm:$0xff]
    %v8586 = vld [vmem:[%s24 + $0xb0] sm:$0xff]
    %v8587 = vld [vmem:[%s24 + $0xb8] sm:$0xff]
    %v8588 = vld [vmem:[%s24 + $0xc0] sm:$0xff]
    %v8589 = vld [vmem:[%s24 + $0xc8] sm:$0xff]
    %v8590 = vld [vmem:[%s24 + $0xd0] sm:$0xff]
    %v8591 = vld [vmem:[%s24 + $0xd8] sm:$0xff]
    %v8592 = vld [vmem:[%s24 + $0xe0] sm:$0xff]
    %v8593 = vld [vmem:[%s24 + $0xe8] sm:$0xff]
    %v8594 = vld [vmem:[%s24 + $0xf0] sm:$0xff]
    %v8595 = vld [vmem:[%s24 + $0xf8] sm:$0xff]
    %v8597 = vsel %vm621, %v8564, 0
    %v8600 = vsel %vm621, %v8565, 0
    %v8603 = vsel %vm621, %v8566, 0
    %v8606 = vsel %vm621, %v8567, 0
    %v8609 = vsel %vm621, %v8568, 0
    %v8612 = vsel %vm621, %v8569, 0
    %v8615 = vsel %vm621, %v8570, 0
    %v8618 = vsel %vm621, %v8571, 0
    %v8621 = vsel %vm621, %v8572, 0
    %v8624 = vsel %vm621, %v8573, 0
    %v8627 = vsel %vm621, %v8574, 0
    %v8630 = vsel %vm621, %v8575, 0
    %v8633 = vsel %vm621, %v8576, 0
    %v8636 = vsel %vm621, %v8577, 0
    %v8639 = vsel %vm621, %v8578, 0
    %v8642 = vsel %vm621, %v8579, 0
    %v8645 = vsel %vm621, %v8580, 0
    %v8648 = vsel %vm621, %v8581, 0
    %v8651 = vsel %vm621, %v8582, 0
    %v8654 = vsel %vm621, %v8583, 0
    %v8657 = vsel %vm621, %v8584, 0
    %v8660 = vsel %vm621, %v8585, 0
    %v8663 = vsel %vm621, %v8586, 0
    %v8666 = vsel %vm621, %v8587, 0
    %v8669 = vsel %vm621, %v8588, 0
    %v8672 = vsel %vm621, %v8589, 0
    %v8675 = vsel %vm621, %v8590, 0
    %v8678 = vsel %vm621, %v8591, 0
    %v8681 = vsel %vm621, %v8592, 0
    %v8684 = vsel %vm621, %v8593, 0
    %v8687 = vsel %vm621, %v8594, 0
    %v8690 = vsel %vm621, %v8595, 0
    %8692 = vmatprep.subr.mxu0 0.0
    %8693 = vmatpush1.msra.mxu0 0.0
    %8694 = vmatprep.subr.mxu0 0.0
    %8695 = vmatpush1.msra.mxu0 0.0
    %8696 = vmatprep.subr.mxu0 0.0
    %8697 = vmatpush1.msra.mxu0 0.0
    %8698 = vmatprep.subr.mxu0 0.0
    %8699 = vmatpush1.msra.mxu0 0.0
    %8700 = vmatprep.subr.mxu0 0.0
    %8701 = vmatpush1.msra.mxu0 0.0
    %8702 = vmatprep.subr.mxu0 0.0
    %8703 = vmatpush1.msra.mxu0 0.0
    %8704 = vmatprep.subr.mxu0 0.0
    %8705 = vmatpush1.msra.mxu0 0.0
    %8706 = vmatprep.subr.mxu0 0.0
    %8707 = vmatpush1.msra.mxu0 0.0
    %8708 = vmatprep.subr.mxu0 0.0
    %8709 = vmatpush1.msra.mxu0 0.0
    %8710 = vmatprep.subr.mxu0 0.0
    %8711 = vmatpush1.msra.mxu0 0.0
    %8712 = vmatprep.subr.mxu0 0.0
    %8713 = vmatpush1.msra.mxu0 0.0
    %8714 = vmatprep.subr.mxu0 0.0
    %8715 = vmatpush1.msra.mxu0 0.0
    %8716 = vmatprep.subr.mxu0 0.0
    %8717 = vmatpush1.msra.mxu0 0.0
    %8718 = vmatprep.subr.mxu0 0.0
    %8719 = vmatpush1.msra.mxu0 0.0
    %8720 = vmatprep.subr.mxu0 0.0
    %8721 = vmatpush1.msra.mxu0 %v8561
    %8722 = vmatprep.subr.mxu0 0.0
    %8723 = vmatpush1.msra.mxu0 %v8560
    %8724 = vmatprep.subr.mxu0 0.0
    %8725 = vmatpush2.msra.mxu0 0.0
    %8726 = vmatprep.subr.mxu0 0.0
    %8727 = vmatpush2.msra.mxu0 0.0
    %8728 = vmatprep.subr.mxu0 0.0
    %8729 = vmatpush2.msra.mxu0 0.0
    %8730 = vmatprep.subr.mxu0 0.0
    %8731 = vmatpush2.msra.mxu0 0.0
    %8732 = vmatprep.subr.mxu0 0.0
    %8733 = vmatpush2.msra.mxu0 0.0
    %8734 = vmatprep.subr.mxu0 0.0
    %8735 = vmatpush2.msra.mxu0 0.0
    %8736 = vmatprep.subr.mxu0 0.0
    %8737 = vmatpush2.msra.mxu0 0.0
    %8738 = vmatprep.subr.mxu0 0.0
    %8739 = vmatpush2.msra.mxu0 0.0
    %8740 = vmatprep.subr.mxu0 0.0
    %8741 = vmatpush2.msra.mxu0 0.0
    %8742 = vmatprep.subr.mxu0 0.0
    %8743 = vmatpush2.msra.mxu0 0.0
    %8744 = vmatprep.subr.mxu0 0.0
    %8745 = vmatpush2.msra.mxu0 0.0
    %8746 = vmatprep.subr.mxu0 0.0
    %8747 = vmatpush2.msra.mxu0 0.0
    %8748 = vmatprep.subr.mxu0 0.0
    %8749 = vmatpush2.msra.mxu0 0.0
    %8750 = vmatprep.subr.mxu0 0.0
    %8751 = vmatpush2.msra.mxu0 0.0
    %8752 = vmatprep.subr.mxu0 0.0
    %8753 = vmatpush2.msra.mxu0 0.0
    %8754 = vmatprep.subr.mxu0 0.0
    %8755 = vmatpush2.msra.mxu0 0.0
    %8756 = vmatprep.mubr.f32.mxu0 0.0
    %8757 = vmatmul.mubr.f32.gmra.mxu0 %v8597
    %v8758 = vpop.f32.mrf.mxu0
    %v8759 = vadd.f32 0.0, %v8758
    %v8760 = vpop.f32.mrf.mxu0
    %8761 = vmatprep.mubr.f32.mxu0 0.0
    %8762 = vmatmul.mubr.f32.gmra.mxu0 %v8600
    %v8763 = vpop.f32.mrf.mxu0
    %v8764 = vadd.f32 0.0, %v8763
    %v8765 = vpop.f32.mrf.mxu0
    %8766 = vmatprep.mubr.f32.mxu0 0.0
    %8767 = vmatmul.mubr.f32.gmra.mxu0 %v8603
    %v8768 = vpop.f32.mrf.mxu0
    %v8769 = vadd.f32 0.0, %v8768
    %v8770 = vpop.f32.mrf.mxu0
    %8771 = vmatprep.mubr.f32.mxu0 0.0
    %8772 = vmatmul.mubr.f32.gmra.mxu0 %v8606
    %v8773 = vpop.f32.mrf.mxu0
    %v8774 = vadd.f32 0.0, %v8773
    %v8775 = vpop.f32.mrf.mxu0
    %8776 = vmatprep.mubr.f32.mxu0 0.0
    %8777 = vmatmul.mubr.f32.gmra.mxu0 %v8609
    %v8778 = vpop.f32.mrf.mxu0
    %v8779 = vadd.f32 0.0, %v8778
    %v8780 = vpop.f32.mrf.mxu0
    %8781 = vmatprep.mubr.f32.mxu0 0.0
    %8782 = vmatmul.mubr.f32.gmra.mxu0 %v8612
    %v8783 = vpop.f32.mrf.mxu0
    %v8784 = vadd.f32 0.0, %v8783
    %v8785 = vpop.f32.mrf.mxu0
    %8786 = vmatprep.mubr.f32.mxu0 0.0
    %8787 = vmatmul.mubr.f32.gmra.mxu0 %v8615
    %v8788 = vpop.f32.mrf.mxu0
    %v8789 = vadd.f32 0.0, %v8788
    %v8790 = vpop.f32.mrf.mxu0
    %8791 = vmatprep.mubr.f32.mxu0 0.0
    %8792 = vmatmul.mubr.f32.gmra.mxu0 %v8618
    %v8793 = vpop.f32.mrf.mxu0
    %v8794 = vadd.f32 0.0, %v8793
    %v8795 = vpop.f32.mrf.mxu0
    %8796 = vmatprep.mubr.f32.mxu0 0.0
    %8797 = vmatmul.mubr.f32.gmra.mxu0 %v8621
    %v8798 = vpop.f32.mrf.mxu0
    %v8799 = vadd.f32 0.0, %v8798
    %v8800 = vpop.f32.mrf.mxu0
    %8801 = vmatprep.mubr.f32.mxu0 0.0
    %8802 = vmatmul.mubr.f32.gmra.mxu0 %v8624
    %v8803 = vpop.f32.mrf.mxu0
    %v8804 = vadd.f32 0.0, %v8803
    %v8805 = vpop.f32.mrf.mxu0
    %8806 = vmatprep.mubr.f32.mxu0 0.0
    %8807 = vmatmul.mubr.f32.gmra.mxu0 %v8627
    %v8808 = vpop.f32.mrf.mxu0
    %v8809 = vadd.f32 0.0, %v8808
    %v8810 = vpop.f32.mrf.mxu0
    %8811 = vmatprep.mubr.f32.mxu0 0.0
    %8812 = vmatmul.mubr.f32.gmra.mxu0 %v8630
    %v8813 = vpop.f32.mrf.mxu0
    %v8814 = vadd.f32 0.0, %v8813
    %v8815 = vpop.f32.mrf.mxu0
    %8816 = vmatprep.mubr.f32.mxu0 0.0
    %8817 = vmatmul.mubr.f32.gmra.mxu0 %v8633
    %v8818 = vpop.f32.mrf.mxu0
    %v8819 = vadd.f32 0.0, %v8818
    %v8820 = vpop.f32.mrf.mxu0
    %8821 = vmatprep.mubr.f32.mxu0 0.0
    %8822 = vmatmul.mubr.f32.gmra.mxu0 %v8636
    %v8823 = vpop.f32.mrf.mxu0
    %v8824 = vadd.f32 0.0, %v8823
    %v8825 = vpop.f32.mrf.mxu0
    %8826 = vmatprep.mubr.f32.mxu0 0.0
    %8827 = vmatmul.mubr.f32.gmra.mxu0 %v8639
    %v8828 = vpop.f32.mrf.mxu0
    %v8829 = vadd.f32 0.0, %v8828
    %v8830 = vpop.f32.mrf.mxu0
    %8831 = vmatprep.mubr.f32.mxu0 0.0
    %8832 = vmatmul.mubr.f32.gmra.mxu0 %v8642
    %v8833 = vpop.f32.mrf.mxu0
    %v8834 = vadd.f32 0.0, %v8833
    %v8835 = vpop.f32.mrf.mxu0
    %8836 = vmatprep.mubr.f32.mxu0 0.0
    %8837 = vmatmul.mubr.f32.gmra.mxu0 %v8645
    %v8838 = vpop.f32.mrf.mxu0
    %v8839 = vadd.f32 0.0, %v8838
    %v8840 = vpop.f32.mrf.mxu0
    %8841 = vmatprep.mubr.f32.mxu0 0.0
    %8842 = vmatmul.mubr.f32.gmra.mxu0 %v8648
    %v8843 = vpop.f32.mrf.mxu0
    %v8844 = vadd.f32 0.0, %v8843
    %v8845 = vpop.f32.mrf.mxu0
    %8846 = vmatprep.mubr.f32.mxu0 0.0
    %8847 = vmatmul.mubr.f32.gmra.mxu0 %v8651
    %v8848 = vpop.f32.mrf.mxu0
    %v8849 = vadd.f32 0.0, %v8848
    %v8850 = vpop.f32.mrf.mxu0
    %8851 = vmatprep.mubr.f32.mxu0 0.0
    %8852 = vmatmul.mubr.f32.gmra.mxu0 %v8654
    %v8853 = vpop.f32.mrf.mxu0
    %v8854 = vadd.f32 0.0, %v8853
    %v8855 = vpop.f32.mrf.mxu0
    %8856 = vmatprep.mubr.f32.mxu0 0.0
    %8857 = vmatmul.mubr.f32.gmra.mxu0 %v8657
    %v8858 = vpop.f32.mrf.mxu0
    %v8859 = vadd.f32 0.0, %v8858
    %v8860 = vpop.f32.mrf.mxu0
    %8861 = vmatprep.mubr.f32.mxu0 0.0
    %8862 = vmatmul.mubr.f32.gmra.mxu0 %v8660
    %v8863 = vpop.f32.mrf.mxu0
    %v8864 = vadd.f32 0.0, %v8863
    %v8865 = vpop.f32.mrf.mxu0
    %8866 = vmatprep.mubr.f32.mxu0 0.0
    %8867 = vmatmul.mubr.f32.gmra.mxu0 %v8663
    %v8868 = vpop.f32.mrf.mxu0
    %v8869 = vadd.f32 0.0, %v8868
    %v8870 = vpop.f32.mrf.mxu0
    %8871 = vmatprep.mubr.f32.mxu0 0.0
    %8872 = vmatmul.mubr.f32.gmra.mxu0 %v8666
    %v8873 = vpop.f32.mrf.mxu0
    %v8874 = vadd.f32 0.0, %v8873
    %v8875 = vpop.f32.mrf.mxu0
    %8876 = vmatprep.mubr.f32.mxu0 0.0
    %8877 = vmatmul.mubr.f32.gmra.mxu0 %v8669
    %v8878 = vpop.f32.mrf.mxu0
    %v8879 = vadd.f32 0.0, %v8878
    %v8880 = vpop.f32.mrf.mxu0
    %8881 = vmatprep.mubr.f32.mxu0 0.0
    %8882 = vmatmul.mubr.f32.gmra.mxu0 %v8672
    %v8883 = vpop.f32.mrf.mxu0
    %v8884 = vadd.f32 0.0, %v8883
    %v8885 = vpop.f32.mrf.mxu0
    %8886 = vmatprep.mubr.f32.mxu0 0.0
    %8887 = vmatmul.mubr.f32.gmra.mxu0 %v8675
    %v8888 = vpop.f32.mrf.mxu0
    %v8889 = vadd.f32 0.0, %v8888
    %v8890 = vpop.f32.mrf.mxu0
    %8891 = vmatprep.mubr.f32.mxu0 0.0
    %8892 = vmatmul.mubr.f32.gmra.mxu0 %v8678
    %v8893 = vpop.f32.mrf.mxu0
    %v8894 = vadd.f32 0.0, %v8893
    %v8895 = vpop.f32.mrf.mxu0
    %8896 = vmatprep.mubr.f32.mxu0 0.0
    %8897 = vmatmul.mubr.f32.gmra.mxu0 %v8681
    %v8898 = vpop.f32.mrf.mxu0
    %v8899 = vadd.f32 0.0, %v8898
    %v8900 = vpop.f32.mrf.mxu0
    %8901 = vmatprep.mubr.f32.mxu0 0.0
    %8902 = vmatmul.mubr.f32.gmra.mxu0 %v8684
    %v8903 = vpop.f32.mrf.mxu0
    %v8904 = vadd.f32 0.0, %v8903
    %v8905 = vpop.f32.mrf.mxu0
    %8906 = vmatprep.mubr.f32.mxu0 0.0
    %8907 = vmatmul.mubr.f32.gmra.mxu0 %v8687
    %v8908 = vpop.f32.mrf.mxu0
    %v8909 = vadd.f32 0.0, %v8908
    %v8910 = vpop.f32.mrf.mxu0
    %8911 = vmatprep.mubr.f32.mxu0 0.0
    %8912 = vmatmul.mubr.f32.gmra.mxu0 %v8690
    %v8913 = vpop.f32.mrf.mxu0
    %v8914 = vadd.f32 0.0, %v8913
    %v8915 = vpop.f32.mrf.mxu0
    %8916 = vdwg.mxu0
    %8917 = vst.msk [vmem:[%s26] sm:$0xff] %vm621, %v8759
    %8918 = vst.msk [vmem:[%s26 + $0x8] sm:$0xff] %vm621, %v8764
    %8919 = vst.msk [vmem:[%s26 + $0x10] sm:$0xff] %vm621, %v8769
    %8920 = vst.msk [vmem:[%s26 + $0x18] sm:$0xff] %vm621, %v8774
    %8921 = vst.msk [vmem:[%s26 + $0x20] sm:$0xff] %vm621, %v8779
    %8922 = vst.msk [vmem:[%s26 + $0x28] sm:$0xff] %vm621, %v8784
    %8923 = vst.msk [vmem:[%s26 + $0x30] sm:$0xff] %vm621, %v8789
    %8924 = vst.msk [vmem:[%s26 + $0x38] sm:$0xff] %vm621, %v8794
    %8925 = vst.msk [vmem:[%s26 + $0x40] sm:$0xff] %vm621, %v8799
    %8926 = vst.msk [vmem:[%s26 + $0x48] sm:$0xff] %vm621, %v8804
    %8927 = vst.msk [vmem:[%s26 + $0x50] sm:$0xff] %vm621, %v8809
    %8928 = vst.msk [vmem:[%s26 + $0x58] sm:$0xff] %vm621, %v8814
    %8929 = vst.msk [vmem:[%s26 + $0x60] sm:$0xff] %vm621, %v8819
    %8930 = vst.msk [vmem:[%s26 + $0x68] sm:$0xff] %vm621, %v8824
    %8931 = vst.msk [vmem:[%s26 + $0x70] sm:$0xff] %vm621, %v8829
    %8932 = vst.msk [vmem:[%s26 + $0x78] sm:$0xff] %vm621, %v8834
    %8933 = vst.msk [vmem:[%s26 + $0x80] sm:$0xff] %vm621, %v8839
    %8934 = vst.msk [vmem:[%s26 + $0x88] sm:$0xff] %vm621, %v8844
    %8935 = vst.msk [vmem:[%s26 + $0x90] sm:$0xff] %vm621, %v8849
    %8936 = vst.msk [vmem:[%s26 + $0x98] sm:$0xff] %vm621, %v8854
    %8937 = vst.msk [vmem:[%s26 + $0xa0] sm:$0xff] %vm621, %v8859
    %8938 = vst.msk [vmem:[%s26 + $0xa8] sm:$0xff] %vm621, %v8864
    %8939 = vst.msk [vmem:[%s26 + $0xb0] sm:$0xff] %vm621, %v8869
    %8940 = vst.msk [vmem:[%s26 + $0xb8] sm:$0xff] %vm621, %v8874
    %8941 = vst.msk [vmem:[%s26 + $0xc0] sm:$0xff] %vm621, %v8879
    %8942 = vst.msk [vmem:[%s26 + $0xc8] sm:$0xff] %vm621, %v8884
    %8943 = vst.msk [vmem:[%s26 + $0xd0] sm:$0xff] %vm621, %v8889
    %8944 = vst.msk [vmem:[%s26 + $0xd8] sm:$0xff] %vm621, %v8894
    %8945 = vst.msk [vmem:[%s26 + $0xe0] sm:$0xff] %vm621, %v8899
    %8946 = vst.msk [vmem:[%s26 + $0xe8] sm:$0xff] %vm621, %v8904
    %8947 = vst.msk [vmem:[%s26 + $0xf0] sm:$0xff] %vm621, %v8909
    %8948 = vst.msk [vmem:[%s26 + $0xf8] sm:$0xff] %vm621, %v8914
    %8949 = vmatprep.subr.mxu0 0.0
    %8950 = vmatpush1.msra.mxu0 0.0
    %8951 = vmatprep.subr.mxu0 0.0
    %8952 = vmatpush1.msra.mxu0 0.0
    %8953 = vmatprep.subr.mxu0 0.0
    %8954 = vmatpush1.msra.mxu0 0.0
    %8955 = vmatprep.subr.mxu0 0.0
    %8956 = vmatpush1.msra.mxu0 0.0
    %8957 = vmatprep.subr.mxu0 0.0
    %8958 = vmatpush1.msra.mxu0 0.0
    %8959 = vmatprep.subr.mxu0 0.0
    %8960 = vmatpush1.msra.mxu0 0.0
    %8961 = vmatprep.subr.mxu0 0.0
    %8962 = vmatpush1.msra.mxu0 0.0
    %8963 = vmatprep.subr.mxu0 0.0
    %8964 = vmatpush1.msra.mxu0 0.0
    %8965 = vmatprep.subr.mxu0 0.0
    %8966 = vmatpush1.msra.mxu0 0.0
    %8967 = vmatprep.subr.mxu0 0.0
    %8968 = vmatpush1.msra.mxu0 0.0
    %8969 = vmatprep.subr.mxu0 0.0
    %8970 = vmatpush1.msra.mxu0 0.0
    %8971 = vmatprep.subr.mxu0 0.0
    %8972 = vmatpush1.msra.mxu0 0.0
    %8973 = vmatprep.subr.mxu0 0.0
    %8974 = vmatpush1.msra.mxu0 0.0
    %8975 = vmatprep.subr.mxu0 0.0
    %8976 = vmatpush1.msra.mxu0 0.0
    %8977 = vmatprep.subr.mxu0 0.0
    %8978 = vmatpush1.msra.mxu0 %v8563
    %8979 = vmatprep.subr.mxu0 0.0
    %8980 = vmatpush1.msra.mxu0 %v8562
    %8981 = vmatprep.subr.mxu0 0.0
    %8982 = vmatpush2.msra.mxu0 0.0
    %8983 = vmatprep.subr.mxu0 0.0
    %8984 = vmatpush2.msra.mxu0 0.0
    %8985 = vmatprep.subr.mxu0 0.0
    %8986 = vmatpush2.msra.mxu0 0.0
    %8987 = vmatprep.subr.mxu0 0.0
    %8988 = vmatpush2.msra.mxu0 0.0
    %8989 = vmatprep.subr.mxu0 0.0
    %8990 = vmatpush2.msra.mxu0 0.0
    %8991 = vmatprep.subr.mxu0 0.0
    %8992 = vmatpush2.msra.mxu0 0.0
    %8993 = vmatprep.subr.mxu0 0.0
    %8994 = vmatpush2.msra.mxu0 0.0
    %8995 = vmatprep.subr.mxu0 0.0
    %8996 = vmatpush2.msra.mxu0 0.0
    %8997 = vmatprep.subr.mxu0 0.0
    %8998 = vmatpush2.msra.mxu0 0.0
    %8999 = vmatprep.subr.mxu0 0.0
    %9000 = vmatpush2.msra.mxu0 0.0
    %9001 = vmatprep.subr.mxu0 0.0
    %9002 = vmatpush2.msra.mxu0 0.0
    %9003 = vmatprep.subr.mxu0 0.0
    %9004 = vmatpush2.msra.mxu0 0.0
    %9005 = vmatprep.subr.mxu0 0.0
    %9006 = vmatpush2.msra.mxu0 0.0
    %9007 = vmatprep.subr.mxu0 0.0
    %9008 = vmatpush2.msra.mxu0 0.0
    %9009 = vmatprep.subr.mxu0 0.0
    %9010 = vmatpush2.msra.mxu0 0.0
    %9011 = vmatprep.subr.mxu0 0.0
    %9012 = vmatpush2.msra.mxu0 0.0
    %9013 = vmatprep.mubr.f32.mxu0 0.0
    %9014 = vmatmul.mubr.f32.gmra.mxu0 %v8597
    %v9015 = vpop.f32.mrf.mxu0
    %v9016 = vadd.f32 0.0, %v9015
    %v9017 = vpop.f32.mrf.mxu0
    %9018 = vmatprep.mubr.f32.mxu0 0.0
    %9019 = vmatmul.mubr.f32.gmra.mxu0 %v8600
    %v9020 = vpop.f32.mrf.mxu0
    %v9021 = vadd.f32 0.0, %v9020
    %v9022 = vpop.f32.mrf.mxu0
    %9023 = vmatprep.mubr.f32.mxu0 0.0
    %9024 = vmatmul.mubr.f32.gmra.mxu0 %v8603
    %v9025 = vpop.f32.mrf.mxu0
    %v9026 = vadd.f32 0.0, %v9025
    %v9027 = vpop.f32.mrf.mxu0
    %9028 = vmatprep.mubr.f32.mxu0 0.0
    %9029 = vmatmul.mubr.f32.gmra.mxu0 %v8606
    %v9030 = vpop.f32.mrf.mxu0
    %v9031 = vadd.f32 0.0, %v9030
    %v9032 = vpop.f32.mrf.mxu0
    %9033 = vmatprep.mubr.f32.mxu0 0.0
    %9034 = vmatmul.mubr.f32.gmra.mxu0 %v8609
    %v9035 = vpop.f32.mrf.mxu0
    %v9036 = vadd.f32 0.0, %v9035
    %v9037 = vpop.f32.mrf.mxu0
    %9038 = vmatprep.mubr.f32.mxu0 0.0
    %9039 = vmatmul.mubr.f32.gmra.mxu0 %v8612
    %v9040 = vpop.f32.mrf.mxu0
    %v9041 = vadd.f32 0.0, %v9040
    %v9042 = vpop.f32.mrf.mxu0
    %9043 = vmatprep.mubr.f32.mxu0 0.0
    %9044 = vmatmul.mubr.f32.gmra.mxu0 %v8615
    %v9045 = vpop.f32.mrf.mxu0
    %v9046 = vadd.f32 0.0, %v9045
    %v9047 = vpop.f32.mrf.mxu0
    %9048 = vmatprep.mubr.f32.mxu0 0.0
    %9049 = vmatmul.mubr.f32.gmra.mxu0 %v8618
    %v9050 = vpop.f32.mrf.mxu0
    %v9051 = vadd.f32 0.0, %v9050
    %v9052 = vpop.f32.mrf.mxu0
    %9053 = vmatprep.mubr.f32.mxu0 0.0
    %9054 = vmatmul.mubr.f32.gmra.mxu0 %v8621
    %v9055 = vpop.f32.mrf.mxu0
    %v9056 = vadd.f32 0.0, %v9055
    %v9057 = vpop.f32.mrf.mxu0
    %9058 = vmatprep.mubr.f32.mxu0 0.0
    %9059 = vmatmul.mubr.f32.gmra.mxu0 %v8624
    %v9060 = vpop.f32.mrf.mxu0
    %v9061 = vadd.f32 0.0, %v9060
    %v9062 = vpop.f32.mrf.mxu0
    %9063 = vmatprep.mubr.f32.mxu0 0.0
    %9064 = vmatmul.mubr.f32.gmra.mxu0 %v8627
    %v9065 = vpop.f32.mrf.mxu0
    %v9066 = vadd.f32 0.0, %v9065
    %v9067 = vpop.f32.mrf.mxu0
    %9068 = vmatprep.mubr.f32.mxu0 0.0
    %9069 = vmatmul.mubr.f32.gmra.mxu0 %v8630
    %v9070 = vpop.f32.mrf.mxu0
    %v9071 = vadd.f32 0.0, %v9070
    %v9072 = vpop.f32.mrf.mxu0
    %9073 = vmatprep.mubr.f32.mxu0 0.0
    %9074 = vmatmul.mubr.f32.gmra.mxu0 %v8633
    %v9075 = vpop.f32.mrf.mxu0
    %v9076 = vadd.f32 0.0, %v9075
    %v9077 = vpop.f32.mrf.mxu0
    %9078 = vmatprep.mubr.f32.mxu0 0.0
    %9079 = vmatmul.mubr.f32.gmra.mxu0 %v8636
    %v9080 = vpop.f32.mrf.mxu0
    %v9081 = vadd.f32 0.0, %v9080
    %v9082 = vpop.f32.mrf.mxu0
    %9083 = vmatprep.mubr.f32.mxu0 0.0
    %9084 = vmatmul.mubr.f32.gmra.mxu0 %v8639
    %v9085 = vpop.f32.mrf.mxu0
    %v9086 = vadd.f32 0.0, %v9085
    %v9087 = vpop.f32.mrf.mxu0
    %9088 = vmatprep.mubr.f32.mxu0 0.0
    %9089 = vmatmul.mubr.f32.gmra.mxu0 %v8642
    %v9090 = vpop.f32.mrf.mxu0
    %v9091 = vadd.f32 0.0, %v9090
    %v9092 = vpop.f32.mrf.mxu0
    %9093 = vmatprep.mubr.f32.mxu0 0.0
    %9094 = vmatmul.mubr.f32.gmra.mxu0 %v8645
    %v9095 = vpop.f32.mrf.mxu0
    %v9096 = vadd.f32 0.0, %v9095
    %v9097 = vpop.f32.mrf.mxu0
    %9098 = vmatprep.mubr.f32.mxu0 0.0
    %9099 = vmatmul.mubr.f32.gmra.mxu0 %v8648
    %v9100 = vpop.f32.mrf.mxu0
    %v9101 = vadd.f32 0.0, %v9100
    %v9102 = vpop.f32.mrf.mxu0
    %9103 = vmatprep.mubr.f32.mxu0 0.0
    %9104 = vmatmul.mubr.f32.gmra.mxu0 %v8651
    %v9105 = vpop.f32.mrf.mxu0
    %v9106 = vadd.f32 0.0, %v9105
    %v9107 = vpop.f32.mrf.mxu0
    %9108 = vmatprep.mubr.f32.mxu0 0.0
    %9109 = vmatmul.mubr.f32.gmra.mxu0 %v8654
    %v9110 = vpop.f32.mrf.mxu0
    %v9111 = vadd.f32 0.0, %v9110
    %v9112 = vpop.f32.mrf.mxu0
    %9113 = vmatprep.mubr.f32.mxu0 0.0
    %9114 = vmatmul.mubr.f32.gmra.mxu0 %v8657
    %v9115 = vpop.f32.mrf.mxu0
    %v9116 = vadd.f32 0.0, %v9115
    %v9117 = vpop.f32.mrf.mxu0
    %9118 = vmatprep.mubr.f32.mxu0 0.0
    %9119 = vmatmul.mubr.f32.gmra.mxu0 %v8660
    %v9120 = vpop.f32.mrf.mxu0
    %v9121 = vadd.f32 0.0, %v9120
    %v9122 = vpop.f32.mrf.mxu0
    %9123 = vmatprep.mubr.f32.mxu0 0.0
    %9124 = vmatmul.mubr.f32.gmra.mxu0 %v8663
    %v9125 = vpop.f32.mrf.mxu0
    %v9126 = vadd.f32 0.0, %v9125
    %v9127 = vpop.f32.mrf.mxu0
    %9128 = vmatprep.mubr.f32.mxu0 0.0
    %9129 = vmatmul.mubr.f32.gmra.mxu0 %v8666
    %v9130 = vpop.f32.mrf.mxu0
    %v9131 = vadd.f32 0.0, %v9130
    %v9132 = vpop.f32.mrf.mxu0
    %9133 = vmatprep.mubr.f32.mxu0 0.0
    %9134 = vmatmul.mubr.f32.gmra.mxu0 %v8669
    %v9135 = vpop.f32.mrf.mxu0
    %v9136 = vadd.f32 0.0, %v9135
    %v9137 = vpop.f32.mrf.mxu0
    %9138 = vmatprep.mubr.f32.mxu0 0.0
    %9139 = vmatmul.mubr.f32.gmra.mxu0 %v8672
    %v9140 = vpop.f32.mrf.mxu0
    %v9141 = vadd.f32 0.0, %v9140
    %v9142 = vpop.f32.mrf.mxu0
    %9143 = vmatprep.mubr.f32.mxu0 0.0
    %9144 = vmatmul.mubr.f32.gmra.mxu0 %v8675
    %v9145 = vpop.f32.mrf.mxu0
    %v9146 = vadd.f32 0.0, %v9145
    %v9147 = vpop.f32.mrf.mxu0
    %9148 = vmatprep.mubr.f32.mxu0 0.0
    %9149 = vmatmul.mubr.f32.gmra.mxu0 %v8678
    %v9150 = vpop.f32.mrf.mxu0
    %v9151 = vadd.f32 0.0, %v9150
    %v9152 = vpop.f32.mrf.mxu0
    %9153 = vmatprep.mubr.f32.mxu0 0.0
    %9154 = vmatmul.mubr.f32.gmra.mxu0 %v8681
    %v9155 = vpop.f32.mrf.mxu0
    %v9156 = vadd.f32 0.0, %v9155
    %v9157 = vpop.f32.mrf.mxu0
    %9158 = vmatprep.mubr.f32.mxu0 0.0
    %9159 = vmatmul.mubr.f32.gmra.mxu0 %v8684
    %v9160 = vpop.f32.mrf.mxu0
    %v9161 = vadd.f32 0.0, %v9160
    %v9162 = vpop.f32.mrf.mxu0
    %9163 = vmatprep.mubr.f32.mxu0 0.0
    %9164 = vmatmul.mubr.f32.gmra.mxu0 %v8687
    %v9165 = vpop.f32.mrf.mxu0
    %v9166 = vadd.f32 0.0, %v9165
    %v9167 = vpop.f32.mrf.mxu0
    %9168 = vmatprep.mubr.f32.mxu0 0.0
    %9169 = vmatmul.mubr.f32.gmra.mxu0 %v8690
    %v9170 = vpop.f32.mrf.mxu0
    %v9171 = vadd.f32 0.0, %v9170
    %v9172 = vpop.f32.mrf.mxu0
    %9173 = vdwg.mxu0
    %s9174 = scalar_lea.vmem %s26, 256
    %9175 = vst.msk [vmem:[%s9174] sm:$0xff] %vm621, %v9016
    %9176 = vst.msk [vmem:[%s9174 + $0x8] sm:$0xff] %vm621, %v9021
    %9177 = vst.msk [vmem:[%s9174 + $0x10] sm:$0xff] %vm621, %v9026
    %9178 = vst.msk [vmem:[%s9174 + $0x18] sm:$0xff] %vm621, %v9031
    %9179 = vst.msk [vmem:[%s9174 + $0x20] sm:$0xff] %vm621, %v9036
    %9180 = vst.msk [vmem:[%s9174 + $0x28] sm:$0xff] %vm621, %v9041
    %9181 = vst.msk [vmem:[%s9174 + $0x30] sm:$0xff] %vm621, %v9046
    %9182 = vst.msk [vmem:[%s9174 + $0x38] sm:$0xff] %vm621, %v9051
    %9183 = vst.msk [vmem:[%s9174 + $0x40] sm:$0xff] %vm621, %v9056
    %9184 = vst.msk [vmem:[%s9174 + $0x48] sm:$0xff] %vm621, %v9061
    %9185 = vst.msk [vmem:[%s9174 + $0x50] sm:$0xff] %vm621, %v9066
    %9186 = vst.msk [vmem:[%s9174 + $0x58] sm:$0xff] %vm621, %v9071
    %9187 = vst.msk [vmem:[%s9174 + $0x60] sm:$0xff] %vm621, %v9076
    %9188 = vst.msk [vmem:[%s9174 + $0x68] sm:$0xff] %vm621, %v9081
    %9189 = vst.msk [vmem:[%s9174 + $0x70] sm:$0xff] %vm621, %v9086
    %9190 = vst.msk [vmem:[%s9174 + $0x78] sm:$0xff] %vm621, %v9091
    %9191 = vst.msk [vmem:[%s9174 + $0x80] sm:$0xff] %vm621, %v9096
    %9192 = vst.msk [vmem:[%s9174 + $0x88] sm:$0xff] %vm621, %v9101
    %9193 = vst.msk [vmem:[%s9174 + $0x90] sm:$0xff] %vm621, %v9106
    %9194 = vst.msk [vmem:[%s9174 + $0x98] sm:$0xff] %vm621, %v9111
    %9195 = vst.msk [vmem:[%s9174 + $0xa0] sm:$0xff] %vm621, %v9116
    %9196 = vst.msk [vmem:[%s9174 + $0xa8] sm:$0xff] %vm621, %v9121
    %9197 = vst.msk [vmem:[%s9174 + $0xb0] sm:$0xff] %vm621, %v9126
    %9198 = vst.msk [vmem:[%s9174 + $0xb8] sm:$0xff] %vm621, %v9131
    %9199 = vst.msk [vmem:[%s9174 + $0xc0] sm:$0xff] %vm621, %v9136
    %9200 = vst.msk [vmem:[%s9174 + $0xc8] sm:$0xff] %vm621, %v9141
    %9201 = vst.msk [vmem:[%s9174 + $0xd0] sm:$0xff] %vm621, %v9146
    %9202 = vst.msk [vmem:[%s9174 + $0xd8] sm:$0xff] %vm621, %v9151
    %9203 = vst.msk [vmem:[%s9174 + $0xe0] sm:$0xff] %vm621, %v9156
    %9204 = vst.msk [vmem:[%s9174 + $0xe8] sm:$0xff] %vm621, %v9161
    %9205 = vst.msk [vmem:[%s9174 + $0xf0] sm:$0xff] %vm621, %v9166
    %9206 = vst.msk [vmem:[%s9174 + $0xf8] sm:$0xff] %vm621, %v9171
    // Predicated region
    $region102: #{dino_forward.1} parent=1 // pred_check
      _
    $region103: #{dino_forward.1} parent=1 // pred_check_branch
      %9208 = sbr.rel (0) target = $region105
    $region104: #{dino_forward.1} parent=1 // pred_region
      %s9210 = ssub.s32 512, 512
      %9211 = vsyncadd [#allocation3], %s9210
      %s9212 = sshll.u32 [#allocation2], 4
      %s9213 = int_to_ptr.vmem [resolvable:$true] %s9212
      %9218 = dma.vmem_to_hbm [thread:$0]  %s9213, 512, %s25, [#allocation3], 128, 128, 8
    $region105: #{dino_forward.1} parent=1 // pred_fallthru
      _
    // Predicated region
    $region106: #{dino_forward.1} parent=1 // pred_check
      _
    $region107: #{dino_forward.1} parent=1 // pred_check_branch
      %9220 = sbr.rel (0) target = $region109
    $region108: #{dino_forward.1} parent=1 // pred_region
      _
    $region109: #{dino_forward.1} parent=1 // pred_fallthru
      _
    // Predicated region
    $region110: #{dino_forward.1} parent=1 // pred_check
      _
    $region111: #{dino_forward.1} parent=1 // pred_check_branch
      %9222 = sbr.rel (0) target = $region113
    $region112: #{dino_forward.1} parent=1 // pred_region
      %9223 = dma.done [#allocation3], 512
    $region113: #{dino_forward.1} parent=1 // pred_fallthru
      _
    // Predicated region
    $region114: #{dino_forward.1} parent=1 // pred_check
      _
    $region115: #{dino_forward.1} parent=1 // pred_check_branch
      %9225 = sbr.rel (0) target = $region117
    $region116: #{dino_forward.1} parent=1 // pred_region
      _
    $region117: #{dino_forward.1} parent=1 // pred_fallthru
      _
    %9226 = vsyncpa [#allocation3], 1

</llo_original>
